<compile_context>
chip_gen: v7x
topology: tpu7x:2x2x1
jax: 0.10.0
libtpu: 0.0.40
codegen_flags: <defaults>
</compile_context>

<pallas_src>
import functools

import jax
import jax.numpy as jnp
from jax.experimental import pallas as pl
from jax.experimental.pallas import tpu as pltpu

# ----------------------- model configuration (synthetic) -----------------------
CONFIG = dict(
    in_channels_first=4,  out_channels_first=8,  kernel_size_first=3, stride_first=1,
    in_channels_second=8, out_channels_second=16, kernel_size_second=3, stride_second=1,
    # input spatial 16x16 -> conv1 -> 14x14 -> conv2 -> 12x12 -> flatten = 16*12*12
    in_features_first=16 * 12 * 12, out_features_first=32,
    in_features_second=32, out_features_second=10,
)
DROPOUT_P = 0.25  # nn.Dropout is identity at inference

# ---- static shape constants derived from the module spec ----------------------
H = W = 16
C_IN = CONFIG["in_channels_first"]        # 4
C_IN_P = 8                                # input channels zero-padded to a sublane tile
C1 = CONFIG["out_channels_first"]         # 8
C2 = CONFIG["out_channels_second"]        # 16
K = CONFIG["kernel_size_first"]           # 3 (both convs)
OH1, OW1 = H - K + 1, W - K + 1           # 14, 14
OH2, OW2 = OH1 - K + 1, OW1 - K + 1       # 12, 12
F1 = CONFIG["out_features_first"]         # 32
F2 = CONFIG["out_features_second"]        # 10
OUT_PAD = 128                             # lane-dense logits (sliced to F2 in wrapper)
GRID = H * W                              # 256 flattened spatial positions per image
LANE_PAD = 128                            # per-image lane pad so shifted slices stay in-bounds
WIDTH = GRID + LANE_PAD                   # 384 lanes per image slab
OFFSETS = tuple(ki * W + kj for ki in range(K) for kj in range(K))   # 9 lane shifts

assert CONFIG["stride_first"] == 1 and CONFIG["stride_second"] == 1
assert CONFIG["kernel_size_second"] == K
assert CONFIG["in_features_first"] == C2 * OH2 * OW2
assert max(OFFSETS) <= LANE_PAD


# ------------------------------ fused Pallas kernel -----------------------------
def _cnn_fused_kernel(x_ref, w1_ref, b1_ref, w2_ref, b2_ref,
                      fw1_ref, fb1_ref, fw2_ref, fb2_ref,
                      out_ref, act2_scr):
    """Whole forward pass for one block of `bb` images; everything resident in VMEM."""
    bb = out_ref.shape[0]                 # images in this grid step
    n2 = bb * WIDTH                       # conv2 output width (lane-packed over the block)
    n1 = n2 + LANE_PAD                    # conv1 output width

    x = x_ref[0]                          # (C_IN_P, n2 + 2*LANE_PAD) f32

    # ---- conv1 + ReLU: 9 lane-shifted slices stacked on the contraction axis -> 1 dot
    s1 = jnp.concatenate([x[:, off:off + n1] for off in OFFSETS], axis=0)       # (72, n1)
    acc1 = jnp.dot(w1_ref[...], s1.astype(jnp.bfloat16),
                   preferred_element_type=jnp.float32)                          # (C1, n1)
    act1 = jnp.maximum(acc1 + b1_ref[...], 0.0)                                 # f32

    # ---- conv2 + ReLU
    s2 = jnp.concatenate([act1[:, off:off + n2] for off in OFFSETS], axis=0)    # (72, n2)
    acc2 = jnp.dot(w2_ref[...], s2.astype(jnp.bfloat16),
                   preferred_element_type=jnp.float32)                          # (C2, n2)
    act2 = jnp.maximum(acc2 + b2_ref[...], 0.0)                                 # f32

    # ---- relayout: lane-packed (C2, bb*WIDTH) -> per-image slabs (bb, C2, WIDTH)
    # (lane-aligned extracts + full-slab stores; the strided access is on the load side)
    for b in range(bb):
        act2_scr[b] = act2[:, b * WIDTH:(b + 1) * WIDTH]

    # ---- flatten + fc1 + ReLU: 16 dots of (bb, 256) @ (256, 32), f32 accumulation.
    # fw1 is zero-packed on the full 16x16 grid, so garbage at invalid conv positions
    # never contributes; per-image pad lanes are excluded by the [:GRID] slice.
    h = jnp.zeros((bb, F1), jnp.float32)
    for c in range(C2):
        h = h + jnp.dot(act2_scr[:, c, :GRID].astype(jnp.bfloat16), fw1_ref[c],
                        preferred_element_type=jnp.float32)
    h = jnp.maximum(h + fb1_ref[...], 0.0)                                      # (bb, F1)
    # TODO(synk): nn.Dropout is identity in eval mode; training-mode masking is not
    # implemented.  act(drop(h)) == relu(relu(h)) == h here, so no extra op needed.

    # ---- fc2 -> lane-dense (bb, 128) store; wrapper slices the first F2 logits
    out_ref[...] = (jnp.dot(h, fw2_ref[...], preferred_element_type=jnp.float32)
                    + fb2_ref[...]).astype(out_ref.dtype)


# ------------------------------ parameter packing -------------------------------
def pack_params(params):
    """One-time re-layout of PyTorch-convention weights into kernel layouts."""
    # conv1: pad channels 4->8, then (Cout, Cin, K, K) -> (Cout, K*K*Cin_p), bf16
    w1 = jnp.pad(params["conv1_w"], ((0, 0), (0, C_IN_P - C_IN), (0, 0), (0, 0)))
    w1p = w1.transpose(0, 2, 3, 1).reshape(C1, K * K * C_IN_P).astype(jnp.bfloat16)
    b1p = params["conv1_b"].reshape(C1, 1).astype(jnp.float32)
    # conv2: (Cout, Cin, K, K) -> (Cout, K*K*Cin), bf16
    w2p = params["conv2_w"].transpose(0, 2, 3, 1).reshape(C2, K * K * C1).astype(jnp.bfloat16)
    b2p = params["conv2_b"].reshape(C2, 1).astype(jnp.float32)
    # fc1: (F1, C2*12*12) -> zero-pack 12x12 window onto the full 16x16 grid
    #      -> (C2, GRID, F1) bf16 so per-channel contraction over the full grid is exact.
    fw1 = params["fc1_w"].reshape(F1, C2, OH2, OW2)
    fw1 = jnp.pad(fw1, ((0, 0), (0, 0), (0, H - OH2), (0, W - OW2)))
    fw1p = fw1.reshape(F1, C2, GRID).transpose(1, 2, 0).astype(jnp.bfloat16)
    fb1p = params["fc1_b"].reshape(1, F1).astype(jnp.float32)
    # fc2: pad output features to 128 lanes for a lane-dense store
    fw2p = jnp.pad(params["fc2_w"].T, ((0, 0), (0, OUT_PAD - F2))).astype(jnp.float32)
    fb2p = jnp.pad(params["fc2_b"].reshape(1, F2),
                   ((0, 0), (0, OUT_PAD - F2))).astype(jnp.float32)
    return dict(w1=w1p, b1=b1p, w2=w2p, b2=b2p,
                fw1=fw1p, fb1=fb1p, fw2=fw2p, fb2=fb2p)


# --------------------------------- forward --------------------------------------
def _round_up(v, m):
    return (v + m - 1) // m * m


@functools.partial(jax.jit, static_argnames=("block_b",))
def cnn_forward(packed, x, block_b=32):
    """x: (N, C_IN, 16, 16) f32 -> logits (N, F2) f32."""
    n = x.shape[0]
    bb = min(block_b, _round_up(max(n, 8), 8))     # images per grid step (>= 8, sublane aligned)
    n_pad = _round_up(n, bb)
    n_blocks = n_pad // bb
    n2 = bb * WIDTH
    n_in = n2 + 2 * LANE_PAD

    # pack the batch block along lanes: (n_blocks, C_IN_P, bb*WIDTH + 2*LANE_PAD), zero pads
    xf = x.reshape(n, C_IN, GRID)
    xf = jnp.pad(xf, ((0, n_pad - n), (0, C_IN_P - C_IN), (0, LANE_PAD)))
    xf = xf.reshape(n_blocks, bb, C_IN_P, WIDTH).transpose(0, 2, 1, 3)
    xf = xf.reshape(n_blocks, C_IN_P, n2)
    xf = jnp.pad(xf, ((0, 0), (0, 0), (0, 2 * LANE_PAD)))

    flops = int(n_pad * 2 * (K * K * C_IN_P * C1 * WIDTH + K * K * C1 * C2 * WIDTH
                             + C2 * GRID * F1 + F1 * OUT_PAD))
    bytes_accessed = int(xf.size * 4
                         + sum(int(v.size) * v.dtype.itemsize for v in packed.values())
                         + n_pad * OUT_PAD * 4)

    out = pl.pallas_call(
        _cnn_fused_kernel,
        out_shape=jax.ShapeDtypeStruct((n_pad, OUT_PAD), jnp.float32),
        grid=(n_blocks,),
        in_specs=[
            pl.BlockSpec((1, C_IN_P, n_in), lambda i: (i, 0, 0)),
            pl.BlockSpec((C1, K * K * C_IN_P), lambda i: (0, 0)),
            pl.BlockSpec((C1, 1), lambda i: (0, 0)),
            pl.BlockSpec((C2, K * K * C1), lambda i: (0, 0)),
            pl.BlockSpec((C2, 1), lambda i: (0, 0)),
            pl.BlockSpec((C2, GRID, F1), lambda i: (0, 0, 0)),
            pl.BlockSpec((1, F1), lambda i: (0, 0)),
            pl.BlockSpec((F1, OUT_PAD), lambda i: (0, 0)),
            pl.BlockSpec((1, OUT_PAD), lambda i: (0, 0)),
        ],
        out_specs=pl.BlockSpec((bb, OUT_PAD), lambda i: (i, 0)),
        scratch_shapes=[pltpu.VMEM((bb, C2, WIDTH), jnp.float32)],
        compiler_params=pltpu.CompilerParams(
            dimension_semantics=("parallel",),          # shard blocks across TensorCores
            vmem_limit_bytes=32 * 1024 * 1024),
        cost_estimate=pl.CostEstimate(flops=flops, transcendentals=0,
                                      bytes_accessed=bytes_accessed),
    )(xf, packed["w1"], packed["b1"], packed["w2"], packed["b2"],
      packed["fw1"], packed["fb1"], packed["fw2"], packed["fb2"])
    return out[:n, :F2]


# ---------------------------- parameter initialization ---------------------------
def init_params(key, cfg):
    ks = jax.random.split(key, 8)

    def uniform(k, shape, fan_in):
        bound = 1.0 / jnp.sqrt(jnp.float32(fan_in))
        return jax.random.uniform(k, shape, jnp.float32, -bound, bound)

    c1_fan = cfg["in_channels_first"] * cfg["kernel_size_first"] ** 2
    c2_fan = cfg["in_channels_second"] * cfg["kernel_size_second"] ** 2
    return {
        "conv1_w": uniform(ks[0], (cfg["out_channels_first"], cfg["in_channels_first"],
                                   cfg["kernel_size_first"], cfg["kernel_size_first"]), c1_fan),
        "conv1_b": uniform(ks[1], (cfg["out_channels_first"],), c1_fan),
        "conv2_w": uniform(ks[2], (cfg["out_channels_second"], cfg["in_channels_second"],
                                   cfg["kernel_size_second"], cfg["kernel_size_second"]), c2_fan),
        "conv2_b": uniform(ks[3], (cfg["out_channels_second"],), c2_fan),
        "fc1_w": uniform(ks[4], (cfg["out_features_first"], cfg["in_features_first"]),
                         cfg["in_features_first"]),
        "fc1_b": uniform(ks[5], (cfg["out_features_first"],), cfg["in_features_first"]),
        "fc2_w": uniform(ks[6], (cfg["out_features_second"], cfg["in_features_second"]),
                         cfg["in_features_second"]),
        "fc2_b": uniform(ks[7], (cfg["out_features_second"],), cfg["in_features_second"]),
    }


# --------------------------- pure-JAX reference (f32) ----------------------------
def cnn_reference(params, x):
    dn = ("NCHW", "OIHW", "NCHW")
    y = jax.lax.conv_general_dilated(x, params["conv1_w"], (1, 1), "VALID",
                                     dimension_numbers=dn)
    y = jax.nn.relu(y + params["conv1_b"].reshape(1, -1, 1, 1))
    y = jax.lax.conv_general_dilated(y, params["conv2_w"], (1, 1), "VALID",
                                     dimension_numbers=dn)
    y = jax.nn.relu(y + params["conv2_b"].reshape(1, -1, 1, 1))
    y = y.reshape(y.shape[0], -1)
    y = jax.nn.relu(y @ params["fc1_w"].T + params["fc1_b"])
    return y @ params["fc2_w"].T + params["fc2_b"]


if __name__ == "__main__":
    key = jax.random.PRNGKey(0)
    k_x, k_p = jax.random.split(key)
    x = jax.random.normal(k_x, (2, C_IN, H, W), jnp.float32)
    params = init_params(k_p, CONFIG)
    packed = pack_params(params)          # one-time weight re-layout (off the hot path)

    out = cnn_forward(packed, x)
    jax.block_until_ready(out)
    assert out.shape == (2, F2), out.shape

    ref = cnn_reference(params, x)
    err = float(jnp.max(jnp.abs(out - ref)))
    assert err < 5e-2, f"max abs error vs reference: {err}"
    print("KERNEL_OK")
</pallas_src>

<mosaic_0001>
module attributes {stable_mosaic.version = 11 : i64} {
  func.func @_cnn_fused_kernel(%arg0: i32, %arg1: memref<1x8x3328xf32, #tpu.memory_space<vmem>>, %arg2: memref<8x72xbf16, #tpu.memory_space<vmem>>, %arg3: memref<8x1xf32, #tpu.memory_space<vmem>>, %arg4: memref<16x72xbf16, #tpu.memory_space<vmem>>, %arg5: memref<16x1xf32, #tpu.memory_space<vmem>>, %arg6: memref<16x256x32xbf16, #tpu.memory_space<vmem>>, %arg7: memref<1x32xf32, #tpu.memory_space<vmem>>, %arg8: memref<32x128xf32, #tpu.memory_space<vmem>>, %arg9: memref<1x128xf32, #tpu.memory_space<vmem>>, %arg10: memref<8x128xf32, #tpu.memory_space<vmem>>, %arg11: memref<8x16x384xf32, #tpu.memory_space<vmem>>) attributes {dimension_semantics = [#tpu.dimension_semantics<parallel>], iteration_bounds = array<i64: 1>, scalar_prefetch = 0 : i64, scratch_operands = 1 : i64, tpu.core_type = #tpu.core_type<tc>, window_params = [{transform_indices = @transform_0, window_bounds = array<i64: 1, 8, 3328>}, {pipeline_mode = #tpu.pipeline_mode<synchronous>, transform_indices = @transform_1, window_bounds = array<i64: 8, 72>}, {pipeline_mode = #tpu.pipeline_mode<synchronous>, transform_indices = @transform_2, window_bounds = array<i64: 8, 1>}, {pipeline_mode = #tpu.pipeline_mode<synchronous>, transform_indices = @transform_3, window_bounds = array<i64: 16, 72>}, {pipeline_mode = #tpu.pipeline_mode<synchronous>, transform_indices = @transform_4, window_bounds = array<i64: 16, 1>}, {pipeline_mode = #tpu.pipeline_mode<synchronous>, transform_indices = @transform_5, window_bounds = array<i64: 16, 256, 32>}, {pipeline_mode = #tpu.pipeline_mode<synchronous>, transform_indices = @transform_6, window_bounds = array<i64: 1, 32>}, {pipeline_mode = #tpu.pipeline_mode<synchronous>, transform_indices = @transform_7, window_bounds = array<i64: 32, 128>}, {pipeline_mode = #tpu.pipeline_mode<synchronous>, transform_indices = @transform_8, window_bounds = array<i64: 1, 128>}, {transform_indices = @transform_9, window_bounds = array<i64: 8, 128>}]} {
    %c0 = arith.constant 0 : index
    %c0_0 = arith.constant 0 : index
    %c0_1 = arith.constant 0 : index
    %0 = vector.load %arg1[%c0, %c0_0, %c0_1] : memref<1x8x3328xf32, #tpu.memory_space<vmem>>, vector<1x8x3328xf32>
    %1 = vector.shape_cast %0 : vector<1x8x3328xf32> to vector<8x3328xf32>
    %2 = vector.extract_strided_slice %1 {offsets = [0, 0], sizes = [8, 3200], strides = [1, 1]} : vector<8x3328xf32> to vector<8x3200xf32>
    %3 = vector.extract_strided_slice %1 {offsets = [0, 1], sizes = [8, 3200], strides = [1, 1]} : vector<8x3328xf32> to vector<8x3200xf32>
    %4 = vector.extract_strided_slice %1 {offsets = [0, 2], sizes = [8, 3200], strides = [1, 1]} : vector<8x3328xf32> to vector<8x3200xf32>
    %5 = vector.extract_strided_slice %1 {offsets = [0, 16], sizes = [8, 3200], strides = [1, 1]} : vector<8x3328xf32> to vector<8x3200xf32>
    %6 = vector.extract_strided_slice %1 {offsets = [0, 17], sizes = [8, 3200], strides = [1, 1]} : vector<8x3328xf32> to vector<8x3200xf32>
    %7 = vector.extract_strided_slice %1 {offsets = [0, 18], sizes = [8, 3200], strides = [1, 1]} : vector<8x3328xf32> to vector<8x3200xf32>
    %8 = vector.extract_strided_slice %1 {offsets = [0, 32], sizes = [8, 3200], strides = [1, 1]} : vector<8x3328xf32> to vector<8x3200xf32>
    %9 = vector.extract_strided_slice %1 {offsets = [0, 33], sizes = [8, 3200], strides = [1, 1]} : vector<8x3328xf32> to vector<8x3200xf32>
    %10 = vector.extract_strided_slice %1 {offsets = [0, 34], sizes = [8, 3200], strides = [1, 1]} : vector<8x3328xf32> to vector<8x3200xf32>
    %11 = tpu.concatenate %2, %3, %4, %5, %6, %7, %8, %9, %10 in 0 : vector<8x3200xf32>, vector<8x3200xf32>, vector<8x3200xf32>, vector<8x3200xf32>, vector<8x3200xf32>, vector<8x3200xf32>, vector<8x3200xf32>, vector<8x3200xf32>, vector<8x3200xf32> -> vector<72x3200xf32>
    %c0_2 = arith.constant 0 : index
    %c0_3 = arith.constant 0 : index
    %12 = vector.load %arg2[%c0_2, %c0_3] : memref<8x72xbf16, #tpu.memory_space<vmem>>, vector<8x72xbf16>
    %13 = arith.truncf %11 : vector<72x3200xf32> to vector<72x3200xbf16>
    %cst = arith.constant dense<0.000000e+00> : vector<8x3200xf32>
    %14 = tpu.matmul %12, %13, %cst {dimension_numbers = #tpu.dot_dimension_numbers<[1], [0], [0], [1], [0, 0, 1, 1], [], []>} : vector<8x72xbf16>, vector<72x3200xbf16>, vector<8x3200xf32> -> vector<8x3200xf32>
    %c0_4 = arith.constant 0 : index
    %c0_5 = arith.constant 0 : index
    %15 = vector.load %arg3[%c0_4, %c0_5] : memref<8x1xf32, #tpu.memory_space<vmem>>, vector<8x1xf32>
    %16 = vector.broadcast %15 : vector<8x1xf32> to vector<8x3200xf32>
    %17 = arith.addf %14, %16 : vector<8x3200xf32>
    %cst_6 = arith.constant 0.000000e+00 : f32
    %18 = vector.broadcast %cst_6 : f32 to vector<8x3200xf32>
    %19 = arith.maximumf %17, %18 : vector<8x3200xf32>
    %20 = vector.extract_strided_slice %19 {offsets = [0, 0], sizes = [8, 3072], strides = [1, 1]} : vector<8x3200xf32> to vector<8x3072xf32>
    %21 = vector.extract_strided_slice %19 {offsets = [0, 1], sizes = [8, 3072], strides = [1, 1]} : vector<8x3200xf32> to vector<8x3072xf32>
    %22 = vector.extract_strided_slice %19 {offsets = [0, 2], sizes = [8, 3072], strides = [1, 1]} : vector<8x3200xf32> to vector<8x3072xf32>
    %23 = vector.extract_strided_slice %19 {offsets = [0, 16], sizes = [8, 3072], strides = [1, 1]} : vector<8x3200xf32> to vector<8x3072xf32>
    %24 = vector.extract_strided_slice %19 {offsets = [0, 17], sizes = [8, 3072], strides = [1, 1]} : vector<8x3200xf32> to vector<8x3072xf32>
    %25 = vector.extract_strided_slice %19 {offsets = [0, 18], sizes = [8, 3072], strides = [1, 1]} : vector<8x3200xf32> to vector<8x3072xf32>
    %26 = vector.extract_strided_slice %19 {offsets = [0, 32], sizes = [8, 3072], strides = [1, 1]} : vector<8x3200xf32> to vector<8x3072xf32>
    %27 = vector.extract_strided_slice %19 {offsets = [0, 33], sizes = [8, 3072], strides = [1, 1]} : vector<8x3200xf32> to vector<8x3072xf32>
    %28 = vector.extract_strided_slice %19 {offsets = [0, 34], sizes = [8, 3072], strides = [1, 1]} : vector<8x3200xf32> to vector<8x3072xf32>
    %29 = tpu.concatenate %20, %21, %22, %23, %24, %25, %26, %27, %28 in 0 : vector<8x3072xf32>, vector<8x3072xf32>, vector<8x3072xf32>, vector<8x3072xf32>, vector<8x3072xf32>, vector<8x3072xf32>, vector<8x3072xf32>, vector<8x3072xf32>, vector<8x3072xf32> -> vector<72x3072xf32>
    %c0_7 = arith.constant 0 : index
    %c0_8 = arith.constant 0 : index
    %30 = vector.load %arg4[%c0_7, %c0_8] : memref<16x72xbf16, #tpu.memory_space<vmem>>, vector<16x72xbf16>
    %31 = arith.truncf %29 : vector<72x3072xf32> to vector<72x3072xbf16>
    %cst_9 = arith.constant dense<0.000000e+00> : vector<16x3072xf32>
    %32 = tpu.matmul %30, %31, %cst_9 {dimension_numbers = #tpu.dot_dimension_numbers<[1], [0], [0], [1], [0, 0, 1, 1], [], []>} : vector<16x72xbf16>, vector<72x3072xbf16>, vector<16x3072xf32> -> vector<16x3072xf32>
    %c0_10 = arith.constant 0 : index
    %c0_11 = arith.constant 0 : index
    %33 = vector.load %arg5[%c0_10, %c0_11] : memref<16x1xf32, #tpu.memory_space<vmem>>, vector<16x1xf32>
    %34 = vector.broadcast %33 : vector<16x1xf32> to vector<16x3072xf32>
    %35 = arith.addf %32, %34 : vector<16x3072xf32>
    %cst_12 = arith.constant 0.000000e+00 : f32
    %36 = vector.broadcast %cst_12 : f32 to vector<16x3072xf32>
    %37 = arith.maximumf %35, %36 : vector<16x3072xf32>
    %38 = vector.extract_strided_slice %37 {offsets = [0, 0], sizes = [16, 384], strides = [1, 1]} : vector<16x3072xf32> to vector<16x384xf32>
    %c0_13 = arith.constant 0 : index
    %c0_14 = arith.constant 0 : index
    %c0_15 = arith.constant 0 : index
    %39 = vector.load %arg11[%c0_13, %c0_14, %c0_15] : memref<8x16x384xf32, #tpu.memory_space<vmem>>, vector<1x16x384xf32>
    %40 = vector.shape_cast %39 : vector<1x16x384xf32> to vector<16x384xf32>
    %41 = vector.shape_cast %38 : vector<16x384xf32> to vector<1x16x384xf32>
    tpu.vector_store %arg11[%c0_13, %c0_14, %c0_15], %41 {strides = array<i32>} : memref<8x16x384xf32, #tpu.memory_space<vmem>>, vector<1x16x384xf32>,
    %42 = vector.extract_strided_slice %37 {offsets = [0, 384], sizes = [16, 384], strides = [1, 1]} : vector<16x3072xf32> to vector<16x384xf32>
    %c1 = arith.constant 1 : index
    %c0_16 = arith.constant 0 : index
    %c0_17 = arith.constant 0 : index
    %43 = vector.load %arg11[%c1, %c0_16, %c0_17] : memref<8x16x384xf32, #tpu.memory_space<vmem>>, vector<1x16x384xf32>
    %44 = vector.shape_cast %43 : vector<1x16x384xf32> to vector<16x384xf32>
    %45 = vector.shape_cast %42 : vector<16x384xf32> to vector<1x16x384xf32>
    tpu.vector_store %arg11[%c1, %c0_16, %c0_17], %45 {strides = array<i32>} : memref<8x16x384xf32, #tpu.memory_space<vmem>>, vector<1x16x384xf32>,
    %46 = vector.extract_strided_slice %37 {offsets = [0, 768], sizes = [16, 384], strides = [1, 1]} : vector<16x3072xf32> to vector<16x384xf32>
    %c2 = arith.constant 2 : index
    %c0_18 = arith.constant 0 : index
    %c0_19 = arith.constant 0 : index
    %47 = vector.load %arg11[%c2, %c0_18, %c0_19] : memref<8x16x384xf32, #tpu.memory_space<vmem>>, vector<1x16x384xf32>
    %48 = vector.shape_cast %47 : vector<1x16x384xf32> to vector<16x384xf32>
    %49 = vector.shape_cast %46 : vector<16x384xf32> to vector<1x16x384xf32>
    tpu.vector_store %arg11[%c2, %c0_18, %c0_19], %49 {strides = array<i32>} : memref<8x16x384xf32, #tpu.memory_space<vmem>>, vector<1x16x384xf32>,
    %50 = vector.extract_strided_slice %37 {offsets = [0, 1152], sizes = [16, 384], strides = [1, 1]} : vector<16x3072xf32> to vector<16x384xf32>
    %c3 = arith.constant 3 : index
    %c0_20 = arith.constant 0 : index
    %c0_21 = arith.constant 0 : index
    %51 = vector.load %arg11[%c3, %c0_20, %c0_21] : memref<8x16x384xf32, #tpu.memory_space<vmem>>, vector<1x16x384xf32>
    %52 = vector.shape_cast %51 : vector<1x16x384xf32> to vector<16x384xf32>
    %53 = vector.shape_cast %50 : vector<16x384xf32> to vector<1x16x384xf32>
    tpu.vector_store %arg11[%c3, %c0_20, %c0_21], %53 {strides = array<i32>} : memref<8x16x384xf32, #tpu.memory_space<vmem>>, vector<1x16x384xf32>,
    %54 = vector.extract_strided_slice %37 {offsets = [0, 1536], sizes = [16, 384], strides = [1, 1]} : vector<16x3072xf32> to vector<16x384xf32>
    %c4 = arith.constant 4 : index
    %c0_22 = arith.constant 0 : index
    %c0_23 = arith.constant 0 : index
    %55 = vector.load %arg11[%c4, %c0_22, %c0_23] : memref<8x16x384xf32, #tpu.memory_space<vmem>>, vector<1x16x384xf32>
    %56 = vector.shape_cast %55 : vector<1x16x384xf32> to vector<16x384xf32>
    %57 = vector.shape_cast %54 : vector<16x384xf32> to vector<1x16x384xf32>
    tpu.vector_store %arg11[%c4, %c0_22, %c0_23], %57 {strides = array<i32>} : memref<8x16x384xf32, #tpu.memory_space<vmem>>, vector<1x16x384xf32>,
    %58 = vector.extract_strided_slice %37 {offsets = [0, 1920], sizes = [16, 384], strides = [1, 1]} : vector<16x3072xf32> to vector<16x384xf32>
    %c5 = arith.constant 5 : index
    %c0_24 = arith.constant 0 : index
    %c0_25 = arith.constant 0 : index
    %59 = vector.load %arg11[%c5, %c0_24, %c0_25] : memref<8x16x384xf32, #tpu.memory_space<vmem>>, vector<1x16x384xf32>
    %60 = vector.shape_cast %59 : vector<1x16x384xf32> to vector<16x384xf32>
    %61 = vector.shape_cast %58 : vector<16x384xf32> to vector<1x16x384xf32>
    tpu.vector_store %arg11[%c5, %c0_24, %c0_25], %61 {strides = array<i32>} : memref<8x16x384xf32, #tpu.memory_space<vmem>>, vector<1x16x384xf32>,
    %62 = vector.extract_strided_slice %37 {offsets = [0, 2304], sizes = [16, 384], strides = [1, 1]} : vector<16x3072xf32> to vector<16x384xf32>
    %c6 = arith.constant 6 : index
    %c0_26 = arith.constant 0 : index
    %c0_27 = arith.constant 0 : index
    %63 = vector.load %arg11[%c6, %c0_26, %c0_27] : memref<8x16x384xf32, #tpu.memory_space<vmem>>, vector<1x16x384xf32>
    %64 = vector.shape_cast %63 : vector<1x16x384xf32> to vector<16x384xf32>
    %65 = vector.shape_cast %62 : vector<16x384xf32> to vector<1x16x384xf32>
    tpu.vector_store %arg11[%c6, %c0_26, %c0_27], %65 {strides = array<i32>} : memref<8x16x384xf32, #tpu.memory_space<vmem>>, vector<1x16x384xf32>,
    %66 = vector.extract_strided_slice %37 {offsets = [0, 2688], sizes = [16, 384], strides = [1, 1]} : vector<16x3072xf32> to vector<16x384xf32>
    %c7 = arith.constant 7 : index
    %c0_28 = arith.constant 0 : index
    %c0_29 = arith.constant 0 : index
    %67 = vector.load %arg11[%c7, %c0_28, %c0_29] : memref<8x16x384xf32, #tpu.memory_space<vmem>>, vector<1x16x384xf32>
    %68 = vector.shape_cast %67 : vector<1x16x384xf32> to vector<16x384xf32>
    %69 = vector.shape_cast %66 : vector<16x384xf32> to vector<1x16x384xf32>
    tpu.vector_store %arg11[%c7, %c0_28, %c0_29], %69 {strides = array<i32>} : memref<8x16x384xf32, #tpu.memory_space<vmem>>, vector<1x16x384xf32>,
    %cst_30 = arith.constant 0.000000e+00 : f32
    %70 = vector.broadcast %cst_30 : f32 to vector<8x32xf32>
    %c0_31 = arith.constant 0 : index
    %c0_32 = arith.constant 0 : index
    %c0_33 = arith.constant 0 : index
    %71 = vector.load %arg11[%c0_31, %c0_32, %c0_33] : memref<8x16x384xf32, #tpu.memory_space<vmem>>, vector<8x1x256xf32>
    %72 = vector.shape_cast %71 : vector<8x1x256xf32> to vector<8x256xf32>
    %73 = arith.truncf %72 : vector<8x256xf32> to vector<8x256xbf16>
    %c0_34 = arith.constant 0 : index
    %c0_35 = arith.constant 0 : index
    %c0_36 = arith.constant 0 : index
    %74 = vector.load %arg6[%c0_34, %c0_35, %c0_36] : memref<16x256x32xbf16, #tpu.memory_space<vmem>>, vector<1x256x32xbf16>
    %75 = vector.shape_cast %74 : vector<1x256x32xbf16> to vector<256x32xbf16>
    %cst_37 = arith.constant dense<0.000000e+00> : vector<8x32xf32>
    %76 = tpu.matmul %73, %75, %cst_37 {dimension_numbers = #tpu.dot_dimension_numbers<[1], [0], [0], [1], [0, 0, 1, 1], [], []>} : vector<8x256xbf16>, vector<256x32xbf16>, vector<8x32xf32> -> vector<8x32xf32>
    %77 = arith.addf %70, %76 : vector<8x32xf32>
    %c0_38 = arith.constant 0 : index
    %c1_39 = arith.constant 1 : index
    %c0_40 = arith.constant 0 : index
    %78 = vector.load %arg11[%c0_38, %c1_39, %c0_40] : memref<8x16x384xf32, #tpu.memory_space<vmem>>, vector<8x1x256xf32>
    %79 = vector.shape_cast %78 : vector<8x1x256xf32> to vector<8x256xf32>
    %80 = arith.truncf %79 : vector<8x256xf32> to vector<8x256xbf16>
    %c1_41 = arith.constant 1 : index
    %c0_42 = arith.constant 0 : index
    %c0_43 = arith.constant 0 : index
    %81 = vector.load %arg6[%c1_41, %c0_42, %c0_43] : memref<16x256x32xbf16, #tpu.memory_space<vmem>>, vector<1x256x32xbf16>
    %82 = vector.shape_cast %81 : vector<1x256x32xbf16> to vector<256x32xbf16>
    %cst_44 = arith.constant dense<0.000000e+00> : vector<8x32xf32>
    %83 = tpu.matmul %80, %82, %cst_44 {dimension_numbers = #tpu.dot_dimension_numbers<[1], [0], [0], [1], [0, 0, 1, 1], [], []>} : vector<8x256xbf16>, vector<256x32xbf16>, vector<8x32xf32> -> vector<8x32xf32>
    %84 = arith.addf %77, %83 : vector<8x32xf32>
    %c0_45 = arith.constant 0 : index
    %c2_46 = arith.constant 2 : index
    %c0_47 = arith.constant 0 : index
    %85 = vector.load %arg11[%c0_45, %c2_46, %c0_47] : memref<8x16x384xf32, #tpu.memory_space<vmem>>, vector<8x1x256xf32>
    %86 = vector.shape_cast %85 : vector<8x1x256xf32> to vector<8x256xf32>
    %87 = arith.truncf %86 : vector<8x256xf32> to vector<8x256xbf16>
    %c2_48 = arith.constant 2 : index
    %c0_49 = arith.constant 0 : index
    %c0_50 = arith.constant 0 : index
    %88 = vector.load %arg6[%c2_48, %c0_49, %c0_50] : memref<16x256x32xbf16, #tpu.memory_space<vmem>>, vector<1x256x32xbf16>
    %89 = vector.shape_cast %88 : vector<1x256x32xbf16> to vector<256x32xbf16>
    %cst_51 = arith.constant dense<0.000000e+00> : vector<8x32xf32>
    %90 = tpu.matmul %87, %89, %cst_51 {dimension_numbers = #tpu.dot_dimension_numbers<[1], [0], [0], [1], [0, 0, 1, 1], [], []>} : vector<8x256xbf16>, vector<256x32xbf16>, vector<8x32xf32> -> vector<8x32xf32>
    %91 = arith.addf %84, %90 : vector<8x32xf32>
    %c0_52 = arith.constant 0 : index
    %c3_53 = arith.constant 3 : index
    %c0_54 = arith.constant 0 : index
    %92 = vector.load %arg11[%c0_52, %c3_53, %c0_54] : memref<8x16x384xf32, #tpu.memory_space<vmem>>, vector<8x1x256xf32>
    %93 = vector.shape_cast %92 : vector<8x1x256xf32> to vector<8x256xf32>
    %94 = arith.truncf %93 : vector<8x256xf32> to vector<8x256xbf16>
    %c3_55 = arith.constant 3 : index
    %c0_56 = arith.constant 0 : index
    %c0_57 = arith.constant 0 : index
    %95 = vector.load %arg6[%c3_55, %c0_56, %c0_57] : memref<16x256x32xbf16, #tpu.memory_space<vmem>>, vector<1x256x32xbf16>
    %96 = vector.shape_cast %95 : vector<1x256x32xbf16> to vector<256x32xbf16>
    %cst_58 = arith.constant dense<0.000000e+00> : vector<8x32xf32>
    %97 = tpu.matmul %94, %96, %cst_58 {dimension_numbers = #tpu.dot_dimension_numbers<[1], [0], [0], [1], [0, 0, 1, 1], [], []>} : vector<8x256xbf16>, vector<256x32xbf16>, vector<8x32xf32> -> vector<8x32xf32>
    %98 = arith.addf %91, %97 : vector<8x32xf32>
    %c0_59 = arith.constant 0 : index
    %c4_60 = arith.constant 4 : index
    %c0_61 = arith.constant 0 : index
    %99 = vector.load %arg11[%c0_59, %c4_60, %c0_61] : memref<8x16x384xf32, #tpu.memory_space<vmem>>, vector<8x1x256xf32>
    %100 = vector.shape_cast %99 : vector<8x1x256xf32> to vector<8x256xf32>
    %101 = arith.truncf %100 : vector<8x256xf32> to vector<8x256xbf16>
    %c4_62 = arith.constant 4 : index
    %c0_63 = arith.constant 0 : index
    %c0_64 = arith.constant 0 : index
    %102 = vector.load %arg6[%c4_62, %c0_63, %c0_64] : memref<16x256x32xbf16, #tpu.memory_space<vmem>>, vector<1x256x32xbf16>
    %103 = vector.shape_cast %102 : vector<1x256x32xbf16> to vector<256x32xbf16>
    %cst_65 = arith.constant dense<0.000000e+00> : vector<8x32xf32>
    %104 = tpu.matmul %101, %103, %cst_65 {dimension_numbers = #tpu.dot_dimension_numbers<[1], [0], [0], [1], [0, 0, 1, 1], [], []>} : vector<8x256xbf16>, vector<256x32xbf16>, vector<8x32xf32> -> vector<8x32xf32>
    %105 = arith.addf %98, %104 : vector<8x32xf32>
    %c0_66 = arith.constant 0 : index
    %c5_67 = arith.constant 5 : index
    %c0_68 = arith.constant 0 : index
    %106 = vector.load %arg11[%c0_66, %c5_67, %c0_68] : memref<8x16x384xf32, #tpu.memory_space<vmem>>, vector<8x1x256xf32>
    %107 = vector.shape_cast %106 : vector<8x1x256xf32> to vector<8x256xf32>
    %108 = arith.truncf %107 : vector<8x256xf32> to vector<8x256xbf16>
    %c5_69 = arith.constant 5 : index
    %c0_70 = arith.constant 0 : index
    %c0_71 = arith.constant 0 : index
    %109 = vector.load %arg6[%c5_69, %c0_70, %c0_71] : memref<16x256x32xbf16, #tpu.memory_space<vmem>>, vector<1x256x32xbf16>
    %110 = vector.shape_cast %109 : vector<1x256x32xbf16> to vector<256x32xbf16>
    %cst_72 = arith.constant dense<0.000000e+00> : vector<8x32xf32>
    %111 = tpu.matmul %108, %110, %cst_72 {dimension_numbers = #tpu.dot_dimension_numbers<[1], [0], [0], [1], [0, 0, 1, 1], [], []>} : vector<8x256xbf16>, vector<256x32xbf16>, vector<8x32xf32> -> vector<8x32xf32>
    %112 = arith.addf %105, %111 : vector<8x32xf32>
    %c0_73 = arith.constant 0 : index
    %c6_74 = arith.constant 6 : index
    %c0_75 = arith.constant 0 : index
    %113 = vector.load %arg11[%c0_73, %c6_74, %c0_75] : memref<8x16x384xf32, #tpu.memory_space<vmem>>, vector<8x1x256xf32>
    %114 = vector.shape_cast %113 : vector<8x1x256xf32> to vector<8x256xf32>
    %115 = arith.truncf %114 : vector<8x256xf32> to vector<8x256xbf16>
    %c6_76 = arith.constant 6 : index
    %c0_77 = arith.constant 0 : index
    %c0_78 = arith.constant 0 : index
    %116 = vector.load %arg6[%c6_76, %c0_77, %c0_78] : memref<16x256x32xbf16, #tpu.memory_space<vmem>>, vector<1x256x32xbf16>
    %117 = vector.shape_cast %116 : vector<1x256x32xbf16> to vector<256x32xbf16>
    %cst_79 = arith.constant dense<0.000000e+00> : vector<8x32xf32>
    %118 = tpu.matmul %115, %117, %cst_79 {dimension_numbers = #tpu.dot_dimension_numbers<[1], [0], [0], [1], [0, 0, 1, 1], [], []>} : vector<8x256xbf16>, vector<256x32xbf16>, vector<8x32xf32> -> vector<8x32xf32>
    %119 = arith.addf %112, %118 : vector<8x32xf32>
    %c0_80 = arith.constant 0 : index
    %c7_81 = arith.constant 7 : index
    %c0_82 = arith.constant 0 : index
    %120 = vector.load %arg11[%c0_80, %c7_81, %c0_82] : memref<8x16x384xf32, #tpu.memory_space<vmem>>, vector<8x1x256xf32>
    %121 = vector.shape_cast %120 : vector<8x1x256xf32> to vector<8x256xf32>
    %122 = arith.truncf %121 : vector<8x256xf32> to vector<8x256xbf16>
    %c7_83 = arith.constant 7 : index
    %c0_84 = arith.constant 0 : index
    %c0_85 = arith.constant 0 : index
    %123 = vector.load %arg6[%c7_83, %c0_84, %c0_85] : memref<16x256x32xbf16, #tpu.memory_space<vmem>>, vector<1x256x32xbf16>
    %124 = vector.shape_cast %123 : vector<1x256x32xbf16> to vector<256x32xbf16>
    %cst_86 = arith.constant dense<0.000000e+00> : vector<8x32xf32>
    %125 = tpu.matmul %122, %124, %cst_86 {dimension_numbers = #tpu.dot_dimension_numbers<[1], [0], [0], [1], [0, 0, 1, 1], [], []>} : vector<8x256xbf16>, vector<256x32xbf16>, vector<8x32xf32> -> vector<8x32xf32>
    %126 = arith.addf %119, %125 : vector<8x32xf32>
    %c0_87 = arith.constant 0 : index
    %c8 = arith.constant 8 : index
    %c0_88 = arith.constant 0 : index
    %127 = vector.load %arg11[%c0_87, %c8, %c0_88] : memref<8x16x384xf32, #tpu.memory_space<vmem>>, vector<8x1x256xf32>
    %128 = vector.shape_cast %127 : vector<8x1x256xf32> to vector<8x256xf32>
    %129 = arith.truncf %128 : vector<8x256xf32> to vector<8x256xbf16>
    %c8_89 = arith.constant 8 : index
    %c0_90 = arith.constant 0 : index
    %c0_91 = arith.constant 0 : index
    %130 = vector.load %arg6[%c8_89, %c0_90, %c0_91] : memref<16x256x32xbf16, #tpu.memory_space<vmem>>, vector<1x256x32xbf16>
    %131 = vector.shape_cast %130 : vector<1x256x32xbf16> to vector<256x32xbf16>
    %cst_92 = arith.constant dense<0.000000e+00> : vector<8x32xf32>
    %132 = tpu.matmul %129, %131, %cst_92 {dimension_numbers = #tpu.dot_dimension_numbers<[1], [0], [0], [1], [0, 0, 1, 1], [], []>} : vector<8x256xbf16>, vector<256x32xbf16>, vector<8x32xf32> -> vector<8x32xf32>
    %133 = arith.addf %126, %132 : vector<8x32xf32>
    %c0_93 = arith.constant 0 : index
    %c9 = arith.constant 9 : index
    %c0_94 = arith.constant 0 : index
    %134 = vector.load %arg11[%c0_93, %c9, %c0_94] : memref<8x16x384xf32, #tpu.memory_space<vmem>>, vector<8x1x256xf32>
    %135 = vector.shape_cast %134 : vector<8x1x256xf32> to vector<8x256xf32>
    %136 = arith.truncf %135 : vector<8x256xf32> to vector<8x256xbf16>
    %c9_95 = arith.constant 9 : index
    %c0_96 = arith.constant 0 : index
    %c0_97 = arith.constant 0 : index
    %137 = vector.load %arg6[%c9_95, %c0_96, %c0_97] : memref<16x256x32xbf16, #tpu.memory_space<vmem>>, vector<1x256x32xbf16>
    %138 = vector.shape_cast %137 : vector<1x256x32xbf16> to vector<256x32xbf16>
    %cst_98 = arith.constant dense<0.000000e+00> : vector<8x32xf32>
    %139 = tpu.matmul %136, %138, %cst_98 {dimension_numbers = #tpu.dot_dimension_numbers<[1], [0], [0], [1], [0, 0, 1, 1], [], []>} : vector<8x256xbf16>, vector<256x32xbf16>, vector<8x32xf32> -> vector<8x32xf32>
    %140 = arith.addf %133, %139 : vector<8x32xf32>
    %c0_99 = arith.constant 0 : index
    %c10 = arith.constant 10 : index
    %c0_100 = arith.constant 0 : index
    %141 = vector.load %arg11[%c0_99, %c10, %c0_100] : memref<8x16x384xf32, #tpu.memory_space<vmem>>, vector<8x1x256xf32>
    %142 = vector.shape_cast %141 : vector<8x1x256xf32> to vector<8x256xf32>
    %143 = arith.truncf %142 : vector<8x256xf32> to vector<8x256xbf16>
    %c10_101 = arith.constant 10 : index
    %c0_102 = arith.constant 0 : index
    %c0_103 = arith.constant 0 : index
    %144 = vector.load %arg6[%c10_101, %c0_102, %c0_103] : memref<16x256x32xbf16, #tpu.memory_space<vmem>>, vector<1x256x32xbf16>
    %145 = vector.shape_cast %144 : vector<1x256x32xbf16> to vector<256x32xbf16>
    %cst_104 = arith.constant dense<0.000000e+00> : vector<8x32xf32>
    %146 = tpu.matmul %143, %145, %cst_104 {dimension_numbers = #tpu.dot_dimension_numbers<[1], [0], [0], [1], [0, 0, 1, 1], [], []>} : vector<8x256xbf16>, vector<256x32xbf16>, vector<8x32xf32> -> vector<8x32xf32>
    %147 = arith.addf %140, %146 : vector<8x32xf32>
    %c0_105 = arith.constant 0 : index
    %c11 = arith.constant 11 : index
    %c0_106 = arith.constant 0 : index
    %148 = vector.load %arg11[%c0_105, %c11, %c0_106] : memref<8x16x384xf32, #tpu.memory_space<vmem>>, vector<8x1x256xf32>
    %149 = vector.shape_cast %148 : vector<8x1x256xf32> to vector<8x256xf32>
    %150 = arith.truncf %149 : vector<8x256xf32> to vector<8x256xbf16>
    %c11_107 = arith.constant 11 : index
    %c0_108 = arith.constant 0 : index
    %c0_109 = arith.constant 0 : index
    %151 = vector.load %arg6[%c11_107, %c0_108, %c0_109] : memref<16x256x32xbf16, #tpu.memory_space<vmem>>, vector<1x256x32xbf16>
    %152 = vector.shape_cast %151 : vector<1x256x32xbf16> to vector<256x32xbf16>
    %cst_110 = arith.constant dense<0.000000e+00> : vector<8x32xf32>
    %153 = tpu.matmul %150, %152, %cst_110 {dimension_numbers = #tpu.dot_dimension_numbers<[1], [0], [0], [1], [0, 0, 1, 1], [], []>} : vector<8x256xbf16>, vector<256x32xbf16>, vector<8x32xf32> -> vector<8x32xf32>
    %154 = arith.addf %147, %153 : vector<8x32xf32>
    %c0_111 = arith.constant 0 : index
    %c12 = arith.constant 12 : index
    %c0_112 = arith.constant 0 : index
    %155 = vector.load %arg11[%c0_111, %c12, %c0_112] : memref<8x16x384xf32, #tpu.memory_space<vmem>>, vector<8x1x256xf32>
    %156 = vector.shape_cast %155 : vector<8x1x256xf32> to vector<8x256xf32>
    %157 = arith.truncf %156 : vector<8x256xf32> to vector<8x256xbf16>
    %c12_113 = arith.constant 12 : index
    %c0_114 = arith.constant 0 : index
    %c0_115 = arith.constant 0 : index
    %158 = vector.load %arg6[%c12_113, %c0_114, %c0_115] : memref<16x256x32xbf16, #tpu.memory_space<vmem>>, vector<1x256x32xbf16>
    %159 = vector.shape_cast %158 : vector<1x256x32xbf16> to vector<256x32xbf16>
    %cst_116 = arith.constant dense<0.000000e+00> : vector<8x32xf32>
    %160 = tpu.matmul %157, %159, %cst_116 {dimension_numbers = #tpu.dot_dimension_numbers<[1], [0], [0], [1], [0, 0, 1, 1], [], []>} : vector<8x256xbf16>, vector<256x32xbf16>, vector<8x32xf32> -> vector<8x32xf32>
    %161 = arith.addf %154, %160 : vector<8x32xf32>
    %c0_117 = arith.constant 0 : index
    %c13 = arith.constant 13 : index
    %c0_118 = arith.constant 0 : index
    %162 = vector.load %arg11[%c0_117, %c13, %c0_118] : memref<8x16x384xf32, #tpu.memory_space<vmem>>, vector<8x1x256xf32>
    %163 = vector.shape_cast %162 : vector<8x1x256xf32> to vector<8x256xf32>
    %164 = arith.truncf %163 : vector<8x256xf32> to vector<8x256xbf16>
    %c13_119 = arith.constant 13 : index
    %c0_120 = arith.constant 0 : index
    %c0_121 = arith.constant 0 : index
    %165 = vector.load %arg6[%c13_119, %c0_120, %c0_121] : memref<16x256x32xbf16, #tpu.memory_space<vmem>>, vector<1x256x32xbf16>
    %166 = vector.shape_cast %165 : vector<1x256x32xbf16> to vector<256x32xbf16>
    %cst_122 = arith.constant dense<0.000000e+00> : vector<8x32xf32>
    %167 = tpu.matmul %164, %166, %cst_122 {dimension_numbers = #tpu.dot_dimension_numbers<[1], [0], [0], [1], [0, 0, 1, 1], [], []>} : vector<8x256xbf16>, vector<256x32xbf16>, vector<8x32xf32> -> vector<8x32xf32>
    %168 = arith.addf %161, %167 : vector<8x32xf32>
    %c0_123 = arith.constant 0 : index
    %c14 = arith.constant 14 : index
    %c0_124 = arith.constant 0 : index
    %169 = vector.load %arg11[%c0_123, %c14, %c0_124] : memref<8x16x384xf32, #tpu.memory_space<vmem>>, vector<8x1x256xf32>
    %170 = vector.shape_cast %169 : vector<8x1x256xf32> to vector<8x256xf32>
    %171 = arith.truncf %170 : vector<8x256xf32> to vector<8x256xbf16>
    %c14_125 = arith.constant 14 : index
    %c0_126 = arith.constant 0 : index
    %c0_127 = arith.constant 0 : index
    %172 = vector.load %arg6[%c14_125, %c0_126, %c0_127] : memref<16x256x32xbf16, #tpu.memory_space<vmem>>, vector<1x256x32xbf16>
    %173 = vector.shape_cast %172 : vector<1x256x32xbf16> to vector<256x32xbf16>
    %cst_128 = arith.constant dense<0.000000e+00> : vector<8x32xf32>
    %174 = tpu.matmul %171, %173, %cst_128 {dimension_numbers = #tpu.dot_dimension_numbers<[1], [0], [0], [1], [0, 0, 1, 1], [], []>} : vector<8x256xbf16>, vector<256x32xbf16>, vector<8x32xf32> -> vector<8x32xf32>
    %175 = arith.addf %168, %174 : vector<8x32xf32>
    %c0_129 = arith.constant 0 : index
    %c15 = arith.constant 15 : index
    %c0_130 = arith.constant 0 : index
    %176 = vector.load %arg11[%c0_129, %c15, %c0_130] : memref<8x16x384xf32, #tpu.memory_space<vmem>>, vector<8x1x256xf32>
    %177 = vector.shape_cast %176 : vector<8x1x256xf32> to vector<8x256xf32>
    %178 = arith.truncf %177 : vector<8x256xf32> to vector<8x256xbf16>
    %c15_131 = arith.constant 15 : index
    %c0_132 = arith.constant 0 : index
    %c0_133 = arith.constant 0 : index
    %179 = vector.load %arg6[%c15_131, %c0_132, %c0_133] : memref<16x256x32xbf16, #tpu.memory_space<vmem>>, vector<1x256x32xbf16>
    %180 = vector.shape_cast %179 : vector<1x256x32xbf16> to vector<256x32xbf16>
    %cst_134 = arith.constant dense<0.000000e+00> : vector<8x32xf32>
    %181 = tpu.matmul %178, %180, %cst_134 {dimension_numbers = #tpu.dot_dimension_numbers<[1], [0], [0], [1], [0, 0, 1, 1], [], []>} : vector<8x256xbf16>, vector<256x32xbf16>, vector<8x32xf32> -> vector<8x32xf32>
    %182 = arith.addf %175, %181 : vector<8x32xf32>
    %c0_135 = arith.constant 0 : index
    %c0_136 = arith.constant 0 : index
    %183 = vector.load %arg7[%c0_135, %c0_136] : memref<1x32xf32, #tpu.memory_space<vmem>>, vector<1x32xf32>
    %184 = vector.broadcast %183 : vector<1x32xf32> to vector<8x32xf32>
    %185 = arith.addf %182, %184 : vector<8x32xf32>
    %cst_137 = arith.constant 0.000000e+00 : f32
    %186 = vector.broadcast %cst_137 : f32 to vector<8x32xf32>
    %187 = arith.maximumf %185, %186 : vector<8x32xf32>
    %c0_138 = arith.constant 0 : index
    %c0_139 = arith.constant 0 : index
    %188 = vector.load %arg8[%c0_138, %c0_139] : memref<32x128xf32, #tpu.memory_space<vmem>>, vector<32x128xf32>
    %cst_140 = arith.constant dense<0.000000e+00> : vector<8x128xf32>
    %189 = tpu.matmul %187, %188, %cst_140 {dimension_numbers = #tpu.dot_dimension_numbers<[1], [0], [0], [1], [0, 0, 1, 1], [], []>} : vector<8x32xf32>, vector<32x128xf32>, vector<8x128xf32> -> vector<8x128xf32>
    %c0_141 = arith.constant 0 : index
    %c0_142 = arith.constant 0 : index
    %190 = vector.load %arg9[%c0_141, %c0_142] : memref<1x128xf32, #tpu.memory_space<vmem>>, vector<1x128xf32>
    %191 = vector.broadcast %190 : vector<1x128xf32> to vector<8x128xf32>
    %192 = arith.addf %189, %191 : vector<8x128xf32>
    %c0_143 = arith.constant 0 : index
    %c0_144 = arith.constant 0 : index
    %193 = vector.load %arg10[%c0_143, %c0_144] : memref<8x128xf32, #tpu.memory_space<vmem>>, vector<8x128xf32>
    tpu.vector_store %arg10[%c0_143, %c0_144], %192 {strides = array<i32>} : memref<8x128xf32, #tpu.memory_space<vmem>>, vector<8x128xf32>,
    return
  }
  func.func @transform_0(%arg0: i32) -> (i32, i32, i32) {
    %c0_i32 = arith.constant 0 : i32
    %c0_i32_0 = arith.constant 0 : i32
    %c0_i32_1 = arith.constant 0 : i32
    return %arg0, %c0_i32, %c0_i32_0 : i32, i32, i32
  }
  func.func @transform_1(%arg0: i32) -> (i32, i32) {
    %c0_i32 = arith.constant 0 : i32
    %c0_i32_0 = arith.constant 0 : i32
    %c0_i32_1 = arith.constant 0 : i32
    return %c0_i32, %c0_i32_0 : i32, i32
  }
  func.func @transform_2(%arg0: i32) -> (i32, i32) {
    %c0_i32 = arith.constant 0 : i32
    %c0_i32_0 = arith.constant 0 : i32
    %c0_i32_1 = arith.constant 0 : i32
    return %c0_i32, %c0_i32_0 : i32, i32
  }
  func.func @transform_3(%arg0: i32) -> (i32, i32) {
    %c0_i32 = arith.constant 0 : i32
    %c0_i32_0 = arith.constant 0 : i32
    %c0_i32_1 = arith.constant 0 : i32
    return %c0_i32, %c0_i32_0 : i32, i32
  }
  func.func @transform_4(%arg0: i32) -> (i32, i32) {
    %c0_i32 = arith.constant 0 : i32
    %c0_i32_0 = arith.constant 0 : i32
    %c0_i32_1 = arith.constant 0 : i32
    return %c0_i32, %c0_i32_0 : i32, i32
  }
  func.func @transform_5(%arg0: i32) -> (i32, i32, i32) {
    %c0_i32 = arith.constant 0 : i32
    %c0_i32_0 = arith.constant 0 : i32
    %c0_i32_1 = arith.constant 0 : i32
    %c0_i32_2 = arith.constant 0 : i32
    return %c0_i32, %c0_i32_0, %c0_i32_1 : i32, i32, i32
  }
  func.func @transform_6(%arg0: i32) -> (i32, i32) {
    %c0_i32 = arith.constant 0 : i32
    %c0_i32_0 = arith.constant 0 : i32
    %c0_i32_1 = arith.constant 0 : i32
    return %c0_i32, %c0_i32_0 : i32, i32
  }
  func.func @transform_7(%arg0: i32) -> (i32, i32) {
    %c0_i32 = arith.constant 0 : i32
    %c0_i32_0 = arith.constant 0 : i32
    %c0_i32_1 = arith.constant 0 : i32
    return %c0_i32, %c0_i32_0 : i32, i32
  }
  func.func @transform_8(%arg0: i32) -> (i32, i32) {
    %c0_i32 = arith.constant 0 : i32
    %c0_i32_0 = arith.constant 0 : i32
    %c0_i32_1 = arith.constant 0 : i32
    return %c0_i32, %c0_i32_0 : i32, i32
  }
  func.func @transform_9(%arg0: i32) -> (i32, i32) {
    %c0_i32 = arith.constant 0 : i32
    %c0_i32_0 = arith.constant 0 : i32
    return %arg0, %c0_i32 : i32, i32
  }
}

</mosaic_0001>

<llo_original>
// kernel: cnn_forward.1
$region0: #{cnn_forward.1}
  #allocation0 [shape = 'u32[]', space=smem, size = 0x4, offset = 0x4, fixed_abs, tag = 'smem constant byte address 0x4 - core index']
  #allocation1 [shape = 'u32[144,128]{1,0:T(1,128)}', space=vmem, size = 0x12000, scoped, tag = 'internal scratch']
  #allocation2 [shape = 'f32[8,16,384]{2,1,0:T(8,128)}', space=vmem, size = 0x30000, scoped, tag = 'scratch operand']
  %s0 = inlined_call_operand.vmem [shape: f32[1,8,3328], index: 0, kind: input, shape index: {}]
  %s1 = inlined_call_operand.vmem [shape: bf16[8,72], index: 1, kind: input, shape index: {}]
  %s2 = inlined_call_operand.vmem [shape: f32[8,1], index: 2, kind: input, shape index: {}]
  %s3 = inlined_call_operand.vmem [shape: bf16[16,72], index: 3, kind: input, shape index: {}]
  %s4 = inlined_call_operand.vmem [shape: f32[16,1], index: 4, kind: input, shape index: {}]
  %s5 = inlined_call_operand.vmem [shape: bf16[16,256,32], index: 5, kind: input, shape index: {}]
  %s6 = inlined_call_operand.vmem [shape: f32[1,32], index: 6, kind: input, shape index: {}]
  %s7 = inlined_call_operand.vmem [shape: f32[32,128], index: 7, kind: input, shape index: {}]
  %s8 = inlined_call_operand.vmem [shape: f32[1,128], index: 8, kind: input, shape index: {}]
  %s9 = inlined_call_operand.vmem [shape: f32[8,128], index: 9, kind: output, shape index: {}]
  %s10 = sld [smem:[#allocation0]]
  $region46: #{cnn_forward.1} parent=0
    _
  %s12 = ssub.s32 1, %s10
  %s13 = scalar_select 0, %s12, %s10
  // Predicated region
  $region2: #{cnn_forward.1} parent=0 // pred_check
    _
  $region3: #{cnn_forward.1} parent=0 // pred_check_branch
    %15 = sbr.rel (0) target = $region5
  $region4: #{cnn_forward.1} parent=0 // pred_region
    _
  $region5: #{cnn_forward.1} parent=0 // pred_fallthru
    _
  // Predicated region
  $region6: #{cnn_forward.1} parent=0 // pred_check
    _
  $region7: #{cnn_forward.1} parent=0 // pred_check_branch
    %17 = sbr.rel (0) target = $region9
  $region8: #{cnn_forward.1} parent=0 // pred_region
    _
  $region9: #{cnn_forward.1} parent=0 // pred_fallthru
    _
  // Predicated region
  $region10: #{cnn_forward.1} parent=0 // pred_check
    _
  $region11: #{cnn_forward.1} parent=0 // pred_check_branch
    %19 = sbr.rel (0) target = $region13
  $region12: #{cnn_forward.1} parent=0 // pred_region
    _
  $region13: #{cnn_forward.1} parent=0 // pred_fallthru
    _
  // Predicated region
  $region14: #{cnn_forward.1} parent=0 // pred_check
    _
  $region15: #{cnn_forward.1} parent=0 // pred_check_branch
    %21 = sbr.rel (0) target = $region17
  $region16: #{cnn_forward.1} parent=0 // pred_region
    _
  $region17: #{cnn_forward.1} parent=0 // pred_fallthru
    _
  // Predicated region
  $region18: #{cnn_forward.1} parent=0 // pred_check
    _
  $region19: #{cnn_forward.1} parent=0 // pred_check_branch
    %23 = sbr.rel (0) target = $region21
  $region20: #{cnn_forward.1} parent=0 // pred_region
    _
  $region21: #{cnn_forward.1} parent=0 // pred_fallthru
    _
  // Predicated region
  $region22: #{cnn_forward.1} parent=0 // pred_check
    _
  $region23: #{cnn_forward.1} parent=0 // pred_check_branch
    %25 = sbr.rel (0) target = $region25
  $region24: #{cnn_forward.1} parent=0 // pred_region
    _
  $region25: #{cnn_forward.1} parent=0 // pred_fallthru
    _
  // Predicated region
  $region26: #{cnn_forward.1} parent=0 // pred_check
    _
  $region27: #{cnn_forward.1} parent=0 // pred_check_branch
    %27 = sbr.rel (0) target = $region29
  $region28: #{cnn_forward.1} parent=0 // pred_region
    _
  $region29: #{cnn_forward.1} parent=0 // pred_fallthru
    _
  // Predicated region
  $region30: #{cnn_forward.1} parent=0 // pred_check
    _
  $region31: #{cnn_forward.1} parent=0 // pred_check_branch
    %29 = sbr.rel (0) target = $region33
  $region32: #{cnn_forward.1} parent=0 // pred_region
    _
  $region33: #{cnn_forward.1} parent=0 // pred_fallthru
    _
  // Predicated region
  $region34: #{cnn_forward.1} parent=0 // pred_check
    _
  $region35: #{cnn_forward.1} parent=0 // pred_check_branch
    %31 = sbr.rel (0) target = $region37
  $region36: #{cnn_forward.1} parent=0 // pred_region
    _
  $region37: #{cnn_forward.1} parent=0 // pred_fallthru
    _
  %v33 = vld [vmem:[%s0] sm:$0xff]
  %v34 = vld [vmem:[%s0 + $0x8] sm:$0xff]
  %v35 = vld [vmem:[%s0 + $0x10] sm:$0xff]
  %v36 = vld [vmem:[%s0 + $0x18] sm:$0xff]
  %v37 = vld [vmem:[%s0 + $0x20] sm:$0xff]
  %v38 = vld [vmem:[%s0 + $0x28] sm:$0xff]
  %v39 = vld [vmem:[%s0 + $0x30] sm:$0xff]
  %v40 = vld [vmem:[%s0 + $0x38] sm:$0xff]
  %v41 = vld [vmem:[%s0 + $0x40] sm:$0xff]
  %v42 = vld [vmem:[%s0 + $0x48] sm:$0xff]
  %v43 = vld [vmem:[%s0 + $0x50] sm:$0xff]
  %v44 = vld [vmem:[%s0 + $0x58] sm:$0xff]
  %v45 = vld [vmem:[%s0 + $0x60] sm:$0xff]
  %v46 = vld [vmem:[%s0 + $0x68] sm:$0xff]
  %v47 = vld [vmem:[%s0 + $0x70] sm:$0xff]
  %v48 = vld [vmem:[%s0 + $0x78] sm:$0xff]
  %v49 = vld [vmem:[%s0 + $0x80] sm:$0xff]
  %v50 = vld [vmem:[%s0 + $0x88] sm:$0xff]
  %v51 = vld [vmem:[%s0 + $0x90] sm:$0xff]
  %v52 = vld [vmem:[%s0 + $0x98] sm:$0xff]
  %v53 = vld [vmem:[%s0 + $0xa0] sm:$0xff]
  %v54 = vld [vmem:[%s0 + $0xa8] sm:$0xff]
  %v55 = vld [vmem:[%s0 + $0xb0] sm:$0xff]
  %v56 = vld [vmem:[%s0 + $0xb8] sm:$0xff]
  %v57 = vld [vmem:[%s0 + $0xc0] sm:$0xff]
  %v58 = vld [vmem:[%s0 + $0xc8] sm:$0xff]
  %85 = vrot.lane.b32.xlu0 %v33, 127
  %v86 = vpop.permute.xlu0 %85
  %87 = vrot.lane.b32.xlu0 %v34, 127
  %v88 = vpop.permute.xlu0 %87
  %89 = vrot.lane.b32.xlu0 %v35, 127
  %v90 = vpop.permute.xlu0 %89
  %91 = vrot.lane.b32.xlu0 %v36, 127
  %v92 = vpop.permute.xlu0 %91
  %93 = vrot.lane.b32.xlu0 %v37, 127
  %v94 = vpop.permute.xlu0 %93
  %95 = vrot.lane.b32.xlu0 %v38, 127
  %v96 = vpop.permute.xlu0 %95
  %97 = vrot.lane.b32.xlu0 %v39, 127
  %v98 = vpop.permute.xlu0 %97
  %99 = vrot.lane.b32.xlu0 %v40, 127
  %v100 = vpop.permute.xlu0 %99
  %101 = vrot.lane.b32.xlu0 %v41, 127
  %v102 = vpop.permute.xlu0 %101
  %103 = vrot.lane.b32.xlu0 %v42, 127
  %v104 = vpop.permute.xlu0 %103
  %105 = vrot.lane.b32.xlu0 %v43, 127
  %v106 = vpop.permute.xlu0 %105
  %107 = vrot.lane.b32.xlu0 %v44, 127
  %v108 = vpop.permute.xlu0 %107
  %109 = vrot.lane.b32.xlu0 %v45, 127
  %v110 = vpop.permute.xlu0 %109
  %111 = vrot.lane.b32.xlu0 %v46, 127
  %v112 = vpop.permute.xlu0 %111
  %113 = vrot.lane.b32.xlu0 %v47, 127
  %v114 = vpop.permute.xlu0 %113
  %115 = vrot.lane.b32.xlu0 %v48, 127
  %v116 = vpop.permute.xlu0 %115
  %117 = vrot.lane.b32.xlu0 %v49, 127
  %v118 = vpop.permute.xlu0 %117
  %119 = vrot.lane.b32.xlu0 %v50, 127
  %v120 = vpop.permute.xlu0 %119
  %121 = vrot.lane.b32.xlu0 %v51, 127
  %v122 = vpop.permute.xlu0 %121
  %123 = vrot.lane.b32.xlu0 %v52, 127
  %v124 = vpop.permute.xlu0 %123
  %125 = vrot.lane.b32.xlu0 %v53, 127
  %v126 = vpop.permute.xlu0 %125
  %127 = vrot.lane.b32.xlu0 %v54, 127
  %v128 = vpop.permute.xlu0 %127
  %129 = vrot.lane.b32.xlu0 %v55, 127
  %v130 = vpop.permute.xlu0 %129
  %131 = vrot.lane.b32.xlu0 %v56, 127
  %v132 = vpop.permute.xlu0 %131
  %133 = vrot.lane.b32.xlu0 %v57, 127
  %v134 = vpop.permute.xlu0 %133
  %135 = vrot.lane.b32.xlu0 %v58, 127
  %v136 = vpop.permute.xlu0 %135
  %vm137 = vcmask 1039360
  %v138 = vsel %vm137, %v86, %v88
  %v139 = vsel %vm137, %v88, %v90
  %v140 = vsel %vm137, %v90, %v92
  %v141 = vsel %vm137, %v92, %v94
  %v142 = vsel %vm137, %v94, %v96
  %v143 = vsel %vm137, %v96, %v98
  %v144 = vsel %vm137, %v98, %v100
  %v145 = vsel %vm137, %v100, %v102
  %v146 = vsel %vm137, %v102, %v104
  %v147 = vsel %vm137, %v104, %v106
  %v148 = vsel %vm137, %v106, %v108
  %v149 = vsel %vm137, %v108, %v110
  %v150 = vsel %vm137, %v110, %v112
  %v151 = vsel %vm137, %v112, %v114
  %v152 = vsel %vm137, %v114, %v116
  %v153 = vsel %vm137, %v116, %v118
  %v154 = vsel %vm137, %v118, %v120
  %v155 = vsel %vm137, %v120, %v122
  %v156 = vsel %vm137, %v122, %v124
  %v157 = vsel %vm137, %v124, %v126
  %v158 = vsel %vm137, %v126, %v128
  %v159 = vsel %vm137, %v128, %v130
  %v160 = vsel %vm137, %v130, %v132
  %v161 = vsel %vm137, %v132, %v134
  %v162 = vsel %vm137, %v134, %v136
  %188 = vrot.lane.b32.xlu0 %v33, 126
  %v189 = vpop.permute.xlu0 %188
  %190 = vrot.lane.b32.xlu0 %v34, 126
  %v191 = vpop.permute.xlu0 %190
  %192 = vrot.lane.b32.xlu0 %v35, 126
  %v193 = vpop.permute.xlu0 %192
  %194 = vrot.lane.b32.xlu0 %v36, 126
  %v195 = vpop.permute.xlu0 %194
  %196 = vrot.lane.b32.xlu0 %v37, 126
  %v197 = vpop.permute.xlu0 %196
  %198 = vrot.lane.b32.xlu0 %v38, 126
  %v199 = vpop.permute.xlu0 %198
  %200 = vrot.lane.b32.xlu0 %v39, 126
  %v201 = vpop.permute.xlu0 %200
  %202 = vrot.lane.b32.xlu0 %v40, 126
  %v203 = vpop.permute.xlu0 %202
  %204 = vrot.lane.b32.xlu0 %v41, 126
  %v205 = vpop.permute.xlu0 %204
  %206 = vrot.lane.b32.xlu0 %v42, 126
  %v207 = vpop.permute.xlu0 %206
  %208 = vrot.lane.b32.xlu0 %v43, 126
  %v209 = vpop.permute.xlu0 %208
  %210 = vrot.lane.b32.xlu0 %v44, 126
  %v211 = vpop.permute.xlu0 %210
  %212 = vrot.lane.b32.xlu0 %v45, 126
  %v213 = vpop.permute.xlu0 %212
  %214 = vrot.lane.b32.xlu0 %v46, 126
  %v215 = vpop.permute.xlu0 %214
  %216 = vrot.lane.b32.xlu0 %v47, 126
  %v217 = vpop.permute.xlu0 %216
  %218 = vrot.lane.b32.xlu0 %v48, 126
  %v219 = vpop.permute.xlu0 %218
  %220 = vrot.lane.b32.xlu0 %v49, 126
  %v221 = vpop.permute.xlu0 %220
  %222 = vrot.lane.b32.xlu0 %v50, 126
  %v223 = vpop.permute.xlu0 %222
  %224 = vrot.lane.b32.xlu0 %v51, 126
  %v225 = vpop.permute.xlu0 %224
  %226 = vrot.lane.b32.xlu0 %v52, 126
  %v227 = vpop.permute.xlu0 %226
  %228 = vrot.lane.b32.xlu0 %v53, 126
  %v229 = vpop.permute.xlu0 %228
  %230 = vrot.lane.b32.xlu0 %v54, 126
  %v231 = vpop.permute.xlu0 %230
  %232 = vrot.lane.b32.xlu0 %v55, 126
  %v233 = vpop.permute.xlu0 %232
  %234 = vrot.lane.b32.xlu0 %v56, 126
  %v235 = vpop.permute.xlu0 %234
  %236 = vrot.lane.b32.xlu0 %v57, 126
  %v237 = vpop.permute.xlu0 %236
  %238 = vrot.lane.b32.xlu0 %v58, 126
  %v239 = vpop.permute.xlu0 %238
  %vm240 = vcmask 1031168
  %v241 = vsel %vm240, %v189, %v191
  %v242 = vsel %vm240, %v191, %v193
  %v243 = vsel %vm240, %v193, %v195
  %v244 = vsel %vm240, %v195, %v197
  %v245 = vsel %vm240, %v197, %v199
  %v246 = vsel %vm240, %v199, %v201
  %v247 = vsel %vm240, %v201, %v203
  %v248 = vsel %vm240, %v203, %v205
  %v249 = vsel %vm240, %v205, %v207
  %v250 = vsel %vm240, %v207, %v209
  %v251 = vsel %vm240, %v209, %v211
  %v252 = vsel %vm240, %v211, %v213
  %v253 = vsel %vm240, %v213, %v215
  %v254 = vsel %vm240, %v215, %v217
  %v255 = vsel %vm240, %v217, %v219
  %v256 = vsel %vm240, %v219, %v221
  %v257 = vsel %vm240, %v221, %v223
  %v258 = vsel %vm240, %v223, %v225
  %v259 = vsel %vm240, %v225, %v227
  %v260 = vsel %vm240, %v227, %v229
  %v261 = vsel %vm240, %v229, %v231
  %v262 = vsel %vm240, %v231, %v233
  %v263 = vsel %vm240, %v233, %v235
  %v264 = vsel %vm240, %v235, %v237
  %v265 = vsel %vm240, %v237, %v239
  %291 = vrot.lane.b32.xlu0 %v33, 112
  %v292 = vpop.permute.xlu0 %291
  %293 = vrot.lane.b32.xlu0 %v34, 112
  %v294 = vpop.permute.xlu0 %293
  %295 = vrot.lane.b32.xlu0 %v35, 112
  %v296 = vpop.permute.xlu0 %295
  %297 = vrot.lane.b32.xlu0 %v36, 112
  %v298 = vpop.permute.xlu0 %297
  %299 = vrot.lane.b32.xlu0 %v37, 112
  %v300 = vpop.permute.xlu0 %299
  %301 = vrot.lane.b32.xlu0 %v38, 112
  %v302 = vpop.permute.xlu0 %301
  %303 = vrot.lane.b32.xlu0 %v39, 112
  %v304 = vpop.permute.xlu0 %303
  %305 = vrot.lane.b32.xlu0 %v40, 112
  %v306 = vpop.permute.xlu0 %305
  %307 = vrot.lane.b32.xlu0 %v41, 112
  %v308 = vpop.permute.xlu0 %307
  %309 = vrot.lane.b32.xlu0 %v42, 112
  %v310 = vpop.permute.xlu0 %309
  %311 = vrot.lane.b32.xlu0 %v43, 112
  %v312 = vpop.permute.xlu0 %311
  %313 = vrot.lane.b32.xlu0 %v44, 112
  %v314 = vpop.permute.xlu0 %313
  %315 = vrot.lane.b32.xlu0 %v45, 112
  %v316 = vpop.permute.xlu0 %315
  %317 = vrot.lane.b32.xlu0 %v46, 112
  %v318 = vpop.permute.xlu0 %317
  %319 = vrot.lane.b32.xlu0 %v47, 112
  %v320 = vpop.permute.xlu0 %319
  %321 = vrot.lane.b32.xlu0 %v48, 112
  %v322 = vpop.permute.xlu0 %321
  %323 = vrot.lane.b32.xlu0 %v49, 112
  %v324 = vpop.permute.xlu0 %323
  %325 = vrot.lane.b32.xlu0 %v50, 112
  %v326 = vpop.permute.xlu0 %325
  %327 = vrot.lane.b32.xlu0 %v51, 112
  %v328 = vpop.permute.xlu0 %327
  %329 = vrot.lane.b32.xlu0 %v52, 112
  %v330 = vpop.permute.xlu0 %329
  %331 = vrot.lane.b32.xlu0 %v53, 112
  %v332 = vpop.permute.xlu0 %331
  %333 = vrot.lane.b32.xlu0 %v54, 112
  %v334 = vpop.permute.xlu0 %333
  %335 = vrot.lane.b32.xlu0 %v55, 112
  %v336 = vpop.permute.xlu0 %335
  %337 = vrot.lane.b32.xlu0 %v56, 112
  %v338 = vpop.permute.xlu0 %337
  %339 = vrot.lane.b32.xlu0 %v57, 112
  %v340 = vpop.permute.xlu0 %339
  %341 = vrot.lane.b32.xlu0 %v58, 112
  %v342 = vpop.permute.xlu0 %341
  %vm343 = vcmask 916480
  %v344 = vsel %vm343, %v292, %v294
  %v345 = vsel %vm343, %v294, %v296
  %v346 = vsel %vm343, %v296, %v298
  %v347 = vsel %vm343, %v298, %v300
  %v348 = vsel %vm343, %v300, %v302
  %v349 = vsel %vm343, %v302, %v304
  %v350 = vsel %vm343, %v304, %v306
  %v351 = vsel %vm343, %v306, %v308
  %v352 = vsel %vm343, %v308, %v310
  %v353 = vsel %vm343, %v310, %v312
  %v354 = vsel %vm343, %v312, %v314
  %v355 = vsel %vm343, %v314, %v316
  %v356 = vsel %vm343, %v316, %v318
  %v357 = vsel %vm343, %v318, %v320
  %v358 = vsel %vm343, %v320, %v322
  %v359 = vsel %vm343, %v322, %v324
  %v360 = vsel %vm343, %v324, %v326
  %v361 = vsel %vm343, %v326, %v328
  %v362 = vsel %vm343, %v328, %v330
  %v363 = vsel %vm343, %v330, %v332
  %v364 = vsel %vm343, %v332, %v334
  %v365 = vsel %vm343, %v334, %v336
  %v366 = vsel %vm343, %v336, %v338
  %v367 = vsel %vm343, %v338, %v340
  %v368 = vsel %vm343, %v340, %v342
  %394 = vrot.lane.b32.xlu0 %v33, 111
  %v395 = vpop.permute.xlu0 %394
  %396 = vrot.lane.b32.xlu0 %v34, 111
  %v397 = vpop.permute.xlu0 %396
  %398 = vrot.lane.b32.xlu0 %v35, 111
  %v399 = vpop.permute.xlu0 %398
  %400 = vrot.lane.b32.xlu0 %v36, 111
  %v401 = vpop.permute.xlu0 %400
  %402 = vrot.lane.b32.xlu0 %v37, 111
  %v403 = vpop.permute.xlu0 %402
  %404 = vrot.lane.b32.xlu0 %v38, 111
  %v405 = vpop.permute.xlu0 %404
  %406 = vrot.lane.b32.xlu0 %v39, 111
  %v407 = vpop.permute.xlu0 %406
  %408 = vrot.lane.b32.xlu0 %v40, 111
  %v409 = vpop.permute.xlu0 %408
  %410 = vrot.lane.b32.xlu0 %v41, 111
  %v411 = vpop.permute.xlu0 %410
  %412 = vrot.lane.b32.xlu0 %v42, 111
  %v413 = vpop.permute.xlu0 %412
  %414 = vrot.lane.b32.xlu0 %v43, 111
  %v415 = vpop.permute.xlu0 %414
  %416 = vrot.lane.b32.xlu0 %v44, 111
  %v417 = vpop.permute.xlu0 %416
  %418 = vrot.lane.b32.xlu0 %v45, 111
  %v419 = vpop.permute.xlu0 %418
  %420 = vrot.lane.b32.xlu0 %v46, 111
  %v421 = vpop.permute.xlu0 %420
  %422 = vrot.lane.b32.xlu0 %v47, 111
  %v423 = vpop.permute.xlu0 %422
  %424 = vrot.lane.b32.xlu0 %v48, 111
  %v425 = vpop.permute.xlu0 %424
  %426 = vrot.lane.b32.xlu0 %v49, 111
  %v427 = vpop.permute.xlu0 %426
  %428 = vrot.lane.b32.xlu0 %v50, 111
  %v429 = vpop.permute.xlu0 %428
  %430 = vrot.lane.b32.xlu0 %v51, 111
  %v431 = vpop.permute.xlu0 %430
  %432 = vrot.lane.b32.xlu0 %v52, 111
  %v433 = vpop.permute.xlu0 %432
  %434 = vrot.lane.b32.xlu0 %v53, 111
  %v435 = vpop.permute.xlu0 %434
  %436 = vrot.lane.b32.xlu0 %v54, 111
  %v437 = vpop.permute.xlu0 %436
  %438 = vrot.lane.b32.xlu0 %v55, 111
  %v439 = vpop.permute.xlu0 %438
  %440 = vrot.lane.b32.xlu0 %v56, 111
  %v441 = vpop.permute.xlu0 %440
  %442 = vrot.lane.b32.xlu0 %v57, 111
  %v443 = vpop.permute.xlu0 %442
  %444 = vrot.lane.b32.xlu0 %v58, 111
  %v445 = vpop.permute.xlu0 %444
  %vm446 = vcmask 908288
  %v447 = vsel %vm446, %v395, %v397
  %v448 = vsel %vm446, %v397, %v399
  %v449 = vsel %vm446, %v399, %v401
  %v450 = vsel %vm446, %v401, %v403
  %v451 = vsel %vm446, %v403, %v405
  %v452 = vsel %vm446, %v405, %v407
  %v453 = vsel %vm446, %v407, %v409
  %v454 = vsel %vm446, %v409, %v411
  %v455 = vsel %vm446, %v411, %v413
  %v456 = vsel %vm446, %v413, %v415
  %v457 = vsel %vm446, %v415, %v417
  %v458 = vsel %vm446, %v417, %v419
  %v459 = vsel %vm446, %v419, %v421
  %v460 = vsel %vm446, %v421, %v423
  %v461 = vsel %vm446, %v423, %v425
  %v462 = vsel %vm446, %v425, %v427
  %v463 = vsel %vm446, %v427, %v429
  %v464 = vsel %vm446, %v429, %v431
  %v465 = vsel %vm446, %v431, %v433
  %v466 = vsel %vm446, %v433, %v435
  %v467 = vsel %vm446, %v435, %v437
  %v468 = vsel %vm446, %v437, %v439
  %v469 = vsel %vm446, %v439, %v441
  %v470 = vsel %vm446, %v441, %v443
  %v471 = vsel %vm446, %v443, %v445
  %497 = vrot.lane.b32.xlu0 %v33, 110
  %v498 = vpop.permute.xlu0 %497
  %499 = vrot.lane.b32.xlu0 %v34, 110
  %v500 = vpop.permute.xlu0 %499
  %501 = vrot.lane.b32.xlu0 %v35, 110
  %v502 = vpop.permute.xlu0 %501
  %503 = vrot.lane.b32.xlu0 %v36, 110
  %v504 = vpop.permute.xlu0 %503
  %505 = vrot.lane.b32.xlu0 %v37, 110
  %v506 = vpop.permute.xlu0 %505
  %507 = vrot.lane.b32.xlu0 %v38, 110
  %v508 = vpop.permute.xlu0 %507
  %509 = vrot.lane.b32.xlu0 %v39, 110
  %v510 = vpop.permute.xlu0 %509
  %511 = vrot.lane.b32.xlu0 %v40, 110
  %v512 = vpop.permute.xlu0 %511
  %513 = vrot.lane.b32.xlu0 %v41, 110
  %v514 = vpop.permute.xlu0 %513
  %515 = vrot.lane.b32.xlu0 %v42, 110
  %v516 = vpop.permute.xlu0 %515
  %517 = vrot.lane.b32.xlu0 %v43, 110
  %v518 = vpop.permute.xlu0 %517
  %519 = vrot.lane.b32.xlu0 %v44, 110
  %v520 = vpop.permute.xlu0 %519
  %521 = vrot.lane.b32.xlu0 %v45, 110
  %v522 = vpop.permute.xlu0 %521
  %523 = vrot.lane.b32.xlu0 %v46, 110
  %v524 = vpop.permute.xlu0 %523
  %525 = vrot.lane.b32.xlu0 %v47, 110
  %v526 = vpop.permute.xlu0 %525
  %527 = vrot.lane.b32.xlu0 %v48, 110
  %v528 = vpop.permute.xlu0 %527
  %529 = vrot.lane.b32.xlu0 %v49, 110
  %v530 = vpop.permute.xlu0 %529
  %531 = vrot.lane.b32.xlu0 %v50, 110
  %v532 = vpop.permute.xlu0 %531
  %533 = vrot.lane.b32.xlu0 %v51, 110
  %v534 = vpop.permute.xlu0 %533
  %535 = vrot.lane.b32.xlu0 %v52, 110
  %v536 = vpop.permute.xlu0 %535
  %537 = vrot.lane.b32.xlu0 %v53, 110
  %v538 = vpop.permute.xlu0 %537
  %539 = vrot.lane.b32.xlu0 %v54, 110
  %v540 = vpop.permute.xlu0 %539
  %541 = vrot.lane.b32.xlu0 %v55, 110
  %v542 = vpop.permute.xlu0 %541
  %543 = vrot.lane.b32.xlu0 %v56, 110
  %v544 = vpop.permute.xlu0 %543
  %545 = vrot.lane.b32.xlu0 %v57, 110
  %v546 = vpop.permute.xlu0 %545
  %547 = vrot.lane.b32.xlu0 %v58, 110
  %v548 = vpop.permute.xlu0 %547
  %vm549 = vcmask 900096
  %v550 = vsel %vm549, %v498, %v500
  %v551 = vsel %vm549, %v500, %v502
  %v552 = vsel %vm549, %v502, %v504
  %v553 = vsel %vm549, %v504, %v506
  %v554 = vsel %vm549, %v506, %v508
  %v555 = vsel %vm549, %v508, %v510
  %v556 = vsel %vm549, %v510, %v512
  %v557 = vsel %vm549, %v512, %v514
  %v558 = vsel %vm549, %v514, %v516
  %v559 = vsel %vm549, %v516, %v518
  %v560 = vsel %vm549, %v518, %v520
  %v561 = vsel %vm549, %v520, %v522
  %v562 = vsel %vm549, %v522, %v524
  %v563 = vsel %vm549, %v524, %v526
  %v564 = vsel %vm549, %v526, %v528
  %v565 = vsel %vm549, %v528, %v530
  %v566 = vsel %vm549, %v530, %v532
  %v567 = vsel %vm549, %v532, %v534
  %v568 = vsel %vm549, %v534, %v536
  %v569 = vsel %vm549, %v536, %v538
  %v570 = vsel %vm549, %v538, %v540
  %v571 = vsel %vm549, %v540, %v542
  %v572 = vsel %vm549, %v542, %v544
  %v573 = vsel %vm549, %v544, %v546
  %v574 = vsel %vm549, %v546, %v548
  %600 = vrot.lane.b32.xlu0 %v33, 96
  %v601 = vpop.permute.xlu0 %600
  %602 = vrot.lane.b32.xlu0 %v34, 96
  %v603 = vpop.permute.xlu0 %602
  %604 = vrot.lane.b32.xlu0 %v35, 96
  %v605 = vpop.permute.xlu0 %604
  %606 = vrot.lane.b32.xlu0 %v36, 96
  %v607 = vpop.permute.xlu0 %606
  %608 = vrot.lane.b32.xlu0 %v37, 96
  %v609 = vpop.permute.xlu0 %608
  %610 = vrot.lane.b32.xlu0 %v38, 96
  %v611 = vpop.permute.xlu0 %610
  %612 = vrot.lane.b32.xlu0 %v39, 96
  %v613 = vpop.permute.xlu0 %612
  %614 = vrot.lane.b32.xlu0 %v40, 96
  %v615 = vpop.permute.xlu0 %614
  %616 = vrot.lane.b32.xlu0 %v41, 96
  %v617 = vpop.permute.xlu0 %616
  %618 = vrot.lane.b32.xlu0 %v42, 96
  %v619 = vpop.permute.xlu0 %618
  %620 = vrot.lane.b32.xlu0 %v43, 96
  %v621 = vpop.permute.xlu0 %620
  %622 = vrot.lane.b32.xlu0 %v44, 96
  %v623 = vpop.permute.xlu0 %622
  %624 = vrot.lane.b32.xlu0 %v45, 96
  %v625 = vpop.permute.xlu0 %624
  %626 = vrot.lane.b32.xlu0 %v46, 96
  %v627 = vpop.permute.xlu0 %626
  %628 = vrot.lane.b32.xlu0 %v47, 96
  %v629 = vpop.permute.xlu0 %628
  %630 = vrot.lane.b32.xlu0 %v48, 96
  %v631 = vpop.permute.xlu0 %630
  %632 = vrot.lane.b32.xlu0 %v49, 96
  %v633 = vpop.permute.xlu0 %632
  %634 = vrot.lane.b32.xlu0 %v50, 96
  %v635 = vpop.permute.xlu0 %634
  %636 = vrot.lane.b32.xlu0 %v51, 96
  %v637 = vpop.permute.xlu0 %636
  %638 = vrot.lane.b32.xlu0 %v52, 96
  %v639 = vpop.permute.xlu0 %638
  %640 = vrot.lane.b32.xlu0 %v53, 96
  %v641 = vpop.permute.xlu0 %640
  %642 = vrot.lane.b32.xlu0 %v54, 96
  %v643 = vpop.permute.xlu0 %642
  %644 = vrot.lane.b32.xlu0 %v55, 96
  %v645 = vpop.permute.xlu0 %644
  %646 = vrot.lane.b32.xlu0 %v56, 96
  %v647 = vpop.permute.xlu0 %646
  %648 = vrot.lane.b32.xlu0 %v57, 96
  %v649 = vpop.permute.xlu0 %648
  %650 = vrot.lane.b32.xlu0 %v58, 96
  %v651 = vpop.permute.xlu0 %650
  %vm652 = vcmask 785408
  %v653 = vsel %vm652, %v601, %v603
  %v654 = vsel %vm652, %v603, %v605
  %v655 = vsel %vm652, %v605, %v607
  %v656 = vsel %vm652, %v607, %v609
  %v657 = vsel %vm652, %v609, %v611
  %v658 = vsel %vm652, %v611, %v613
  %v659 = vsel %vm652, %v613, %v615
  %v660 = vsel %vm652, %v615, %v617
  %v661 = vsel %vm652, %v617, %v619
  %v662 = vsel %vm652, %v619, %v621
  %v663 = vsel %vm652, %v621, %v623
  %v664 = vsel %vm652, %v623, %v625
  %v665 = vsel %vm652, %v625, %v627
  %v666 = vsel %vm652, %v627, %v629
  %v667 = vsel %vm652, %v629, %v631
  %v668 = vsel %vm652, %v631, %v633
  %v669 = vsel %vm652, %v633, %v635
  %v670 = vsel %vm652, %v635, %v637
  %v671 = vsel %vm652, %v637, %v639
  %v672 = vsel %vm652, %v639, %v641
  %v673 = vsel %vm652, %v641, %v643
  %v674 = vsel %vm652, %v643, %v645
  %v675 = vsel %vm652, %v645, %v647
  %v676 = vsel %vm652, %v647, %v649
  %v677 = vsel %vm652, %v649, %v651
  %703 = vrot.lane.b32.xlu0 %v33, 95
  %v704 = vpop.permute.xlu0 %703
  %705 = vrot.lane.b32.xlu0 %v34, 95
  %v706 = vpop.permute.xlu0 %705
  %707 = vrot.lane.b32.xlu0 %v35, 95
  %v708 = vpop.permute.xlu0 %707
  %709 = vrot.lane.b32.xlu0 %v36, 95
  %v710 = vpop.permute.xlu0 %709
  %711 = vrot.lane.b32.xlu0 %v37, 95
  %v712 = vpop.permute.xlu0 %711
  %713 = vrot.lane.b32.xlu0 %v38, 95
  %v714 = vpop.permute.xlu0 %713
  %715 = vrot.lane.b32.xlu0 %v39, 95
  %v716 = vpop.permute.xlu0 %715
  %717 = vrot.lane.b32.xlu0 %v40, 95
  %v718 = vpop.permute.xlu0 %717
  %719 = vrot.lane.b32.xlu0 %v41, 95
  %v720 = vpop.permute.xlu0 %719
  %721 = vrot.lane.b32.xlu0 %v42, 95
  %v722 = vpop.permute.xlu0 %721
  %723 = vrot.lane.b32.xlu0 %v43, 95
  %v724 = vpop.permute.xlu0 %723
  %725 = vrot.lane.b32.xlu0 %v44, 95
  %v726 = vpop.permute.xlu0 %725
  %727 = vrot.lane.b32.xlu0 %v45, 95
  %v728 = vpop.permute.xlu0 %727
  %729 = vrot.lane.b32.xlu0 %v46, 95
  %v730 = vpop.permute.xlu0 %729
  %731 = vrot.lane.b32.xlu0 %v47, 95
  %v732 = vpop.permute.xlu0 %731
  %733 = vrot.lane.b32.xlu0 %v48, 95
  %v734 = vpop.permute.xlu0 %733
  %735 = vrot.lane.b32.xlu0 %v49, 95
  %v736 = vpop.permute.xlu0 %735
  %737 = vrot.lane.b32.xlu0 %v50, 95
  %v738 = vpop.permute.xlu0 %737
  %739 = vrot.lane.b32.xlu0 %v51, 95
  %v740 = vpop.permute.xlu0 %739
  %741 = vrot.lane.b32.xlu0 %v52, 95
  %v742 = vpop.permute.xlu0 %741
  %743 = vrot.lane.b32.xlu0 %v53, 95
  %v744 = vpop.permute.xlu0 %743
  %745 = vrot.lane.b32.xlu0 %v54, 95
  %v746 = vpop.permute.xlu0 %745
  %747 = vrot.lane.b32.xlu0 %v55, 95
  %v748 = vpop.permute.xlu0 %747
  %749 = vrot.lane.b32.xlu0 %v56, 95
  %v750 = vpop.permute.xlu0 %749
  %751 = vrot.lane.b32.xlu0 %v57, 95
  %v752 = vpop.permute.xlu0 %751
  %753 = vrot.lane.b32.xlu0 %v58, 95
  %v754 = vpop.permute.xlu0 %753
  %vm755 = vcmask 777216
  %v756 = vsel %vm755, %v704, %v706
  %v757 = vsel %vm755, %v706, %v708
  %v758 = vsel %vm755, %v708, %v710
  %v759 = vsel %vm755, %v710, %v712
  %v760 = vsel %vm755, %v712, %v714
  %v761 = vsel %vm755, %v714, %v716
  %v762 = vsel %vm755, %v716, %v718
  %v763 = vsel %vm755, %v718, %v720
  %v764 = vsel %vm755, %v720, %v722
  %v765 = vsel %vm755, %v722, %v724
  %v766 = vsel %vm755, %v724, %v726
  %v767 = vsel %vm755, %v726, %v728
  %v768 = vsel %vm755, %v728, %v730
  %v769 = vsel %vm755, %v730, %v732
  %v770 = vsel %vm755, %v732, %v734
  %v771 = vsel %vm755, %v734, %v736
  %v772 = vsel %vm755, %v736, %v738
  %v773 = vsel %vm755, %v738, %v740
  %v774 = vsel %vm755, %v740, %v742
  %v775 = vsel %vm755, %v742, %v744
  %v776 = vsel %vm755, %v744, %v746
  %v777 = vsel %vm755, %v746, %v748
  %v778 = vsel %vm755, %v748, %v750
  %v779 = vsel %vm755, %v750, %v752
  %v780 = vsel %vm755, %v752, %v754
  %806 = vrot.lane.b32.xlu0 %v33, 94
  %v807 = vpop.permute.xlu0 %806
  %808 = vrot.lane.b32.xlu0 %v34, 94
  %v809 = vpop.permute.xlu0 %808
  %810 = vrot.lane.b32.xlu0 %v35, 94
  %v811 = vpop.permute.xlu0 %810
  %812 = vrot.lane.b32.xlu0 %v36, 94
  %v813 = vpop.permute.xlu0 %812
  %814 = vrot.lane.b32.xlu0 %v37, 94
  %v815 = vpop.permute.xlu0 %814
  %816 = vrot.lane.b32.xlu0 %v38, 94
  %v817 = vpop.permute.xlu0 %816
  %818 = vrot.lane.b32.xlu0 %v39, 94
  %v819 = vpop.permute.xlu0 %818
  %820 = vrot.lane.b32.xlu0 %v40, 94
  %v821 = vpop.permute.xlu0 %820
  %822 = vrot.lane.b32.xlu0 %v41, 94
  %v823 = vpop.permute.xlu0 %822
  %824 = vrot.lane.b32.xlu0 %v42, 94
  %v825 = vpop.permute.xlu0 %824
  %826 = vrot.lane.b32.xlu0 %v43, 94
  %v827 = vpop.permute.xlu0 %826
  %828 = vrot.lane.b32.xlu0 %v44, 94
  %v829 = vpop.permute.xlu0 %828
  %830 = vrot.lane.b32.xlu0 %v45, 94
  %v831 = vpop.permute.xlu0 %830
  %832 = vrot.lane.b32.xlu0 %v46, 94
  %v833 = vpop.permute.xlu0 %832
  %834 = vrot.lane.b32.xlu0 %v47, 94
  %v835 = vpop.permute.xlu0 %834
  %836 = vrot.lane.b32.xlu0 %v48, 94
  %v837 = vpop.permute.xlu0 %836
  %838 = vrot.lane.b32.xlu0 %v49, 94
  %v839 = vpop.permute.xlu0 %838
  %840 = vrot.lane.b32.xlu0 %v50, 94
  %v841 = vpop.permute.xlu0 %840
  %842 = vrot.lane.b32.xlu0 %v51, 94
  %v843 = vpop.permute.xlu0 %842
  %844 = vrot.lane.b32.xlu0 %v52, 94
  %v845 = vpop.permute.xlu0 %844
  %846 = vrot.lane.b32.xlu0 %v53, 94
  %v847 = vpop.permute.xlu0 %846
  %848 = vrot.lane.b32.xlu0 %v54, 94
  %v849 = vpop.permute.xlu0 %848
  %850 = vrot.lane.b32.xlu0 %v55, 94
  %v851 = vpop.permute.xlu0 %850
  %852 = vrot.lane.b32.xlu0 %v56, 94
  %v853 = vpop.permute.xlu0 %852
  %854 = vrot.lane.b32.xlu0 %v57, 94
  %v855 = vpop.permute.xlu0 %854
  %856 = vrot.lane.b32.xlu0 %v58, 94
  %v857 = vpop.permute.xlu0 %856
  %vm858 = vcmask 769024
  %v859 = vsel %vm858, %v807, %v809
  %v860 = vsel %vm858, %v809, %v811
  %v861 = vsel %vm858, %v811, %v813
  %v862 = vsel %vm858, %v813, %v815
  %v863 = vsel %vm858, %v815, %v817
  %v864 = vsel %vm858, %v817, %v819
  %v865 = vsel %vm858, %v819, %v821
  %v866 = vsel %vm858, %v821, %v823
  %v867 = vsel %vm858, %v823, %v825
  %v868 = vsel %vm858, %v825, %v827
  %v869 = vsel %vm858, %v827, %v829
  %v870 = vsel %vm858, %v829, %v831
  %v871 = vsel %vm858, %v831, %v833
  %v872 = vsel %vm858, %v833, %v835
  %v873 = vsel %vm858, %v835, %v837
  %v874 = vsel %vm858, %v837, %v839
  %v875 = vsel %vm858, %v839, %v841
  %v876 = vsel %vm858, %v841, %v843
  %v877 = vsel %vm858, %v843, %v845
  %v878 = vsel %vm858, %v845, %v847
  %v879 = vsel %vm858, %v847, %v849
  %v880 = vsel %vm858, %v849, %v851
  %v881 = vsel %vm858, %v851, %v853
  %v882 = vsel %vm858, %v853, %v855
  %v883 = vsel %vm858, %v855, %v857
  %v909 = vld [vmem:[%s1] sm:$0xf]
  %v910 = vpack.c.bf16 %v138, %v33
  %v911 = vpack.c.bf16 %v139, %v34
  %v912 = vpack.c.bf16 %v140, %v35
  %v913 = vpack.c.bf16 %v141, %v36
  %v914 = vpack.c.bf16 %v142, %v37
  %v915 = vpack.c.bf16 %v143, %v38
  %v916 = vpack.c.bf16 %v144, %v39
  %v917 = vpack.c.bf16 %v145, %v40
  %v918 = vpack.c.bf16 %v146, %v41
  %v919 = vpack.c.bf16 %v147, %v42
  %v920 = vpack.c.bf16 %v148, %v43
  %v921 = vpack.c.bf16 %v149, %v44
  %v922 = vpack.c.bf16 %v150, %v45
  %v923 = vpack.c.bf16 %v151, %v46
  %v924 = vpack.c.bf16 %v152, %v47
  %v925 = vpack.c.bf16 %v153, %v48
  %v926 = vpack.c.bf16 %v154, %v49
  %v927 = vpack.c.bf16 %v155, %v50
  %v928 = vpack.c.bf16 %v156, %v51
  %v929 = vpack.c.bf16 %v157, %v52
  %v930 = vpack.c.bf16 %v158, %v53
  %v931 = vpack.c.bf16 %v159, %v54
  %v932 = vpack.c.bf16 %v160, %v55
  %v933 = vpack.c.bf16 %v161, %v56
  %v934 = vpack.c.bf16 %v162, %v57
  %v935 = vpack.c.bf16 %v344, %v241
  %v936 = vpack.c.bf16 %v345, %v242
  %v937 = vpack.c.bf16 %v346, %v243
  %v938 = vpack.c.bf16 %v347, %v244
  %v939 = vpack.c.bf16 %v348, %v245
  %v940 = vpack.c.bf16 %v349, %v246
  %v941 = vpack.c.bf16 %v350, %v247
  %v942 = vpack.c.bf16 %v351, %v248
  %v943 = vpack.c.bf16 %v352, %v249
  %v944 = vpack.c.bf16 %v353, %v250
  %v945 = vpack.c.bf16 %v354, %v251
  %v946 = vpack.c.bf16 %v355, %v252
  %v947 = vpack.c.bf16 %v356, %v253
  %v948 = vpack.c.bf16 %v357, %v254
  %v949 = vpack.c.bf16 %v358, %v255
  %v950 = vpack.c.bf16 %v359, %v256
  %v951 = vpack.c.bf16 %v360, %v257
  %v952 = vpack.c.bf16 %v361, %v258
  %v953 = vpack.c.bf16 %v362, %v259
  %v954 = vpack.c.bf16 %v363, %v260
  %v955 = vpack.c.bf16 %v364, %v261
  %v956 = vpack.c.bf16 %v365, %v262
  %v957 = vpack.c.bf16 %v366, %v263
  %v958 = vpack.c.bf16 %v367, %v264
  %v959 = vpack.c.bf16 %v368, %v265
  %v960 = vpack.c.bf16 %v550, %v447
  %v961 = vpack.c.bf16 %v551, %v448
  %v962 = vpack.c.bf16 %v552, %v449
  %v963 = vpack.c.bf16 %v553, %v450
  %v964 = vpack.c.bf16 %v554, %v451
  %v965 = vpack.c.bf16 %v555, %v452
  %v966 = vpack.c.bf16 %v556, %v453
  %v967 = vpack.c.bf16 %v557, %v454
  %v968 = vpack.c.bf16 %v558, %v455
  %v969 = vpack.c.bf16 %v559, %v456
  %v970 = vpack.c.bf16 %v560, %v457
  %v971 = vpack.c.bf16 %v561, %v458
  %v972 = vpack.c.bf16 %v562, %v459
  %v973 = vpack.c.bf16 %v563, %v460
  %v974 = vpack.c.bf16 %v564, %v461
  %v975 = vpack.c.bf16 %v565, %v462
  %v976 = vpack.c.bf16 %v566, %v463
  %v977 = vpack.c.bf16 %v567, %v464
  %v978 = vpack.c.bf16 %v568, %v465
  %v979 = vpack.c.bf16 %v569, %v466
  %v980 = vpack.c.bf16 %v570, %v467
  %v981 = vpack.c.bf16 %v571, %v468
  %v982 = vpack.c.bf16 %v572, %v469
  %v983 = vpack.c.bf16 %v573, %v470
  %v984 = vpack.c.bf16 %v574, %v471
  %v985 = vpack.c.bf16 %v756, %v653
  %v986 = vpack.c.bf16 %v757, %v654
  %v987 = vpack.c.bf16 %v758, %v655
  %v988 = vpack.c.bf16 %v759, %v656
  %v989 = vpack.c.bf16 %v760, %v657
  %v990 = vpack.c.bf16 %v761, %v658
  %v991 = vpack.c.bf16 %v762, %v659
  %v992 = vpack.c.bf16 %v763, %v660
  %v993 = vpack.c.bf16 %v764, %v661
  %v994 = vpack.c.bf16 %v765, %v662
  %v995 = vpack.c.bf16 %v766, %v663
  %v996 = vpack.c.bf16 %v767, %v664
  %v997 = vpack.c.bf16 %v768, %v665
  %v998 = vpack.c.bf16 %v769, %v666
  %v999 = vpack.c.bf16 %v770, %v667
  %v1000 = vpack.c.bf16 %v771, %v668
  %v1001 = vpack.c.bf16 %v772, %v669
  %v1002 = vpack.c.bf16 %v773, %v670
  %v1003 = vpack.c.bf16 %v774, %v671
  %v1004 = vpack.c.bf16 %v775, %v672
  %v1005 = vpack.c.bf16 %v776, %v673
  %v1006 = vpack.c.bf16 %v777, %v674
  %v1007 = vpack.c.bf16 %v778, %v675
  %v1008 = vpack.c.bf16 %v779, %v676
  %v1009 = vpack.c.bf16 %v780, %v677
  %v1010 = vpack.c.bf16 %v859, %v859
  %v1011 = vpack.c.bf16 %v860, %v860
  %v1012 = vpack.c.bf16 %v861, %v861
  %v1013 = vpack.c.bf16 %v862, %v862
  %v1014 = vpack.c.bf16 %v863, %v863
  %v1015 = vpack.c.bf16 %v864, %v864
  %v1016 = vpack.c.bf16 %v865, %v865
  %v1017 = vpack.c.bf16 %v866, %v866
  %v1018 = vpack.c.bf16 %v867, %v867
  %v1019 = vpack.c.bf16 %v868, %v868
  %v1020 = vpack.c.bf16 %v869, %v869
  %v1021 = vpack.c.bf16 %v870, %v870
  %v1022 = vpack.c.bf16 %v871, %v871
  %v1023 = vpack.c.bf16 %v872, %v872
  %v1024 = vpack.c.bf16 %v873, %v873
  %v1025 = vpack.c.bf16 %v874, %v874
  %v1026 = vpack.c.bf16 %v875, %v875
  %v1027 = vpack.c.bf16 %v876, %v876
  %v1028 = vpack.c.bf16 %v877, %v877
  %v1029 = vpack.c.bf16 %v878, %v878
  %v1030 = vpack.c.bf16 %v879, %v879
  %v1031 = vpack.c.bf16 %v880, %v880
  %v1032 = vpack.c.bf16 %v881, %v881
  %v1033 = vpack.c.bf16 %v882, %v882
  %v1034 = vpack.c.bf16 %v883, %v883
  %v1035 = vld [vmem:[%s2] sm:$0xff]
  %1037 = vset.pattern.permute.xlu0 0
  %1038 = vperm.xlu0 %1037, %v1035
  %v1039 = vpop.permute.xlu0 %1038
  %vm1041 = vcmask 588800
  %v1043 = vsel %vm1041, %v909, 0
  %vm1045 = vcmask 1043456
  %v1047 = vsel %vm1045, %v1010, 0
  %v1050 = vsel %vm1045, %v1011, 0
  %v1053 = vsel %vm1045, %v1012, 0
  %v1056 = vsel %vm1045, %v1013, 0
  %v1059 = vsel %vm1045, %v1014, 0
  %v1062 = vsel %vm1045, %v1015, 0
  %v1065 = vsel %vm1045, %v1016, 0
  %v1068 = vsel %vm1045, %v1017, 0
  %v1071 = vsel %vm1045, %v1018, 0
  %v1074 = vsel %vm1045, %v1019, 0
  %v1077 = vsel %vm1045, %v1020, 0
  %v1080 = vsel %vm1045, %v1021, 0
  %v1083 = vsel %vm1045, %v1022, 0
  %v1086 = vsel %vm1045, %v1023, 0
  %v1089 = vsel %vm1045, %v1024, 0
  %v1092 = vsel %vm1045, %v1025, 0
  %v1095 = vsel %vm1045, %v1026, 0
  %v1098 = vsel %vm1045, %v1027, 0
  %v1101 = vsel %vm1045, %v1028, 0
  %v1104 = vsel %vm1045, %v1029, 0
  %v1107 = vsel %vm1045, %v1030, 0
  %v1110 = vsel %vm1045, %v1031, 0
  %v1113 = vsel %vm1045, %v1032, 0
  %v1116 = vsel %vm1045, %v1033, 0
  %v1119 = vsel %vm1045, %v1034, 0
  %1121 = vmatprep.subr.bf16.mxu0 %v911
  %1122 = vmatpush1.bf16.msra.mxu0 %v910
  %1123 = vmatprep.subr.bf16.mxu0 %v936
  %1124 = vmatpush1.bf16.msra.mxu0 %v935
  %1125 = vmatprep.subr.bf16.mxu0 %v961
  %1126 = vmatpush1.bf16.msra.mxu0 %v960
  %1127 = vmatprep.subr.bf16.mxu0 %v986
  %1128 = vmatpush1.bf16.msra.mxu0 %v985
  %1129 = vmatprep.subr.bf16.mxu0 %v1050
  %1130 = vmatpush1.bf16.msra.mxu0 %v1047
  %1131 = vmatprep.subr.bf16.mxu0 0
  %1132 = vmatpush1.bf16.msra.mxu0 0
  %1133 = vmatprep.subr.bf16.mxu0 0
  %1134 = vmatpush1.bf16.msra.mxu0 0
  %1135 = vmatprep.subr.bf16.mxu0 0
  %1136 = vmatpush1.bf16.msra.mxu0 0
  %1137 = vmatprep.subr.bf16.mxu0 0
  %1138 = vmatpush1.bf16.msra.mxu0 0
  %1139 = vmatprep.subr.bf16.mxu0 0
  %1140 = vmatpush1.bf16.msra.mxu0 0
  %1141 = vmatprep.subr.bf16.mxu0 0
  %1142 = vmatpush1.bf16.msra.mxu0 0
  %1143 = vmatprep.subr.bf16.mxu0 0
  %1144 = vmatpush1.bf16.msra.mxu0 0
  %1145 = vmatprep.subr.bf16.mxu0 0
  %1146 = vmatpush1.bf16.msra.mxu0 0
  %1147 = vmatprep.subr.bf16.mxu0 0
  %1148 = vmatpush1.bf16.msra.mxu0 0
  %1149 = vmatprep.subr.bf16.mxu0 0
  %1150 = vmatpush1.bf16.msra.mxu0 0
  %1151 = vmatprep.subr.bf16.mxu0 0
  %1152 = vmatpush1.bf16.msra.mxu0 0
  %1153 = vmatprep.mubr.bf16.mxu0 0
  %1154 = vmatmul.mubr.bf16.gmra.mrb[0].mxu0 %v1043
  %v1155 = vpop.f32.mrb[0].mxu0
  %v1156 = vadd.f32 %v1039, %v1155
  %v1157 = vpop.f32.mrb[0].mxu0
  %v1158 = vadd.f32 %v1039, %v1157
  %v1159 = vpop.f32.mrb[0].mxu0
  %v1160 = vpop.f32.mrb[0].mxu0
  %1161 = vdwg.mxu0
  %1162 = vmatprep.subr.bf16.mxu0 %v913
  %1163 = vmatpush1.bf16.msra.mxu0 %v912
  %1164 = vmatprep.subr.bf16.mxu0 %v938
  %1165 = vmatpush1.bf16.msra.mxu0 %v937
  %1166 = vmatprep.subr.bf16.mxu0 %v963
  %1167 = vmatpush1.bf16.msra.mxu0 %v962
  %1168 = vmatprep.subr.bf16.mxu0 %v988
  %1169 = vmatpush1.bf16.msra.mxu0 %v987
  %1170 = vmatprep.subr.bf16.mxu0 %v1056
  %1171 = vmatpush1.bf16.msra.mxu0 %v1053
  %1172 = vmatprep.subr.bf16.mxu0 0
  %1173 = vmatpush1.bf16.msra.mxu0 0
  %1174 = vmatprep.subr.bf16.mxu0 0
  %1175 = vmatpush1.bf16.msra.mxu0 0
  %1176 = vmatprep.subr.bf16.mxu0 0
  %1177 = vmatpush1.bf16.msra.mxu0 0
  %1178 = vmatprep.subr.bf16.mxu0 0
  %1179 = vmatpush1.bf16.msra.mxu0 0
  %1180 = vmatprep.subr.bf16.mxu0 0
  %1181 = vmatpush1.bf16.msra.mxu0 0
  %1182 = vmatprep.subr.bf16.mxu0 0
  %1183 = vmatpush1.bf16.msra.mxu0 0
  %1184 = vmatprep.subr.bf16.mxu0 0
  %1185 = vmatpush1.bf16.msra.mxu0 0
  %1186 = vmatprep.subr.bf16.mxu0 0
  %1187 = vmatpush1.bf16.msra.mxu0 0
  %1188 = vmatprep.subr.bf16.mxu0 0
  %1189 = vmatpush1.bf16.msra.mxu0 0
  %1190 = vmatprep.subr.bf16.mxu0 0
  %1191 = vmatpush1.bf16.msra.mxu0 0
  %1192 = vmatprep.subr.bf16.mxu0 0
  %1193 = vmatpush1.bf16.msra.mxu0 0
  %1194 = vmatprep.mubr.bf16.mxu0 0
  %1195 = vmatmul.mubr.bf16.gmra.mrb[0].mxu0 %v1043
  %v1196 = vpop.f32.mrb[0].mxu0
  %v1197 = vadd.f32 %v1039, %v1196
  %v1198 = vpop.f32.mrb[0].mxu0
  %v1199 = vadd.f32 %v1039, %v1198
  %v1200 = vpop.f32.mrb[0].mxu0
  %v1201 = vpop.f32.mrb[0].mxu0
  %1202 = vdwg.mxu0
  %1203 = vmatprep.subr.bf16.mxu0 %v915
  %1204 = vmatpush1.bf16.msra.mxu0 %v914
  %1205 = vmatprep.subr.bf16.mxu0 %v940
  %1206 = vmatpush1.bf16.msra.mxu0 %v939
  %1207 = vmatprep.subr.bf16.mxu0 %v965
  %1208 = vmatpush1.bf16.msra.mxu0 %v964
  %1209 = vmatprep.subr.bf16.mxu0 %v990
  %1210 = vmatpush1.bf16.msra.mxu0 %v989
  %1211 = vmatprep.subr.bf16.mxu0 %v1062
  %1212 = vmatpush1.bf16.msra.mxu0 %v1059
  %1213 = vmatprep.subr.bf16.mxu0 0
  %1214 = vmatpush1.bf16.msra.mxu0 0
  %1215 = vmatprep.subr.bf16.mxu0 0
  %1216 = vmatpush1.bf16.msra.mxu0 0
  %1217 = vmatprep.subr.bf16.mxu0 0
  %1218 = vmatpush1.bf16.msra.mxu0 0
  %1219 = vmatprep.subr.bf16.mxu0 0
  %1220 = vmatpush1.bf16.msra.mxu0 0
  %1221 = vmatprep.subr.bf16.mxu0 0
  %1222 = vmatpush1.bf16.msra.mxu0 0
  %1223 = vmatprep.subr.bf16.mxu0 0
  %1224 = vmatpush1.bf16.msra.mxu0 0
  %1225 = vmatprep.subr.bf16.mxu0 0
  %1226 = vmatpush1.bf16.msra.mxu0 0
  %1227 = vmatprep.subr.bf16.mxu0 0
  %1228 = vmatpush1.bf16.msra.mxu0 0
  %1229 = vmatprep.subr.bf16.mxu0 0
  %1230 = vmatpush1.bf16.msra.mxu0 0
  %1231 = vmatprep.subr.bf16.mxu0 0
  %1232 = vmatpush1.bf16.msra.mxu0 0
  %1233 = vmatprep.subr.bf16.mxu0 0
  %1234 = vmatpush1.bf16.msra.mxu0 0
  %1235 = vmatprep.mubr.bf16.mxu0 0
  %1236 = vmatmul.mubr.bf16.gmra.mrb[0].mxu0 %v1043
  %v1237 = vpop.f32.mrb[0].mxu0
  %v1238 = vadd.f32 %v1039, %v1237
  %v1239 = vpop.f32.mrb[0].mxu0
  %v1240 = vadd.f32 %v1039, %v1239
  %v1241 = vpop.f32.mrb[0].mxu0
  %v1242 = vpop.f32.mrb[0].mxu0
  %1243 = vdwg.mxu0
  %1244 = vmatprep.subr.bf16.mxu0 %v917
  %1245 = vmatpush1.bf16.msra.mxu0 %v916
  %1246 = vmatprep.subr.bf16.mxu0 %v942
  %1247 = vmatpush1.bf16.msra.mxu0 %v941
  %1248 = vmatprep.subr.bf16.mxu0 %v967
  %1249 = vmatpush1.bf16.msra.mxu0 %v966
  %1250 = vmatprep.subr.bf16.mxu0 %v992
  %1251 = vmatpush1.bf16.msra.mxu0 %v991
  %1252 = vmatprep.subr.bf16.mxu0 %v1068
  %1253 = vmatpush1.bf16.msra.mxu0 %v1065
  %1254 = vmatprep.subr.bf16.mxu0 0
  %1255 = vmatpush1.bf16.msra.mxu0 0
  %1256 = vmatprep.subr.bf16.mxu0 0
  %1257 = vmatpush1.bf16.msra.mxu0 0
  %1258 = vmatprep.subr.bf16.mxu0 0
  %1259 = vmatpush1.bf16.msra.mxu0 0
  %1260 = vmatprep.subr.bf16.mxu0 0
  %1261 = vmatpush1.bf16.msra.mxu0 0
  %1262 = vmatprep.subr.bf16.mxu0 0
  %1263 = vmatpush1.bf16.msra.mxu0 0
  %1264 = vmatprep.subr.bf16.mxu0 0
  %1265 = vmatpush1.bf16.msra.mxu0 0
  %1266 = vmatprep.subr.bf16.mxu0 0
  %1267 = vmatpush1.bf16.msra.mxu0 0
  %1268 = vmatprep.subr.bf16.mxu0 0
  %1269 = vmatpush1.bf16.msra.mxu0 0
  %1270 = vmatprep.subr.bf16.mxu0 0
  %1271 = vmatpush1.bf16.msra.mxu0 0
  %1272 = vmatprep.subr.bf16.mxu0 0
  %1273 = vmatpush1.bf16.msra.mxu0 0
  %1274 = vmatprep.subr.bf16.mxu0 0
  %1275 = vmatpush1.bf16.msra.mxu0 0
  %1276 = vmatprep.mubr.bf16.mxu0 0
  %1277 = vmatmul.mubr.bf16.gmra.mrb[0].mxu0 %v1043
  %v1278 = vpop.f32.mrb[0].mxu0
  %v1279 = vadd.f32 %v1039, %v1278
  %v1280 = vpop.f32.mrb[0].mxu0
  %v1281 = vadd.f32 %v1039, %v1280
  %v1282 = vpop.f32.mrb[0].mxu0
  %v1283 = vpop.f32.mrb[0].mxu0
  %1284 = vdwg.mxu0
  %1285 = vmatprep.subr.bf16.mxu0 %v919
  %1286 = vmatpush1.bf16.msra.mxu0 %v918
  %1287 = vmatprep.subr.bf16.mxu0 %v944
  %1288 = vmatpush1.bf16.msra.mxu0 %v943
  %1289 = vmatprep.subr.bf16.mxu0 %v969
  %1290 = vmatpush1.bf16.msra.mxu0 %v968
  %1291 = vmatprep.subr.bf16.mxu0 %v994
  %1292 = vmatpush1.bf16.msra.mxu0 %v993
  %1293 = vmatprep.subr.bf16.mxu0 %v1074
  %1294 = vmatpush1.bf16.msra.mxu0 %v1071
  %1295 = vmatprep.subr.bf16.mxu0 0
  %1296 = vmatpush1.bf16.msra.mxu0 0
  %1297 = vmatprep.subr.bf16.mxu0 0
  %1298 = vmatpush1.bf16.msra.mxu0 0
  %1299 = vmatprep.subr.bf16.mxu0 0
  %1300 = vmatpush1.bf16.msra.mxu0 0
  %1301 = vmatprep.subr.bf16.mxu0 0
  %1302 = vmatpush1.bf16.msra.mxu0 0
  %1303 = vmatprep.subr.bf16.mxu0 0
  %1304 = vmatpush1.bf16.msra.mxu0 0
  %1305 = vmatprep.subr.bf16.mxu0 0
  %1306 = vmatpush1.bf16.msra.mxu0 0
  %1307 = vmatprep.subr.bf16.mxu0 0
  %1308 = vmatpush1.bf16.msra.mxu0 0
  %1309 = vmatprep.subr.bf16.mxu0 0
  %1310 = vmatpush1.bf16.msra.mxu0 0
  %1311 = vmatprep.subr.bf16.mxu0 0
  %1312 = vmatpush1.bf16.msra.mxu0 0
  %1313 = vmatprep.subr.bf16.mxu0 0
  %1314 = vmatpush1.bf16.msra.mxu0 0
  %1315 = vmatprep.subr.bf16.mxu0 0
  %1316 = vmatpush1.bf16.msra.mxu0 0
  %1317 = vmatprep.mubr.bf16.mxu0 0
  %1318 = vmatmul.mubr.bf16.gmra.mrb[0].mxu0 %v1043
  %v1319 = vpop.f32.mrb[0].mxu0
  %v1320 = vadd.f32 %v1039, %v1319
  %v1321 = vpop.f32.mrb[0].mxu0
  %v1322 = vadd.f32 %v1039, %v1321
  %v1323 = vpop.f32.mrb[0].mxu0
  %v1324 = vpop.f32.mrb[0].mxu0
  %1325 = vdwg.mxu0
  %1326 = vmatprep.subr.bf16.mxu0 %v921
  %1327 = vmatpush1.bf16.msra.mxu0 %v920
  %1328 = vmatprep.subr.bf16.mxu0 %v946
  %1329 = vmatpush1.bf16.msra.mxu0 %v945
  %1330 = vmatprep.subr.bf16.mxu0 %v971
  %1331 = vmatpush1.bf16.msra.mxu0 %v970
  %1332 = vmatprep.subr.bf16.mxu0 %v996
  %1333 = vmatpush1.bf16.msra.mxu0 %v995
  %1334 = vmatprep.subr.bf16.mxu0 %v1080
  %1335 = vmatpush1.bf16.msra.mxu0 %v1077
  %1336 = vmatprep.subr.bf16.mxu0 0
  %1337 = vmatpush1.bf16.msra.mxu0 0
  %1338 = vmatprep.subr.bf16.mxu0 0
  %1339 = vmatpush1.bf16.msra.mxu0 0
  %1340 = vmatprep.subr.bf16.mxu0 0
  %1341 = vmatpush1.bf16.msra.mxu0 0
  %1342 = vmatprep.subr.bf16.mxu0 0
  %1343 = vmatpush1.bf16.msra.mxu0 0
  %1344 = vmatprep.subr.bf16.mxu0 0
  %1345 = vmatpush1.bf16.msra.mxu0 0
  %1346 = vmatprep.subr.bf16.mxu0 0
  %1347 = vmatpush1.bf16.msra.mxu0 0
  %1348 = vmatprep.subr.bf16.mxu0 0
  %1349 = vmatpush1.bf16.msra.mxu0 0
  %1350 = vmatprep.subr.bf16.mxu0 0
  %1351 = vmatpush1.bf16.msra.mxu0 0
  %1352 = vmatprep.subr.bf16.mxu0 0
  %1353 = vmatpush1.bf16.msra.mxu0 0
  %1354 = vmatprep.subr.bf16.mxu0 0
  %1355 = vmatpush1.bf16.msra.mxu0 0
  %1356 = vmatprep.subr.bf16.mxu0 0
  %1357 = vmatpush1.bf16.msra.mxu0 0
  %1358 = vmatprep.mubr.bf16.mxu0 0
  %1359 = vmatmul.mubr.bf16.gmra.mrb[0].mxu0 %v1043
  %v1360 = vpop.f32.mrb[0].mxu0
  %v1361 = vadd.f32 %v1039, %v1360
  %v1362 = vpop.f32.mrb[0].mxu0
  %v1363 = vadd.f32 %v1039, %v1362
  %v1364 = vpop.f32.mrb[0].mxu0
  %v1365 = vpop.f32.mrb[0].mxu0
  %1366 = vdwg.mxu0
  %1367 = vmatprep.subr.bf16.mxu0 %v923
  %1368 = vmatpush1.bf16.msra.mxu0 %v922
  %1369 = vmatprep.subr.bf16.mxu0 %v948
  %1370 = vmatpush1.bf16.msra.mxu0 %v947
  %1371 = vmatprep.subr.bf16.mxu0 %v973
  %1372 = vmatpush1.bf16.msra.mxu0 %v972
  %1373 = vmatprep.subr.bf16.mxu0 %v998
  %1374 = vmatpush1.bf16.msra.mxu0 %v997
  %1375 = vmatprep.subr.bf16.mxu0 %v1086
  %1376 = vmatpush1.bf16.msra.mxu0 %v1083
  %1377 = vmatprep.subr.bf16.mxu0 0
  %1378 = vmatpush1.bf16.msra.mxu0 0
  %1379 = vmatprep.subr.bf16.mxu0 0
  %1380 = vmatpush1.bf16.msra.mxu0 0
  %1381 = vmatprep.subr.bf16.mxu0 0
  %1382 = vmatpush1.bf16.msra.mxu0 0
  %1383 = vmatprep.subr.bf16.mxu0 0
  %1384 = vmatpush1.bf16.msra.mxu0 0
  %1385 = vmatprep.subr.bf16.mxu0 0
  %1386 = vmatpush1.bf16.msra.mxu0 0
  %1387 = vmatprep.subr.bf16.mxu0 0
  %1388 = vmatpush1.bf16.msra.mxu0 0
  %1389 = vmatprep.subr.bf16.mxu0 0
  %1390 = vmatpush1.bf16.msra.mxu0 0
  %1391 = vmatprep.subr.bf16.mxu0 0
  %1392 = vmatpush1.bf16.msra.mxu0 0
  %1393 = vmatprep.subr.bf16.mxu0 0
  %1394 = vmatpush1.bf16.msra.mxu0 0
  %1395 = vmatprep.subr.bf16.mxu0 0
  %1396 = vmatpush1.bf16.msra.mxu0 0
  %1397 = vmatprep.subr.bf16.mxu0 0
  %1398 = vmatpush1.bf16.msra.mxu0 0
  %1399 = vmatprep.mubr.bf16.mxu0 0
  %1400 = vmatmul.mubr.bf16.gmra.mrb[0].mxu0 %v1043
  %v1401 = vpop.f32.mrb[0].mxu0
  %v1402 = vadd.f32 %v1039, %v1401
  %v1403 = vpop.f32.mrb[0].mxu0
  %v1404 = vadd.f32 %v1039, %v1403
  %v1405 = vpop.f32.mrb[0].mxu0
  %v1406 = vpop.f32.mrb[0].mxu0
  %1407 = vdwg.mxu0
  %1408 = vmatprep.subr.bf16.mxu0 %v925
  %1409 = vmatpush1.bf16.msra.mxu0 %v924
  %1410 = vmatprep.subr.bf16.mxu0 %v950
  %1411 = vmatpush1.bf16.msra.mxu0 %v949
  %1412 = vmatprep.subr.bf16.mxu0 %v975
  %1413 = vmatpush1.bf16.msra.mxu0 %v974
  %1414 = vmatprep.subr.bf16.mxu0 %v1000
  %1415 = vmatpush1.bf16.msra.mxu0 %v999
  %1416 = vmatprep.subr.bf16.mxu0 %v1092
  %1417 = vmatpush1.bf16.msra.mxu0 %v1089
  %1418 = vmatprep.subr.bf16.mxu0 0
  %1419 = vmatpush1.bf16.msra.mxu0 0
  %1420 = vmatprep.subr.bf16.mxu0 0
  %1421 = vmatpush1.bf16.msra.mxu0 0
  %1422 = vmatprep.subr.bf16.mxu0 0
  %1423 = vmatpush1.bf16.msra.mxu0 0
  %1424 = vmatprep.subr.bf16.mxu0 0
  %1425 = vmatpush1.bf16.msra.mxu0 0
  %1426 = vmatprep.subr.bf16.mxu0 0
  %1427 = vmatpush1.bf16.msra.mxu0 0
  %1428 = vmatprep.subr.bf16.mxu0 0
  %1429 = vmatpush1.bf16.msra.mxu0 0
  %1430 = vmatprep.subr.bf16.mxu0 0
  %1431 = vmatpush1.bf16.msra.mxu0 0
  %1432 = vmatprep.subr.bf16.mxu0 0
  %1433 = vmatpush1.bf16.msra.mxu0 0
  %1434 = vmatprep.subr.bf16.mxu0 0
  %1435 = vmatpush1.bf16.msra.mxu0 0
  %1436 = vmatprep.subr.bf16.mxu0 0
  %1437 = vmatpush1.bf16.msra.mxu0 0
  %1438 = vmatprep.subr.bf16.mxu0 0
  %1439 = vmatpush1.bf16.msra.mxu0 0
  %1440 = vmatprep.mubr.bf16.mxu0 0
  %1441 = vmatmul.mubr.bf16.gmra.mrb[0].mxu0 %v1043
  %v1442 = vpop.f32.mrb[0].mxu0
  %v1443 = vadd.f32 %v1039, %v1442
  %v1444 = vpop.f32.mrb[0].mxu0
  %v1445 = vadd.f32 %v1039, %v1444
  %v1446 = vpop.f32.mrb[0].mxu0
  %v1447 = vpop.f32.mrb[0].mxu0
  %1448 = vdwg.mxu0
  %1449 = vmatprep.subr.bf16.mxu0 %v927
  %1450 = vmatpush1.bf16.msra.mxu0 %v926
  %1451 = vmatprep.subr.bf16.mxu0 %v952
  %1452 = vmatpush1.bf16.msra.mxu0 %v951
  %1453 = vmatprep.subr.bf16.mxu0 %v977
  %1454 = vmatpush1.bf16.msra.mxu0 %v976
  %1455 = vmatprep.subr.bf16.mxu0 %v1002
  %1456 = vmatpush1.bf16.msra.mxu0 %v1001
  %1457 = vmatprep.subr.bf16.mxu0 %v1098
  %1458 = vmatpush1.bf16.msra.mxu0 %v1095
  %1459 = vmatprep.subr.bf16.mxu0 0
  %1460 = vmatpush1.bf16.msra.mxu0 0
  %1461 = vmatprep.subr.bf16.mxu0 0
  %1462 = vmatpush1.bf16.msra.mxu0 0
  %1463 = vmatprep.subr.bf16.mxu0 0
  %1464 = vmatpush1.bf16.msra.mxu0 0
  %1465 = vmatprep.subr.bf16.mxu0 0
  %1466 = vmatpush1.bf16.msra.mxu0 0
  %1467 = vmatprep.subr.bf16.mxu0 0
  %1468 = vmatpush1.bf16.msra.mxu0 0
  %1469 = vmatprep.subr.bf16.mxu0 0
  %1470 = vmatpush1.bf16.msra.mxu0 0
  %1471 = vmatprep.subr.bf16.mxu0 0
  %1472 = vmatpush1.bf16.msra.mxu0 0
  %1473 = vmatprep.subr.bf16.mxu0 0
  %1474 = vmatpush1.bf16.msra.mxu0 0
  %1475 = vmatprep.subr.bf16.mxu0 0
  %1476 = vmatpush1.bf16.msra.mxu0 0
  %1477 = vmatprep.subr.bf16.mxu0 0
  %1478 = vmatpush1.bf16.msra.mxu0 0
  %1479 = vmatprep.subr.bf16.mxu0 0
  %1480 = vmatpush1.bf16.msra.mxu0 0
  %1481 = vmatprep.mubr.bf16.mxu0 0
  %1482 = vmatmul.mubr.bf16.gmra.mrb[0].mxu0 %v1043
  %v1483 = vpop.f32.mrb[0].mxu0
  %v1484 = vadd.f32 %v1039, %v1483
  %v1485 = vpop.f32.mrb[0].mxu0
  %v1486 = vadd.f32 %v1039, %v1485
  %v1487 = vpop.f32.mrb[0].mxu0
  %v1488 = vpop.f32.mrb[0].mxu0
  %1489 = vdwg.mxu0
  %1490 = vmatprep.subr.bf16.mxu0 %v929
  %1491 = vmatpush1.bf16.msra.mxu0 %v928
  %1492 = vmatprep.subr.bf16.mxu0 %v954
  %1493 = vmatpush1.bf16.msra.mxu0 %v953
  %1494 = vmatprep.subr.bf16.mxu0 %v979
  %1495 = vmatpush1.bf16.msra.mxu0 %v978
  %1496 = vmatprep.subr.bf16.mxu0 %v1004
  %1497 = vmatpush1.bf16.msra.mxu0 %v1003
  %1498 = vmatprep.subr.bf16.mxu0 %v1104
  %1499 = vmatpush1.bf16.msra.mxu0 %v1101
  %1500 = vmatprep.subr.bf16.mxu0 0
  %1501 = vmatpush1.bf16.msra.mxu0 0
  %1502 = vmatprep.subr.bf16.mxu0 0
  %1503 = vmatpush1.bf16.msra.mxu0 0
  %1504 = vmatprep.subr.bf16.mxu0 0
  %1505 = vmatpush1.bf16.msra.mxu0 0
  %1506 = vmatprep.subr.bf16.mxu0 0
  %1507 = vmatpush1.bf16.msra.mxu0 0
  %1508 = vmatprep.subr.bf16.mxu0 0
  %1509 = vmatpush1.bf16.msra.mxu0 0
  %1510 = vmatprep.subr.bf16.mxu0 0
  %1511 = vmatpush1.bf16.msra.mxu0 0
  %1512 = vmatprep.subr.bf16.mxu0 0
  %1513 = vmatpush1.bf16.msra.mxu0 0
  %1514 = vmatprep.subr.bf16.mxu0 0
  %1515 = vmatpush1.bf16.msra.mxu0 0
  %1516 = vmatprep.subr.bf16.mxu0 0
  %1517 = vmatpush1.bf16.msra.mxu0 0
  %1518 = vmatprep.subr.bf16.mxu0 0
  %1519 = vmatpush1.bf16.msra.mxu0 0
  %1520 = vmatprep.subr.bf16.mxu0 0
  %1521 = vmatpush1.bf16.msra.mxu0 0
  %1522 = vmatprep.mubr.bf16.mxu0 0
  %1523 = vmatmul.mubr.bf16.gmra.mrb[0].mxu0 %v1043
  %v1524 = vpop.f32.mrb[0].mxu0
  %v1525 = vadd.f32 %v1039, %v1524
  %v1526 = vpop.f32.mrb[0].mxu0
  %v1527 = vadd.f32 %v1039, %v1526
  %v1528 = vpop.f32.mrb[0].mxu0
  %v1529 = vpop.f32.mrb[0].mxu0
  %1530 = vdwg.mxu0
  %1531 = vmatprep.subr.bf16.mxu0 %v931
  %1532 = vmatpush1.bf16.msra.mxu0 %v930
  %1533 = vmatprep.subr.bf16.mxu0 %v956
  %1534 = vmatpush1.bf16.msra.mxu0 %v955
  %1535 = vmatprep.subr.bf16.mxu0 %v981
  %1536 = vmatpush1.bf16.msra.mxu0 %v980
  %1537 = vmatprep.subr.bf16.mxu0 %v1006
  %1538 = vmatpush1.bf16.msra.mxu0 %v1005
  %1539 = vmatprep.subr.bf16.mxu0 %v1110
  %1540 = vmatpush1.bf16.msra.mxu0 %v1107
  %1541 = vmatprep.subr.bf16.mxu0 0
  %1542 = vmatpush1.bf16.msra.mxu0 0
  %1543 = vmatprep.subr.bf16.mxu0 0
  %1544 = vmatpush1.bf16.msra.mxu0 0
  %1545 = vmatprep.subr.bf16.mxu0 0
  %1546 = vmatpush1.bf16.msra.mxu0 0
  %1547 = vmatprep.subr.bf16.mxu0 0
  %1548 = vmatpush1.bf16.msra.mxu0 0
  %1549 = vmatprep.subr.bf16.mxu0 0
  %1550 = vmatpush1.bf16.msra.mxu0 0
  %1551 = vmatprep.subr.bf16.mxu0 0
  %1552 = vmatpush1.bf16.msra.mxu0 0
  %1553 = vmatprep.subr.bf16.mxu0 0
  %1554 = vmatpush1.bf16.msra.mxu0 0
  %1555 = vmatprep.subr.bf16.mxu0 0
  %1556 = vmatpush1.bf16.msra.mxu0 0
  %1557 = vmatprep.subr.bf16.mxu0 0
  %1558 = vmatpush1.bf16.msra.mxu0 0
  %1559 = vmatprep.subr.bf16.mxu0 0
  %1560 = vmatpush1.bf16.msra.mxu0 0
  %1561 = vmatprep.subr.bf16.mxu0 0
  %1562 = vmatpush1.bf16.msra.mxu0 0
  %1563 = vmatprep.mubr.bf16.mxu0 0
  %1564 = vmatmul.mubr.bf16.gmra.mrb[0].mxu0 %v1043
  %v1565 = vpop.f32.mrb[0].mxu0
  %v1566 = vadd.f32 %v1039, %v1565
  %v1567 = vpop.f32.mrb[0].mxu0
  %v1568 = vadd.f32 %v1039, %v1567
  %v1569 = vpop.f32.mrb[0].mxu0
  %v1570 = vpop.f32.mrb[0].mxu0
  %1571 = vdwg.mxu0
  %1572 = vmatprep.subr.bf16.mxu0 %v933
  %1573 = vmatpush1.bf16.msra.mxu0 %v932
  %1574 = vmatprep.subr.bf16.mxu0 %v958
  %1575 = vmatpush1.bf16.msra.mxu0 %v957
  %1576 = vmatprep.subr.bf16.mxu0 %v983
  %1577 = vmatpush1.bf16.msra.mxu0 %v982
  %1578 = vmatprep.subr.bf16.mxu0 %v1008
  %1579 = vmatpush1.bf16.msra.mxu0 %v1007
  %1580 = vmatprep.subr.bf16.mxu0 %v1116
  %1581 = vmatpush1.bf16.msra.mxu0 %v1113
  %1582 = vmatprep.subr.bf16.mxu0 0
  %1583 = vmatpush1.bf16.msra.mxu0 0
  %1584 = vmatprep.subr.bf16.mxu0 0
  %1585 = vmatpush1.bf16.msra.mxu0 0
  %1586 = vmatprep.subr.bf16.mxu0 0
  %1587 = vmatpush1.bf16.msra.mxu0 0
  %1588 = vmatprep.subr.bf16.mxu0 0
  %1589 = vmatpush1.bf16.msra.mxu0 0
  %1590 = vmatprep.subr.bf16.mxu0 0
  %1591 = vmatpush1.bf16.msra.mxu0 0
  %1592 = vmatprep.subr.bf16.mxu0 0
  %1593 = vmatpush1.bf16.msra.mxu0 0
  %1594 = vmatprep.subr.bf16.mxu0 0
  %1595 = vmatpush1.bf16.msra.mxu0 0
  %1596 = vmatprep.subr.bf16.mxu0 0
  %1597 = vmatpush1.bf16.msra.mxu0 0
  %1598 = vmatprep.subr.bf16.mxu0 0
  %1599 = vmatpush1.bf16.msra.mxu0 0
  %1600 = vmatprep.subr.bf16.mxu0 0
  %1601 = vmatpush1.bf16.msra.mxu0 0
  %1602 = vmatprep.subr.bf16.mxu0 0
  %1603 = vmatpush1.bf16.msra.mxu0 0
  %1604 = vmatprep.mubr.bf16.mxu0 0
  %1605 = vmatmul.mubr.bf16.gmra.mrb[0].mxu0 %v1043
  %v1606 = vpop.f32.mrb[0].mxu0
  %v1607 = vadd.f32 %v1039, %v1606
  %v1608 = vpop.f32.mrb[0].mxu0
  %v1609 = vadd.f32 %v1039, %v1608
  %v1610 = vpop.f32.mrb[0].mxu0
  %v1611 = vpop.f32.mrb[0].mxu0
  %1612 = vdwg.mxu0
  %1613 = vmatprep.subr.bf16.mxu0 0
  %1614 = vmatpush1.bf16.msra.mxu0 %v934
  %1615 = vmatprep.subr.bf16.mxu0 0
  %1616 = vmatpush1.bf16.msra.mxu0 %v959
  %1617 = vmatprep.subr.bf16.mxu0 0
  %1618 = vmatpush1.bf16.msra.mxu0 %v984
  %1619 = vmatprep.subr.bf16.mxu0 0
  %1620 = vmatpush1.bf16.msra.mxu0 %v1009
  %1621 = vmatprep.subr.bf16.mxu0 0
  %1622 = vmatpush1.bf16.msra.mxu0 %v1119
  %1623 = vmatprep.subr.bf16.mxu0 0
  %1624 = vmatpush1.bf16.msra.mxu0 0
  %1625 = vmatprep.subr.bf16.mxu0 0
  %1626 = vmatpush1.bf16.msra.mxu0 0
  %1627 = vmatprep.subr.bf16.mxu0 0
  %1628 = vmatpush1.bf16.msra.mxu0 0
  %1629 = vmatprep.subr.bf16.mxu0 0
  %1630 = vmatpush1.bf16.msra.mxu0 0
  %1631 = vmatprep.subr.bf16.mxu0 0
  %1632 = vmatpush1.bf16.msra.mxu0 0
  %1633 = vmatprep.subr.bf16.mxu0 0
  %1634 = vmatpush1.bf16.msra.mxu0 0
  %1635 = vmatprep.subr.bf16.mxu0 0
  %1636 = vmatpush1.bf16.msra.mxu0 0
  %1637 = vmatprep.subr.bf16.mxu0 0
  %1638 = vmatpush1.bf16.msra.mxu0 0
  %1639 = vmatprep.subr.bf16.mxu0 0
  %1640 = vmatpush1.bf16.msra.mxu0 0
  %1641 = vmatprep.subr.bf16.mxu0 0
  %1642 = vmatpush1.bf16.msra.mxu0 0
  %1643 = vmatprep.subr.bf16.mxu0 0
  %1644 = vmatpush1.bf16.msra.mxu0 0
  %1645 = vmatprep.mubr.bf16.mxu0 0
  %1646 = vmatmul.mubr.bf16.gmra.mrb[0].mxu0 %v1043
  %v1647 = vpop.f32.mrb[0].mxu0
  %v1648 = vadd.f32 %v1039, %v1647
  %v1649 = vpop.f32.mrb[0].mxu0
  %v1650 = vpop.f32.mrb[0].mxu0
  %v1651 = vpop.f32.mrb[0].mxu0
  %1652 = vdwg.mxu0
  %v1653 = vmax.f32 %v1156, 0.0
  %v1654 = vmax.f32 %v1158, 0.0
  %v1655 = vmax.f32 %v1197, 0.0
  %v1656 = vmax.f32 %v1199, 0.0
  %v1657 = vmax.f32 %v1238, 0.0
  %v1658 = vmax.f32 %v1240, 0.0
  %v1659 = vmax.f32 %v1279, 0.0
  %v1660 = vmax.f32 %v1281, 0.0
  %v1661 = vmax.f32 %v1320, 0.0
  %v1662 = vmax.f32 %v1322, 0.0
  %v1663 = vmax.f32 %v1361, 0.0
  %v1664 = vmax.f32 %v1363, 0.0
  %v1665 = vmax.f32 %v1402, 0.0
  %v1666 = vmax.f32 %v1404, 0.0
  %v1667 = vmax.f32 %v1443, 0.0
  %v1668 = vmax.f32 %v1445, 0.0
  %v1669 = vmax.f32 %v1484, 0.0
  %v1670 = vmax.f32 %v1486, 0.0
  %v1671 = vmax.f32 %v1525, 0.0
  %v1672 = vmax.f32 %v1527, 0.0
  %v1673 = vmax.f32 %v1566, 0.0
  %v1674 = vmax.f32 %v1568, 0.0
  %v1675 = vmax.f32 %v1607, 0.0
  %v1676 = vmax.f32 %v1609, 0.0
  %v1677 = vmax.f32 %v1648, 0.0
  %1703 = vrot.lane.b32.xlu0 %v1653, 127
  %v1704 = vpop.permute.xlu0 %1703
  %1705 = vrot.lane.b32.xlu0 %v1654, 127
  %v1706 = vpop.permute.xlu0 %1705
  %1707 = vrot.lane.b32.xlu0 %v1655, 127
  %v1708 = vpop.permute.xlu0 %1707
  %1709 = vrot.lane.b32.xlu0 %v1656, 127
  %v1710 = vpop.permute.xlu0 %1709
  %1711 = vrot.lane.b32.xlu0 %v1657, 127
  %v1712 = vpop.permute.xlu0 %1711
  %1713 = vrot.lane.b32.xlu0 %v1658, 127
  %v1714 = vpop.permute.xlu0 %1713
  %1715 = vrot.lane.b32.xlu0 %v1659, 127
  %v1716 = vpop.permute.xlu0 %1715
  %1717 = vrot.lane.b32.xlu0 %v1660, 127
  %v1718 = vpop.permute.xlu0 %1717
  %1719 = vrot.lane.b32.xlu0 %v1661, 127
  %v1720 = vpop.permute.xlu0 %1719
  %1721 = vrot.lane.b32.xlu0 %v1662, 127
  %v1722 = vpop.permute.xlu0 %1721
  %1723 = vrot.lane.b32.xlu0 %v1663, 127
  %v1724 = vpop.permute.xlu0 %1723
  %1725 = vrot.lane.b32.xlu0 %v1664, 127
  %v1726 = vpop.permute.xlu0 %1725
  %1727 = vrot.lane.b32.xlu0 %v1665, 127
  %v1728 = vpop.permute.xlu0 %1727
  %1729 = vrot.lane.b32.xlu0 %v1666, 127
  %v1730 = vpop.permute.xlu0 %1729
  %1731 = vrot.lane.b32.xlu0 %v1667, 127
  %v1732 = vpop.permute.xlu0 %1731
  %1733 = vrot.lane.b32.xlu0 %v1668, 127
  %v1734 = vpop.permute.xlu0 %1733
  %1735 = vrot.lane.b32.xlu0 %v1669, 127
  %v1736 = vpop.permute.xlu0 %1735
  %1737 = vrot.lane.b32.xlu0 %v1670, 127
  %v1738 = vpop.permute.xlu0 %1737
  %1739 = vrot.lane.b32.xlu0 %v1671, 127
  %v1740 = vpop.permute.xlu0 %1739
  %1741 = vrot.lane.b32.xlu0 %v1672, 127
  %v1742 = vpop.permute.xlu0 %1741
  %1743 = vrot.lane.b32.xlu0 %v1673, 127
  %v1744 = vpop.permute.xlu0 %1743
  %1745 = vrot.lane.b32.xlu0 %v1674, 127
  %v1746 = vpop.permute.xlu0 %1745
  %1747 = vrot.lane.b32.xlu0 %v1675, 127
  %v1748 = vpop.permute.xlu0 %1747
  %1749 = vrot.lane.b32.xlu0 %v1676, 127
  %v1750 = vpop.permute.xlu0 %1749
  %1751 = vrot.lane.b32.xlu0 %v1677, 127
  %v1752 = vpop.permute.xlu0 %1751
  %v1753 = vsel %vm137, %v1704, %v1706
  %v1754 = vsel %vm137, %v1706, %v1708
  %v1755 = vsel %vm137, %v1708, %v1710
  %v1756 = vsel %vm137, %v1710, %v1712
  %v1757 = vsel %vm137, %v1712, %v1714
  %v1758 = vsel %vm137, %v1714, %v1716
  %v1759 = vsel %vm137, %v1716, %v1718
  %v1760 = vsel %vm137, %v1718, %v1720
  %v1761 = vsel %vm137, %v1720, %v1722
  %v1762 = vsel %vm137, %v1722, %v1724
  %v1763 = vsel %vm137, %v1724, %v1726
  %v1764 = vsel %vm137, %v1726, %v1728
  %v1765 = vsel %vm137, %v1728, %v1730
  %v1766 = vsel %vm137, %v1730, %v1732
  %v1767 = vsel %vm137, %v1732, %v1734
  %v1768 = vsel %vm137, %v1734, %v1736
  %v1769 = vsel %vm137, %v1736, %v1738
  %v1770 = vsel %vm137, %v1738, %v1740
  %v1771 = vsel %vm137, %v1740, %v1742
  %v1772 = vsel %vm137, %v1742, %v1744
  %v1773 = vsel %vm137, %v1744, %v1746
  %v1774 = vsel %vm137, %v1746, %v1748
  %v1775 = vsel %vm137, %v1748, %v1750
  %v1776 = vsel %vm137, %v1750, %v1752
  %1801 = vrot.lane.b32.xlu0 %v1653, 126
  %v1802 = vpop.permute.xlu0 %1801
  %1803 = vrot.lane.b32.xlu0 %v1654, 126
  %v1804 = vpop.permute.xlu0 %1803
  %1805 = vrot.lane.b32.xlu0 %v1655, 126
  %v1806 = vpop.permute.xlu0 %1805
  %1807 = vrot.lane.b32.xlu0 %v1656, 126
  %v1808 = vpop.permute.xlu0 %1807
  %1809 = vrot.lane.b32.xlu0 %v1657, 126
  %v1810 = vpop.permute.xlu0 %1809
  %1811 = vrot.lane.b32.xlu0 %v1658, 126
  %v1812 = vpop.permute.xlu0 %1811
  %1813 = vrot.lane.b32.xlu0 %v1659, 126
  %v1814 = vpop.permute.xlu0 %1813
  %1815 = vrot.lane.b32.xlu0 %v1660, 126
  %v1816 = vpop.permute.xlu0 %1815
  %1817 = vrot.lane.b32.xlu0 %v1661, 126
  %v1818 = vpop.permute.xlu0 %1817
  %1819 = vrot.lane.b32.xlu0 %v1662, 126
  %v1820 = vpop.permute.xlu0 %1819
  %1821 = vrot.lane.b32.xlu0 %v1663, 126
  %v1822 = vpop.permute.xlu0 %1821
  %1823 = vrot.lane.b32.xlu0 %v1664, 126
  %v1824 = vpop.permute.xlu0 %1823
  %1825 = vrot.lane.b32.xlu0 %v1665, 126
  %v1826 = vpop.permute.xlu0 %1825
  %1827 = vrot.lane.b32.xlu0 %v1666, 126
  %v1828 = vpop.permute.xlu0 %1827
  %1829 = vrot.lane.b32.xlu0 %v1667, 126
  %v1830 = vpop.permute.xlu0 %1829
  %1831 = vrot.lane.b32.xlu0 %v1668, 126
  %v1832 = vpop.permute.xlu0 %1831
  %1833 = vrot.lane.b32.xlu0 %v1669, 126
  %v1834 = vpop.permute.xlu0 %1833
  %1835 = vrot.lane.b32.xlu0 %v1670, 126
  %v1836 = vpop.permute.xlu0 %1835
  %1837 = vrot.lane.b32.xlu0 %v1671, 126
  %v1838 = vpop.permute.xlu0 %1837
  %1839 = vrot.lane.b32.xlu0 %v1672, 126
  %v1840 = vpop.permute.xlu0 %1839
  %1841 = vrot.lane.b32.xlu0 %v1673, 126
  %v1842 = vpop.permute.xlu0 %1841
  %1843 = vrot.lane.b32.xlu0 %v1674, 126
  %v1844 = vpop.permute.xlu0 %1843
  %1845 = vrot.lane.b32.xlu0 %v1675, 126
  %v1846 = vpop.permute.xlu0 %1845
  %1847 = vrot.lane.b32.xlu0 %v1676, 126
  %v1848 = vpop.permute.xlu0 %1847
  %1849 = vrot.lane.b32.xlu0 %v1677, 126
  %v1850 = vpop.permute.xlu0 %1849
  %v1851 = vsel %vm240, %v1802, %v1804
  %v1852 = vsel %vm240, %v1804, %v1806
  %v1853 = vsel %vm240, %v1806, %v1808
  %v1854 = vsel %vm240, %v1808, %v1810
  %v1855 = vsel %vm240, %v1810, %v1812
  %v1856 = vsel %vm240, %v1812, %v1814
  %v1857 = vsel %vm240, %v1814, %v1816
  %v1858 = vsel %vm240, %v1816, %v1818
  %v1859 = vsel %vm240, %v1818, %v1820
  %v1860 = vsel %vm240, %v1820, %v1822
  %v1861 = vsel %vm240, %v1822, %v1824
  %v1862 = vsel %vm240, %v1824, %v1826
  %v1863 = vsel %vm240, %v1826, %v1828
  %v1864 = vsel %vm240, %v1828, %v1830
  %v1865 = vsel %vm240, %v1830, %v1832
  %v1866 = vsel %vm240, %v1832, %v1834
  %v1867 = vsel %vm240, %v1834, %v1836
  %v1868 = vsel %vm240, %v1836, %v1838
  %v1869 = vsel %vm240, %v1838, %v1840
  %v1870 = vsel %vm240, %v1840, %v1842
  %v1871 = vsel %vm240, %v1842, %v1844
  %v1872 = vsel %vm240, %v1844, %v1846
  %v1873 = vsel %vm240, %v1846, %v1848
  %v1874 = vsel %vm240, %v1848, %v1850
  %1899 = vrot.lane.b32.xlu0 %v1653, 112
  %v1900 = vpop.permute.xlu0 %1899
  %1901 = vrot.lane.b32.xlu0 %v1654, 112
  %v1902 = vpop.permute.xlu0 %1901
  %1903 = vrot.lane.b32.xlu0 %v1655, 112
  %v1904 = vpop.permute.xlu0 %1903
  %1905 = vrot.lane.b32.xlu0 %v1656, 112
  %v1906 = vpop.permute.xlu0 %1905
  %1907 = vrot.lane.b32.xlu0 %v1657, 112
  %v1908 = vpop.permute.xlu0 %1907
  %1909 = vrot.lane.b32.xlu0 %v1658, 112
  %v1910 = vpop.permute.xlu0 %1909
  %1911 = vrot.lane.b32.xlu0 %v1659, 112
  %v1912 = vpop.permute.xlu0 %1911
  %1913 = vrot.lane.b32.xlu0 %v1660, 112
  %v1914 = vpop.permute.xlu0 %1913
  %1915 = vrot.lane.b32.xlu0 %v1661, 112
  %v1916 = vpop.permute.xlu0 %1915
  %1917 = vrot.lane.b32.xlu0 %v1662, 112
  %v1918 = vpop.permute.xlu0 %1917
  %1919 = vrot.lane.b32.xlu0 %v1663, 112
  %v1920 = vpop.permute.xlu0 %1919
  %1921 = vrot.lane.b32.xlu0 %v1664, 112
  %v1922 = vpop.permute.xlu0 %1921
  %1923 = vrot.lane.b32.xlu0 %v1665, 112
  %v1924 = vpop.permute.xlu0 %1923
  %1925 = vrot.lane.b32.xlu0 %v1666, 112
  %v1926 = vpop.permute.xlu0 %1925
  %1927 = vrot.lane.b32.xlu0 %v1667, 112
  %v1928 = vpop.permute.xlu0 %1927
  %1929 = vrot.lane.b32.xlu0 %v1668, 112
  %v1930 = vpop.permute.xlu0 %1929
  %1931 = vrot.lane.b32.xlu0 %v1669, 112
  %v1932 = vpop.permute.xlu0 %1931
  %1933 = vrot.lane.b32.xlu0 %v1670, 112
  %v1934 = vpop.permute.xlu0 %1933
  %1935 = vrot.lane.b32.xlu0 %v1671, 112
  %v1936 = vpop.permute.xlu0 %1935
  %1937 = vrot.lane.b32.xlu0 %v1672, 112
  %v1938 = vpop.permute.xlu0 %1937
  %1939 = vrot.lane.b32.xlu0 %v1673, 112
  %v1940 = vpop.permute.xlu0 %1939
  %1941 = vrot.lane.b32.xlu0 %v1674, 112
  %v1942 = vpop.permute.xlu0 %1941
  %1943 = vrot.lane.b32.xlu0 %v1675, 112
  %v1944 = vpop.permute.xlu0 %1943
  %1945 = vrot.lane.b32.xlu0 %v1676, 112
  %v1946 = vpop.permute.xlu0 %1945
  %1947 = vrot.lane.b32.xlu0 %v1677, 112
  %v1948 = vpop.permute.xlu0 %1947
  %v1949 = vsel %vm343, %v1900, %v1902
  %v1950 = vsel %vm343, %v1902, %v1904
  %v1951 = vsel %vm343, %v1904, %v1906
  %v1952 = vsel %vm343, %v1906, %v1908
  %v1953 = vsel %vm343, %v1908, %v1910
  %v1954 = vsel %vm343, %v1910, %v1912
  %v1955 = vsel %vm343, %v1912, %v1914
  %v1956 = vsel %vm343, %v1914, %v1916
  %v1957 = vsel %vm343, %v1916, %v1918
  %v1958 = vsel %vm343, %v1918, %v1920
  %v1959 = vsel %vm343, %v1920, %v1922
  %v1960 = vsel %vm343, %v1922, %v1924
  %v1961 = vsel %vm343, %v1924, %v1926
  %v1962 = vsel %vm343, %v1926, %v1928
  %v1963 = vsel %vm343, %v1928, %v1930
  %v1964 = vsel %vm343, %v1930, %v1932
  %v1965 = vsel %vm343, %v1932, %v1934
  %v1966 = vsel %vm343, %v1934, %v1936
  %v1967 = vsel %vm343, %v1936, %v1938
  %v1968 = vsel %vm343, %v1938, %v1940
  %v1969 = vsel %vm343, %v1940, %v1942
  %v1970 = vsel %vm343, %v1942, %v1944
  %v1971 = vsel %vm343, %v1944, %v1946
  %v1972 = vsel %vm343, %v1946, %v1948
  %1997 = vrot.lane.b32.xlu0 %v1653, 111
  %v1998 = vpop.permute.xlu0 %1997
  %1999 = vrot.lane.b32.xlu0 %v1654, 111
  %v2000 = vpop.permute.xlu0 %1999
  %2001 = vrot.lane.b32.xlu0 %v1655, 111
  %v2002 = vpop.permute.xlu0 %2001
  %2003 = vrot.lane.b32.xlu0 %v1656, 111
  %v2004 = vpop.permute.xlu0 %2003
  %2005 = vrot.lane.b32.xlu0 %v1657, 111
  %v2006 = vpop.permute.xlu0 %2005
  %2007 = vrot.lane.b32.xlu0 %v1658, 111
  %v2008 = vpop.permute.xlu0 %2007
  %2009 = vrot.lane.b32.xlu0 %v1659, 111
  %v2010 = vpop.permute.xlu0 %2009
  %2011 = vrot.lane.b32.xlu0 %v1660, 111
  %v2012 = vpop.permute.xlu0 %2011
  %2013 = vrot.lane.b32.xlu0 %v1661, 111
  %v2014 = vpop.permute.xlu0 %2013
  %2015 = vrot.lane.b32.xlu0 %v1662, 111
  %v2016 = vpop.permute.xlu0 %2015
  %2017 = vrot.lane.b32.xlu0 %v1663, 111
  %v2018 = vpop.permute.xlu0 %2017
  %2019 = vrot.lane.b32.xlu0 %v1664, 111
  %v2020 = vpop.permute.xlu0 %2019
  %2021 = vrot.lane.b32.xlu0 %v1665, 111
  %v2022 = vpop.permute.xlu0 %2021
  %2023 = vrot.lane.b32.xlu0 %v1666, 111
  %v2024 = vpop.permute.xlu0 %2023
  %2025 = vrot.lane.b32.xlu0 %v1667, 111
  %v2026 = vpop.permute.xlu0 %2025
  %2027 = vrot.lane.b32.xlu0 %v1668, 111
  %v2028 = vpop.permute.xlu0 %2027
  %2029 = vrot.lane.b32.xlu0 %v1669, 111
  %v2030 = vpop.permute.xlu0 %2029
  %2031 = vrot.lane.b32.xlu0 %v1670, 111
  %v2032 = vpop.permute.xlu0 %2031
  %2033 = vrot.lane.b32.xlu0 %v1671, 111
  %v2034 = vpop.permute.xlu0 %2033
  %2035 = vrot.lane.b32.xlu0 %v1672, 111
  %v2036 = vpop.permute.xlu0 %2035
  %2037 = vrot.lane.b32.xlu0 %v1673, 111
  %v2038 = vpop.permute.xlu0 %2037
  %2039 = vrot.lane.b32.xlu0 %v1674, 111
  %v2040 = vpop.permute.xlu0 %2039
  %2041 = vrot.lane.b32.xlu0 %v1675, 111
  %v2042 = vpop.permute.xlu0 %2041
  %2043 = vrot.lane.b32.xlu0 %v1676, 111
  %v2044 = vpop.permute.xlu0 %2043
  %2045 = vrot.lane.b32.xlu0 %v1677, 111
  %v2046 = vpop.permute.xlu0 %2045
  %v2047 = vsel %vm446, %v1998, %v2000
  %v2048 = vsel %vm446, %v2000, %v2002
  %v2049 = vsel %vm446, %v2002, %v2004
  %v2050 = vsel %vm446, %v2004, %v2006
  %v2051 = vsel %vm446, %v2006, %v2008
  %v2052 = vsel %vm446, %v2008, %v2010
  %v2053 = vsel %vm446, %v2010, %v2012
  %v2054 = vsel %vm446, %v2012, %v2014
  %v2055 = vsel %vm446, %v2014, %v2016
  %v2056 = vsel %vm446, %v2016, %v2018
  %v2057 = vsel %vm446, %v2018, %v2020
  %v2058 = vsel %vm446, %v2020, %v2022
  %v2059 = vsel %vm446, %v2022, %v2024
  %v2060 = vsel %vm446, %v2024, %v2026
  %v2061 = vsel %vm446, %v2026, %v2028
  %v2062 = vsel %vm446, %v2028, %v2030
  %v2063 = vsel %vm446, %v2030, %v2032
  %v2064 = vsel %vm446, %v2032, %v2034
  %v2065 = vsel %vm446, %v2034, %v2036
  %v2066 = vsel %vm446, %v2036, %v2038
  %v2067 = vsel %vm446, %v2038, %v2040
  %v2068 = vsel %vm446, %v2040, %v2042
  %v2069 = vsel %vm446, %v2042, %v2044
  %v2070 = vsel %vm446, %v2044, %v2046
  %2095 = vrot.lane.b32.xlu0 %v1653, 110
  %v2096 = vpop.permute.xlu0 %2095
  %2097 = vrot.lane.b32.xlu0 %v1654, 110
  %v2098 = vpop.permute.xlu0 %2097
  %2099 = vrot.lane.b32.xlu0 %v1655, 110
  %v2100 = vpop.permute.xlu0 %2099
  %2101 = vrot.lane.b32.xlu0 %v1656, 110
  %v2102 = vpop.permute.xlu0 %2101
  %2103 = vrot.lane.b32.xlu0 %v1657, 110
  %v2104 = vpop.permute.xlu0 %2103
  %2105 = vrot.lane.b32.xlu0 %v1658, 110
  %v2106 = vpop.permute.xlu0 %2105
  %2107 = vrot.lane.b32.xlu0 %v1659, 110
  %v2108 = vpop.permute.xlu0 %2107
  %2109 = vrot.lane.b32.xlu0 %v1660, 110
  %v2110 = vpop.permute.xlu0 %2109
  %2111 = vrot.lane.b32.xlu0 %v1661, 110
  %v2112 = vpop.permute.xlu0 %2111
  %2113 = vrot.lane.b32.xlu0 %v1662, 110
  %v2114 = vpop.permute.xlu0 %2113
  %2115 = vrot.lane.b32.xlu0 %v1663, 110
  %v2116 = vpop.permute.xlu0 %2115
  %2117 = vrot.lane.b32.xlu0 %v1664, 110
  %v2118 = vpop.permute.xlu0 %2117
  %2119 = vrot.lane.b32.xlu0 %v1665, 110
  %v2120 = vpop.permute.xlu0 %2119
  %2121 = vrot.lane.b32.xlu0 %v1666, 110
  %v2122 = vpop.permute.xlu0 %2121
  %2123 = vrot.lane.b32.xlu0 %v1667, 110
  %v2124 = vpop.permute.xlu0 %2123
  %2125 = vrot.lane.b32.xlu0 %v1668, 110
  %v2126 = vpop.permute.xlu0 %2125
  %2127 = vrot.lane.b32.xlu0 %v1669, 110
  %v2128 = vpop.permute.xlu0 %2127
  %2129 = vrot.lane.b32.xlu0 %v1670, 110
  %v2130 = vpop.permute.xlu0 %2129
  %2131 = vrot.lane.b32.xlu0 %v1671, 110
  %v2132 = vpop.permute.xlu0 %2131
  %2133 = vrot.lane.b32.xlu0 %v1672, 110
  %v2134 = vpop.permute.xlu0 %2133
  %2135 = vrot.lane.b32.xlu0 %v1673, 110
  %v2136 = vpop.permute.xlu0 %2135
  %2137 = vrot.lane.b32.xlu0 %v1674, 110
  %v2138 = vpop.permute.xlu0 %2137
  %2139 = vrot.lane.b32.xlu0 %v1675, 110
  %v2140 = vpop.permute.xlu0 %2139
  %2141 = vrot.lane.b32.xlu0 %v1676, 110
  %v2142 = vpop.permute.xlu0 %2141
  %2143 = vrot.lane.b32.xlu0 %v1677, 110
  %v2144 = vpop.permute.xlu0 %2143
  %v2145 = vsel %vm549, %v2096, %v2098
  %v2146 = vsel %vm549, %v2098, %v2100
  %v2147 = vsel %vm549, %v2100, %v2102
  %v2148 = vsel %vm549, %v2102, %v2104
  %v2149 = vsel %vm549, %v2104, %v2106
  %v2150 = vsel %vm549, %v2106, %v2108
  %v2151 = vsel %vm549, %v2108, %v2110
  %v2152 = vsel %vm549, %v2110, %v2112
  %v2153 = vsel %vm549, %v2112, %v2114
  %v2154 = vsel %vm549, %v2114, %v2116
  %v2155 = vsel %vm549, %v2116, %v2118
  %v2156 = vsel %vm549, %v2118, %v2120
  %v2157 = vsel %vm549, %v2120, %v2122
  %v2158 = vsel %vm549, %v2122, %v2124
  %v2159 = vsel %vm549, %v2124, %v2126
  %v2160 = vsel %vm549, %v2126, %v2128
  %v2161 = vsel %vm549, %v2128, %v2130
  %v2162 = vsel %vm549, %v2130, %v2132
  %v2163 = vsel %vm549, %v2132, %v2134
  %v2164 = vsel %vm549, %v2134, %v2136
  %v2165 = vsel %vm549, %v2136, %v2138
  %v2166 = vsel %vm549, %v2138, %v2140
  %v2167 = vsel %vm549, %v2140, %v2142
  %v2168 = vsel %vm549, %v2142, %v2144
  %2193 = vrot.lane.b32.xlu0 %v1653, 96
  %v2194 = vpop.permute.xlu0 %2193
  %2195 = vrot.lane.b32.xlu0 %v1654, 96
  %v2196 = vpop.permute.xlu0 %2195
  %2197 = vrot.lane.b32.xlu0 %v1655, 96
  %v2198 = vpop.permute.xlu0 %2197
  %2199 = vrot.lane.b32.xlu0 %v1656, 96
  %v2200 = vpop.permute.xlu0 %2199
  %2201 = vrot.lane.b32.xlu0 %v1657, 96
  %v2202 = vpop.permute.xlu0 %2201
  %2203 = vrot.lane.b32.xlu0 %v1658, 96
  %v2204 = vpop.permute.xlu0 %2203
  %2205 = vrot.lane.b32.xlu0 %v1659, 96
  %v2206 = vpop.permute.xlu0 %2205
  %2207 = vrot.lane.b32.xlu0 %v1660, 96
  %v2208 = vpop.permute.xlu0 %2207
  %2209 = vrot.lane.b32.xlu0 %v1661, 96
  %v2210 = vpop.permute.xlu0 %2209
  %2211 = vrot.lane.b32.xlu0 %v1662, 96
  %v2212 = vpop.permute.xlu0 %2211
  %2213 = vrot.lane.b32.xlu0 %v1663, 96
  %v2214 = vpop.permute.xlu0 %2213
  %2215 = vrot.lane.b32.xlu0 %v1664, 96
  %v2216 = vpop.permute.xlu0 %2215
  %2217 = vrot.lane.b32.xlu0 %v1665, 96
  %v2218 = vpop.permute.xlu0 %2217
  %2219 = vrot.lane.b32.xlu0 %v1666, 96
  %v2220 = vpop.permute.xlu0 %2219
  %2221 = vrot.lane.b32.xlu0 %v1667, 96
  %v2222 = vpop.permute.xlu0 %2221
  %2223 = vrot.lane.b32.xlu0 %v1668, 96
  %v2224 = vpop.permute.xlu0 %2223
  %2225 = vrot.lane.b32.xlu0 %v1669, 96
  %v2226 = vpop.permute.xlu0 %2225
  %2227 = vrot.lane.b32.xlu0 %v1670, 96
  %v2228 = vpop.permute.xlu0 %2227
  %2229 = vrot.lane.b32.xlu0 %v1671, 96
  %v2230 = vpop.permute.xlu0 %2229
  %2231 = vrot.lane.b32.xlu0 %v1672, 96
  %v2232 = vpop.permute.xlu0 %2231
  %2233 = vrot.lane.b32.xlu0 %v1673, 96
  %v2234 = vpop.permute.xlu0 %2233
  %2235 = vrot.lane.b32.xlu0 %v1674, 96
  %v2236 = vpop.permute.xlu0 %2235
  %2237 = vrot.lane.b32.xlu0 %v1675, 96
  %v2238 = vpop.permute.xlu0 %2237
  %2239 = vrot.lane.b32.xlu0 %v1676, 96
  %v2240 = vpop.permute.xlu0 %2239
  %2241 = vrot.lane.b32.xlu0 %v1677, 96
  %v2242 = vpop.permute.xlu0 %2241
  %v2243 = vsel %vm652, %v2194, %v2196
  %v2244 = vsel %vm652, %v2196, %v2198
  %v2245 = vsel %vm652, %v2198, %v2200
  %v2246 = vsel %vm652, %v2200, %v2202
  %v2247 = vsel %vm652, %v2202, %v2204
  %v2248 = vsel %vm652, %v2204, %v2206
  %v2249 = vsel %vm652, %v2206, %v2208
  %v2250 = vsel %vm652, %v2208, %v2210
  %v2251 = vsel %vm652, %v2210, %v2212
  %v2252 = vsel %vm652, %v2212, %v2214
  %v2253 = vsel %vm652, %v2214, %v2216
  %v2254 = vsel %vm652, %v2216, %v2218
  %v2255 = vsel %vm652, %v2218, %v2220
  %v2256 = vsel %vm652, %v2220, %v2222
  %v2257 = vsel %vm652, %v2222, %v2224
  %v2258 = vsel %vm652, %v2224, %v2226
  %v2259 = vsel %vm652, %v2226, %v2228
  %v2260 = vsel %vm652, %v2228, %v2230
  %v2261 = vsel %vm652, %v2230, %v2232
  %v2262 = vsel %vm652, %v2232, %v2234
  %v2263 = vsel %vm652, %v2234, %v2236
  %v2264 = vsel %vm652, %v2236, %v2238
  %v2265 = vsel %vm652, %v2238, %v2240
  %v2266 = vsel %vm652, %v2240, %v2242
  %2291 = vrot.lane.b32.xlu0 %v1653, 95
  %v2292 = vpop.permute.xlu0 %2291
  %2293 = vrot.lane.b32.xlu0 %v1654, 95
  %v2294 = vpop.permute.xlu0 %2293
  %2295 = vrot.lane.b32.xlu0 %v1655, 95
  %v2296 = vpop.permute.xlu0 %2295
  %2297 = vrot.lane.b32.xlu0 %v1656, 95
  %v2298 = vpop.permute.xlu0 %2297
  %2299 = vrot.lane.b32.xlu0 %v1657, 95
  %v2300 = vpop.permute.xlu0 %2299
  %2301 = vrot.lane.b32.xlu0 %v1658, 95
  %v2302 = vpop.permute.xlu0 %2301
  %2303 = vrot.lane.b32.xlu0 %v1659, 95
  %v2304 = vpop.permute.xlu0 %2303
  %2305 = vrot.lane.b32.xlu0 %v1660, 95
  %v2306 = vpop.permute.xlu0 %2305
  %2307 = vrot.lane.b32.xlu0 %v1661, 95
  %v2308 = vpop.permute.xlu0 %2307
  %2309 = vrot.lane.b32.xlu0 %v1662, 95
  %v2310 = vpop.permute.xlu0 %2309
  %2311 = vrot.lane.b32.xlu0 %v1663, 95
  %v2312 = vpop.permute.xlu0 %2311
  %2313 = vrot.lane.b32.xlu0 %v1664, 95
  %v2314 = vpop.permute.xlu0 %2313
  %2315 = vrot.lane.b32.xlu0 %v1665, 95
  %v2316 = vpop.permute.xlu0 %2315
  %2317 = vrot.lane.b32.xlu0 %v1666, 95
  %v2318 = vpop.permute.xlu0 %2317
  %2319 = vrot.lane.b32.xlu0 %v1667, 95
  %v2320 = vpop.permute.xlu0 %2319
  %2321 = vrot.lane.b32.xlu0 %v1668, 95
  %v2322 = vpop.permute.xlu0 %2321
  %2323 = vrot.lane.b32.xlu0 %v1669, 95
  %v2324 = vpop.permute.xlu0 %2323
  %2325 = vrot.lane.b32.xlu0 %v1670, 95
  %v2326 = vpop.permute.xlu0 %2325
  %2327 = vrot.lane.b32.xlu0 %v1671, 95
  %v2328 = vpop.permute.xlu0 %2327
  %2329 = vrot.lane.b32.xlu0 %v1672, 95
  %v2330 = vpop.permute.xlu0 %2329
  %2331 = vrot.lane.b32.xlu0 %v1673, 95
  %v2332 = vpop.permute.xlu0 %2331
  %2333 = vrot.lane.b32.xlu0 %v1674, 95
  %v2334 = vpop.permute.xlu0 %2333
  %2335 = vrot.lane.b32.xlu0 %v1675, 95
  %v2336 = vpop.permute.xlu0 %2335
  %2337 = vrot.lane.b32.xlu0 %v1676, 95
  %v2338 = vpop.permute.xlu0 %2337
  %2339 = vrot.lane.b32.xlu0 %v1677, 95
  %v2340 = vpop.permute.xlu0 %2339
  %v2341 = vsel %vm755, %v2292, %v2294
  %v2342 = vsel %vm755, %v2294, %v2296
  %v2343 = vsel %vm755, %v2296, %v2298
  %v2344 = vsel %vm755, %v2298, %v2300
  %v2345 = vsel %vm755, %v2300, %v2302
  %v2346 = vsel %vm755, %v2302, %v2304
  %v2347 = vsel %vm755, %v2304, %v2306
  %v2348 = vsel %vm755, %v2306, %v2308
  %v2349 = vsel %vm755, %v2308, %v2310
  %v2350 = vsel %vm755, %v2310, %v2312
  %v2351 = vsel %vm755, %v2312, %v2314
  %v2352 = vsel %vm755, %v2314, %v2316
  %v2353 = vsel %vm755, %v2316, %v2318
  %v2354 = vsel %vm755, %v2318, %v2320
  %v2355 = vsel %vm755, %v2320, %v2322
  %v2356 = vsel %vm755, %v2322, %v2324
  %v2357 = vsel %vm755, %v2324, %v2326
  %v2358 = vsel %vm755, %v2326, %v2328
  %v2359 = vsel %vm755, %v2328, %v2330
  %v2360 = vsel %vm755, %v2330, %v2332
  %v2361 = vsel %vm755, %v2332, %v2334
  %v2362 = vsel %vm755, %v2334, %v2336
  %v2363 = vsel %vm755, %v2336, %v2338
  %v2364 = vsel %vm755, %v2338, %v2340
  %2389 = vrot.lane.b32.xlu0 %v1653, 94
  %v2390 = vpop.permute.xlu0 %2389
  %2391 = vrot.lane.b32.xlu0 %v1654, 94
  %v2392 = vpop.permute.xlu0 %2391
  %2393 = vrot.lane.b32.xlu0 %v1655, 94
  %v2394 = vpop.permute.xlu0 %2393
  %2395 = vrot.lane.b32.xlu0 %v1656, 94
  %v2396 = vpop.permute.xlu0 %2395
  %2397 = vrot.lane.b32.xlu0 %v1657, 94
  %v2398 = vpop.permute.xlu0 %2397
  %2399 = vrot.lane.b32.xlu0 %v1658, 94
  %v2400 = vpop.permute.xlu0 %2399
  %2401 = vrot.lane.b32.xlu0 %v1659, 94
  %v2402 = vpop.permute.xlu0 %2401
  %2403 = vrot.lane.b32.xlu0 %v1660, 94
  %v2404 = vpop.permute.xlu0 %2403
  %2405 = vrot.lane.b32.xlu0 %v1661, 94
  %v2406 = vpop.permute.xlu0 %2405
  %2407 = vrot.lane.b32.xlu0 %v1662, 94
  %v2408 = vpop.permute.xlu0 %2407
  %2409 = vrot.lane.b32.xlu0 %v1663, 94
  %v2410 = vpop.permute.xlu0 %2409
  %2411 = vrot.lane.b32.xlu0 %v1664, 94
  %v2412 = vpop.permute.xlu0 %2411
  %2413 = vrot.lane.b32.xlu0 %v1665, 94
  %v2414 = vpop.permute.xlu0 %2413
  %2415 = vrot.lane.b32.xlu0 %v1666, 94
  %v2416 = vpop.permute.xlu0 %2415
  %2417 = vrot.lane.b32.xlu0 %v1667, 94
  %v2418 = vpop.permute.xlu0 %2417
  %2419 = vrot.lane.b32.xlu0 %v1668, 94
  %v2420 = vpop.permute.xlu0 %2419
  %2421 = vrot.lane.b32.xlu0 %v1669, 94
  %v2422 = vpop.permute.xlu0 %2421
  %2423 = vrot.lane.b32.xlu0 %v1670, 94
  %v2424 = vpop.permute.xlu0 %2423
  %2425 = vrot.lane.b32.xlu0 %v1671, 94
  %v2426 = vpop.permute.xlu0 %2425
  %2427 = vrot.lane.b32.xlu0 %v1672, 94
  %v2428 = vpop.permute.xlu0 %2427
  %2429 = vrot.lane.b32.xlu0 %v1673, 94
  %v2430 = vpop.permute.xlu0 %2429
  %2431 = vrot.lane.b32.xlu0 %v1674, 94
  %v2432 = vpop.permute.xlu0 %2431
  %2433 = vrot.lane.b32.xlu0 %v1675, 94
  %v2434 = vpop.permute.xlu0 %2433
  %2435 = vrot.lane.b32.xlu0 %v1676, 94
  %v2436 = vpop.permute.xlu0 %2435
  %2437 = vrot.lane.b32.xlu0 %v1677, 94
  %v2438 = vpop.permute.xlu0 %2437
  %v2439 = vsel %vm858, %v2390, %v2392
  %v2440 = vsel %vm858, %v2392, %v2394
  %v2441 = vsel %vm858, %v2394, %v2396
  %v2442 = vsel %vm858, %v2396, %v2398
  %v2443 = vsel %vm858, %v2398, %v2400
  %v2444 = vsel %vm858, %v2400, %v2402
  %v2445 = vsel %vm858, %v2402, %v2404
  %v2446 = vsel %vm858, %v2404, %v2406
  %v2447 = vsel %vm858, %v2406, %v2408
  %v2448 = vsel %vm858, %v2408, %v2410
  %v2449 = vsel %vm858, %v2410, %v2412
  %v2450 = vsel %vm858, %v2412, %v2414
  %v2451 = vsel %vm858, %v2414, %v2416
  %v2452 = vsel %vm858, %v2416, %v2418
  %v2453 = vsel %vm858, %v2418, %v2420
  %v2454 = vsel %vm858, %v2420, %v2422
  %v2455 = vsel %vm858, %v2422, %v2424
  %v2456 = vsel %vm858, %v2424, %v2426
  %v2457 = vsel %vm858, %v2426, %v2428
  %v2458 = vsel %vm858, %v2428, %v2430
  %v2459 = vsel %vm858, %v2430, %v2432
  %v2460 = vsel %vm858, %v2432, %v2434
  %v2461 = vsel %vm858, %v2434, %v2436
  %v2462 = vsel %vm858, %v2436, %v2438
  %v2487 = vld [vmem:[%s3] sm:$0xf]
  %v2488 = vld [vmem:[%s3 + $0x4] sm:$0xf]
  %v2489 = vpack.c.bf16 %v1753, %v1653
  %v2490 = vpack.c.bf16 %v1754, %v1654
  %v2491 = vpack.c.bf16 %v1755, %v1655
  %v2492 = vpack.c.bf16 %v1756, %v1656
  %v2493 = vpack.c.bf16 %v1757, %v1657
  %v2494 = vpack.c.bf16 %v1758, %v1658
  %v2495 = vpack.c.bf16 %v1759, %v1659
  %v2496 = vpack.c.bf16 %v1760, %v1660
  %v2497 = vpack.c.bf16 %v1761, %v1661
  %v2498 = vpack.c.bf16 %v1762, %v1662
  %v2499 = vpack.c.bf16 %v1763, %v1663
  %v2500 = vpack.c.bf16 %v1764, %v1664
  %v2501 = vpack.c.bf16 %v1765, %v1665
  %v2502 = vpack.c.bf16 %v1766, %v1666
  %v2503 = vpack.c.bf16 %v1767, %v1667
  %v2504 = vpack.c.bf16 %v1768, %v1668
  %v2505 = vpack.c.bf16 %v1769, %v1669
  %v2506 = vpack.c.bf16 %v1770, %v1670
  %v2507 = vpack.c.bf16 %v1771, %v1671
  %v2508 = vpack.c.bf16 %v1772, %v1672
  %v2509 = vpack.c.bf16 %v1773, %v1673
  %v2510 = vpack.c.bf16 %v1774, %v1674
  %v2511 = vpack.c.bf16 %v1775, %v1675
  %v2512 = vpack.c.bf16 %v1776, %v1676
  %v2513 = vpack.c.bf16 %v1949, %v1851
  %v2514 = vpack.c.bf16 %v1950, %v1852
  %v2515 = vpack.c.bf16 %v1951, %v1853
  %v2516 = vpack.c.bf16 %v1952, %v1854
  %v2517 = vpack.c.bf16 %v1953, %v1855
  %v2518 = vpack.c.bf16 %v1954, %v1856
  %v2519 = vpack.c.bf16 %v1955, %v1857
  %v2520 = vpack.c.bf16 %v1956, %v1858
  %v2521 = vpack.c.bf16 %v1957, %v1859
  %v2522 = vpack.c.bf16 %v1958, %v1860
  %v2523 = vpack.c.bf16 %v1959, %v1861
  %v2524 = vpack.c.bf16 %v1960, %v1862
  %v2525 = vpack.c.bf16 %v1961, %v1863
  %v2526 = vpack.c.bf16 %v1962, %v1864
  %v2527 = vpack.c.bf16 %v1963, %v1865
  %v2528 = vpack.c.bf16 %v1964, %v1866
  %v2529 = vpack.c.bf16 %v1965, %v1867
  %v2530 = vpack.c.bf16 %v1966, %v1868
  %v2531 = vpack.c.bf16 %v1967, %v1869
  %v2532 = vpack.c.bf16 %v1968, %v1870
  %v2533 = vpack.c.bf16 %v1969, %v1871
  %v2534 = vpack.c.bf16 %v1970, %v1872
  %v2535 = vpack.c.bf16 %v1971, %v1873
  %v2536 = vpack.c.bf16 %v1972, %v1874
  %v2537 = vpack.c.bf16 %v2145, %v2047
  %v2538 = vpack.c.bf16 %v2146, %v2048
  %v2539 = vpack.c.bf16 %v2147, %v2049
  %v2540 = vpack.c.bf16 %v2148, %v2050
  %v2541 = vpack.c.bf16 %v2149, %v2051
  %v2542 = vpack.c.bf16 %v2150, %v2052
  %v2543 = vpack.c.bf16 %v2151, %v2053
  %v2544 = vpack.c.bf16 %v2152, %v2054
  %v2545 = vpack.c.bf16 %v2153, %v2055
  %v2546 = vpack.c.bf16 %v2154, %v2056
  %v2547 = vpack.c.bf16 %v2155, %v2057
  %v2548 = vpack.c.bf16 %v2156, %v2058
  %v2549 = vpack.c.bf16 %v2157, %v2059
  %v2550 = vpack.c.bf16 %v2158, %v2060
  %v2551 = vpack.c.bf16 %v2159, %v2061
  %v2552 = vpack.c.bf16 %v2160, %v2062
  %v2553 = vpack.c.bf16 %v2161, %v2063
  %v2554 = vpack.c.bf16 %v2162, %v2064
  %v2555 = vpack.c.bf16 %v2163, %v2065
  %v2556 = vpack.c.bf16 %v2164, %v2066
  %v2557 = vpack.c.bf16 %v2165, %v2067
  %v2558 = vpack.c.bf16 %v2166, %v2068
  %v2559 = vpack.c.bf16 %v2167, %v2069
  %v2560 = vpack.c.bf16 %v2168, %v2070
  %v2561 = vpack.c.bf16 %v2341, %v2243
  %v2562 = vpack.c.bf16 %v2342, %v2244
  %v2563 = vpack.c.bf16 %v2343, %v2245
  %v2564 = vpack.c.bf16 %v2344, %v2246
  %v2565 = vpack.c.bf16 %v2345, %v2247
  %v2566 = vpack.c.bf16 %v2346, %v2248
  %v2567 = vpack.c.bf16 %v2347, %v2249
  %v2568 = vpack.c.bf16 %v2348, %v2250
  %v2569 = vpack.c.bf16 %v2349, %v2251
  %v2570 = vpack.c.bf16 %v2350, %v2252
  %v2571 = vpack.c.bf16 %v2351, %v2253
  %v2572 = vpack.c.bf16 %v2352, %v2254
  %v2573 = vpack.c.bf16 %v2353, %v2255
  %v2574 = vpack.c.bf16 %v2354, %v2256
  %v2575 = vpack.c.bf16 %v2355, %v2257
  %v2576 = vpack.c.bf16 %v2356, %v2258
  %v2577 = vpack.c.bf16 %v2357, %v2259
  %v2578 = vpack.c.bf16 %v2358, %v2260
  %v2579 = vpack.c.bf16 %v2359, %v2261
  %v2580 = vpack.c.bf16 %v2360, %v2262
  %v2581 = vpack.c.bf16 %v2361, %v2263
  %v2582 = vpack.c.bf16 %v2362, %v2264
  %v2583 = vpack.c.bf16 %v2363, %v2265
  %v2584 = vpack.c.bf16 %v2364, %v2266
  %v2585 = vpack.c.bf16 %v2439, %v2439
  %v2586 = vpack.c.bf16 %v2440, %v2440
  %v2587 = vpack.c.bf16 %v2441, %v2441
  %v2588 = vpack.c.bf16 %v2442, %v2442
  %v2589 = vpack.c.bf16 %v2443, %v2443
  %v2590 = vpack.c.bf16 %v2444, %v2444
  %v2591 = vpack.c.bf16 %v2445, %v2445
  %v2592 = vpack.c.bf16 %v2446, %v2446
  %v2593 = vpack.c.bf16 %v2447, %v2447
  %v2594 = vpack.c.bf16 %v2448, %v2448
  %v2595 = vpack.c.bf16 %v2449, %v2449
  %v2596 = vpack.c.bf16 %v2450, %v2450
  %v2597 = vpack.c.bf16 %v2451, %v2451
  %v2598 = vpack.c.bf16 %v2452, %v2452
  %v2599 = vpack.c.bf16 %v2453, %v2453
  %v2600 = vpack.c.bf16 %v2454, %v2454
  %v2601 = vpack.c.bf16 %v2455, %v2455
  %v2602 = vpack.c.bf16 %v2456, %v2456
  %v2603 = vpack.c.bf16 %v2457, %v2457
  %v2604 = vpack.c.bf16 %v2458, %v2458
  %v2605 = vpack.c.bf16 %v2459, %v2459
  %v2606 = vpack.c.bf16 %v2460, %v2460
  %v2607 = vpack.c.bf16 %v2461, %v2461
  %v2608 = vpack.c.bf16 %v2462, %v2462
  %v2609 = vld [vmem:[%s4] sm:$0xff]
  %v2610 = vld [vmem:[%s4 + $0x8] sm:$0xff]
  %2612 = vset.pattern.permute.xlu0 0
  %2613 = vperm.xlu0 %2612, %v2609
  %v2614 = vpop.permute.xlu0 %2613
  %2617 = vset.pattern.permute.xlu0 0
  %2618 = vperm.xlu0 %2617, %v2610
  %v2619 = vpop.permute.xlu0 %2618
  %v2623 = vunpack.c.l.b16 %v2487
  %v2624 = vunpack.c.l.b16 %v2488
  %v2625 = vpack.c.b16 %v2624, %v2623
  %v2627 = vsel %vm1041, %v2625, 0
  %v2630 = vsel %vm1045, %v2585, 0
  %v2633 = vsel %vm1045, %v2586, 0
  %v2636 = vsel %vm1045, %v2587, 0
  %v2639 = vsel %vm1045, %v2588, 0
  %v2642 = vsel %vm1045, %v2589, 0
  %v2645 = vsel %vm1045, %v2590, 0
  %v2648 = vsel %vm1045, %v2591, 0
  %v2651 = vsel %vm1045, %v2592, 0
  %v2654 = vsel %vm1045, %v2593, 0
  %v2657 = vsel %vm1045, %v2594, 0
  %v2660 = vsel %vm1045, %v2595, 0
  %v2663 = vsel %vm1045, %v2596, 0
  %v2666 = vsel %vm1045, %v2597, 0
  %v2669 = vsel %vm1045, %v2598, 0
  %v2672 = vsel %vm1045, %v2599, 0
  %v2675 = vsel %vm1045, %v2600, 0
  %v2678 = vsel %vm1045, %v2601, 0
  %v2681 = vsel %vm1045, %v2602, 0
  %v2684 = vsel %vm1045, %v2603, 0
  %v2687 = vsel %vm1045, %v2604, 0
  %v2690 = vsel %vm1045, %v2605, 0
  %v2693 = vsel %vm1045, %v2606, 0
  %v2696 = vsel %vm1045, %v2607, 0
  %v2699 = vsel %vm1045, %v2608, 0
  %2701 = vmatprep.subr.bf16.mxu0 %v2490
  %2702 = vmatpush1.bf16.msra.mxu0 %v2489
  %2703 = vmatprep.subr.bf16.mxu0 %v2514
  %2704 = vmatpush1.bf16.msra.mxu0 %v2513
  %2705 = vmatprep.subr.bf16.mxu0 %v2538
  %2706 = vmatpush1.bf16.msra.mxu0 %v2537
  %2707 = vmatprep.subr.bf16.mxu0 %v2562
  %2708 = vmatpush1.bf16.msra.mxu0 %v2561
  %2709 = vmatprep.subr.bf16.mxu0 %v2633
  %2710 = vmatpush1.bf16.msra.mxu0 %v2630
  %2711 = vmatprep.subr.bf16.mxu0 0
  %2712 = vmatpush1.bf16.msra.mxu0 0
  %2713 = vmatprep.subr.bf16.mxu0 0
  %2714 = vmatpush1.bf16.msra.mxu0 0
  %2715 = vmatprep.subr.bf16.mxu0 0
  %2716 = vmatpush1.bf16.msra.mxu0 0
  %2717 = vmatprep.subr.bf16.mxu0 0
  %2718 = vmatpush1.bf16.msra.mxu0 0
  %2719 = vmatprep.subr.bf16.mxu0 0
  %2720 = vmatpush1.bf16.msra.mxu0 0
  %2721 = vmatprep.subr.bf16.mxu0 0
  %2722 = vmatpush1.bf16.msra.mxu0 0
  %2723 = vmatprep.subr.bf16.mxu0 0
  %2724 = vmatpush1.bf16.msra.mxu0 0
  %2725 = vmatprep.subr.bf16.mxu0 0
  %2726 = vmatpush1.bf16.msra.mxu0 0
  %2727 = vmatprep.subr.bf16.mxu0 0
  %2728 = vmatpush1.bf16.msra.mxu0 0
  %2729 = vmatprep.subr.bf16.mxu0 0
  %2730 = vmatpush1.bf16.msra.mxu0 0
  %2731 = vmatprep.subr.bf16.mxu0 0
  %2732 = vmatpush1.bf16.msra.mxu0 0
  %2733 = vmatprep.mubr.bf16.mxu0 0
  %2734 = vmatmul.mubr.bf16.gmra.mrb[0].mxu0 %v2627
  %v2735 = vpop.f32.mrb[0].mxu0
  %v2736 = vadd.f32 %v2614, %v2735
  %v2737 = vpop.f32.mrb[0].mxu0
  %v2738 = vadd.f32 %v2614, %v2737
  %v2739 = vpop.f32.mrb[0].mxu0
  %v2740 = vadd.f32 %v2619, %v2739
  %v2741 = vpop.f32.mrb[0].mxu0
  %v2742 = vadd.f32 %v2619, %v2741
  %2743 = vdwg.mxu0
  %2744 = vmatprep.subr.bf16.mxu0 %v2492
  %2745 = vmatpush1.bf16.msra.mxu0 %v2491
  %2746 = vmatprep.subr.bf16.mxu0 %v2516
  %2747 = vmatpush1.bf16.msra.mxu0 %v2515
  %2748 = vmatprep.subr.bf16.mxu0 %v2540
  %2749 = vmatpush1.bf16.msra.mxu0 %v2539
  %2750 = vmatprep.subr.bf16.mxu0 %v2564
  %2751 = vmatpush1.bf16.msra.mxu0 %v2563
  %2752 = vmatprep.subr.bf16.mxu0 %v2639
  %2753 = vmatpush1.bf16.msra.mxu0 %v2636
  %2754 = vmatprep.subr.bf16.mxu0 0
  %2755 = vmatpush1.bf16.msra.mxu0 0
  %2756 = vmatprep.subr.bf16.mxu0 0
  %2757 = vmatpush1.bf16.msra.mxu0 0
  %2758 = vmatprep.subr.bf16.mxu0 0
  %2759 = vmatpush1.bf16.msra.mxu0 0
  %2760 = vmatprep.subr.bf16.mxu0 0
  %2761 = vmatpush1.bf16.msra.mxu0 0
  %2762 = vmatprep.subr.bf16.mxu0 0
  %2763 = vmatpush1.bf16.msra.mxu0 0
  %2764 = vmatprep.subr.bf16.mxu0 0
  %2765 = vmatpush1.bf16.msra.mxu0 0
  %2766 = vmatprep.subr.bf16.mxu0 0
  %2767 = vmatpush1.bf16.msra.mxu0 0
  %2768 = vmatprep.subr.bf16.mxu0 0
  %2769 = vmatpush1.bf16.msra.mxu0 0
  %2770 = vmatprep.subr.bf16.mxu0 0
  %2771 = vmatpush1.bf16.msra.mxu0 0
  %2772 = vmatprep.subr.bf16.mxu0 0
  %2773 = vmatpush1.bf16.msra.mxu0 0
  %2774 = vmatprep.subr.bf16.mxu0 0
  %2775 = vmatpush1.bf16.msra.mxu0 0
  %2776 = vmatprep.mubr.bf16.mxu0 0
  %2777 = vmatmul.mubr.bf16.gmra.mrb[0].mxu0 %v2627
  %v2778 = vpop.f32.mrb[0].mxu0
  %v2779 = vadd.f32 %v2614, %v2778
  %v2780 = vpop.f32.mrb[0].mxu0
  %v2781 = vadd.f32 %v2614, %v2780
  %v2782 = vpop.f32.mrb[0].mxu0
  %v2783 = vadd.f32 %v2619, %v2782
  %v2784 = vpop.f32.mrb[0].mxu0
  %v2785 = vadd.f32 %v2619, %v2784
  %2786 = vdwg.mxu0
  %2787 = vmatprep.subr.bf16.mxu0 %v2494
  %2788 = vmatpush1.bf16.msra.mxu0 %v2493
  %2789 = vmatprep.subr.bf16.mxu0 %v2518
  %2790 = vmatpush1.bf16.msra.mxu0 %v2517
  %2791 = vmatprep.subr.bf16.mxu0 %v2542
  %2792 = vmatpush1.bf16.msra.mxu0 %v2541
  %2793 = vmatprep.subr.bf16.mxu0 %v2566
  %2794 = vmatpush1.bf16.msra.mxu0 %v2565
  %2795 = vmatprep.subr.bf16.mxu0 %v2645
  %2796 = vmatpush1.bf16.msra.mxu0 %v2642
  %2797 = vmatprep.subr.bf16.mxu0 0
  %2798 = vmatpush1.bf16.msra.mxu0 0
  %2799 = vmatprep.subr.bf16.mxu0 0
  %2800 = vmatpush1.bf16.msra.mxu0 0
  %2801 = vmatprep.subr.bf16.mxu0 0
  %2802 = vmatpush1.bf16.msra.mxu0 0
  %2803 = vmatprep.subr.bf16.mxu0 0
  %2804 = vmatpush1.bf16.msra.mxu0 0
  %2805 = vmatprep.subr.bf16.mxu0 0
  %2806 = vmatpush1.bf16.msra.mxu0 0
  %2807 = vmatprep.subr.bf16.mxu0 0
  %2808 = vmatpush1.bf16.msra.mxu0 0
  %2809 = vmatprep.subr.bf16.mxu0 0
  %2810 = vmatpush1.bf16.msra.mxu0 0
  %2811 = vmatprep.subr.bf16.mxu0 0
  %2812 = vmatpush1.bf16.msra.mxu0 0
  %2813 = vmatprep.subr.bf16.mxu0 0
  %2814 = vmatpush1.bf16.msra.mxu0 0
  %2815 = vmatprep.subr.bf16.mxu0 0
  %2816 = vmatpush1.bf16.msra.mxu0 0
  %2817 = vmatprep.subr.bf16.mxu0 0
  %2818 = vmatpush1.bf16.msra.mxu0 0
  %2819 = vmatprep.mubr.bf16.mxu0 0
  %2820 = vmatmul.mubr.bf16.gmra.mrb[0].mxu0 %v2627
  %v2821 = vpop.f32.mrb[0].mxu0
  %v2822 = vadd.f32 %v2614, %v2821
  %v2823 = vpop.f32.mrb[0].mxu0
  %v2824 = vadd.f32 %v2614, %v2823
  %v2825 = vpop.f32.mrb[0].mxu0
  %v2826 = vadd.f32 %v2619, %v2825
  %v2827 = vpop.f32.mrb[0].mxu0
  %v2828 = vadd.f32 %v2619, %v2827
  %2829 = vdwg.mxu0
  %2830 = vmatprep.subr.bf16.mxu0 %v2496
  %2831 = vmatpush1.bf16.msra.mxu0 %v2495
  %2832 = vmatprep.subr.bf16.mxu0 %v2520
  %2833 = vmatpush1.bf16.msra.mxu0 %v2519
  %2834 = vmatprep.subr.bf16.mxu0 %v2544
  %2835 = vmatpush1.bf16.msra.mxu0 %v2543
  %2836 = vmatprep.subr.bf16.mxu0 %v2568
  %2837 = vmatpush1.bf16.msra.mxu0 %v2567
  %2838 = vmatprep.subr.bf16.mxu0 %v2651
  %2839 = vmatpush1.bf16.msra.mxu0 %v2648
  %2840 = vmatprep.subr.bf16.mxu0 0
  %2841 = vmatpush1.bf16.msra.mxu0 0
  %2842 = vmatprep.subr.bf16.mxu0 0
  %2843 = vmatpush1.bf16.msra.mxu0 0
  %2844 = vmatprep.subr.bf16.mxu0 0
  %2845 = vmatpush1.bf16.msra.mxu0 0
  %2846 = vmatprep.subr.bf16.mxu0 0
  %2847 = vmatpush1.bf16.msra.mxu0 0
  %2848 = vmatprep.subr.bf16.mxu0 0
  %2849 = vmatpush1.bf16.msra.mxu0 0
  %2850 = vmatprep.subr.bf16.mxu0 0
  %2851 = vmatpush1.bf16.msra.mxu0 0
  %2852 = vmatprep.subr.bf16.mxu0 0
  %2853 = vmatpush1.bf16.msra.mxu0 0
  %2854 = vmatprep.subr.bf16.mxu0 0
  %2855 = vmatpush1.bf16.msra.mxu0 0
  %2856 = vmatprep.subr.bf16.mxu0 0
  %2857 = vmatpush1.bf16.msra.mxu0 0
  %2858 = vmatprep.subr.bf16.mxu0 0
  %2859 = vmatpush1.bf16.msra.mxu0 0
  %2860 = vmatprep.subr.bf16.mxu0 0
  %2861 = vmatpush1.bf16.msra.mxu0 0
  %2862 = vmatprep.mubr.bf16.mxu0 0
  %2863 = vmatmul.mubr.bf16.gmra.mrb[0].mxu0 %v2627
  %v2864 = vpop.f32.mrb[0].mxu0
  %v2865 = vadd.f32 %v2614, %v2864
  %v2866 = vpop.f32.mrb[0].mxu0
  %v2867 = vadd.f32 %v2614, %v2866
  %v2868 = vpop.f32.mrb[0].mxu0
  %v2869 = vadd.f32 %v2619, %v2868
  %v2870 = vpop.f32.mrb[0].mxu0
  %v2871 = vadd.f32 %v2619, %v2870
  %2872 = vdwg.mxu0
  %2873 = vmatprep.subr.bf16.mxu0 %v2498
  %2874 = vmatpush1.bf16.msra.mxu0 %v2497
  %2875 = vmatprep.subr.bf16.mxu0 %v2522
  %2876 = vmatpush1.bf16.msra.mxu0 %v2521
  %2877 = vmatprep.subr.bf16.mxu0 %v2546
  %2878 = vmatpush1.bf16.msra.mxu0 %v2545
  %2879 = vmatprep.subr.bf16.mxu0 %v2570
  %2880 = vmatpush1.bf16.msra.mxu0 %v2569
  %2881 = vmatprep.subr.bf16.mxu0 %v2657
  %2882 = vmatpush1.bf16.msra.mxu0 %v2654
  %2883 = vmatprep.subr.bf16.mxu0 0
  %2884 = vmatpush1.bf16.msra.mxu0 0
  %2885 = vmatprep.subr.bf16.mxu0 0
  %2886 = vmatpush1.bf16.msra.mxu0 0
  %2887 = vmatprep.subr.bf16.mxu0 0
  %2888 = vmatpush1.bf16.msra.mxu0 0
  %2889 = vmatprep.subr.bf16.mxu0 0
  %2890 = vmatpush1.bf16.msra.mxu0 0
  %2891 = vmatprep.subr.bf16.mxu0 0
  %2892 = vmatpush1.bf16.msra.mxu0 0
  %2893 = vmatprep.subr.bf16.mxu0 0
  %2894 = vmatpush1.bf16.msra.mxu0 0
  %2895 = vmatprep.subr.bf16.mxu0 0
  %2896 = vmatpush1.bf16.msra.mxu0 0
  %2897 = vmatprep.subr.bf16.mxu0 0
  %2898 = vmatpush1.bf16.msra.mxu0 0
  %2899 = vmatprep.subr.bf16.mxu0 0
  %2900 = vmatpush1.bf16.msra.mxu0 0
  %2901 = vmatprep.subr.bf16.mxu0 0
  %2902 = vmatpush1.bf16.msra.mxu0 0
  %2903 = vmatprep.subr.bf16.mxu0 0
  %2904 = vmatpush1.bf16.msra.mxu0 0
  %2905 = vmatprep.mubr.bf16.mxu0 0
  %2906 = vmatmul.mubr.bf16.gmra.mrb[0].mxu0 %v2627
  %v2907 = vpop.f32.mrb[0].mxu0
  %v2908 = vadd.f32 %v2614, %v2907
  %v2909 = vpop.f32.mrb[0].mxu0
  %v2910 = vadd.f32 %v2614, %v2909
  %v2911 = vpop.f32.mrb[0].mxu0
  %v2912 = vadd.f32 %v2619, %v2911
  %v2913 = vpop.f32.mrb[0].mxu0
  %v2914 = vadd.f32 %v2619, %v2913
  %2915 = vdwg.mxu0
  %2916 = vmatprep.subr.bf16.mxu0 %v2500
  %2917 = vmatpush1.bf16.msra.mxu0 %v2499
  %2918 = vmatprep.subr.bf16.mxu0 %v2524
  %2919 = vmatpush1.bf16.msra.mxu0 %v2523
  %2920 = vmatprep.subr.bf16.mxu0 %v2548
  %2921 = vmatpush1.bf16.msra.mxu0 %v2547
  %2922 = vmatprep.subr.bf16.mxu0 %v2572
  %2923 = vmatpush1.bf16.msra.mxu0 %v2571
  %2924 = vmatprep.subr.bf16.mxu0 %v2663
  %2925 = vmatpush1.bf16.msra.mxu0 %v2660
  %2926 = vmatprep.subr.bf16.mxu0 0
  %2927 = vmatpush1.bf16.msra.mxu0 0
  %2928 = vmatprep.subr.bf16.mxu0 0
  %2929 = vmatpush1.bf16.msra.mxu0 0
  %2930 = vmatprep.subr.bf16.mxu0 0
  %2931 = vmatpush1.bf16.msra.mxu0 0
  %2932 = vmatprep.subr.bf16.mxu0 0
  %2933 = vmatpush1.bf16.msra.mxu0 0
  %2934 = vmatprep.subr.bf16.mxu0 0
  %2935 = vmatpush1.bf16.msra.mxu0 0
  %2936 = vmatprep.subr.bf16.mxu0 0
  %2937 = vmatpush1.bf16.msra.mxu0 0
  %2938 = vmatprep.subr.bf16.mxu0 0
  %2939 = vmatpush1.bf16.msra.mxu0 0
  %2940 = vmatprep.subr.bf16.mxu0 0
  %2941 = vmatpush1.bf16.msra.mxu0 0
  %2942 = vmatprep.subr.bf16.mxu0 0
  %2943 = vmatpush1.bf16.msra.mxu0 0
  %2944 = vmatprep.subr.bf16.mxu0 0
  %2945 = vmatpush1.bf16.msra.mxu0 0
  %2946 = vmatprep.subr.bf16.mxu0 0
  %2947 = vmatpush1.bf16.msra.mxu0 0
  %2948 = vmatprep.mubr.bf16.mxu0 0
  %2949 = vmatmul.mubr.bf16.gmra.mrb[0].mxu0 %v2627
  %v2950 = vpop.f32.mrb[0].mxu0
  %v2951 = vadd.f32 %v2614, %v2950
  %v2952 = vpop.f32.mrb[0].mxu0
  %v2953 = vadd.f32 %v2614, %v2952
  %v2954 = vpop.f32.mrb[0].mxu0
  %v2955 = vadd.f32 %v2619, %v2954
  %v2956 = vpop.f32.mrb[0].mxu0
  %v2957 = vadd.f32 %v2619, %v2956
  %2958 = vdwg.mxu0
  %2959 = vmatprep.subr.bf16.mxu0 %v2502
  %2960 = vmatpush1.bf16.msra.mxu0 %v2501
  %2961 = vmatprep.subr.bf16.mxu0 %v2526
  %2962 = vmatpush1.bf16.msra.mxu0 %v2525
  %2963 = vmatprep.subr.bf16.mxu0 %v2550
  %2964 = vmatpush1.bf16.msra.mxu0 %v2549
  %2965 = vmatprep.subr.bf16.mxu0 %v2574
  %2966 = vmatpush1.bf16.msra.mxu0 %v2573
  %2967 = vmatprep.subr.bf16.mxu0 %v2669
  %2968 = vmatpush1.bf16.msra.mxu0 %v2666
  %2969 = vmatprep.subr.bf16.mxu0 0
  %2970 = vmatpush1.bf16.msra.mxu0 0
  %2971 = vmatprep.subr.bf16.mxu0 0
  %2972 = vmatpush1.bf16.msra.mxu0 0
  %2973 = vmatprep.subr.bf16.mxu0 0
  %2974 = vmatpush1.bf16.msra.mxu0 0
  %2975 = vmatprep.subr.bf16.mxu0 0
  %2976 = vmatpush1.bf16.msra.mxu0 0
  %2977 = vmatprep.subr.bf16.mxu0 0
  %2978 = vmatpush1.bf16.msra.mxu0 0
  %2979 = vmatprep.subr.bf16.mxu0 0
  %2980 = vmatpush1.bf16.msra.mxu0 0
  %2981 = vmatprep.subr.bf16.mxu0 0
  %2982 = vmatpush1.bf16.msra.mxu0 0
  %2983 = vmatprep.subr.bf16.mxu0 0
  %2984 = vmatpush1.bf16.msra.mxu0 0
  %2985 = vmatprep.subr.bf16.mxu0 0
  %2986 = vmatpush1.bf16.msra.mxu0 0
  %2987 = vmatprep.subr.bf16.mxu0 0
  %2988 = vmatpush1.bf16.msra.mxu0 0
  %2989 = vmatprep.subr.bf16.mxu0 0
  %2990 = vmatpush1.bf16.msra.mxu0 0
  %2991 = vmatprep.mubr.bf16.mxu0 0
  %2992 = vmatmul.mubr.bf16.gmra.mrb[0].mxu0 %v2627
  %v2993 = vpop.f32.mrb[0].mxu0
  %v2994 = vadd.f32 %v2614, %v2993
  %v2995 = vpop.f32.mrb[0].mxu0
  %v2996 = vadd.f32 %v2614, %v2995
  %v2997 = vpop.f32.mrb[0].mxu0
  %v2998 = vadd.f32 %v2619, %v2997
  %v2999 = vpop.f32.mrb[0].mxu0
  %v3000 = vadd.f32 %v2619, %v2999
  %3001 = vdwg.mxu0
  %3002 = vmatprep.subr.bf16.mxu0 %v2504
  %3003 = vmatpush1.bf16.msra.mxu0 %v2503
  %3004 = vmatprep.subr.bf16.mxu0 %v2528
  %3005 = vmatpush1.bf16.msra.mxu0 %v2527
  %3006 = vmatprep.subr.bf16.mxu0 %v2552
  %3007 = vmatpush1.bf16.msra.mxu0 %v2551
  %3008 = vmatprep.subr.bf16.mxu0 %v2576
  %3009 = vmatpush1.bf16.msra.mxu0 %v2575
  %3010 = vmatprep.subr.bf16.mxu0 %v2675
  %3011 = vmatpush1.bf16.msra.mxu0 %v2672
  %3012 = vmatprep.subr.bf16.mxu0 0
  %3013 = vmatpush1.bf16.msra.mxu0 0
  %3014 = vmatprep.subr.bf16.mxu0 0
  %3015 = vmatpush1.bf16.msra.mxu0 0
  %3016 = vmatprep.subr.bf16.mxu0 0
  %3017 = vmatpush1.bf16.msra.mxu0 0
  %3018 = vmatprep.subr.bf16.mxu0 0
  %3019 = vmatpush1.bf16.msra.mxu0 0
  %3020 = vmatprep.subr.bf16.mxu0 0
  %3021 = vmatpush1.bf16.msra.mxu0 0
  %3022 = vmatprep.subr.bf16.mxu0 0
  %3023 = vmatpush1.bf16.msra.mxu0 0
  %3024 = vmatprep.subr.bf16.mxu0 0
  %3025 = vmatpush1.bf16.msra.mxu0 0
  %3026 = vmatprep.subr.bf16.mxu0 0
  %3027 = vmatpush1.bf16.msra.mxu0 0
  %3028 = vmatprep.subr.bf16.mxu0 0
  %3029 = vmatpush1.bf16.msra.mxu0 0
  %3030 = vmatprep.subr.bf16.mxu0 0
  %3031 = vmatpush1.bf16.msra.mxu0 0
  %3032 = vmatprep.subr.bf16.mxu0 0
  %3033 = vmatpush1.bf16.msra.mxu0 0
  %3034 = vmatprep.mubr.bf16.mxu0 0
  %3035 = vmatmul.mubr.bf16.gmra.mrb[0].mxu0 %v2627
  %v3036 = vpop.f32.mrb[0].mxu0
  %v3037 = vadd.f32 %v2614, %v3036
  %v3038 = vpop.f32.mrb[0].mxu0
  %v3039 = vadd.f32 %v2614, %v3038
  %v3040 = vpop.f32.mrb[0].mxu0
  %v3041 = vadd.f32 %v2619, %v3040
  %v3042 = vpop.f32.mrb[0].mxu0
  %v3043 = vadd.f32 %v2619, %v3042
  %3044 = vdwg.mxu0
  %3045 = vmatprep.subr.bf16.mxu0 %v2506
  %3046 = vmatpush1.bf16.msra.mxu0 %v2505
  %3047 = vmatprep.subr.bf16.mxu0 %v2530
  %3048 = vmatpush1.bf16.msra.mxu0 %v2529
  %3049 = vmatprep.subr.bf16.mxu0 %v2554
  %3050 = vmatpush1.bf16.msra.mxu0 %v2553
  %3051 = vmatprep.subr.bf16.mxu0 %v2578
  %3052 = vmatpush1.bf16.msra.mxu0 %v2577
  %3053 = vmatprep.subr.bf16.mxu0 %v2681
  %3054 = vmatpush1.bf16.msra.mxu0 %v2678
  %3055 = vmatprep.subr.bf16.mxu0 0
  %3056 = vmatpush1.bf16.msra.mxu0 0
  %3057 = vmatprep.subr.bf16.mxu0 0
  %3058 = vmatpush1.bf16.msra.mxu0 0
  %3059 = vmatprep.subr.bf16.mxu0 0
  %3060 = vmatpush1.bf16.msra.mxu0 0
  %3061 = vmatprep.subr.bf16.mxu0 0
  %3062 = vmatpush1.bf16.msra.mxu0 0
  %3063 = vmatprep.subr.bf16.mxu0 0
  %3064 = vmatpush1.bf16.msra.mxu0 0
  %3065 = vmatprep.subr.bf16.mxu0 0
  %3066 = vmatpush1.bf16.msra.mxu0 0
  %3067 = vmatprep.subr.bf16.mxu0 0
  %3068 = vmatpush1.bf16.msra.mxu0 0
  %3069 = vmatprep.subr.bf16.mxu0 0
  %3070 = vmatpush1.bf16.msra.mxu0 0
  %3071 = vmatprep.subr.bf16.mxu0 0
  %3072 = vmatpush1.bf16.msra.mxu0 0
  %3073 = vmatprep.subr.bf16.mxu0 0
  %3074 = vmatpush1.bf16.msra.mxu0 0
  %3075 = vmatprep.subr.bf16.mxu0 0
  %3076 = vmatpush1.bf16.msra.mxu0 0
  %3077 = vmatprep.mubr.bf16.mxu0 0
  %3078 = vmatmul.mubr.bf16.gmra.mrb[0].mxu0 %v2627
  %v3079 = vpop.f32.mrb[0].mxu0
  %v3080 = vadd.f32 %v2614, %v3079
  %v3081 = vpop.f32.mrb[0].mxu0
  %v3082 = vadd.f32 %v2614, %v3081
  %v3083 = vpop.f32.mrb[0].mxu0
  %v3084 = vadd.f32 %v2619, %v3083
  %v3085 = vpop.f32.mrb[0].mxu0
  %v3086 = vadd.f32 %v2619, %v3085
  %3087 = vdwg.mxu0
  %3088 = vmatprep.subr.bf16.mxu0 %v2508
  %3089 = vmatpush1.bf16.msra.mxu0 %v2507
  %3090 = vmatprep.subr.bf16.mxu0 %v2532
  %3091 = vmatpush1.bf16.msra.mxu0 %v2531
  %3092 = vmatprep.subr.bf16.mxu0 %v2556
  %3093 = vmatpush1.bf16.msra.mxu0 %v2555
  %3094 = vmatprep.subr.bf16.mxu0 %v2580
  %3095 = vmatpush1.bf16.msra.mxu0 %v2579
  %3096 = vmatprep.subr.bf16.mxu0 %v2687
  %3097 = vmatpush1.bf16.msra.mxu0 %v2684
  %3098 = vmatprep.subr.bf16.mxu0 0
  %3099 = vmatpush1.bf16.msra.mxu0 0
  %3100 = vmatprep.subr.bf16.mxu0 0
  %3101 = vmatpush1.bf16.msra.mxu0 0
  %3102 = vmatprep.subr.bf16.mxu0 0
  %3103 = vmatpush1.bf16.msra.mxu0 0
  %3104 = vmatprep.subr.bf16.mxu0 0
  %3105 = vmatpush1.bf16.msra.mxu0 0
  %3106 = vmatprep.subr.bf16.mxu0 0
  %3107 = vmatpush1.bf16.msra.mxu0 0
  %3108 = vmatprep.subr.bf16.mxu0 0
  %3109 = vmatpush1.bf16.msra.mxu0 0
  %3110 = vmatprep.subr.bf16.mxu0 0
  %3111 = vmatpush1.bf16.msra.mxu0 0
  %3112 = vmatprep.subr.bf16.mxu0 0
  %3113 = vmatpush1.bf16.msra.mxu0 0
  %3114 = vmatprep.subr.bf16.mxu0 0
  %3115 = vmatpush1.bf16.msra.mxu0 0
  %3116 = vmatprep.subr.bf16.mxu0 0
  %3117 = vmatpush1.bf16.msra.mxu0 0
  %3118 = vmatprep.subr.bf16.mxu0 0
  %3119 = vmatpush1.bf16.msra.mxu0 0
  %3120 = vmatprep.mubr.bf16.mxu0 0
  %3121 = vmatmul.mubr.bf16.gmra.mrb[0].mxu0 %v2627
  %v3122 = vpop.f32.mrb[0].mxu0
  %v3123 = vadd.f32 %v2614, %v3122
  %v3124 = vpop.f32.mrb[0].mxu0
  %v3125 = vadd.f32 %v2614, %v3124
  %v3126 = vpop.f32.mrb[0].mxu0
  %v3127 = vadd.f32 %v2619, %v3126
  %v3128 = vpop.f32.mrb[0].mxu0
  %v3129 = vadd.f32 %v2619, %v3128
  %3130 = vdwg.mxu0
  %3131 = vmatprep.subr.bf16.mxu0 %v2510
  %3132 = vmatpush1.bf16.msra.mxu0 %v2509
  %3133 = vmatprep.subr.bf16.mxu0 %v2534
  %3134 = vmatpush1.bf16.msra.mxu0 %v2533
  %3135 = vmatprep.subr.bf16.mxu0 %v2558
  %3136 = vmatpush1.bf16.msra.mxu0 %v2557
  %3137 = vmatprep.subr.bf16.mxu0 %v2582
  %3138 = vmatpush1.bf16.msra.mxu0 %v2581
  %3139 = vmatprep.subr.bf16.mxu0 %v2693
  %3140 = vmatpush1.bf16.msra.mxu0 %v2690
  %3141 = vmatprep.subr.bf16.mxu0 0
  %3142 = vmatpush1.bf16.msra.mxu0 0
  %3143 = vmatprep.subr.bf16.mxu0 0
  %3144 = vmatpush1.bf16.msra.mxu0 0
  %3145 = vmatprep.subr.bf16.mxu0 0
  %3146 = vmatpush1.bf16.msra.mxu0 0
  %3147 = vmatprep.subr.bf16.mxu0 0
  %3148 = vmatpush1.bf16.msra.mxu0 0
  %3149 = vmatprep.subr.bf16.mxu0 0
  %3150 = vmatpush1.bf16.msra.mxu0 0
  %3151 = vmatprep.subr.bf16.mxu0 0
  %3152 = vmatpush1.bf16.msra.mxu0 0
  %3153 = vmatprep.subr.bf16.mxu0 0
  %3154 = vmatpush1.bf16.msra.mxu0 0
  %3155 = vmatprep.subr.bf16.mxu0 0
  %3156 = vmatpush1.bf16.msra.mxu0 0
  %3157 = vmatprep.subr.bf16.mxu0 0
  %3158 = vmatpush1.bf16.msra.mxu0 0
  %3159 = vmatprep.subr.bf16.mxu0 0
  %3160 = vmatpush1.bf16.msra.mxu0 0
  %3161 = vmatprep.subr.bf16.mxu0 0
  %3162 = vmatpush1.bf16.msra.mxu0 0
  %3163 = vmatprep.mubr.bf16.mxu0 0
  %3164 = vmatmul.mubr.bf16.gmra.mrb[0].mxu0 %v2627
  %v3165 = vpop.f32.mrb[0].mxu0
  %v3166 = vadd.f32 %v2614, %v3165
  %v3167 = vpop.f32.mrb[0].mxu0
  %v3168 = vadd.f32 %v2614, %v3167
  %v3169 = vpop.f32.mrb[0].mxu0
  %v3170 = vadd.f32 %v2619, %v3169
  %v3171 = vpop.f32.mrb[0].mxu0
  %v3172 = vadd.f32 %v2619, %v3171
  %3173 = vdwg.mxu0
  %3174 = vmatprep.subr.bf16.mxu0 %v2512
  %3175 = vmatpush1.bf16.msra.mxu0 %v2511
  %3176 = vmatprep.subr.bf16.mxu0 %v2536
  %3177 = vmatpush1.bf16.msra.mxu0 %v2535
  %3178 = vmatprep.subr.bf16.mxu0 %v2560
  %3179 = vmatpush1.bf16.msra.mxu0 %v2559
  %3180 = vmatprep.subr.bf16.mxu0 %v2584
  %3181 = vmatpush1.bf16.msra.mxu0 %v2583
  %3182 = vmatprep.subr.bf16.mxu0 %v2699
  %3183 = vmatpush1.bf16.msra.mxu0 %v2696
  %3184 = vmatprep.subr.bf16.mxu0 0
  %3185 = vmatpush1.bf16.msra.mxu0 0
  %3186 = vmatprep.subr.bf16.mxu0 0
  %3187 = vmatpush1.bf16.msra.mxu0 0
  %3188 = vmatprep.subr.bf16.mxu0 0
  %3189 = vmatpush1.bf16.msra.mxu0 0
  %3190 = vmatprep.subr.bf16.mxu0 0
  %3191 = vmatpush1.bf16.msra.mxu0 0
  %3192 = vmatprep.subr.bf16.mxu0 0
  %3193 = vmatpush1.bf16.msra.mxu0 0
  %3194 = vmatprep.subr.bf16.mxu0 0
  %3195 = vmatpush1.bf16.msra.mxu0 0
  %3196 = vmatprep.subr.bf16.mxu0 0
  %3197 = vmatpush1.bf16.msra.mxu0 0
  %3198 = vmatprep.subr.bf16.mxu0 0
  %3199 = vmatpush1.bf16.msra.mxu0 0
  %3200 = vmatprep.subr.bf16.mxu0 0
  %3201 = vmatpush1.bf16.msra.mxu0 0
  %3202 = vmatprep.subr.bf16.mxu0 0
  %3203 = vmatpush1.bf16.msra.mxu0 0
  %3204 = vmatprep.subr.bf16.mxu0 0
  %3205 = vmatpush1.bf16.msra.mxu0 0
  %3206 = vmatprep.mubr.bf16.mxu0 0
  %3207 = vmatmul.mubr.bf16.gmra.mrb[0].mxu0 %v2627
  %v3208 = vpop.f32.mrb[0].mxu0
  %v3209 = vadd.f32 %v2614, %v3208
  %v3210 = vpop.f32.mrb[0].mxu0
  %v3211 = vadd.f32 %v2614, %v3210
  %v3212 = vpop.f32.mrb[0].mxu0
  %v3213 = vadd.f32 %v2619, %v3212
  %v3214 = vpop.f32.mrb[0].mxu0
  %v3215 = vadd.f32 %v2619, %v3214
  %3216 = vdwg.mxu0
  %v3217 = vmax.f32 %v2736, 0.0
  %v3218 = vmax.f32 %v2738, 0.0
  %v3219 = vmax.f32 %v2779, 0.0
  %v3220 = vmax.f32 %v2781, 0.0
  %v3221 = vmax.f32 %v2822, 0.0
  %v3222 = vmax.f32 %v2824, 0.0
  %v3223 = vmax.f32 %v2865, 0.0
  %v3224 = vmax.f32 %v2867, 0.0
  %v3225 = vmax.f32 %v2908, 0.0
  %v3226 = vmax.f32 %v2910, 0.0
  %v3227 = vmax.f32 %v2951, 0.0
  %v3228 = vmax.f32 %v2953, 0.0
  %v3229 = vmax.f32 %v2994, 0.0
  %v3230 = vmax.f32 %v2996, 0.0
  %v3231 = vmax.f32 %v3037, 0.0
  %v3232 = vmax.f32 %v3039, 0.0
  %v3233 = vmax.f32 %v3080, 0.0
  %v3234 = vmax.f32 %v3082, 0.0
  %v3235 = vmax.f32 %v3123, 0.0
  %v3236 = vmax.f32 %v3125, 0.0
  %v3237 = vmax.f32 %v3166, 0.0
  %v3238 = vmax.f32 %v3168, 0.0
  %v3239 = vmax.f32 %v3209, 0.0
  %v3240 = vmax.f32 %v3211, 0.0
  %v3241 = vmax.f32 %v2740, 0.0
  %v3242 = vmax.f32 %v2742, 0.0
  %v3243 = vmax.f32 %v2783, 0.0
  %v3244 = vmax.f32 %v2785, 0.0
  %v3245 = vmax.f32 %v2826, 0.0
  %v3246 = vmax.f32 %v2828, 0.0
  %v3247 = vmax.f32 %v2869, 0.0
  %v3248 = vmax.f32 %v2871, 0.0
  %v3249 = vmax.f32 %v2912, 0.0
  %v3250 = vmax.f32 %v2914, 0.0
  %v3251 = vmax.f32 %v2955, 0.0
  %v3252 = vmax.f32 %v2957, 0.0
  %v3253 = vmax.f32 %v2998, 0.0
  %v3254 = vmax.f32 %v3000, 0.0
  %v3255 = vmax.f32 %v3041, 0.0
  %v3256 = vmax.f32 %v3043, 0.0
  %v3257 = vmax.f32 %v3084, 0.0
  %v3258 = vmax.f32 %v3086, 0.0
  %v3259 = vmax.f32 %v3127, 0.0
  %v3260 = vmax.f32 %v3129, 0.0
  %v3261 = vmax.f32 %v3170, 0.0
  %v3262 = vmax.f32 %v3172, 0.0
  %v3263 = vmax.f32 %v3213, 0.0
  %v3264 = vmax.f32 %v3215, 0.0
  %3265 = vst [vmem:[#allocation2] sm:$0xff] %v3217
  %3266 = vst [vmem:[#allocation2 + $0x8] sm:$0xff] %v3218
  %3267 = vst [vmem:[#allocation2 + $0x10] sm:$0xff] %v3219
  %3268 = vst [vmem:[#allocation2 + $0x18] sm:$0xff] %v3241
  %3269 = vst [vmem:[#allocation2 + $0x20] sm:$0xff] %v3242
  %3270 = vst [vmem:[#allocation2 + $0x28] sm:$0xff] %v3243
  %s3271 = scalar_lea.vmem [#allocation2], 48
  %3272 = vst [vmem:[%s3271] sm:$0xff] %v3220
  %3273 = vst [vmem:[%s3271 + $0x8] sm:$0xff] %v3221
  %3274 = vst [vmem:[%s3271 + $0x10] sm:$0xff] %v3222
  %3275 = vst [vmem:[%s3271 + $0x18] sm:$0xff] %v3244
  %3276 = vst [vmem:[%s3271 + $0x20] sm:$0xff] %v3245
  %3277 = vst [vmem:[%s3271 + $0x28] sm:$0xff] %v3246
  %s3278 = scalar_lea.vmem [#allocation2], 96
  %3279 = vst [vmem:[%s3278] sm:$0xff] %v3223
  %3280 = vst [vmem:[%s3278 + $0x8] sm:$0xff] %v3224
  %3281 = vst [vmem:[%s3278 + $0x10] sm:$0xff] %v3225
  %3282 = vst [vmem:[%s3278 + $0x18] sm:$0xff] %v3247
  %3283 = vst [vmem:[%s3278 + $0x20] sm:$0xff] %v3248
  %3284 = vst [vmem:[%s3278 + $0x28] sm:$0xff] %v3249
  %s3285 = scalar_lea.vmem [#allocation2], 144
  %3286 = vst [vmem:[%s3285] sm:$0xff] %v3226
  %3287 = vst [vmem:[%s3285 + $0x8] sm:$0xff] %v3227
  %3288 = vst [vmem:[%s3285 + $0x10] sm:$0xff] %v3228
  %3289 = vst [vmem:[%s3285 + $0x18] sm:$0xff] %v3250
  %3290 = vst [vmem:[%s3285 + $0x20] sm:$0xff] %v3251
  %3291 = vst [vmem:[%s3285 + $0x28] sm:$0xff] %v3252
  %s3292 = scalar_lea.vmem [#allocation2], 192
  %3293 = vst [vmem:[%s3292] sm:$0xff] %v3229
  %3294 = vst [vmem:[%s3292 + $0x8] sm:$0xff] %v3230
  %3295 = vst [vmem:[%s3292 + $0x10] sm:$0xff] %v3231
  %3296 = vst [vmem:[%s3292 + $0x18] sm:$0xff] %v3253
  %3297 = vst [vmem:[%s3292 + $0x20] sm:$0xff] %v3254
  %3298 = vst [vmem:[%s3292 + $0x28] sm:$0xff] %v3255
  %s3299 = scalar_lea.vmem [#allocation2], 240
  %3300 = vst [vmem:[%s3299] sm:$0xff] %v3232
  %3301 = vst [vmem:[%s3299 + $0x8] sm:$0xff] %v3233
  %3302 = vst [vmem:[%s3299 + $0x10] sm:$0xff] %v3234
  %3303 = vst [vmem:[%s3299 + $0x18] sm:$0xff] %v3256
  %3304 = vst [vmem:[%s3299 + $0x20] sm:$0xff] %v3257
  %3305 = vst [vmem:[%s3299 + $0x28] sm:$0xff] %v3258
  %s3306 = scalar_lea.vmem [#allocation2], 288
  %3307 = vst [vmem:[%s3306] sm:$0xff] %v3235
  %3308 = vst [vmem:[%s3306 + $0x8] sm:$0xff] %v3236
  %3309 = vst [vmem:[%s3306 + $0x10] sm:$0xff] %v3237
  %3310 = vst [vmem:[%s3306 + $0x18] sm:$0xff] %v3259
  %3311 = vst [vmem:[%s3306 + $0x20] sm:$0xff] %v3260
  %3312 = vst [vmem:[%s3306 + $0x28] sm:$0xff] %v3261
  %s3313 = scalar_lea.vmem [#allocation2], 336
  %3314 = vst [vmem:[%s3313] sm:$0xff] %v3238
  %3315 = vst [vmem:[%s3313 + $0x8] sm:$0xff] %v3239
  %3316 = vst [vmem:[%s3313 + $0x10] sm:$0xff] %v3240
  %3317 = vst [vmem:[%s3313 + $0x18] sm:$0xff] %v3262
  %3318 = vst [vmem:[%s3313 + $0x20] sm:$0xff] %v3263
  %3319 = vst [vmem:[%s3313 + $0x28] sm:$0xff] %v3264
  %v3320 = vld [vmem:[#allocation2] ss:$8 sm:$0x3]
  %s3321 = scalar_lea.vmem [#allocation2], 48
  %v3322 = vld [vmem:[%s3321] ss:$8 sm:$0x3]
  %s3323 = scalar_lea.vmem [#allocation2], 96
  %v3324 = vld [vmem:[%s3323] ss:$8 sm:$0x3]
  %s3325 = scalar_lea.vmem [#allocation2], 144
  %v3326 = vld [vmem:[%s3325] ss:$8 sm:$0x3]
  %s3327 = scalar_lea.vmem [#allocation2], 192
  %v3328 = vld [vmem:[%s3327] ss:$8 sm:$0x3]
  %s3329 = scalar_lea.vmem [#allocation2], 240
  %v3330 = vld [vmem:[%s3329] ss:$8 sm:$0x3]
  %s3331 = scalar_lea.vmem [#allocation2], 288
  %v3332 = vld [vmem:[%s3331] ss:$8 sm:$0x3]
  %s3333 = scalar_lea.vmem [#allocation2], 336
  %v3334 = vld [vmem:[%s3333] ss:$8 sm:$0x3]
  %v3343 = vlaneseq
  %v3344 = vshrl.u32 %v3343, 7
  %v3345 = vsub.s32 0, %v3344
  %v3346 = vrot.slane %v3320, %v3345
  %v3347 = vlaneseq
  %v3348 = vshrl.u32 %v3347, 7
  %v3349 = vsub.s32 1, %v3348
  %v3350 = vrot.slane %v3320, %v3349
  %v3351 = vlaneseq
  %v3352 = vshrl.u32 %v3351, 7
  %v3353 = vsub.s32 0, %v3352
  %v3354 = vrot.slane %v3322, %v3353
  %v3355 = vlaneseq
  %v3356 = vshrl.u32 %v3355, 7
  %v3357 = vsub.s32 1, %v3356
  %v3358 = vrot.slane %v3322, %v3357
  %v3359 = vlaneseq
  %v3360 = vshrl.u32 %v3359, 7
  %v3361 = vsub.s32 0, %v3360
  %v3362 = vrot.slane %v3324, %v3361
  %v3363 = vlaneseq
  %v3364 = vshrl.u32 %v3363, 7
  %v3365 = vsub.s32 1, %v3364
  %v3366 = vrot.slane %v3324, %v3365
  %v3367 = vlaneseq
  %v3368 = vshrl.u32 %v3367, 7
  %v3369 = vsub.s32 0, %v3368
  %v3370 = vrot.slane %v3326, %v3369
  %v3371 = vlaneseq
  %v3372 = vshrl.u32 %v3371, 7
  %v3373 = vsub.s32 1, %v3372
  %v3374 = vrot.slane %v3326, %v3373
  %v3375 = vlaneseq
  %v3376 = vshrl.u32 %v3375, 7
  %v3377 = vsub.s32 0, %v3376
  %v3378 = vrot.slane %v3328, %v3377
  %v3379 = vlaneseq
  %v3380 = vshrl.u32 %v3379, 7
  %v3381 = vsub.s32 1, %v3380
  %v3382 = vrot.slane %v3328, %v3381
  %v3383 = vlaneseq
  %v3384 = vshrl.u32 %v3383, 7
  %v3385 = vsub.s32 0, %v3384
  %v3386 = vrot.slane %v3330, %v3385
  %v3387 = vlaneseq
  %v3388 = vshrl.u32 %v3387, 7
  %v3389 = vsub.s32 1, %v3388
  %v3390 = vrot.slane %v3330, %v3389
  %v3391 = vlaneseq
  %v3392 = vshrl.u32 %v3391, 7
  %v3393 = vsub.s32 0, %v3392
  %v3394 = vrot.slane %v3332, %v3393
  %v3395 = vlaneseq
  %v3396 = vshrl.u32 %v3395, 7
  %v3397 = vsub.s32 1, %v3396
  %v3398 = vrot.slane %v3332, %v3397
  %v3399 = vlaneseq
  %v3400 = vshrl.u32 %v3399, 7
  %v3401 = vsub.s32 0, %v3400
  %v3402 = vrot.slane %v3334, %v3401
  %v3403 = vlaneseq
  %v3404 = vshrl.u32 %v3403, 7
  %v3405 = vsub.s32 1, %v3404
  %v3406 = vrot.slane %v3334, %v3405
  %v3423 = vpack.c.bf16 %v3346, %v3346
  %v3424 = vpack.c.bf16 %v3350, %v3350
  %v3425 = vpack.c.bf16 %v3354, %v3354
  %v3426 = vpack.c.bf16 %v3358, %v3358
  %v3427 = vpack.c.bf16 %v3362, %v3362
  %v3428 = vpack.c.bf16 %v3366, %v3366
  %v3429 = vpack.c.bf16 %v3370, %v3370
  %v3430 = vpack.c.bf16 %v3374, %v3374
  %v3431 = vpack.c.bf16 %v3378, %v3378
  %v3432 = vpack.c.bf16 %v3382, %v3382
  %v3433 = vpack.c.bf16 %v3386, %v3386
  %v3434 = vpack.c.bf16 %v3390, %v3390
  %v3435 = vpack.c.bf16 %v3394, %v3394
  %v3436 = vpack.c.bf16 %v3398, %v3398
  %v3437 = vpack.c.bf16 %v3402, %v3402
  %v3438 = vpack.c.bf16 %v3406, %v3406
  %v3439 = vld [vmem:[%s5] sm:$0xf]
  %v3440 = vld [vmem:[%s5 + $0x4] sm:$0xf]
  %v3441 = vld [vmem:[%s5 + $0x8] sm:$0xf]
  %v3442 = vld [vmem:[%s5 + $0xc] sm:$0xf]
  %v3443 = vld [vmem:[%s5 + $0x10] sm:$0xf]
  %v3444 = vld [vmem:[%s5 + $0x14] sm:$0xf]
  %v3445 = vld [vmem:[%s5 + $0x18] sm:$0xf]
  %v3446 = vld [vmem:[%s5 + $0x1c] sm:$0xf]
  %v3447 = vld [vmem:[%s5 + $0x20] sm:$0xf]
  %v3448 = vld [vmem:[%s5 + $0x24] sm:$0xf]
  %v3449 = vld [vmem:[%s5 + $0x28] sm:$0xf]
  %v3450 = vld [vmem:[%s5 + $0x2c] sm:$0xf]
  %v3451 = vld [vmem:[%s5 + $0x30] sm:$0xf]
  %v3452 = vld [vmem:[%s5 + $0x34] sm:$0xf]
  %v3453 = vld [vmem:[%s5 + $0x38] sm:$0xf]
  %v3454 = vld [vmem:[%s5 + $0x3c] sm:$0xf]
  %v3455 = vld [vmem:[%s5 + $0x40] sm:$0xf]
  %v3456 = vld [vmem:[%s5 + $0x44] sm:$0xf]
  %v3457 = vld [vmem:[%s5 + $0x48] sm:$0xf]
  %v3458 = vld [vmem:[%s5 + $0x4c] sm:$0xf]
  %v3459 = vld [vmem:[%s5 + $0x50] sm:$0xf]
  %v3460 = vld [vmem:[%s5 + $0x54] sm:$0xf]
  %v3461 = vld [vmem:[%s5 + $0x58] sm:$0xf]
  %v3462 = vld [vmem:[%s5 + $0x5c] sm:$0xf]
  %v3463 = vld [vmem:[%s5 + $0x60] sm:$0xf]
  %v3464 = vld [vmem:[%s5 + $0x64] sm:$0xf]
  %v3465 = vld [vmem:[%s5 + $0x68] sm:$0xf]
  %v3466 = vld [vmem:[%s5 + $0x6c] sm:$0xf]
  %v3467 = vld [vmem:[%s5 + $0x70] sm:$0xf]
  %v3468 = vld [vmem:[%s5 + $0x74] sm:$0xf]
  %v3469 = vld [vmem:[%s5 + $0x78] sm:$0xf]
  %v3470 = vld [vmem:[%s5 + $0x7c] sm:$0xf]
  %s3471 = scalar_lea.vmem [#allocation2], 1
  %v3472 = vld [vmem:[%s3471] ss:$8 sm:$0x3]
  %s3473 = scalar_lea.vmem [#allocation2], 49
  %v3474 = vld [vmem:[%s3473] ss:$8 sm:$0x3]
  %s3475 = scalar_lea.vmem [#allocation2], 97
  %v3476 = vld [vmem:[%s3475] ss:$8 sm:$0x3]
  %s3477 = scalar_lea.vmem [#allocation2], 145
  %v3478 = vld [vmem:[%s3477] ss:$8 sm:$0x3]
  %s3479 = scalar_lea.vmem [#allocation2], 193
  %v3480 = vld [vmem:[%s3479] ss:$8 sm:$0x3]
  %s3481 = scalar_lea.vmem [#allocation2], 241
  %v3482 = vld [vmem:[%s3481] ss:$8 sm:$0x3]
  %s3483 = scalar_lea.vmem [#allocation2], 289
  %v3484 = vld [vmem:[%s3483] ss:$8 sm:$0x3]
  %s3485 = scalar_lea.vmem [#allocation2], 337
  %v3486 = vld [vmem:[%s3485] ss:$8 sm:$0x3]
  %v3495 = vlaneseq
  %v3496 = vshrl.u32 %v3495, 7
  %v3497 = vsub.s32 0, %v3496
  %v3498 = vrot.slane %v3472, %v3497
  %v3499 = vlaneseq
  %v3500 = vshrl.u32 %v3499, 7
  %v3501 = vsub.s32 1, %v3500
  %v3502 = vrot.slane %v3472, %v3501
  %v3503 = vlaneseq
  %v3504 = vshrl.u32 %v3503, 7
  %v3505 = vsub.s32 0, %v3504
  %v3506 = vrot.slane %v3474, %v3505
  %v3507 = vlaneseq
  %v3508 = vshrl.u32 %v3507, 7
  %v3509 = vsub.s32 1, %v3508
  %v3510 = vrot.slane %v3474, %v3509
  %v3511 = vlaneseq
  %v3512 = vshrl.u32 %v3511, 7
  %v3513 = vsub.s32 0, %v3512
  %v3514 = vrot.slane %v3476, %v3513
  %v3515 = vlaneseq
  %v3516 = vshrl.u32 %v3515, 7
  %v3517 = vsub.s32 1, %v3516
  %v3518 = vrot.slane %v3476, %v3517
  %v3519 = vlaneseq
  %v3520 = vshrl.u32 %v3519, 7
  %v3521 = vsub.s32 0, %v3520
  %v3522 = vrot.slane %v3478, %v3521
  %v3523 = vlaneseq
  %v3524 = vshrl.u32 %v3523, 7
  %v3525 = vsub.s32 1, %v3524
  %v3526 = vrot.slane %v3478, %v3525
  %v3527 = vlaneseq
  %v3528 = vshrl.u32 %v3527, 7
  %v3529 = vsub.s32 0, %v3528
  %v3530 = vrot.slane %v3480, %v3529
  %v3531 = vlaneseq
  %v3532 = vshrl.u32 %v3531, 7
  %v3533 = vsub.s32 1, %v3532
  %v3534 = vrot.slane %v3480, %v3533
  %v3535 = vlaneseq
  %v3536 = vshrl.u32 %v3535, 7
  %v3537 = vsub.s32 0, %v3536
  %v3538 = vrot.slane %v3482, %v3537
  %v3539 = vlaneseq
  %v3540 = vshrl.u32 %v3539, 7
  %v3541 = vsub.s32 1, %v3540
  %v3542 = vrot.slane %v3482, %v3541
  %v3543 = vlaneseq
  %v3544 = vshrl.u32 %v3543, 7
  %v3545 = vsub.s32 0, %v3544
  %v3546 = vrot.slane %v3484, %v3545
  %v3547 = vlaneseq
  %v3548 = vshrl.u32 %v3547, 7
  %v3549 = vsub.s32 1, %v3548
  %v3550 = vrot.slane %v3484, %v3549
  %v3551 = vlaneseq
  %v3552 = vshrl.u32 %v3551, 7
  %v3553 = vsub.s32 0, %v3552
  %v3554 = vrot.slane %v3486, %v3553
  %v3555 = vlaneseq
  %v3556 = vshrl.u32 %v3555, 7
  %v3557 = vsub.s32 1, %v3556
  %v3558 = vrot.slane %v3486, %v3557
  %v3575 = vpack.c.bf16 %v3498, %v3498
  %v3576 = vpack.c.bf16 %v3502, %v3502
  %v3577 = vpack.c.bf16 %v3506, %v3506
  %v3578 = vpack.c.bf16 %v3510, %v3510
  %v3579 = vpack.c.bf16 %v3514, %v3514
  %v3580 = vpack.c.bf16 %v3518, %v3518
  %v3581 = vpack.c.bf16 %v3522, %v3522
  %v3582 = vpack.c.bf16 %v3526, %v3526
  %v3583 = vpack.c.bf16 %v3530, %v3530
  %v3584 = vpack.c.bf16 %v3534, %v3534
  %v3585 = vpack.c.bf16 %v3538, %v3538
  %v3586 = vpack.c.bf16 %v3542, %v3542
  %v3587 = vpack.c.bf16 %v3546, %v3546
  %v3588 = vpack.c.bf16 %v3550, %v3550
  %v3589 = vpack.c.bf16 %v3554, %v3554
  %v3590 = vpack.c.bf16 %v3558, %v3558
  %s3591 = scalar_lea.vmem %s5, 128
  %v3592 = vld [vmem:[%s3591] sm:$0xf]
  %v3593 = vld [vmem:[%s3591 + $0x4] sm:$0xf]
  %v3594 = vld [vmem:[%s3591 + $0x8] sm:$0xf]
  %v3595 = vld [vmem:[%s3591 + $0xc] sm:$0xf]
  %v3596 = vld [vmem:[%s3591 + $0x10] sm:$0xf]
  %v3597 = vld [vmem:[%s3591 + $0x14] sm:$0xf]
  %v3598 = vld [vmem:[%s3591 + $0x18] sm:$0xf]
  %v3599 = vld [vmem:[%s3591 + $0x1c] sm:$0xf]
  %v3600 = vld [vmem:[%s3591 + $0x20] sm:$0xf]
  %v3601 = vld [vmem:[%s3591 + $0x24] sm:$0xf]
  %v3602 = vld [vmem:[%s3591 + $0x28] sm:$0xf]
  %v3603 = vld [vmem:[%s3591 + $0x2c] sm:$0xf]
  %v3604 = vld [vmem:[%s3591 + $0x30] sm:$0xf]
  %v3605 = vld [vmem:[%s3591 + $0x34] sm:$0xf]
  %v3606 = vld [vmem:[%s3591 + $0x38] sm:$0xf]
  %v3607 = vld [vmem:[%s3591 + $0x3c] sm:$0xf]
  %v3608 = vld [vmem:[%s3591 + $0x40] sm:$0xf]
  %v3609 = vld [vmem:[%s3591 + $0x44] sm:$0xf]
  %v3610 = vld [vmem:[%s3591 + $0x48] sm:$0xf]
  %v3611 = vld [vmem:[%s3591 + $0x4c] sm:$0xf]
  %v3612 = vld [vmem:[%s3591 + $0x50] sm:$0xf]
  %v3613 = vld [vmem:[%s3591 + $0x54] sm:$0xf]
  %v3614 = vld [vmem:[%s3591 + $0x58] sm:$0xf]
  %v3615 = vld [vmem:[%s3591 + $0x5c] sm:$0xf]
  %v3616 = vld [vmem:[%s3591 + $0x60] sm:$0xf]
  %v3617 = vld [vmem:[%s3591 + $0x64] sm:$0xf]
  %v3618 = vld [vmem:[%s3591 + $0x68] sm:$0xf]
  %v3619 = vld [vmem:[%s3591 + $0x6c] sm:$0xf]
  %v3620 = vld [vmem:[%s3591 + $0x70] sm:$0xf]
  %v3621 = vld [vmem:[%s3591 + $0x74] sm:$0xf]
  %v3622 = vld [vmem:[%s3591 + $0x78] sm:$0xf]
  %v3623 = vld [vmem:[%s3591 + $0x7c] sm:$0xf]
  %v3640 = vunpack.c.l.b16 %v3575
  %v3641 = vunpack.c.l.b16 %v3576
  %v3642 = vunpack.c.l.b16 %v3577
  %v3643 = vunpack.c.l.b16 %v3578
  %v3644 = vunpack.c.l.b16 %v3579
  %v3645 = vunpack.c.l.b16 %v3580
  %v3646 = vunpack.c.l.b16 %v3581
  %v3647 = vunpack.c.l.b16 %v3582
  %v3648 = vunpack.c.l.b16 %v3583
  %v3649 = vunpack.c.l.b16 %v3584
  %v3650 = vunpack.c.l.b16 %v3585
  %v3651 = vunpack.c.l.b16 %v3586
  %v3652 = vunpack.c.l.b16 %v3587
  %v3653 = vunpack.c.l.b16 %v3588
  %v3654 = vunpack.c.l.b16 %v3589
  %v3655 = vunpack.c.l.b16 %v3590
  %v3656 = vrot.slane %v3642, 7
  %vm3657 = vcmask 1041409
  %v3658 = vsel %vm3657, %v3656, %v3640
  %v3659 = vrot.slane %v3644, 6
  %vm3660 = vcmask 1042434
  %v3661 = vsel %vm3660, %v3659, %v3658
  %v3662 = vrot.slane %v3646, 5
  %vm3663 = vcmask 1043459
  %v3664 = vsel %vm3663, %v3662, %v3661
  %v3665 = vrot.slane %v3648, 4
  %vm3666 = vcmask 1044484
  %v3667 = vsel %vm3666, %v3665, %v3664
  %v3668 = vrot.slane %v3650, 3
  %vm3669 = vcmask 1045509
  %v3670 = vsel %vm3669, %v3668, %v3667
  %v3671 = vrot.slane %v3652, 2
  %vm3672 = vcmask 1046534
  %v3673 = vsel %vm3672, %v3671, %v3670
  %v3674 = vrot.slane %v3654, 1
  %vm3675 = vcmask 1047559
  %v3676 = vsel %vm3675, %v3674, %v3673
  %v3677 = vrot.slane %v3643, 7
  %v3678 = vsel %vm3657, %v3677, %v3641
  %v3679 = vrot.slane %v3645, 6
  %v3680 = vsel %vm3660, %v3679, %v3678
  %v3681 = vrot.slane %v3647, 5
  %v3682 = vsel %vm3663, %v3681, %v3680
  %v3683 = vrot.slane %v3649, 4
  %v3684 = vsel %vm3666, %v3683, %v3682
  %v3685 = vrot.slane %v3651, 3
  %v3686 = vsel %vm3669, %v3685, %v3684
  %v3687 = vrot.slane %v3653, 2
  %v3688 = vsel %vm3672, %v3687, %v3686
  %v3689 = vrot.slane %v3655, 1
  %v3690 = vsel %vm3675, %v3689, %v3688
  %v3691 = vpack.c.b16 %v3676, %v3676
  %v3692 = vpack.c.b16 %v3690, %v3690
  %v3727 = vunpack.c.l.b16 %v3592
  %v3728 = vunpack.c.l.b16 %v3593
  %v3729 = vunpack.c.l.b16 %v3594
  %v3730 = vunpack.c.l.b16 %v3595
  %v3731 = vunpack.c.l.b16 %v3596
  %v3732 = vunpack.c.l.b16 %v3597
  %v3733 = vunpack.c.l.b16 %v3598
  %v3734 = vunpack.c.l.b16 %v3599
  %v3735 = vunpack.c.l.b16 %v3600
  %v3736 = vunpack.c.l.b16 %v3601
  %v3737 = vunpack.c.l.b16 %v3602
  %v3738 = vunpack.c.l.b16 %v3603
  %v3739 = vunpack.c.l.b16 %v3604
  %v3740 = vunpack.c.l.b16 %v3605
  %v3741 = vunpack.c.l.b16 %v3606
  %v3742 = vunpack.c.l.b16 %v3607
  %v3743 = vunpack.c.l.b16 %v3608
  %v3744 = vunpack.c.l.b16 %v3609
  %v3745 = vunpack.c.l.b16 %v3610
  %v3746 = vunpack.c.l.b16 %v3611
  %v3747 = vunpack.c.l.b16 %v3612
  %v3748 = vunpack.c.l.b16 %v3613
  %v3749 = vunpack.c.l.b16 %v3614
  %v3750 = vunpack.c.l.b16 %v3615
  %v3751 = vunpack.c.l.b16 %v3616
  %v3752 = vunpack.c.l.b16 %v3617
  %v3753 = vunpack.c.l.b16 %v3618
  %v3754 = vunpack.c.l.b16 %v3619
  %v3755 = vunpack.c.l.b16 %v3620
  %v3756 = vunpack.c.l.b16 %v3621
  %v3757 = vunpack.c.l.b16 %v3622
  %v3758 = vunpack.c.l.b16 %v3623
  %v3759 = vpack.c.b16 %v3728, %v3727
  %v3760 = vpack.c.b16 %v3730, %v3729
  %v3761 = vpack.c.b16 %v3732, %v3731
  %v3762 = vpack.c.b16 %v3734, %v3733
  %v3763 = vpack.c.b16 %v3736, %v3735
  %v3764 = vpack.c.b16 %v3738, %v3737
  %v3765 = vpack.c.b16 %v3740, %v3739
  %v3766 = vpack.c.b16 %v3742, %v3741
  %v3767 = vpack.c.b16 %v3744, %v3743
  %v3768 = vpack.c.b16 %v3746, %v3745
  %v3769 = vpack.c.b16 %v3748, %v3747
  %v3770 = vpack.c.b16 %v3750, %v3749
  %v3771 = vpack.c.b16 %v3752, %v3751
  %v3772 = vpack.c.b16 %v3754, %v3753
  %v3773 = vpack.c.b16 %v3756, %v3755
  %v3774 = vpack.c.b16 %v3758, %v3757
  %3791 = vmatprep.subr.bf16.mxu0 0
  %3792 = vmatpush1.bf16.msra.mxu0 %v3759
  %3793 = vmatprep.subr.bf16.mxu0 0
  %3794 = vmatpush1.bf16.msra.mxu0 %v3760
  %3795 = vmatprep.subr.bf16.mxu0 0
  %3796 = vmatpush1.bf16.msra.mxu0 %v3761
  %3797 = vmatprep.subr.bf16.mxu0 0
  %3798 = vmatpush1.bf16.msra.mxu0 %v3762
  %3799 = vmatprep.subr.bf16.mxu0 0
  %3800 = vmatpush1.bf16.msra.mxu0 %v3763
  %3801 = vmatprep.subr.bf16.mxu0 0
  %3802 = vmatpush1.bf16.msra.mxu0 %v3764
  %3803 = vmatprep.subr.bf16.mxu0 0
  %3804 = vmatpush1.bf16.msra.mxu0 %v3765
  %3805 = vmatprep.subr.bf16.mxu0 0
  %3806 = vmatpush1.bf16.msra.mxu0 %v3766
  %3807 = vmatprep.subr.bf16.mxu0 0
  %3808 = vmatpush1.bf16.msra.mxu0 %v3767
  %3809 = vmatprep.subr.bf16.mxu0 0
  %3810 = vmatpush1.bf16.msra.mxu0 %v3768
  %3811 = vmatprep.subr.bf16.mxu0 0
  %3812 = vmatpush1.bf16.msra.mxu0 %v3769
  %3813 = vmatprep.subr.bf16.mxu0 0
  %3814 = vmatpush1.bf16.msra.mxu0 %v3770
  %3815 = vmatprep.subr.bf16.mxu0 0
  %3816 = vmatpush1.bf16.msra.mxu0 %v3771
  %3817 = vmatprep.subr.bf16.mxu0 0
  %3818 = vmatpush1.bf16.msra.mxu0 %v3772
  %3819 = vmatprep.subr.bf16.mxu0 0
  %3820 = vmatpush1.bf16.msra.mxu0 %v3773
  %3821 = vmatprep.subr.bf16.mxu0 0
  %3822 = vmatpush1.bf16.msra.mxu0 %v3774
  %3823 = vmatprep.mubr.bf16.mxu0 %v3692
  %3824 = vmatmul.mubr.bf16.gmra.mrb[0].mxu0 %v3691
  %v3825 = vpop.f32.mrb[0].mxu0
  %v3826 = vadd.f32 0.0, %v3825
  %v3827 = vpop.f32.mrb[0].mxu0
  %v3828 = vpop.f32.mrb[0].mxu0
  %v3829 = vpop.f32.mrb[0].mxu0
  %3830 = vdwg.mxu0
  %v3847 = vunpack.c.l.b16 %v3423
  %v3848 = vunpack.c.l.b16 %v3424
  %v3849 = vunpack.c.l.b16 %v3425
  %v3850 = vunpack.c.l.b16 %v3426
  %v3851 = vunpack.c.l.b16 %v3427
  %v3852 = vunpack.c.l.b16 %v3428
  %v3853 = vunpack.c.l.b16 %v3429
  %v3854 = vunpack.c.l.b16 %v3430
  %v3855 = vunpack.c.l.b16 %v3431
  %v3856 = vunpack.c.l.b16 %v3432
  %v3857 = vunpack.c.l.b16 %v3433
  %v3858 = vunpack.c.l.b16 %v3434
  %v3859 = vunpack.c.l.b16 %v3435
  %v3860 = vunpack.c.l.b16 %v3436
  %v3861 = vunpack.c.l.b16 %v3437
  %v3862 = vunpack.c.l.b16 %v3438
  %v3863 = vrot.slane %v3849, 7
  %v3864 = vsel %vm3657, %v3863, %v3847
  %v3865 = vrot.slane %v3851, 6
  %v3866 = vsel %vm3660, %v3865, %v3864
  %v3867 = vrot.slane %v3853, 5
  %v3868 = vsel %vm3663, %v3867, %v3866
  %v3869 = vrot.slane %v3855, 4
  %v3870 = vsel %vm3666, %v3869, %v3868
  %v3871 = vrot.slane %v3857, 3
  %v3872 = vsel %vm3669, %v3871, %v3870
  %v3873 = vrot.slane %v3859, 2
  %v3874 = vsel %vm3672, %v3873, %v3872
  %v3875 = vrot.slane %v3861, 1
  %v3876 = vsel %vm3675, %v3875, %v3874
  %v3877 = vrot.slane %v3850, 7
  %v3878 = vsel %vm3657, %v3877, %v3848
  %v3879 = vrot.slane %v3852, 6
  %v3880 = vsel %vm3660, %v3879, %v3878
  %v3881 = vrot.slane %v3854, 5
  %v3882 = vsel %vm3663, %v3881, %v3880
  %v3883 = vrot.slane %v3856, 4
  %v3884 = vsel %vm3666, %v3883, %v3882
  %v3885 = vrot.slane %v3858, 3
  %v3886 = vsel %vm3669, %v3885, %v3884
  %v3887 = vrot.slane %v3860, 2
  %v3888 = vsel %vm3672, %v3887, %v3886
  %v3889 = vrot.slane %v3862, 1
  %v3890 = vsel %vm3675, %v3889, %v3888
  %v3891 = vpack.c.b16 %v3876, %v3876
  %v3892 = vpack.c.b16 %v3890, %v3890
  %v3927 = vunpack.c.l.b16 %v3439
  %v3928 = vunpack.c.l.b16 %v3440
  %v3929 = vunpack.c.l.b16 %v3441
  %v3930 = vunpack.c.l.b16 %v3442
  %v3931 = vunpack.c.l.b16 %v3443
  %v3932 = vunpack.c.l.b16 %v3444
  %v3933 = vunpack.c.l.b16 %v3445
  %v3934 = vunpack.c.l.b16 %v3446
  %v3935 = vunpack.c.l.b16 %v3447
  %v3936 = vunpack.c.l.b16 %v3448
  %v3937 = vunpack.c.l.b16 %v3449
  %v3938 = vunpack.c.l.b16 %v3450
  %v3939 = vunpack.c.l.b16 %v3451
  %v3940 = vunpack.c.l.b16 %v3452
  %v3941 = vunpack.c.l.b16 %v3453
  %v3942 = vunpack.c.l.b16 %v3454
  %v3943 = vunpack.c.l.b16 %v3455
  %v3944 = vunpack.c.l.b16 %v3456
  %v3945 = vunpack.c.l.b16 %v3457
  %v3946 = vunpack.c.l.b16 %v3458
  %v3947 = vunpack.c.l.b16 %v3459
  %v3948 = vunpack.c.l.b16 %v3460
  %v3949 = vunpack.c.l.b16 %v3461
  %v3950 = vunpack.c.l.b16 %v3462
  %v3951 = vunpack.c.l.b16 %v3463
  %v3952 = vunpack.c.l.b16 %v3464
  %v3953 = vunpack.c.l.b16 %v3465
  %v3954 = vunpack.c.l.b16 %v3466
  %v3955 = vunpack.c.l.b16 %v3467
  %v3956 = vunpack.c.l.b16 %v3468
  %v3957 = vunpack.c.l.b16 %v3469
  %v3958 = vunpack.c.l.b16 %v3470
  %v3959 = vpack.c.b16 %v3928, %v3927
  %v3960 = vpack.c.b16 %v3930, %v3929
  %v3961 = vpack.c.b16 %v3932, %v3931
  %v3962 = vpack.c.b16 %v3934, %v3933
  %v3963 = vpack.c.b16 %v3936, %v3935
  %v3964 = vpack.c.b16 %v3938, %v3937
  %v3965 = vpack.c.b16 %v3940, %v3939
  %v3966 = vpack.c.b16 %v3942, %v3941
  %v3967 = vpack.c.b16 %v3944, %v3943
  %v3968 = vpack.c.b16 %v3946, %v3945
  %v3969 = vpack.c.b16 %v3948, %v3947
  %v3970 = vpack.c.b16 %v3950, %v3949
  %v3971 = vpack.c.b16 %v3952, %v3951
  %v3972 = vpack.c.b16 %v3954, %v3953
  %v3973 = vpack.c.b16 %v3956, %v3955
  %v3974 = vpack.c.b16 %v3958, %v3957
  %3991 = vmatprep.subr.bf16.mxu0 0
  %3992 = vmatpush1.bf16.msra.mxu0 %v3959
  %3993 = vmatprep.subr.bf16.mxu0 0
  %3994 = vmatpush1.bf16.msra.mxu0 %v3960
  %3995 = vmatprep.subr.bf16.mxu0 0
  %3996 = vmatpush1.bf16.msra.mxu0 %v3961
  %3997 = vmatprep.subr.bf16.mxu0 0
  %3998 = vmatpush1.bf16.msra.mxu0 %v3962
  %3999 = vmatprep.subr.bf16.mxu0 0
  %4000 = vmatpush1.bf16.msra.mxu0 %v3963
  %4001 = vmatprep.subr.bf16.mxu0 0
  %4002 = vmatpush1.bf16.msra.mxu0 %v3964
  %4003 = vmatprep.subr.bf16.mxu0 0
  %4004 = vmatpush1.bf16.msra.mxu0 %v3965
  %4005 = vmatprep.subr.bf16.mxu0 0
  %4006 = vmatpush1.bf16.msra.mxu0 %v3966
  %4007 = vmatprep.subr.bf16.mxu0 0
  %4008 = vmatpush1.bf16.msra.mxu0 %v3967
  %4009 = vmatprep.subr.bf16.mxu0 0
  %4010 = vmatpush1.bf16.msra.mxu0 %v3968
  %4011 = vmatprep.subr.bf16.mxu0 0
  %4012 = vmatpush1.bf16.msra.mxu0 %v3969
  %4013 = vmatprep.subr.bf16.mxu0 0
  %4014 = vmatpush1.bf16.msra.mxu0 %v3970
  %4015 = vmatprep.subr.bf16.mxu0 0
  %4016 = vmatpush1.bf16.msra.mxu0 %v3971
  %4017 = vmatprep.subr.bf16.mxu0 0
  %4018 = vmatpush1.bf16.msra.mxu0 %v3972
  %4019 = vmatprep.subr.bf16.mxu0 0
  %4020 = vmatpush1.bf16.msra.mxu0 %v3973
  %4021 = vmatprep.subr.bf16.mxu0 0
  %4022 = vmatpush1.bf16.msra.mxu0 %v3974
  %4023 = vmatprep.mubr.bf16.mxu0 %v3892
  %4024 = vmatmul.mubr.bf16.gmra.mrb[0].mxu0 %v3891
  %v4025 = vpop.f32.mrb[0].mxu0
  %v4026 = vadd.f32 %v3826, %v4025
  %v4027 = vpop.f32.mrb[0].mxu0
  %v4028 = vpop.f32.mrb[0].mxu0
  %v4029 = vpop.f32.mrb[0].mxu0
  %4030 = vdwg.mxu0
  %s4031 = scalar_lea.vmem [#allocation2], 2
  %v4032 = vld [vmem:[%s4031] ss:$8 sm:$0x3]
  %s4033 = scalar_lea.vmem [#allocation2], 50
  %v4034 = vld [vmem:[%s4033] ss:$8 sm:$0x3]
  %s4035 = scalar_lea.vmem [#allocation2], 98
  %v4036 = vld [vmem:[%s4035] ss:$8 sm:$0x3]
  %s4037 = scalar_lea.vmem [#allocation2], 146
  %v4038 = vld [vmem:[%s4037] ss:$8 sm:$0x3]
  %s4039 = scalar_lea.vmem [#allocation2], 194
  %v4040 = vld [vmem:[%s4039] ss:$8 sm:$0x3]
  %s4041 = scalar_lea.vmem [#allocation2], 242
  %v4042 = vld [vmem:[%s4041] ss:$8 sm:$0x3]
  %s4043 = scalar_lea.vmem [#allocation2], 290
  %v4044 = vld [vmem:[%s4043] ss:$8 sm:$0x3]
  %s4045 = scalar_lea.vmem [#allocation2], 338
  %v4046 = vld [vmem:[%s4045] ss:$8 sm:$0x3]
  %v4055 = vlaneseq
  %v4056 = vshrl.u32 %v4055, 7
  %v4057 = vsub.s32 0, %v4056
  %v4058 = vrot.slane %v4032, %v4057
  %v4059 = vlaneseq
  %v4060 = vshrl.u32 %v4059, 7
  %v4061 = vsub.s32 1, %v4060
  %v4062 = vrot.slane %v4032, %v4061
  %v4063 = vlaneseq
  %v4064 = vshrl.u32 %v4063, 7
  %v4065 = vsub.s32 0, %v4064
  %v4066 = vrot.slane %v4034, %v4065
  %v4067 = vlaneseq
  %v4068 = vshrl.u32 %v4067, 7
  %v4069 = vsub.s32 1, %v4068
  %v4070 = vrot.slane %v4034, %v4069
  %v4071 = vlaneseq
  %v4072 = vshrl.u32 %v4071, 7
  %v4073 = vsub.s32 0, %v4072
  %v4074 = vrot.slane %v4036, %v4073
  %v4075 = vlaneseq
  %v4076 = vshrl.u32 %v4075, 7
  %v4077 = vsub.s32 1, %v4076
  %v4078 = vrot.slane %v4036, %v4077
  %v4079 = vlaneseq
  %v4080 = vshrl.u32 %v4079, 7
  %v4081 = vsub.s32 0, %v4080
  %v4082 = vrot.slane %v4038, %v4081
  %v4083 = vlaneseq
  %v4084 = vshrl.u32 %v4083, 7
  %v4085 = vsub.s32 1, %v4084
  %v4086 = vrot.slane %v4038, %v4085
  %v4087 = vlaneseq
  %v4088 = vshrl.u32 %v4087, 7
  %v4089 = vsub.s32 0, %v4088
  %v4090 = vrot.slane %v4040, %v4089
  %v4091 = vlaneseq
  %v4092 = vshrl.u32 %v4091, 7
  %v4093 = vsub.s32 1, %v4092
  %v4094 = vrot.slane %v4040, %v4093
  %v4095 = vlaneseq
  %v4096 = vshrl.u32 %v4095, 7
  %v4097 = vsub.s32 0, %v4096
  %v4098 = vrot.slane %v4042, %v4097
  %v4099 = vlaneseq
  %v4100 = vshrl.u32 %v4099, 7
  %v4101 = vsub.s32 1, %v4100
  %v4102 = vrot.slane %v4042, %v4101
  %v4103 = vlaneseq
  %v4104 = vshrl.u32 %v4103, 7
  %v4105 = vsub.s32 0, %v4104
  %v4106 = vrot.slane %v4044, %v4105
  %v4107 = vlaneseq
  %v4108 = vshrl.u32 %v4107, 7
  %v4109 = vsub.s32 1, %v4108
  %v4110 = vrot.slane %v4044, %v4109
  %v4111 = vlaneseq
  %v4112 = vshrl.u32 %v4111, 7
  %v4113 = vsub.s32 0, %v4112
  %v4114 = vrot.slane %v4046, %v4113
  %v4115 = vlaneseq
  %v4116 = vshrl.u32 %v4115, 7
  %v4117 = vsub.s32 1, %v4116
  %v4118 = vrot.slane %v4046, %v4117
  %v4135 = vpack.c.bf16 %v4058, %v4058
  %v4136 = vpack.c.bf16 %v4062, %v4062
  %v4137 = vpack.c.bf16 %v4066, %v4066
  %v4138 = vpack.c.bf16 %v4070, %v4070
  %v4139 = vpack.c.bf16 %v4074, %v4074
  %v4140 = vpack.c.bf16 %v4078, %v4078
  %v4141 = vpack.c.bf16 %v4082, %v4082
  %v4142 = vpack.c.bf16 %v4086, %v4086
  %v4143 = vpack.c.bf16 %v4090, %v4090
  %v4144 = vpack.c.bf16 %v4094, %v4094
  %v4145 = vpack.c.bf16 %v4098, %v4098
  %v4146 = vpack.c.bf16 %v4102, %v4102
  %v4147 = vpack.c.bf16 %v4106, %v4106
  %v4148 = vpack.c.bf16 %v4110, %v4110
  %v4149 = vpack.c.bf16 %v4114, %v4114
  %v4150 = vpack.c.bf16 %v4118, %v4118
  %s4151 = scalar_lea.vmem %s5, 256
  %v4152 = vld [vmem:[%s4151] sm:$0xf]
  %v4153 = vld [vmem:[%s4151 + $0x4] sm:$0xf]
  %v4154 = vld [vmem:[%s4151 + $0x8] sm:$0xf]
  %v4155 = vld [vmem:[%s4151 + $0xc] sm:$0xf]
  %v4156 = vld [vmem:[%s4151 + $0x10] sm:$0xf]
  %v4157 = vld [vmem:[%s4151 + $0x14] sm:$0xf]
  %v4158 = vld [vmem:[%s4151 + $0x18] sm:$0xf]
  %v4159 = vld [vmem:[%s4151 + $0x1c] sm:$0xf]
  %v4160 = vld [vmem:[%s4151 + $0x20] sm:$0xf]
  %v4161 = vld [vmem:[%s4151 + $0x24] sm:$0xf]
  %v4162 = vld [vmem:[%s4151 + $0x28] sm:$0xf]
  %v4163 = vld [vmem:[%s4151 + $0x2c] sm:$0xf]
  %v4164 = vld [vmem:[%s4151 + $0x30] sm:$0xf]
  %v4165 = vld [vmem:[%s4151 + $0x34] sm:$0xf]
  %v4166 = vld [vmem:[%s4151 + $0x38] sm:$0xf]
  %v4167 = vld [vmem:[%s4151 + $0x3c] sm:$0xf]
  %v4168 = vld [vmem:[%s4151 + $0x40] sm:$0xf]
  %v4169 = vld [vmem:[%s4151 + $0x44] sm:$0xf]
  %v4170 = vld [vmem:[%s4151 + $0x48] sm:$0xf]
  %v4171 = vld [vmem:[%s4151 + $0x4c] sm:$0xf]
  %v4172 = vld [vmem:[%s4151 + $0x50] sm:$0xf]
  %v4173 = vld [vmem:[%s4151 + $0x54] sm:$0xf]
  %v4174 = vld [vmem:[%s4151 + $0x58] sm:$0xf]
  %v4175 = vld [vmem:[%s4151 + $0x5c] sm:$0xf]
  %v4176 = vld [vmem:[%s4151 + $0x60] sm:$0xf]
  %v4177 = vld [vmem:[%s4151 + $0x64] sm:$0xf]
  %v4178 = vld [vmem:[%s4151 + $0x68] sm:$0xf]
  %v4179 = vld [vmem:[%s4151 + $0x6c] sm:$0xf]
  %v4180 = vld [vmem:[%s4151 + $0x70] sm:$0xf]
  %v4181 = vld [vmem:[%s4151 + $0x74] sm:$0xf]
  %v4182 = vld [vmem:[%s4151 + $0x78] sm:$0xf]
  %v4183 = vld [vmem:[%s4151 + $0x7c] sm:$0xf]
  %v4200 = vunpack.c.l.b16 %v4135
  %v4201 = vunpack.c.l.b16 %v4136
  %v4202 = vunpack.c.l.b16 %v4137
  %v4203 = vunpack.c.l.b16 %v4138
  %v4204 = vunpack.c.l.b16 %v4139
  %v4205 = vunpack.c.l.b16 %v4140
  %v4206 = vunpack.c.l.b16 %v4141
  %v4207 = vunpack.c.l.b16 %v4142
  %v4208 = vunpack.c.l.b16 %v4143
  %v4209 = vunpack.c.l.b16 %v4144
  %v4210 = vunpack.c.l.b16 %v4145
  %v4211 = vunpack.c.l.b16 %v4146
  %v4212 = vunpack.c.l.b16 %v4147
  %v4213 = vunpack.c.l.b16 %v4148
  %v4214 = vunpack.c.l.b16 %v4149
  %v4215 = vunpack.c.l.b16 %v4150
  %v4216 = vrot.slane %v4202, 7
  %v4217 = vsel %vm3657, %v4216, %v4200
  %v4218 = vrot.slane %v4204, 6
  %v4219 = vsel %vm3660, %v4218, %v4217
  %v4220 = vrot.slane %v4206, 5
  %v4221 = vsel %vm3663, %v4220, %v4219
  %v4222 = vrot.slane %v4208, 4
  %v4223 = vsel %vm3666, %v4222, %v4221
  %v4224 = vrot.slane %v4210, 3
  %v4225 = vsel %vm3669, %v4224, %v4223
  %v4226 = vrot.slane %v4212, 2
  %v4227 = vsel %vm3672, %v4226, %v4225
  %v4228 = vrot.slane %v4214, 1
  %v4229 = vsel %vm3675, %v4228, %v4227
  %v4230 = vrot.slane %v4203, 7
  %v4231 = vsel %vm3657, %v4230, %v4201
  %v4232 = vrot.slane %v4205, 6
  %v4233 = vsel %vm3660, %v4232, %v4231
  %v4234 = vrot.slane %v4207, 5
  %v4235 = vsel %vm3663, %v4234, %v4233
  %v4236 = vrot.slane %v4209, 4
  %v4237 = vsel %vm3666, %v4236, %v4235
  %v4238 = vrot.slane %v4211, 3
  %v4239 = vsel %vm3669, %v4238, %v4237
  %v4240 = vrot.slane %v4213, 2
  %v4241 = vsel %vm3672, %v4240, %v4239
  %v4242 = vrot.slane %v4215, 1
  %v4243 = vsel %vm3675, %v4242, %v4241
  %v4244 = vpack.c.b16 %v4229, %v4229
  %v4245 = vpack.c.b16 %v4243, %v4243
  %v4280 = vunpack.c.l.b16 %v4152
  %v4281 = vunpack.c.l.b16 %v4153
  %v4282 = vunpack.c.l.b16 %v4154
  %v4283 = vunpack.c.l.b16 %v4155
  %v4284 = vunpack.c.l.b16 %v4156
  %v4285 = vunpack.c.l.b16 %v4157
  %v4286 = vunpack.c.l.b16 %v4158
  %v4287 = vunpack.c.l.b16 %v4159
  %v4288 = vunpack.c.l.b16 %v4160
  %v4289 = vunpack.c.l.b16 %v4161
  %v4290 = vunpack.c.l.b16 %v4162
  %v4291 = vunpack.c.l.b16 %v4163
  %v4292 = vunpack.c.l.b16 %v4164
  %v4293 = vunpack.c.l.b16 %v4165
  %v4294 = vunpack.c.l.b16 %v4166
  %v4295 = vunpack.c.l.b16 %v4167
  %v4296 = vunpack.c.l.b16 %v4168
  %v4297 = vunpack.c.l.b16 %v4169
  %v4298 = vunpack.c.l.b16 %v4170
  %v4299 = vunpack.c.l.b16 %v4171
  %v4300 = vunpack.c.l.b16 %v4172
  %v4301 = vunpack.c.l.b16 %v4173
  %v4302 = vunpack.c.l.b16 %v4174
  %v4303 = vunpack.c.l.b16 %v4175
  %v4304 = vunpack.c.l.b16 %v4176
  %v4305 = vunpack.c.l.b16 %v4177
  %v4306 = vunpack.c.l.b16 %v4178
  %v4307 = vunpack.c.l.b16 %v4179
  %v4308 = vunpack.c.l.b16 %v4180
  %v4309 = vunpack.c.l.b16 %v4181
  %v4310 = vunpack.c.l.b16 %v4182
  %v4311 = vunpack.c.l.b16 %v4183
  %v4312 = vpack.c.b16 %v4281, %v4280
  %v4313 = vpack.c.b16 %v4283, %v4282
  %v4314 = vpack.c.b16 %v4285, %v4284
  %v4315 = vpack.c.b16 %v4287, %v4286
  %v4316 = vpack.c.b16 %v4289, %v4288
  %v4317 = vpack.c.b16 %v4291, %v4290
  %v4318 = vpack.c.b16 %v4293, %v4292
  %v4319 = vpack.c.b16 %v4295, %v4294
  %v4320 = vpack.c.b16 %v4297, %v4296
  %v4321 = vpack.c.b16 %v4299, %v4298
  %v4322 = vpack.c.b16 %v4301, %v4300
  %v4323 = vpack.c.b16 %v4303, %v4302
  %v4324 = vpack.c.b16 %v4305, %v4304
  %v4325 = vpack.c.b16 %v4307, %v4306
  %v4326 = vpack.c.b16 %v4309, %v4308
  %v4327 = vpack.c.b16 %v4311, %v4310
  %4344 = vmatprep.subr.bf16.mxu0 0
  %4345 = vmatpush1.bf16.msra.mxu0 %v4312
  %4346 = vmatprep.subr.bf16.mxu0 0
  %4347 = vmatpush1.bf16.msra.mxu0 %v4313
  %4348 = vmatprep.subr.bf16.mxu0 0
  %4349 = vmatpush1.bf16.msra.mxu0 %v4314
  %4350 = vmatprep.subr.bf16.mxu0 0
  %4351 = vmatpush1.bf16.msra.mxu0 %v4315
  %4352 = vmatprep.subr.bf16.mxu0 0
  %4353 = vmatpush1.bf16.msra.mxu0 %v4316
  %4354 = vmatprep.subr.bf16.mxu0 0
  %4355 = vmatpush1.bf16.msra.mxu0 %v4317
  %4356 = vmatprep.subr.bf16.mxu0 0
  %4357 = vmatpush1.bf16.msra.mxu0 %v4318
  %4358 = vmatprep.subr.bf16.mxu0 0
  %4359 = vmatpush1.bf16.msra.mxu0 %v4319
  %4360 = vmatprep.subr.bf16.mxu0 0
  %4361 = vmatpush1.bf16.msra.mxu0 %v4320
  %4362 = vmatprep.subr.bf16.mxu0 0
  %4363 = vmatpush1.bf16.msra.mxu0 %v4321
  %4364 = vmatprep.subr.bf16.mxu0 0
  %4365 = vmatpush1.bf16.msra.mxu0 %v4322
  %4366 = vmatprep.subr.bf16.mxu0 0
  %4367 = vmatpush1.bf16.msra.mxu0 %v4323
  %4368 = vmatprep.subr.bf16.mxu0 0
  %4369 = vmatpush1.bf16.msra.mxu0 %v4324
  %4370 = vmatprep.subr.bf16.mxu0 0
  %4371 = vmatpush1.bf16.msra.mxu0 %v4325
  %4372 = vmatprep.subr.bf16.mxu0 0
  %4373 = vmatpush1.bf16.msra.mxu0 %v4326
  %4374 = vmatprep.subr.bf16.mxu0 0
  %4375 = vmatpush1.bf16.msra.mxu0 %v4327
  %4376 = vmatprep.mubr.bf16.mxu0 %v4245
  %4377 = vmatmul.mubr.bf16.gmra.mrb[0].mxu0 %v4244
  %v4378 = vpop.f32.mrb[0].mxu0
  %v4379 = vadd.f32 0.0, %v4378
  %v4380 = vpop.f32.mrb[0].mxu0
  %v4381 = vpop.f32.mrb[0].mxu0
  %v4382 = vpop.f32.mrb[0].mxu0
  %4383 = vdwg.mxu0
  %v4384 = vadd.f32 %v4026, %v4379
  %s4385 = scalar_lea.vmem [#allocation2], 3
  %v4386 = vld [vmem:[%s4385] ss:$8 sm:$0x3]
  %s4387 = scalar_lea.vmem [#allocation2], 51
  %v4388 = vld [vmem:[%s4387] ss:$8 sm:$0x3]
  %s4389 = scalar_lea.vmem [#allocation2], 99
  %v4390 = vld [vmem:[%s4389] ss:$8 sm:$0x3]
  %s4391 = scalar_lea.vmem [#allocation2], 147
  %v4392 = vld [vmem:[%s4391] ss:$8 sm:$0x3]
  %s4393 = scalar_lea.vmem [#allocation2], 195
  %v4394 = vld [vmem:[%s4393] ss:$8 sm:$0x3]
  %s4395 = scalar_lea.vmem [#allocation2], 243
  %v4396 = vld [vmem:[%s4395] ss:$8 sm:$0x3]
  %s4397 = scalar_lea.vmem [#allocation2], 291
  %v4398 = vld [vmem:[%s4397] ss:$8 sm:$0x3]
  %s4399 = scalar_lea.vmem [#allocation2], 339
  %v4400 = vld [vmem:[%s4399] ss:$8 sm:$0x3]
  %v4409 = vlaneseq
  %v4410 = vshrl.u32 %v4409, 7
  %v4411 = vsub.s32 0, %v4410
  %v4412 = vrot.slane %v4386, %v4411
  %v4413 = vlaneseq
  %v4414 = vshrl.u32 %v4413, 7
  %v4415 = vsub.s32 1, %v4414
  %v4416 = vrot.slane %v4386, %v4415
  %v4417 = vlaneseq
  %v4418 = vshrl.u32 %v4417, 7
  %v4419 = vsub.s32 0, %v4418
  %v4420 = vrot.slane %v4388, %v4419
  %v4421 = vlaneseq
  %v4422 = vshrl.u32 %v4421, 7
  %v4423 = vsub.s32 1, %v4422
  %v4424 = vrot.slane %v4388, %v4423
  %v4425 = vlaneseq
  %v4426 = vshrl.u32 %v4425, 7
  %v4427 = vsub.s32 0, %v4426
  %v4428 = vrot.slane %v4390, %v4427
  %v4429 = vlaneseq
  %v4430 = vshrl.u32 %v4429, 7
  %v4431 = vsub.s32 1, %v4430
  %v4432 = vrot.slane %v4390, %v4431
  %v4433 = vlaneseq
  %v4434 = vshrl.u32 %v4433, 7
  %v4435 = vsub.s32 0, %v4434
  %v4436 = vrot.slane %v4392, %v4435
  %v4437 = vlaneseq
  %v4438 = vshrl.u32 %v4437, 7
  %v4439 = vsub.s32 1, %v4438
  %v4440 = vrot.slane %v4392, %v4439
  %v4441 = vlaneseq
  %v4442 = vshrl.u32 %v4441, 7
  %v4443 = vsub.s32 0, %v4442
  %v4444 = vrot.slane %v4394, %v4443
  %v4445 = vlaneseq
  %v4446 = vshrl.u32 %v4445, 7
  %v4447 = vsub.s32 1, %v4446
  %v4448 = vrot.slane %v4394, %v4447
  %v4449 = vlaneseq
  %v4450 = vshrl.u32 %v4449, 7
  %v4451 = vsub.s32 0, %v4450
  %v4452 = vrot.slane %v4396, %v4451
  %v4453 = vlaneseq
  %v4454 = vshrl.u32 %v4453, 7
  %v4455 = vsub.s32 1, %v4454
  %v4456 = vrot.slane %v4396, %v4455
  %v4457 = vlaneseq
  %v4458 = vshrl.u32 %v4457, 7
  %v4459 = vsub.s32 0, %v4458
  %v4460 = vrot.slane %v4398, %v4459
  %v4461 = vlaneseq
  %v4462 = vshrl.u32 %v4461, 7
  %v4463 = vsub.s32 1, %v4462
  %v4464 = vrot.slane %v4398, %v4463
  %v4465 = vlaneseq
  %v4466 = vshrl.u32 %v4465, 7
  %v4467 = vsub.s32 0, %v4466
  %v4468 = vrot.slane %v4400, %v4467
  %v4469 = vlaneseq
  %v4470 = vshrl.u32 %v4469, 7
  %v4471 = vsub.s32 1, %v4470
  %v4472 = vrot.slane %v4400, %v4471
  %v4489 = vpack.c.bf16 %v4412, %v4412
  %v4490 = vpack.c.bf16 %v4416, %v4416
  %v4491 = vpack.c.bf16 %v4420, %v4420
  %v4492 = vpack.c.bf16 %v4424, %v4424
  %v4493 = vpack.c.bf16 %v4428, %v4428
  %v4494 = vpack.c.bf16 %v4432, %v4432
  %v4495 = vpack.c.bf16 %v4436, %v4436
  %v4496 = vpack.c.bf16 %v4440, %v4440
  %v4497 = vpack.c.bf16 %v4444, %v4444
  %v4498 = vpack.c.bf16 %v4448, %v4448
  %v4499 = vpack.c.bf16 %v4452, %v4452
  %v4500 = vpack.c.bf16 %v4456, %v4456
  %v4501 = vpack.c.bf16 %v4460, %v4460
  %v4502 = vpack.c.bf16 %v4464, %v4464
  %v4503 = vpack.c.bf16 %v4468, %v4468
  %v4504 = vpack.c.bf16 %v4472, %v4472
  %s4505 = scalar_lea.vmem %s5, 384
  %v4506 = vld [vmem:[%s4505] sm:$0xf]
  %v4507 = vld [vmem:[%s4505 + $0x4] sm:$0xf]
  %v4508 = vld [vmem:[%s4505 + $0x8] sm:$0xf]
  %v4509 = vld [vmem:[%s4505 + $0xc] sm:$0xf]
  %v4510 = vld [vmem:[%s4505 + $0x10] sm:$0xf]
  %v4511 = vld [vmem:[%s4505 + $0x14] sm:$0xf]
  %v4512 = vld [vmem:[%s4505 + $0x18] sm:$0xf]
  %v4513 = vld [vmem:[%s4505 + $0x1c] sm:$0xf]
  %v4514 = vld [vmem:[%s4505 + $0x20] sm:$0xf]
  %v4515 = vld [vmem:[%s4505 + $0x24] sm:$0xf]
  %v4516 = vld [vmem:[%s4505 + $0x28] sm:$0xf]
  %v4517 = vld [vmem:[%s4505 + $0x2c] sm:$0xf]
  %v4518 = vld [vmem:[%s4505 + $0x30] sm:$0xf]
  %v4519 = vld [vmem:[%s4505 + $0x34] sm:$0xf]
  %v4520 = vld [vmem:[%s4505 + $0x38] sm:$0xf]
  %v4521 = vld [vmem:[%s4505 + $0x3c] sm:$0xf]
  %v4522 = vld [vmem:[%s4505 + $0x40] sm:$0xf]
  %v4523 = vld [vmem:[%s4505 + $0x44] sm:$0xf]
  %v4524 = vld [vmem:[%s4505 + $0x48] sm:$0xf]
  %v4525 = vld [vmem:[%s4505 + $0x4c] sm:$0xf]
  %v4526 = vld [vmem:[%s4505 + $0x50] sm:$0xf]
  %v4527 = vld [vmem:[%s4505 + $0x54] sm:$0xf]
  %v4528 = vld [vmem:[%s4505 + $0x58] sm:$0xf]
  %v4529 = vld [vmem:[%s4505 + $0x5c] sm:$0xf]
  %v4530 = vld [vmem:[%s4505 + $0x60] sm:$0xf]
  %v4531 = vld [vmem:[%s4505 + $0x64] sm:$0xf]
  %v4532 = vld [vmem:[%s4505 + $0x68] sm:$0xf]
  %v4533 = vld [vmem:[%s4505 + $0x6c] sm:$0xf]
  %v4534 = vld [vmem:[%s4505 + $0x70] sm:$0xf]
  %v4535 = vld [vmem:[%s4505 + $0x74] sm:$0xf]
  %v4536 = vld [vmem:[%s4505 + $0x78] sm:$0xf]
  %v4537 = vld [vmem:[%s4505 + $0x7c] sm:$0xf]
  %v4554 = vunpack.c.l.b16 %v4489
  %v4555 = vunpack.c.l.b16 %v4490
  %v4556 = vunpack.c.l.b16 %v4491
  %v4557 = vunpack.c.l.b16 %v4492
  %v4558 = vunpack.c.l.b16 %v4493
  %v4559 = vunpack.c.l.b16 %v4494
  %v4560 = vunpack.c.l.b16 %v4495
  %v4561 = vunpack.c.l.b16 %v4496
  %v4562 = vunpack.c.l.b16 %v4497
  %v4563 = vunpack.c.l.b16 %v4498
  %v4564 = vunpack.c.l.b16 %v4499
  %v4565 = vunpack.c.l.b16 %v4500
  %v4566 = vunpack.c.l.b16 %v4501
  %v4567 = vunpack.c.l.b16 %v4502
  %v4568 = vunpack.c.l.b16 %v4503
  %v4569 = vunpack.c.l.b16 %v4504
  %v4570 = vrot.slane %v4556, 7
  %v4571 = vsel %vm3657, %v4570, %v4554
  %v4572 = vrot.slane %v4558, 6
  %v4573 = vsel %vm3660, %v4572, %v4571
  %v4574 = vrot.slane %v4560, 5
  %v4575 = vsel %vm3663, %v4574, %v4573
  %v4576 = vrot.slane %v4562, 4
  %v4577 = vsel %vm3666, %v4576, %v4575
  %v4578 = vrot.slane %v4564, 3
  %v4579 = vsel %vm3669, %v4578, %v4577
  %v4580 = vrot.slane %v4566, 2
  %v4581 = vsel %vm3672, %v4580, %v4579
  %v4582 = vrot.slane %v4568, 1
  %v4583 = vsel %vm3675, %v4582, %v4581
  %v4584 = vrot.slane %v4557, 7
  %v4585 = vsel %vm3657, %v4584, %v4555
  %v4586 = vrot.slane %v4559, 6
  %v4587 = vsel %vm3660, %v4586, %v4585
  %v4588 = vrot.slane %v4561, 5
  %v4589 = vsel %vm3663, %v4588, %v4587
  %v4590 = vrot.slane %v4563, 4
  %v4591 = vsel %vm3666, %v4590, %v4589
  %v4592 = vrot.slane %v4565, 3
  %v4593 = vsel %vm3669, %v4592, %v4591
  %v4594 = vrot.slane %v4567, 2
  %v4595 = vsel %vm3672, %v4594, %v4593
  %v4596 = vrot.slane %v4569, 1
  %v4597 = vsel %vm3675, %v4596, %v4595
  %v4598 = vpack.c.b16 %v4583, %v4583
  %v4599 = vpack.c.b16 %v4597, %v4597
  %v4634 = vunpack.c.l.b16 %v4506
  %v4635 = vunpack.c.l.b16 %v4507
  %v4636 = vunpack.c.l.b16 %v4508
  %v4637 = vunpack.c.l.b16 %v4509
  %v4638 = vunpack.c.l.b16 %v4510
  %v4639 = vunpack.c.l.b16 %v4511
  %v4640 = vunpack.c.l.b16 %v4512
  %v4641 = vunpack.c.l.b16 %v4513
  %v4642 = vunpack.c.l.b16 %v4514
  %v4643 = vunpack.c.l.b16 %v4515
  %v4644 = vunpack.c.l.b16 %v4516
  %v4645 = vunpack.c.l.b16 %v4517
  %v4646 = vunpack.c.l.b16 %v4518
  %v4647 = vunpack.c.l.b16 %v4519
  %v4648 = vunpack.c.l.b16 %v4520
  %v4649 = vunpack.c.l.b16 %v4521
  %v4650 = vunpack.c.l.b16 %v4522
  %v4651 = vunpack.c.l.b16 %v4523
  %v4652 = vunpack.c.l.b16 %v4524
  %v4653 = vunpack.c.l.b16 %v4525
  %v4654 = vunpack.c.l.b16 %v4526
  %v4655 = vunpack.c.l.b16 %v4527
  %v4656 = vunpack.c.l.b16 %v4528
  %v4657 = vunpack.c.l.b16 %v4529
  %v4658 = vunpack.c.l.b16 %v4530
  %v4659 = vunpack.c.l.b16 %v4531
  %v4660 = vunpack.c.l.b16 %v4532
  %v4661 = vunpack.c.l.b16 %v4533
  %v4662 = vunpack.c.l.b16 %v4534
  %v4663 = vunpack.c.l.b16 %v4535
  %v4664 = vunpack.c.l.b16 %v4536
  %v4665 = vunpack.c.l.b16 %v4537
  %v4666 = vpack.c.b16 %v4635, %v4634
  %v4667 = vpack.c.b16 %v4637, %v4636
  %v4668 = vpack.c.b16 %v4639, %v4638
  %v4669 = vpack.c.b16 %v4641, %v4640
  %v4670 = vpack.c.b16 %v4643, %v4642
  %v4671 = vpack.c.b16 %v4645, %v4644
  %v4672 = vpack.c.b16 %v4647, %v4646
  %v4673 = vpack.c.b16 %v4649, %v4648
  %v4674 = vpack.c.b16 %v4651, %v4650
  %v4675 = vpack.c.b16 %v4653, %v4652
  %v4676 = vpack.c.b16 %v4655, %v4654
  %v4677 = vpack.c.b16 %v4657, %v4656
  %v4678 = vpack.c.b16 %v4659, %v4658
  %v4679 = vpack.c.b16 %v4661, %v4660
  %v4680 = vpack.c.b16 %v4663, %v4662
  %v4681 = vpack.c.b16 %v4665, %v4664
  %4698 = vmatprep.subr.bf16.mxu0 0
  %4699 = vmatpush1.bf16.msra.mxu0 %v4666
  %4700 = vmatprep.subr.bf16.mxu0 0
  %4701 = vmatpush1.bf16.msra.mxu0 %v4667
  %4702 = vmatprep.subr.bf16.mxu0 0
  %4703 = vmatpush1.bf16.msra.mxu0 %v4668
  %4704 = vmatprep.subr.bf16.mxu0 0
  %4705 = vmatpush1.bf16.msra.mxu0 %v4669
  %4706 = vmatprep.subr.bf16.mxu0 0
  %4707 = vmatpush1.bf16.msra.mxu0 %v4670
  %4708 = vmatprep.subr.bf16.mxu0 0
  %4709 = vmatpush1.bf16.msra.mxu0 %v4671
  %4710 = vmatprep.subr.bf16.mxu0 0
  %4711 = vmatpush1.bf16.msra.mxu0 %v4672
  %4712 = vmatprep.subr.bf16.mxu0 0
  %4713 = vmatpush1.bf16.msra.mxu0 %v4673
  %4714 = vmatprep.subr.bf16.mxu0 0
  %4715 = vmatpush1.bf16.msra.mxu0 %v4674
  %4716 = vmatprep.subr.bf16.mxu0 0
  %4717 = vmatpush1.bf16.msra.mxu0 %v4675
  %4718 = vmatprep.subr.bf16.mxu0 0
  %4719 = vmatpush1.bf16.msra.mxu0 %v4676
  %4720 = vmatprep.subr.bf16.mxu0 0
  %4721 = vmatpush1.bf16.msra.mxu0 %v4677
  %4722 = vmatprep.subr.bf16.mxu0 0
  %4723 = vmatpush1.bf16.msra.mxu0 %v4678
  %4724 = vmatprep.subr.bf16.mxu0 0
  %4725 = vmatpush1.bf16.msra.mxu0 %v4679
  %4726 = vmatprep.subr.bf16.mxu0 0
  %4727 = vmatpush1.bf16.msra.mxu0 %v4680
  %4728 = vmatprep.subr.bf16.mxu0 0
  %4729 = vmatpush1.bf16.msra.mxu0 %v4681
  %4730 = vmatprep.mubr.bf16.mxu0 %v4599
  %4731 = vmatmul.mubr.bf16.gmra.mrb[0].mxu0 %v4598
  %v4732 = vpop.f32.mrb[0].mxu0
  %v4733 = vadd.f32 0.0, %v4732
  %v4734 = vpop.f32.mrb[0].mxu0
  %v4735 = vpop.f32.mrb[0].mxu0
  %v4736 = vpop.f32.mrb[0].mxu0
  %4737 = vdwg.mxu0
  %v4738 = vadd.f32 %v4384, %v4733
  %s4739 = scalar_lea.vmem [#allocation2], 4
  %v4740 = vld [vmem:[%s4739] ss:$8 sm:$0x3]
  %s4741 = scalar_lea.vmem [#allocation2], 52
  %v4742 = vld [vmem:[%s4741] ss:$8 sm:$0x3]
  %s4743 = scalar_lea.vmem [#allocation2], 100
  %v4744 = vld [vmem:[%s4743] ss:$8 sm:$0x3]
  %s4745 = scalar_lea.vmem [#allocation2], 148
  %v4746 = vld [vmem:[%s4745] ss:$8 sm:$0x3]
  %s4747 = scalar_lea.vmem [#allocation2], 196
  %v4748 = vld [vmem:[%s4747] ss:$8 sm:$0x3]
  %s4749 = scalar_lea.vmem [#allocation2], 244
  %v4750 = vld [vmem:[%s4749] ss:$8 sm:$0x3]
  %s4751 = scalar_lea.vmem [#allocation2], 292
  %v4752 = vld [vmem:[%s4751] ss:$8 sm:$0x3]
  %s4753 = scalar_lea.vmem [#allocation2], 340
  %v4754 = vld [vmem:[%s4753] ss:$8 sm:$0x3]
  %v4763 = vlaneseq
  %v4764 = vshrl.u32 %v4763, 7
  %v4765 = vsub.s32 0, %v4764
  %v4766 = vrot.slane %v4740, %v4765
  %v4767 = vlaneseq
  %v4768 = vshrl.u32 %v4767, 7
  %v4769 = vsub.s32 1, %v4768
  %v4770 = vrot.slane %v4740, %v4769
  %v4771 = vlaneseq
  %v4772 = vshrl.u32 %v4771, 7
  %v4773 = vsub.s32 0, %v4772
  %v4774 = vrot.slane %v4742, %v4773
  %v4775 = vlaneseq
  %v4776 = vshrl.u32 %v4775, 7
  %v4777 = vsub.s32 1, %v4776
  %v4778 = vrot.slane %v4742, %v4777
  %v4779 = vlaneseq
  %v4780 = vshrl.u32 %v4779, 7
  %v4781 = vsub.s32 0, %v4780
  %v4782 = vrot.slane %v4744, %v4781
  %v4783 = vlaneseq
  %v4784 = vshrl.u32 %v4783, 7
  %v4785 = vsub.s32 1, %v4784
  %v4786 = vrot.slane %v4744, %v4785
  %v4787 = vlaneseq
  %v4788 = vshrl.u32 %v4787, 7
  %v4789 = vsub.s32 0, %v4788
  %v4790 = vrot.slane %v4746, %v4789
  %v4791 = vlaneseq
  %v4792 = vshrl.u32 %v4791, 7
  %v4793 = vsub.s32 1, %v4792
  %v4794 = vrot.slane %v4746, %v4793
  %v4795 = vlaneseq
  %v4796 = vshrl.u32 %v4795, 7
  %v4797 = vsub.s32 0, %v4796
  %v4798 = vrot.slane %v4748, %v4797
  %v4799 = vlaneseq
  %v4800 = vshrl.u32 %v4799, 7
  %v4801 = vsub.s32 1, %v4800
  %v4802 = vrot.slane %v4748, %v4801
  %v4803 = vlaneseq
  %v4804 = vshrl.u32 %v4803, 7
  %v4805 = vsub.s32 0, %v4804
  %v4806 = vrot.slane %v4750, %v4805
  %v4807 = vlaneseq
  %v4808 = vshrl.u32 %v4807, 7
  %v4809 = vsub.s32 1, %v4808
  %v4810 = vrot.slane %v4750, %v4809
  %v4811 = vlaneseq
  %v4812 = vshrl.u32 %v4811, 7
  %v4813 = vsub.s32 0, %v4812
  %v4814 = vrot.slane %v4752, %v4813
  %v4815 = vlaneseq
  %v4816 = vshrl.u32 %v4815, 7
  %v4817 = vsub.s32 1, %v4816
  %v4818 = vrot.slane %v4752, %v4817
  %v4819 = vlaneseq
  %v4820 = vshrl.u32 %v4819, 7
  %v4821 = vsub.s32 0, %v4820
  %v4822 = vrot.slane %v4754, %v4821
  %v4823 = vlaneseq
  %v4824 = vshrl.u32 %v4823, 7
  %v4825 = vsub.s32 1, %v4824
  %v4826 = vrot.slane %v4754, %v4825
  %v4843 = vpack.c.bf16 %v4766, %v4766
  %v4844 = vpack.c.bf16 %v4770, %v4770
  %v4845 = vpack.c.bf16 %v4774, %v4774
  %v4846 = vpack.c.bf16 %v4778, %v4778
  %v4847 = vpack.c.bf16 %v4782, %v4782
  %v4848 = vpack.c.bf16 %v4786, %v4786
  %v4849 = vpack.c.bf16 %v4790, %v4790
  %v4850 = vpack.c.bf16 %v4794, %v4794
  %v4851 = vpack.c.bf16 %v4798, %v4798
  %v4852 = vpack.c.bf16 %v4802, %v4802
  %v4853 = vpack.c.bf16 %v4806, %v4806
  %v4854 = vpack.c.bf16 %v4810, %v4810
  %v4855 = vpack.c.bf16 %v4814, %v4814
  %v4856 = vpack.c.bf16 %v4818, %v4818
  %v4857 = vpack.c.bf16 %v4822, %v4822
  %v4858 = vpack.c.bf16 %v4826, %v4826
  %s4859 = scalar_lea.vmem %s5, 512
  %v4860 = vld [vmem:[%s4859] sm:$0xf]
  %v4861 = vld [vmem:[%s4859 + $0x4] sm:$0xf]
  %v4862 = vld [vmem:[%s4859 + $0x8] sm:$0xf]
  %v4863 = vld [vmem:[%s4859 + $0xc] sm:$0xf]
  %v4864 = vld [vmem:[%s4859 + $0x10] sm:$0xf]
  %v4865 = vld [vmem:[%s4859 + $0x14] sm:$0xf]
  %v4866 = vld [vmem:[%s4859 + $0x18] sm:$0xf]
  %v4867 = vld [vmem:[%s4859 + $0x1c] sm:$0xf]
  %v4868 = vld [vmem:[%s4859 + $0x20] sm:$0xf]
  %v4869 = vld [vmem:[%s4859 + $0x24] sm:$0xf]
  %v4870 = vld [vmem:[%s4859 + $0x28] sm:$0xf]
  %v4871 = vld [vmem:[%s4859 + $0x2c] sm:$0xf]
  %v4872 = vld [vmem:[%s4859 + $0x30] sm:$0xf]
  %v4873 = vld [vmem:[%s4859 + $0x34] sm:$0xf]
  %v4874 = vld [vmem:[%s4859 + $0x38] sm:$0xf]
  %v4875 = vld [vmem:[%s4859 + $0x3c] sm:$0xf]
  %v4876 = vld [vmem:[%s4859 + $0x40] sm:$0xf]
  %v4877 = vld [vmem:[%s4859 + $0x44] sm:$0xf]
  %v4878 = vld [vmem:[%s4859 + $0x48] sm:$0xf]
  %v4879 = vld [vmem:[%s4859 + $0x4c] sm:$0xf]
  %v4880 = vld [vmem:[%s4859 + $0x50] sm:$0xf]
  %v4881 = vld [vmem:[%s4859 + $0x54] sm:$0xf]
  %v4882 = vld [vmem:[%s4859 + $0x58] sm:$0xf]
  %v4883 = vld [vmem:[%s4859 + $0x5c] sm:$0xf]
  %v4884 = vld [vmem:[%s4859 + $0x60] sm:$0xf]
  %v4885 = vld [vmem:[%s4859 + $0x64] sm:$0xf]
  %v4886 = vld [vmem:[%s4859 + $0x68] sm:$0xf]
  %v4887 = vld [vmem:[%s4859 + $0x6c] sm:$0xf]
  %v4888 = vld [vmem:[%s4859 + $0x70] sm:$0xf]
  %v4889 = vld [vmem:[%s4859 + $0x74] sm:$0xf]
  %v4890 = vld [vmem:[%s4859 + $0x78] sm:$0xf]
  %v4891 = vld [vmem:[%s4859 + $0x7c] sm:$0xf]
  %v4908 = vunpack.c.l.b16 %v4843
  %v4909 = vunpack.c.l.b16 %v4844
  %v4910 = vunpack.c.l.b16 %v4845
  %v4911 = vunpack.c.l.b16 %v4846
  %v4912 = vunpack.c.l.b16 %v4847
  %v4913 = vunpack.c.l.b16 %v4848
  %v4914 = vunpack.c.l.b16 %v4849
  %v4915 = vunpack.c.l.b16 %v4850
  %v4916 = vunpack.c.l.b16 %v4851
  %v4917 = vunpack.c.l.b16 %v4852
  %v4918 = vunpack.c.l.b16 %v4853
  %v4919 = vunpack.c.l.b16 %v4854
  %v4920 = vunpack.c.l.b16 %v4855
  %v4921 = vunpack.c.l.b16 %v4856
  %v4922 = vunpack.c.l.b16 %v4857
  %v4923 = vunpack.c.l.b16 %v4858
  %v4924 = vrot.slane %v4910, 7
  %v4925 = vsel %vm3657, %v4924, %v4908
  %v4926 = vrot.slane %v4912, 6
  %v4927 = vsel %vm3660, %v4926, %v4925
  %v4928 = vrot.slane %v4914, 5
  %v4929 = vsel %vm3663, %v4928, %v4927
  %v4930 = vrot.slane %v4916, 4
  %v4931 = vsel %vm3666, %v4930, %v4929
  %v4932 = vrot.slane %v4918, 3
  %v4933 = vsel %vm3669, %v4932, %v4931
  %v4934 = vrot.slane %v4920, 2
  %v4935 = vsel %vm3672, %v4934, %v4933
  %v4936 = vrot.slane %v4922, 1
  %v4937 = vsel %vm3675, %v4936, %v4935
  %v4938 = vrot.slane %v4911, 7
  %v4939 = vsel %vm3657, %v4938, %v4909
  %v4940 = vrot.slane %v4913, 6
  %v4941 = vsel %vm3660, %v4940, %v4939
  %v4942 = vrot.slane %v4915, 5
  %v4943 = vsel %vm3663, %v4942, %v4941
  %v4944 = vrot.slane %v4917, 4
  %v4945 = vsel %vm3666, %v4944, %v4943
  %v4946 = vrot.slane %v4919, 3
  %v4947 = vsel %vm3669, %v4946, %v4945
  %v4948 = vrot.slane %v4921, 2
  %v4949 = vsel %vm3672, %v4948, %v4947
  %v4950 = vrot.slane %v4923, 1
  %v4951 = vsel %vm3675, %v4950, %v4949
  %v4952 = vpack.c.b16 %v4937, %v4937
  %v4953 = vpack.c.b16 %v4951, %v4951
  %v4988 = vunpack.c.l.b16 %v4860
  %v4989 = vunpack.c.l.b16 %v4861
  %v4990 = vunpack.c.l.b16 %v4862
  %v4991 = vunpack.c.l.b16 %v4863
  %v4992 = vunpack.c.l.b16 %v4864
  %v4993 = vunpack.c.l.b16 %v4865
  %v4994 = vunpack.c.l.b16 %v4866
  %v4995 = vunpack.c.l.b16 %v4867
  %v4996 = vunpack.c.l.b16 %v4868
  %v4997 = vunpack.c.l.b16 %v4869
  %v4998 = vunpack.c.l.b16 %v4870
  %v4999 = vunpack.c.l.b16 %v4871
  %v5000 = vunpack.c.l.b16 %v4872
  %v5001 = vunpack.c.l.b16 %v4873
  %v5002 = vunpack.c.l.b16 %v4874
  %v5003 = vunpack.c.l.b16 %v4875
  %v5004 = vunpack.c.l.b16 %v4876
  %v5005 = vunpack.c.l.b16 %v4877
  %v5006 = vunpack.c.l.b16 %v4878
  %v5007 = vunpack.c.l.b16 %v4879
  %v5008 = vunpack.c.l.b16 %v4880
  %v5009 = vunpack.c.l.b16 %v4881
  %v5010 = vunpack.c.l.b16 %v4882
  %v5011 = vunpack.c.l.b16 %v4883
  %v5012 = vunpack.c.l.b16 %v4884
  %v5013 = vunpack.c.l.b16 %v4885
  %v5014 = vunpack.c.l.b16 %v4886
  %v5015 = vunpack.c.l.b16 %v4887
  %v5016 = vunpack.c.l.b16 %v4888
  %v5017 = vunpack.c.l.b16 %v4889
  %v5018 = vunpack.c.l.b16 %v4890
  %v5019 = vunpack.c.l.b16 %v4891
  %v5020 = vpack.c.b16 %v4989, %v4988
  %v5021 = vpack.c.b16 %v4991, %v4990
  %v5022 = vpack.c.b16 %v4993, %v4992
  %v5023 = vpack.c.b16 %v4995, %v4994
  %v5024 = vpack.c.b16 %v4997, %v4996
  %v5025 = vpack.c.b16 %v4999, %v4998
  %v5026 = vpack.c.b16 %v5001, %v5000
  %v5027 = vpack.c.b16 %v5003, %v5002
  %v5028 = vpack.c.b16 %v5005, %v5004
  %v5029 = vpack.c.b16 %v5007, %v5006
  %v5030 = vpack.c.b16 %v5009, %v5008
  %v5031 = vpack.c.b16 %v5011, %v5010
  %v5032 = vpack.c.b16 %v5013, %v5012
  %v5033 = vpack.c.b16 %v5015, %v5014
  %v5034 = vpack.c.b16 %v5017, %v5016
  %v5035 = vpack.c.b16 %v5019, %v5018
  %5052 = vmatprep.subr.bf16.mxu0 0
  %5053 = vmatpush1.bf16.msra.mxu0 %v5020
  %5054 = vmatprep.subr.bf16.mxu0 0
  %5055 = vmatpush1.bf16.msra.mxu0 %v5021
  %5056 = vmatprep.subr.bf16.mxu0 0
  %5057 = vmatpush1.bf16.msra.mxu0 %v5022
  %5058 = vmatprep.subr.bf16.mxu0 0
  %5059 = vmatpush1.bf16.msra.mxu0 %v5023
  %5060 = vmatprep.subr.bf16.mxu0 0
  %5061 = vmatpush1.bf16.msra.mxu0 %v5024
  %5062 = vmatprep.subr.bf16.mxu0 0
  %5063 = vmatpush1.bf16.msra.mxu0 %v5025
  %5064 = vmatprep.subr.bf16.mxu0 0
  %5065 = vmatpush1.bf16.msra.mxu0 %v5026
  %5066 = vmatprep.subr.bf16.mxu0 0
  %5067 = vmatpush1.bf16.msra.mxu0 %v5027
  %5068 = vmatprep.subr.bf16.mxu0 0
  %5069 = vmatpush1.bf16.msra.mxu0 %v5028
  %5070 = vmatprep.subr.bf16.mxu0 0
  %5071 = vmatpush1.bf16.msra.mxu0 %v5029
  %5072 = vmatprep.subr.bf16.mxu0 0
  %5073 = vmatpush1.bf16.msra.mxu0 %v5030
  %5074 = vmatprep.subr.bf16.mxu0 0
  %5075 = vmatpush1.bf16.msra.mxu0 %v5031
  %5076 = vmatprep.subr.bf16.mxu0 0
  %5077 = vmatpush1.bf16.msra.mxu0 %v5032
  %5078 = vmatprep.subr.bf16.mxu0 0
  %5079 = vmatpush1.bf16.msra.mxu0 %v5033
  %5080 = vmatprep.subr.bf16.mxu0 0
  %5081 = vmatpush1.bf16.msra.mxu0 %v5034
  %5082 = vmatprep.subr.bf16.mxu0 0
  %5083 = vmatpush1.bf16.msra.mxu0 %v5035
  %5084 = vmatprep.mubr.bf16.mxu0 %v4953
  %5085 = vmatmul.mubr.bf16.gmra.mrb[0].mxu0 %v4952
  %v5086 = vpop.f32.mrb[0].mxu0
  %v5087 = vadd.f32 0.0, %v5086
  %v5088 = vpop.f32.mrb[0].mxu0
  %v5089 = vpop.f32.mrb[0].mxu0
  %v5090 = vpop.f32.mrb[0].mxu0
  %5091 = vdwg.mxu0
  %v5092 = vadd.f32 %v4738, %v5087
  %s5093 = scalar_lea.vmem [#allocation2], 5
  %v5094 = vld [vmem:[%s5093] ss:$8 sm:$0x3]
  %s5095 = scalar_lea.vmem [#allocation2], 53
  %v5096 = vld [vmem:[%s5095] ss:$8 sm:$0x3]
  %s5097 = scalar_lea.vmem [#allocation2], 101
  %v5098 = vld [vmem:[%s5097] ss:$8 sm:$0x3]
  %s5099 = scalar_lea.vmem [#allocation2], 149
  %v5100 = vld [vmem:[%s5099] ss:$8 sm:$0x3]
  %s5101 = scalar_lea.vmem [#allocation2], 197
  %v5102 = vld [vmem:[%s5101] ss:$8 sm:$0x3]
  %s5103 = scalar_lea.vmem [#allocation2], 245
  %v5104 = vld [vmem:[%s5103] ss:$8 sm:$0x3]
  %s5105 = scalar_lea.vmem [#allocation2], 293
  %v5106 = vld [vmem:[%s5105] ss:$8 sm:$0x3]
  %s5107 = scalar_lea.vmem [#allocation2], 341
  %v5108 = vld [vmem:[%s5107] ss:$8 sm:$0x3]
  %v5117 = vlaneseq
  %v5118 = vshrl.u32 %v5117, 7
  %v5119 = vsub.s32 0, %v5118
  %v5120 = vrot.slane %v5094, %v5119
  %v5121 = vlaneseq
  %v5122 = vshrl.u32 %v5121, 7
  %v5123 = vsub.s32 1, %v5122
  %v5124 = vrot.slane %v5094, %v5123
  %v5125 = vlaneseq
  %v5126 = vshrl.u32 %v5125, 7
  %v5127 = vsub.s32 0, %v5126
  %v5128 = vrot.slane %v5096, %v5127
  %v5129 = vlaneseq
  %v5130 = vshrl.u32 %v5129, 7
  %v5131 = vsub.s32 1, %v5130
  %v5132 = vrot.slane %v5096, %v5131
  %v5133 = vlaneseq
  %v5134 = vshrl.u32 %v5133, 7
  %v5135 = vsub.s32 0, %v5134
  %v5136 = vrot.slane %v5098, %v5135
  %v5137 = vlaneseq
  %v5138 = vshrl.u32 %v5137, 7
  %v5139 = vsub.s32 1, %v5138
  %v5140 = vrot.slane %v5098, %v5139
  %v5141 = vlaneseq
  %v5142 = vshrl.u32 %v5141, 7
  %v5143 = vsub.s32 0, %v5142
  %v5144 = vrot.slane %v5100, %v5143
  %v5145 = vlaneseq
  %v5146 = vshrl.u32 %v5145, 7
  %v5147 = vsub.s32 1, %v5146
  %v5148 = vrot.slane %v5100, %v5147
  %v5149 = vlaneseq
  %v5150 = vshrl.u32 %v5149, 7
  %v5151 = vsub.s32 0, %v5150
  %v5152 = vrot.slane %v5102, %v5151
  %v5153 = vlaneseq
  %v5154 = vshrl.u32 %v5153, 7
  %v5155 = vsub.s32 1, %v5154
  %v5156 = vrot.slane %v5102, %v5155
  %v5157 = vlaneseq
  %v5158 = vshrl.u32 %v5157, 7
  %v5159 = vsub.s32 0, %v5158
  %v5160 = vrot.slane %v5104, %v5159
  %v5161 = vlaneseq
  %v5162 = vshrl.u32 %v5161, 7
  %v5163 = vsub.s32 1, %v5162
  %v5164 = vrot.slane %v5104, %v5163
  %v5165 = vlaneseq
  %v5166 = vshrl.u32 %v5165, 7
  %v5167 = vsub.s32 0, %v5166
  %v5168 = vrot.slane %v5106, %v5167
  %v5169 = vlaneseq
  %v5170 = vshrl.u32 %v5169, 7
  %v5171 = vsub.s32 1, %v5170
  %v5172 = vrot.slane %v5106, %v5171
  %v5173 = vlaneseq
  %v5174 = vshrl.u32 %v5173, 7
  %v5175 = vsub.s32 0, %v5174
  %v5176 = vrot.slane %v5108, %v5175
  %v5177 = vlaneseq
  %v5178 = vshrl.u32 %v5177, 7
  %v5179 = vsub.s32 1, %v5178
  %v5180 = vrot.slane %v5108, %v5179
  %v5197 = vpack.c.bf16 %v5120, %v5120
  %v5198 = vpack.c.bf16 %v5124, %v5124
  %v5199 = vpack.c.bf16 %v5128, %v5128
  %v5200 = vpack.c.bf16 %v5132, %v5132
  %v5201 = vpack.c.bf16 %v5136, %v5136
  %v5202 = vpack.c.bf16 %v5140, %v5140
  %v5203 = vpack.c.bf16 %v5144, %v5144
  %v5204 = vpack.c.bf16 %v5148, %v5148
  %v5205 = vpack.c.bf16 %v5152, %v5152
  %v5206 = vpack.c.bf16 %v5156, %v5156
  %v5207 = vpack.c.bf16 %v5160, %v5160
  %v5208 = vpack.c.bf16 %v5164, %v5164
  %v5209 = vpack.c.bf16 %v5168, %v5168
  %v5210 = vpack.c.bf16 %v5172, %v5172
  %v5211 = vpack.c.bf16 %v5176, %v5176
  %v5212 = vpack.c.bf16 %v5180, %v5180
  %s5213 = scalar_lea.vmem %s5, 640
  %v5214 = vld [vmem:[%s5213] sm:$0xf]
  %v5215 = vld [vmem:[%s5213 + $0x4] sm:$0xf]
  %v5216 = vld [vmem:[%s5213 + $0x8] sm:$0xf]
  %v5217 = vld [vmem:[%s5213 + $0xc] sm:$0xf]
  %v5218 = vld [vmem:[%s5213 + $0x10] sm:$0xf]
  %v5219 = vld [vmem:[%s5213 + $0x14] sm:$0xf]
  %v5220 = vld [vmem:[%s5213 + $0x18] sm:$0xf]
  %v5221 = vld [vmem:[%s5213 + $0x1c] sm:$0xf]
  %v5222 = vld [vmem:[%s5213 + $0x20] sm:$0xf]
  %v5223 = vld [vmem:[%s5213 + $0x24] sm:$0xf]
  %v5224 = vld [vmem:[%s5213 + $0x28] sm:$0xf]
  %v5225 = vld [vmem:[%s5213 + $0x2c] sm:$0xf]
  %v5226 = vld [vmem:[%s5213 + $0x30] sm:$0xf]
  %v5227 = vld [vmem:[%s5213 + $0x34] sm:$0xf]
  %v5228 = vld [vmem:[%s5213 + $0x38] sm:$0xf]
  %v5229 = vld [vmem:[%s5213 + $0x3c] sm:$0xf]
  %v5230 = vld [vmem:[%s5213 + $0x40] sm:$0xf]
  %v5231 = vld [vmem:[%s5213 + $0x44] sm:$0xf]
  %v5232 = vld [vmem:[%s5213 + $0x48] sm:$0xf]
  %v5233 = vld [vmem:[%s5213 + $0x4c] sm:$0xf]
  %v5234 = vld [vmem:[%s5213 + $0x50] sm:$0xf]
  %v5235 = vld [vmem:[%s5213 + $0x54] sm:$0xf]
  %v5236 = vld [vmem:[%s5213 + $0x58] sm:$0xf]
  %v5237 = vld [vmem:[%s5213 + $0x5c] sm:$0xf]
  %v5238 = vld [vmem:[%s5213 + $0x60] sm:$0xf]
  %v5239 = vld [vmem:[%s5213 + $0x64] sm:$0xf]
  %v5240 = vld [vmem:[%s5213 + $0x68] sm:$0xf]
  %v5241 = vld [vmem:[%s5213 + $0x6c] sm:$0xf]
  %v5242 = vld [vmem:[%s5213 + $0x70] sm:$0xf]
  %v5243 = vld [vmem:[%s5213 + $0x74] sm:$0xf]
  %v5244 = vld [vmem:[%s5213 + $0x78] sm:$0xf]
  %v5245 = vld [vmem:[%s5213 + $0x7c] sm:$0xf]
  %v5262 = vunpack.c.l.b16 %v5197
  %v5263 = vunpack.c.l.b16 %v5198
  %v5264 = vunpack.c.l.b16 %v5199
  %v5265 = vunpack.c.l.b16 %v5200
  %v5266 = vunpack.c.l.b16 %v5201
  %v5267 = vunpack.c.l.b16 %v5202
  %v5268 = vunpack.c.l.b16 %v5203
  %v5269 = vunpack.c.l.b16 %v5204
  %v5270 = vunpack.c.l.b16 %v5205
  %v5271 = vunpack.c.l.b16 %v5206
  %v5272 = vunpack.c.l.b16 %v5207
  %v5273 = vunpack.c.l.b16 %v5208
  %v5274 = vunpack.c.l.b16 %v5209
  %v5275 = vunpack.c.l.b16 %v5210
  %v5276 = vunpack.c.l.b16 %v5211
  %v5277 = vunpack.c.l.b16 %v5212
  %v5278 = vrot.slane %v5264, 7
  %v5279 = vsel %vm3657, %v5278, %v5262
  %v5280 = vrot.slane %v5266, 6
  %v5281 = vsel %vm3660, %v5280, %v5279
  %v5282 = vrot.slane %v5268, 5
  %v5283 = vsel %vm3663, %v5282, %v5281
  %v5284 = vrot.slane %v5270, 4
  %v5285 = vsel %vm3666, %v5284, %v5283
  %v5286 = vrot.slane %v5272, 3
  %v5287 = vsel %vm3669, %v5286, %v5285
  %v5288 = vrot.slane %v5274, 2
  %v5289 = vsel %vm3672, %v5288, %v5287
  %v5290 = vrot.slane %v5276, 1
  %v5291 = vsel %vm3675, %v5290, %v5289
  %v5292 = vrot.slane %v5265, 7
  %v5293 = vsel %vm3657, %v5292, %v5263
  %v5294 = vrot.slane %v5267, 6
  %v5295 = vsel %vm3660, %v5294, %v5293
  %v5296 = vrot.slane %v5269, 5
  %v5297 = vsel %vm3663, %v5296, %v5295
  %v5298 = vrot.slane %v5271, 4
  %v5299 = vsel %vm3666, %v5298, %v5297
  %v5300 = vrot.slane %v5273, 3
  %v5301 = vsel %vm3669, %v5300, %v5299
  %v5302 = vrot.slane %v5275, 2
  %v5303 = vsel %vm3672, %v5302, %v5301
  %v5304 = vrot.slane %v5277, 1
  %v5305 = vsel %vm3675, %v5304, %v5303
  %v5306 = vpack.c.b16 %v5291, %v5291
  %v5307 = vpack.c.b16 %v5305, %v5305
  %v5342 = vunpack.c.l.b16 %v5214
  %v5343 = vunpack.c.l.b16 %v5215
  %v5344 = vunpack.c.l.b16 %v5216
  %v5345 = vunpack.c.l.b16 %v5217
  %v5346 = vunpack.c.l.b16 %v5218
  %v5347 = vunpack.c.l.b16 %v5219
  %v5348 = vunpack.c.l.b16 %v5220
  %v5349 = vunpack.c.l.b16 %v5221
  %v5350 = vunpack.c.l.b16 %v5222
  %v5351 = vunpack.c.l.b16 %v5223
  %v5352 = vunpack.c.l.b16 %v5224
  %v5353 = vunpack.c.l.b16 %v5225
  %v5354 = vunpack.c.l.b16 %v5226
  %v5355 = vunpack.c.l.b16 %v5227
  %v5356 = vunpack.c.l.b16 %v5228
  %v5357 = vunpack.c.l.b16 %v5229
  %v5358 = vunpack.c.l.b16 %v5230
  %v5359 = vunpack.c.l.b16 %v5231
  %v5360 = vunpack.c.l.b16 %v5232
  %v5361 = vunpack.c.l.b16 %v5233
  %v5362 = vunpack.c.l.b16 %v5234
  %v5363 = vunpack.c.l.b16 %v5235
  %v5364 = vunpack.c.l.b16 %v5236
  %v5365 = vunpack.c.l.b16 %v5237
  %v5366 = vunpack.c.l.b16 %v5238
  %v5367 = vunpack.c.l.b16 %v5239
  %v5368 = vunpack.c.l.b16 %v5240
  %v5369 = vunpack.c.l.b16 %v5241
  %v5370 = vunpack.c.l.b16 %v5242
  %v5371 = vunpack.c.l.b16 %v5243
  %v5372 = vunpack.c.l.b16 %v5244
  %v5373 = vunpack.c.l.b16 %v5245
  %v5374 = vpack.c.b16 %v5343, %v5342
  %v5375 = vpack.c.b16 %v5345, %v5344
  %v5376 = vpack.c.b16 %v5347, %v5346
  %v5377 = vpack.c.b16 %v5349, %v5348
  %v5378 = vpack.c.b16 %v5351, %v5350
  %v5379 = vpack.c.b16 %v5353, %v5352
  %v5380 = vpack.c.b16 %v5355, %v5354
  %v5381 = vpack.c.b16 %v5357, %v5356
  %v5382 = vpack.c.b16 %v5359, %v5358
  %v5383 = vpack.c.b16 %v5361, %v5360
  %v5384 = vpack.c.b16 %v5363, %v5362
  %v5385 = vpack.c.b16 %v5365, %v5364
  %v5386 = vpack.c.b16 %v5367, %v5366
  %v5387 = vpack.c.b16 %v5369, %v5368
  %v5388 = vpack.c.b16 %v5371, %v5370
  %v5389 = vpack.c.b16 %v5373, %v5372
  %5406 = vmatprep.subr.bf16.mxu0 0
  %5407 = vmatpush1.bf16.msra.mxu0 %v5374
  %5408 = vmatprep.subr.bf16.mxu0 0
  %5409 = vmatpush1.bf16.msra.mxu0 %v5375
  %5410 = vmatprep.subr.bf16.mxu0 0
  %5411 = vmatpush1.bf16.msra.mxu0 %v5376
  %5412 = vmatprep.subr.bf16.mxu0 0
  %5413 = vmatpush1.bf16.msra.mxu0 %v5377
  %5414 = vmatprep.subr.bf16.mxu0 0
  %5415 = vmatpush1.bf16.msra.mxu0 %v5378
  %5416 = vmatprep.subr.bf16.mxu0 0
  %5417 = vmatpush1.bf16.msra.mxu0 %v5379
  %5418 = vmatprep.subr.bf16.mxu0 0
  %5419 = vmatpush1.bf16.msra.mxu0 %v5380
  %5420 = vmatprep.subr.bf16.mxu0 0
  %5421 = vmatpush1.bf16.msra.mxu0 %v5381
  %5422 = vmatprep.subr.bf16.mxu0 0
  %5423 = vmatpush1.bf16.msra.mxu0 %v5382
  %5424 = vmatprep.subr.bf16.mxu0 0
  %5425 = vmatpush1.bf16.msra.mxu0 %v5383
  %5426 = vmatprep.subr.bf16.mxu0 0
  %5427 = vmatpush1.bf16.msra.mxu0 %v5384
  %5428 = vmatprep.subr.bf16.mxu0 0
  %5429 = vmatpush1.bf16.msra.mxu0 %v5385
  %5430 = vmatprep.subr.bf16.mxu0 0
  %5431 = vmatpush1.bf16.msra.mxu0 %v5386
  %5432 = vmatprep.subr.bf16.mxu0 0
  %5433 = vmatpush1.bf16.msra.mxu0 %v5387
  %5434 = vmatprep.subr.bf16.mxu0 0
  %5435 = vmatpush1.bf16.msra.mxu0 %v5388
  %5436 = vmatprep.subr.bf16.mxu0 0
  %5437 = vmatpush1.bf16.msra.mxu0 %v5389
  %5438 = vmatprep.mubr.bf16.mxu0 %v5307
  %5439 = vmatmul.mubr.bf16.gmra.mrb[0].mxu0 %v5306
  %v5440 = vpop.f32.mrb[0].mxu0
  %v5441 = vadd.f32 0.0, %v5440
  %v5442 = vpop.f32.mrb[0].mxu0
  %v5443 = vpop.f32.mrb[0].mxu0
  %v5444 = vpop.f32.mrb[0].mxu0
  %5445 = vdwg.mxu0
  %v5446 = vadd.f32 %v5092, %v5441
  %s5447 = scalar_lea.vmem [#allocation2], 6
  %v5448 = vld [vmem:[%s5447] ss:$8 sm:$0x3]
  %s5449 = scalar_lea.vmem [#allocation2], 54
  %v5450 = vld [vmem:[%s5449] ss:$8 sm:$0x3]
  %s5451 = scalar_lea.vmem [#allocation2], 102
  %v5452 = vld [vmem:[%s5451] ss:$8 sm:$0x3]
  %s5453 = scalar_lea.vmem [#allocation2], 150
  %v5454 = vld [vmem:[%s5453] ss:$8 sm:$0x3]
  %s5455 = scalar_lea.vmem [#allocation2], 198
  %v5456 = vld [vmem:[%s5455] ss:$8 sm:$0x3]
  %s5457 = scalar_lea.vmem [#allocation2], 246
  %v5458 = vld [vmem:[%s5457] ss:$8 sm:$0x3]
  %s5459 = scalar_lea.vmem [#allocation2], 294
  %v5460 = vld [vmem:[%s5459] ss:$8 sm:$0x3]
  %s5461 = scalar_lea.vmem [#allocation2], 342
  %v5462 = vld [vmem:[%s5461] ss:$8 sm:$0x3]
  %v5471 = vlaneseq
  %v5472 = vshrl.u32 %v5471, 7
  %v5473 = vsub.s32 0, %v5472
  %v5474 = vrot.slane %v5448, %v5473
  %v5475 = vlaneseq
  %v5476 = vshrl.u32 %v5475, 7
  %v5477 = vsub.s32 1, %v5476
  %v5478 = vrot.slane %v5448, %v5477
  %v5479 = vlaneseq
  %v5480 = vshrl.u32 %v5479, 7
  %v5481 = vsub.s32 0, %v5480
  %v5482 = vrot.slane %v5450, %v5481
  %v5483 = vlaneseq
  %v5484 = vshrl.u32 %v5483, 7
  %v5485 = vsub.s32 1, %v5484
  %v5486 = vrot.slane %v5450, %v5485
  %v5487 = vlaneseq
  %v5488 = vshrl.u32 %v5487, 7
  %v5489 = vsub.s32 0, %v5488
  %v5490 = vrot.slane %v5452, %v5489
  %v5491 = vlaneseq
  %v5492 = vshrl.u32 %v5491, 7
  %v5493 = vsub.s32 1, %v5492
  %v5494 = vrot.slane %v5452, %v5493
  %v5495 = vlaneseq
  %v5496 = vshrl.u32 %v5495, 7
  %v5497 = vsub.s32 0, %v5496
  %v5498 = vrot.slane %v5454, %v5497
  %v5499 = vlaneseq
  %v5500 = vshrl.u32 %v5499, 7
  %v5501 = vsub.s32 1, %v5500
  %v5502 = vrot.slane %v5454, %v5501
  %v5503 = vlaneseq
  %v5504 = vshrl.u32 %v5503, 7
  %v5505 = vsub.s32 0, %v5504
  %v5506 = vrot.slane %v5456, %v5505
  %v5507 = vlaneseq
  %v5508 = vshrl.u32 %v5507, 7
  %v5509 = vsub.s32 1, %v5508
  %v5510 = vrot.slane %v5456, %v5509
  %v5511 = vlaneseq
  %v5512 = vshrl.u32 %v5511, 7
  %v5513 = vsub.s32 0, %v5512
  %v5514 = vrot.slane %v5458, %v5513
  %v5515 = vlaneseq
  %v5516 = vshrl.u32 %v5515, 7
  %v5517 = vsub.s32 1, %v5516
  %v5518 = vrot.slane %v5458, %v5517
  %v5519 = vlaneseq
  %v5520 = vshrl.u32 %v5519, 7
  %v5521 = vsub.s32 0, %v5520
  %v5522 = vrot.slane %v5460, %v5521
  %v5523 = vlaneseq
  %v5524 = vshrl.u32 %v5523, 7
  %v5525 = vsub.s32 1, %v5524
  %v5526 = vrot.slane %v5460, %v5525
  %v5527 = vlaneseq
  %v5528 = vshrl.u32 %v5527, 7
  %v5529 = vsub.s32 0, %v5528
  %v5530 = vrot.slane %v5462, %v5529
  %v5531 = vlaneseq
  %v5532 = vshrl.u32 %v5531, 7
  %v5533 = vsub.s32 1, %v5532
  %v5534 = vrot.slane %v5462, %v5533
  %v5551 = vpack.c.bf16 %v5474, %v5474
  %v5552 = vpack.c.bf16 %v5478, %v5478
  %v5553 = vpack.c.bf16 %v5482, %v5482
  %v5554 = vpack.c.bf16 %v5486, %v5486
  %v5555 = vpack.c.bf16 %v5490, %v5490
  %v5556 = vpack.c.bf16 %v5494, %v5494
  %v5557 = vpack.c.bf16 %v5498, %v5498
  %v5558 = vpack.c.bf16 %v5502, %v5502
  %v5559 = vpack.c.bf16 %v5506, %v5506
  %v5560 = vpack.c.bf16 %v5510, %v5510
  %v5561 = vpack.c.bf16 %v5514, %v5514
  %v5562 = vpack.c.bf16 %v5518, %v5518
  %v5563 = vpack.c.bf16 %v5522, %v5522
  %v5564 = vpack.c.bf16 %v5526, %v5526
  %v5565 = vpack.c.bf16 %v5530, %v5530
  %v5566 = vpack.c.bf16 %v5534, %v5534
  %s5567 = scalar_lea.vmem %s5, 768
  %v5568 = vld [vmem:[%s5567] sm:$0xf]
  %v5569 = vld [vmem:[%s5567 + $0x4] sm:$0xf]
  %v5570 = vld [vmem:[%s5567 + $0x8] sm:$0xf]
  %v5571 = vld [vmem:[%s5567 + $0xc] sm:$0xf]
  %v5572 = vld [vmem:[%s5567 + $0x10] sm:$0xf]
  %v5573 = vld [vmem:[%s5567 + $0x14] sm:$0xf]
  %v5574 = vld [vmem:[%s5567 + $0x18] sm:$0xf]
  %v5575 = vld [vmem:[%s5567 + $0x1c] sm:$0xf]
  %v5576 = vld [vmem:[%s5567 + $0x20] sm:$0xf]
  %v5577 = vld [vmem:[%s5567 + $0x24] sm:$0xf]
  %v5578 = vld [vmem:[%s5567 + $0x28] sm:$0xf]
  %v5579 = vld [vmem:[%s5567 + $0x2c] sm:$0xf]
  %v5580 = vld [vmem:[%s5567 + $0x30] sm:$0xf]
  %v5581 = vld [vmem:[%s5567 + $0x34] sm:$0xf]
  %v5582 = vld [vmem:[%s5567 + $0x38] sm:$0xf]
  %v5583 = vld [vmem:[%s5567 + $0x3c] sm:$0xf]
  %v5584 = vld [vmem:[%s5567 + $0x40] sm:$0xf]
  %v5585 = vld [vmem:[%s5567 + $0x44] sm:$0xf]
  %v5586 = vld [vmem:[%s5567 + $0x48] sm:$0xf]
  %v5587 = vld [vmem:[%s5567 + $0x4c] sm:$0xf]
  %v5588 = vld [vmem:[%s5567 + $0x50] sm:$0xf]
  %v5589 = vld [vmem:[%s5567 + $0x54] sm:$0xf]
  %v5590 = vld [vmem:[%s5567 + $0x58] sm:$0xf]
  %v5591 = vld [vmem:[%s5567 + $0x5c] sm:$0xf]
  %v5592 = vld [vmem:[%s5567 + $0x60] sm:$0xf]
  %v5593 = vld [vmem:[%s5567 + $0x64] sm:$0xf]
  %v5594 = vld [vmem:[%s5567 + $0x68] sm:$0xf]
  %v5595 = vld [vmem:[%s5567 + $0x6c] sm:$0xf]
  %v5596 = vld [vmem:[%s5567 + $0x70] sm:$0xf]
  %v5597 = vld [vmem:[%s5567 + $0x74] sm:$0xf]
  %v5598 = vld [vmem:[%s5567 + $0x78] sm:$0xf]
  %v5599 = vld [vmem:[%s5567 + $0x7c] sm:$0xf]
  %v5616 = vunpack.c.l.b16 %v5551
  %v5617 = vunpack.c.l.b16 %v5552
  %v5618 = vunpack.c.l.b16 %v5553
  %v5619 = vunpack.c.l.b16 %v5554
  %v5620 = vunpack.c.l.b16 %v5555
  %v5621 = vunpack.c.l.b16 %v5556
  %v5622 = vunpack.c.l.b16 %v5557
  %v5623 = vunpack.c.l.b16 %v5558
  %v5624 = vunpack.c.l.b16 %v5559
  %v5625 = vunpack.c.l.b16 %v5560
  %v5626 = vunpack.c.l.b16 %v5561
  %v5627 = vunpack.c.l.b16 %v5562
  %v5628 = vunpack.c.l.b16 %v5563
  %v5629 = vunpack.c.l.b16 %v5564
  %v5630 = vunpack.c.l.b16 %v5565
  %v5631 = vunpack.c.l.b16 %v5566
  %v5632 = vrot.slane %v5618, 7
  %v5633 = vsel %vm3657, %v5632, %v5616
  %v5634 = vrot.slane %v5620, 6
  %v5635 = vsel %vm3660, %v5634, %v5633
  %v5636 = vrot.slane %v5622, 5
  %v5637 = vsel %vm3663, %v5636, %v5635
  %v5638 = vrot.slane %v5624, 4
  %v5639 = vsel %vm3666, %v5638, %v5637
  %v5640 = vrot.slane %v5626, 3
  %v5641 = vsel %vm3669, %v5640, %v5639
  %v5642 = vrot.slane %v5628, 2
  %v5643 = vsel %vm3672, %v5642, %v5641
  %v5644 = vrot.slane %v5630, 1
  %v5645 = vsel %vm3675, %v5644, %v5643
  %v5646 = vrot.slane %v5619, 7
  %v5647 = vsel %vm3657, %v5646, %v5617
  %v5648 = vrot.slane %v5621, 6
  %v5649 = vsel %vm3660, %v5648, %v5647
  %v5650 = vrot.slane %v5623, 5
  %v5651 = vsel %vm3663, %v5650, %v5649
  %v5652 = vrot.slane %v5625, 4
  %v5653 = vsel %vm3666, %v5652, %v5651
  %v5654 = vrot.slane %v5627, 3
  %v5655 = vsel %vm3669, %v5654, %v5653
  %v5656 = vrot.slane %v5629, 2
  %v5657 = vsel %vm3672, %v5656, %v5655
  %v5658 = vrot.slane %v5631, 1
  %v5659 = vsel %vm3675, %v5658, %v5657
  %v5660 = vpack.c.b16 %v5645, %v5645
  %v5661 = vpack.c.b16 %v5659, %v5659
  %v5696 = vunpack.c.l.b16 %v5568
  %v5697 = vunpack.c.l.b16 %v5569
  %v5698 = vunpack.c.l.b16 %v5570
  %v5699 = vunpack.c.l.b16 %v5571
  %v5700 = vunpack.c.l.b16 %v5572
  %v5701 = vunpack.c.l.b16 %v5573
  %v5702 = vunpack.c.l.b16 %v5574
  %v5703 = vunpack.c.l.b16 %v5575
  %v5704 = vunpack.c.l.b16 %v5576
  %v5705 = vunpack.c.l.b16 %v5577
  %v5706 = vunpack.c.l.b16 %v5578
  %v5707 = vunpack.c.l.b16 %v5579
  %v5708 = vunpack.c.l.b16 %v5580
  %v5709 = vunpack.c.l.b16 %v5581
  %v5710 = vunpack.c.l.b16 %v5582
  %v5711 = vunpack.c.l.b16 %v5583
  %v5712 = vunpack.c.l.b16 %v5584
  %v5713 = vunpack.c.l.b16 %v5585
  %v5714 = vunpack.c.l.b16 %v5586
  %v5715 = vunpack.c.l.b16 %v5587
  %v5716 = vunpack.c.l.b16 %v5588
  %v5717 = vunpack.c.l.b16 %v5589
  %v5718 = vunpack.c.l.b16 %v5590
  %v5719 = vunpack.c.l.b16 %v5591
  %v5720 = vunpack.c.l.b16 %v5592
  %v5721 = vunpack.c.l.b16 %v5593
  %v5722 = vunpack.c.l.b16 %v5594
  %v5723 = vunpack.c.l.b16 %v5595
  %v5724 = vunpack.c.l.b16 %v5596
  %v5725 = vunpack.c.l.b16 %v5597
  %v5726 = vunpack.c.l.b16 %v5598
  %v5727 = vunpack.c.l.b16 %v5599
  %v5728 = vpack.c.b16 %v5697, %v5696
  %v5729 = vpack.c.b16 %v5699, %v5698
  %v5730 = vpack.c.b16 %v5701, %v5700
  %v5731 = vpack.c.b16 %v5703, %v5702
  %v5732 = vpack.c.b16 %v5705, %v5704
  %v5733 = vpack.c.b16 %v5707, %v5706
  %v5734 = vpack.c.b16 %v5709, %v5708
  %v5735 = vpack.c.b16 %v5711, %v5710
  %v5736 = vpack.c.b16 %v5713, %v5712
  %v5737 = vpack.c.b16 %v5715, %v5714
  %v5738 = vpack.c.b16 %v5717, %v5716
  %v5739 = vpack.c.b16 %v5719, %v5718
  %v5740 = vpack.c.b16 %v5721, %v5720
  %v5741 = vpack.c.b16 %v5723, %v5722
  %v5742 = vpack.c.b16 %v5725, %v5724
  %v5743 = vpack.c.b16 %v5727, %v5726
  %5760 = vmatprep.subr.bf16.mxu0 0
  %5761 = vmatpush1.bf16.msra.mxu0 %v5728
  %5762 = vmatprep.subr.bf16.mxu0 0
  %5763 = vmatpush1.bf16.msra.mxu0 %v5729
  %5764 = vmatprep.subr.bf16.mxu0 0
  %5765 = vmatpush1.bf16.msra.mxu0 %v5730
  %5766 = vmatprep.subr.bf16.mxu0 0
  %5767 = vmatpush1.bf16.msra.mxu0 %v5731
  %5768 = vmatprep.subr.bf16.mxu0 0
  %5769 = vmatpush1.bf16.msra.mxu0 %v5732
  %5770 = vmatprep.subr.bf16.mxu0 0
  %5771 = vmatpush1.bf16.msra.mxu0 %v5733
  %5772 = vmatprep.subr.bf16.mxu0 0
  %5773 = vmatpush1.bf16.msra.mxu0 %v5734
  %5774 = vmatprep.subr.bf16.mxu0 0
  %5775 = vmatpush1.bf16.msra.mxu0 %v5735
  %5776 = vmatprep.subr.bf16.mxu0 0
  %5777 = vmatpush1.bf16.msra.mxu0 %v5736
  %5778 = vmatprep.subr.bf16.mxu0 0
  %5779 = vmatpush1.bf16.msra.mxu0 %v5737
  %5780 = vmatprep.subr.bf16.mxu0 0
  %5781 = vmatpush1.bf16.msra.mxu0 %v5738
  %5782 = vmatprep.subr.bf16.mxu0 0
  %5783 = vmatpush1.bf16.msra.mxu0 %v5739
  %5784 = vmatprep.subr.bf16.mxu0 0
  %5785 = vmatpush1.bf16.msra.mxu0 %v5740
  %5786 = vmatprep.subr.bf16.mxu0 0
  %5787 = vmatpush1.bf16.msra.mxu0 %v5741
  %5788 = vmatprep.subr.bf16.mxu0 0
  %5789 = vmatpush1.bf16.msra.mxu0 %v5742
  %5790 = vmatprep.subr.bf16.mxu0 0
  %5791 = vmatpush1.bf16.msra.mxu0 %v5743
  %5792 = vmatprep.mubr.bf16.mxu0 %v5661
  %5793 = vmatmul.mubr.bf16.gmra.mrb[0].mxu0 %v5660
  %v5794 = vpop.f32.mrb[0].mxu0
  %v5795 = vadd.f32 0.0, %v5794
  %v5796 = vpop.f32.mrb[0].mxu0
  %v5797 = vpop.f32.mrb[0].mxu0
  %v5798 = vpop.f32.mrb[0].mxu0
  %5799 = vdwg.mxu0
  %v5800 = vadd.f32 %v5446, %v5795
  %s5801 = scalar_lea.vmem [#allocation2], 7
  %v5802 = vld [vmem:[%s5801] ss:$8 sm:$0x3]
  %s5803 = scalar_lea.vmem [#allocation2], 55
  %v5804 = vld [vmem:[%s5803] ss:$8 sm:$0x3]
  %s5805 = scalar_lea.vmem [#allocation2], 103
  %v5806 = vld [vmem:[%s5805] ss:$8 sm:$0x3]
  %s5807 = scalar_lea.vmem [#allocation2], 151
  %v5808 = vld [vmem:[%s5807] ss:$8 sm:$0x3]
  %s5809 = scalar_lea.vmem [#allocation2], 199
  %v5810 = vld [vmem:[%s5809] ss:$8 sm:$0x3]
  %s5811 = scalar_lea.vmem [#allocation2], 247
  %v5812 = vld [vmem:[%s5811] ss:$8 sm:$0x3]
  %s5813 = scalar_lea.vmem [#allocation2], 295
  %v5814 = vld [vmem:[%s5813] ss:$8 sm:$0x3]
  %s5815 = scalar_lea.vmem [#allocation2], 343
  %v5816 = vld [vmem:[%s5815] ss:$8 sm:$0x3]
  %v5825 = vlaneseq
  %v5826 = vshrl.u32 %v5825, 7
  %v5827 = vsub.s32 0, %v5826
  %v5828 = vrot.slane %v5802, %v5827
  %v5829 = vlaneseq
  %v5830 = vshrl.u32 %v5829, 7
  %v5831 = vsub.s32 1, %v5830
  %v5832 = vrot.slane %v5802, %v5831
  %v5833 = vlaneseq
  %v5834 = vshrl.u32 %v5833, 7
  %v5835 = vsub.s32 0, %v5834
  %v5836 = vrot.slane %v5804, %v5835
  %v5837 = vlaneseq
  %v5838 = vshrl.u32 %v5837, 7
  %v5839 = vsub.s32 1, %v5838
  %v5840 = vrot.slane %v5804, %v5839
  %v5841 = vlaneseq
  %v5842 = vshrl.u32 %v5841, 7
  %v5843 = vsub.s32 0, %v5842
  %v5844 = vrot.slane %v5806, %v5843
  %v5845 = vlaneseq
  %v5846 = vshrl.u32 %v5845, 7
  %v5847 = vsub.s32 1, %v5846
  %v5848 = vrot.slane %v5806, %v5847
  %v5849 = vlaneseq
  %v5850 = vshrl.u32 %v5849, 7
  %v5851 = vsub.s32 0, %v5850
  %v5852 = vrot.slane %v5808, %v5851
  %v5853 = vlaneseq
  %v5854 = vshrl.u32 %v5853, 7
  %v5855 = vsub.s32 1, %v5854
  %v5856 = vrot.slane %v5808, %v5855
  %v5857 = vlaneseq
  %v5858 = vshrl.u32 %v5857, 7
  %v5859 = vsub.s32 0, %v5858
  %v5860 = vrot.slane %v5810, %v5859
  %v5861 = vlaneseq
  %v5862 = vshrl.u32 %v5861, 7
  %v5863 = vsub.s32 1, %v5862
  %v5864 = vrot.slane %v5810, %v5863
  %v5865 = vlaneseq
  %v5866 = vshrl.u32 %v5865, 7
  %v5867 = vsub.s32 0, %v5866
  %v5868 = vrot.slane %v5812, %v5867
  %v5869 = vlaneseq
  %v5870 = vshrl.u32 %v5869, 7
  %v5871 = vsub.s32 1, %v5870
  %v5872 = vrot.slane %v5812, %v5871
  %v5873 = vlaneseq
  %v5874 = vshrl.u32 %v5873, 7
  %v5875 = vsub.s32 0, %v5874
  %v5876 = vrot.slane %v5814, %v5875
  %v5877 = vlaneseq
  %v5878 = vshrl.u32 %v5877, 7
  %v5879 = vsub.s32 1, %v5878
  %v5880 = vrot.slane %v5814, %v5879
  %v5881 = vlaneseq
  %v5882 = vshrl.u32 %v5881, 7
  %v5883 = vsub.s32 0, %v5882
  %v5884 = vrot.slane %v5816, %v5883
  %v5885 = vlaneseq
  %v5886 = vshrl.u32 %v5885, 7
  %v5887 = vsub.s32 1, %v5886
  %v5888 = vrot.slane %v5816, %v5887
  %v5905 = vpack.c.bf16 %v5828, %v5828
  %v5906 = vpack.c.bf16 %v5832, %v5832
  %v5907 = vpack.c.bf16 %v5836, %v5836
  %v5908 = vpack.c.bf16 %v5840, %v5840
  %v5909 = vpack.c.bf16 %v5844, %v5844
  %v5910 = vpack.c.bf16 %v5848, %v5848
  %v5911 = vpack.c.bf16 %v5852, %v5852
  %v5912 = vpack.c.bf16 %v5856, %v5856
  %v5913 = vpack.c.bf16 %v5860, %v5860
  %v5914 = vpack.c.bf16 %v5864, %v5864
  %v5915 = vpack.c.bf16 %v5868, %v5868
  %v5916 = vpack.c.bf16 %v5872, %v5872
  %v5917 = vpack.c.bf16 %v5876, %v5876
  %v5918 = vpack.c.bf16 %v5880, %v5880
  %v5919 = vpack.c.bf16 %v5884, %v5884
  %v5920 = vpack.c.bf16 %v5888, %v5888
  %s5921 = scalar_lea.vmem %s5, 896
  %v5922 = vld [vmem:[%s5921] sm:$0xf]
  %v5923 = vld [vmem:[%s5921 + $0x4] sm:$0xf]
  %v5924 = vld [vmem:[%s5921 + $0x8] sm:$0xf]
  %v5925 = vld [vmem:[%s5921 + $0xc] sm:$0xf]
  %v5926 = vld [vmem:[%s5921 + $0x10] sm:$0xf]
  %v5927 = vld [vmem:[%s5921 + $0x14] sm:$0xf]
  %v5928 = vld [vmem:[%s5921 + $0x18] sm:$0xf]
  %v5929 = vld [vmem:[%s5921 + $0x1c] sm:$0xf]
  %v5930 = vld [vmem:[%s5921 + $0x20] sm:$0xf]
  %v5931 = vld [vmem:[%s5921 + $0x24] sm:$0xf]
  %v5932 = vld [vmem:[%s5921 + $0x28] sm:$0xf]
  %v5933 = vld [vmem:[%s5921 + $0x2c] sm:$0xf]
  %v5934 = vld [vmem:[%s5921 + $0x30] sm:$0xf]
  %v5935 = vld [vmem:[%s5921 + $0x34] sm:$0xf]
  %v5936 = vld [vmem:[%s5921 + $0x38] sm:$0xf]
  %v5937 = vld [vmem:[%s5921 + $0x3c] sm:$0xf]
  %v5938 = vld [vmem:[%s5921 + $0x40] sm:$0xf]
  %v5939 = vld [vmem:[%s5921 + $0x44] sm:$0xf]
  %v5940 = vld [vmem:[%s5921 + $0x48] sm:$0xf]
  %v5941 = vld [vmem:[%s5921 + $0x4c] sm:$0xf]
  %v5942 = vld [vmem:[%s5921 + $0x50] sm:$0xf]
  %v5943 = vld [vmem:[%s5921 + $0x54] sm:$0xf]
  %v5944 = vld [vmem:[%s5921 + $0x58] sm:$0xf]
  %v5945 = vld [vmem:[%s5921 + $0x5c] sm:$0xf]
  %v5946 = vld [vmem:[%s5921 + $0x60] sm:$0xf]
  %v5947 = vld [vmem:[%s5921 + $0x64] sm:$0xf]
  %v5948 = vld [vmem:[%s5921 + $0x68] sm:$0xf]
  %v5949 = vld [vmem:[%s5921 + $0x6c] sm:$0xf]
  %v5950 = vld [vmem:[%s5921 + $0x70] sm:$0xf]
  %v5951 = vld [vmem:[%s5921 + $0x74] sm:$0xf]
  %v5952 = vld [vmem:[%s5921 + $0x78] sm:$0xf]
  %v5953 = vld [vmem:[%s5921 + $0x7c] sm:$0xf]
  %v5970 = vunpack.c.l.b16 %v5905
  %v5971 = vunpack.c.l.b16 %v5906
  %v5972 = vunpack.c.l.b16 %v5907
  %v5973 = vunpack.c.l.b16 %v5908
  %v5974 = vunpack.c.l.b16 %v5909
  %v5975 = vunpack.c.l.b16 %v5910
  %v5976 = vunpack.c.l.b16 %v5911
  %v5977 = vunpack.c.l.b16 %v5912
  %v5978 = vunpack.c.l.b16 %v5913
  %v5979 = vunpack.c.l.b16 %v5914
  %v5980 = vunpack.c.l.b16 %v5915
  %v5981 = vunpack.c.l.b16 %v5916
  %v5982 = vunpack.c.l.b16 %v5917
  %v5983 = vunpack.c.l.b16 %v5918
  %v5984 = vunpack.c.l.b16 %v5919
  %v5985 = vunpack.c.l.b16 %v5920
  %v5986 = vrot.slane %v5972, 7
  %v5987 = vsel %vm3657, %v5986, %v5970
  %v5988 = vrot.slane %v5974, 6
  %v5989 = vsel %vm3660, %v5988, %v5987
  %v5990 = vrot.slane %v5976, 5
  %v5991 = vsel %vm3663, %v5990, %v5989
  %v5992 = vrot.slane %v5978, 4
  %v5993 = vsel %vm3666, %v5992, %v5991
  %v5994 = vrot.slane %v5980, 3
  %v5995 = vsel %vm3669, %v5994, %v5993
  %v5996 = vrot.slane %v5982, 2
  %v5997 = vsel %vm3672, %v5996, %v5995
  %v5998 = vrot.slane %v5984, 1
  %v5999 = vsel %vm3675, %v5998, %v5997
  %v6000 = vrot.slane %v5973, 7
  %v6001 = vsel %vm3657, %v6000, %v5971
  %v6002 = vrot.slane %v5975, 6
  %v6003 = vsel %vm3660, %v6002, %v6001
  %v6004 = vrot.slane %v5977, 5
  %v6005 = vsel %vm3663, %v6004, %v6003
  %v6006 = vrot.slane %v5979, 4
  %v6007 = vsel %vm3666, %v6006, %v6005
  %v6008 = vrot.slane %v5981, 3
  %v6009 = vsel %vm3669, %v6008, %v6007
  %v6010 = vrot.slane %v5983, 2
  %v6011 = vsel %vm3672, %v6010, %v6009
  %v6012 = vrot.slane %v5985, 1
  %v6013 = vsel %vm3675, %v6012, %v6011
  %v6014 = vpack.c.b16 %v5999, %v5999
  %v6015 = vpack.c.b16 %v6013, %v6013
  %v6050 = vunpack.c.l.b16 %v5922
  %v6051 = vunpack.c.l.b16 %v5923
  %v6052 = vunpack.c.l.b16 %v5924
  %v6053 = vunpack.c.l.b16 %v5925
  %v6054 = vunpack.c.l.b16 %v5926
  %v6055 = vunpack.c.l.b16 %v5927
  %v6056 = vunpack.c.l.b16 %v5928
  %v6057 = vunpack.c.l.b16 %v5929
  %v6058 = vunpack.c.l.b16 %v5930
  %v6059 = vunpack.c.l.b16 %v5931
  %v6060 = vunpack.c.l.b16 %v5932
  %v6061 = vunpack.c.l.b16 %v5933
  %v6062 = vunpack.c.l.b16 %v5934
  %v6063 = vunpack.c.l.b16 %v5935
  %v6064 = vunpack.c.l.b16 %v5936
  %v6065 = vunpack.c.l.b16 %v5937
  %v6066 = vunpack.c.l.b16 %v5938
  %v6067 = vunpack.c.l.b16 %v5939
  %v6068 = vunpack.c.l.b16 %v5940
  %v6069 = vunpack.c.l.b16 %v5941
  %v6070 = vunpack.c.l.b16 %v5942
  %v6071 = vunpack.c.l.b16 %v5943
  %v6072 = vunpack.c.l.b16 %v5944
  %v6073 = vunpack.c.l.b16 %v5945
  %v6074 = vunpack.c.l.b16 %v5946
  %v6075 = vunpack.c.l.b16 %v5947
  %v6076 = vunpack.c.l.b16 %v5948
  %v6077 = vunpack.c.l.b16 %v5949
  %v6078 = vunpack.c.l.b16 %v5950
  %v6079 = vunpack.c.l.b16 %v5951
  %v6080 = vunpack.c.l.b16 %v5952
  %v6081 = vunpack.c.l.b16 %v5953
  %v6082 = vpack.c.b16 %v6051, %v6050
  %v6083 = vpack.c.b16 %v6053, %v6052
  %v6084 = vpack.c.b16 %v6055, %v6054
  %v6085 = vpack.c.b16 %v6057, %v6056
  %v6086 = vpack.c.b16 %v6059, %v6058
  %v6087 = vpack.c.b16 %v6061, %v6060
  %v6088 = vpack.c.b16 %v6063, %v6062
  %v6089 = vpack.c.b16 %v6065, %v6064
  %v6090 = vpack.c.b16 %v6067, %v6066
  %v6091 = vpack.c.b16 %v6069, %v6068
  %v6092 = vpack.c.b16 %v6071, %v6070
  %v6093 = vpack.c.b16 %v6073, %v6072
  %v6094 = vpack.c.b16 %v6075, %v6074
  %v6095 = vpack.c.b16 %v6077, %v6076
  %v6096 = vpack.c.b16 %v6079, %v6078
  %v6097 = vpack.c.b16 %v6081, %v6080
  %6114 = vmatprep.subr.bf16.mxu0 0
  %6115 = vmatpush1.bf16.msra.mxu0 %v6082
  %6116 = vmatprep.subr.bf16.mxu0 0
  %6117 = vmatpush1.bf16.msra.mxu0 %v6083
  %6118 = vmatprep.subr.bf16.mxu0 0
  %6119 = vmatpush1.bf16.msra.mxu0 %v6084
  %6120 = vmatprep.subr.bf16.mxu0 0
  %6121 = vmatpush1.bf16.msra.mxu0 %v6085
  %6122 = vmatprep.subr.bf16.mxu0 0
  %6123 = vmatpush1.bf16.msra.mxu0 %v6086
  %6124 = vmatprep.subr.bf16.mxu0 0
  %6125 = vmatpush1.bf16.msra.mxu0 %v6087
  %6126 = vmatprep.subr.bf16.mxu0 0
  %6127 = vmatpush1.bf16.msra.mxu0 %v6088
  %6128 = vmatprep.subr.bf16.mxu0 0
  %6129 = vmatpush1.bf16.msra.mxu0 %v6089
  %6130 = vmatprep.subr.bf16.mxu0 0
  %6131 = vmatpush1.bf16.msra.mxu0 %v6090
  %6132 = vmatprep.subr.bf16.mxu0 0
  %6133 = vmatpush1.bf16.msra.mxu0 %v6091
  %6134 = vmatprep.subr.bf16.mxu0 0
  %6135 = vmatpush1.bf16.msra.mxu0 %v6092
  %6136 = vmatprep.subr.bf16.mxu0 0
  %6137 = vmatpush1.bf16.msra.mxu0 %v6093
  %6138 = vmatprep.subr.bf16.mxu0 0
  %6139 = vmatpush1.bf16.msra.mxu0 %v6094
  %6140 = vmatprep.subr.bf16.mxu0 0
  %6141 = vmatpush1.bf16.msra.mxu0 %v6095
  %6142 = vmatprep.subr.bf16.mxu0 0
  %6143 = vmatpush1.bf16.msra.mxu0 %v6096
  %6144 = vmatprep.subr.bf16.mxu0 0
  %6145 = vmatpush1.bf16.msra.mxu0 %v6097
  %6146 = vmatprep.mubr.bf16.mxu0 %v6015
  %6147 = vmatmul.mubr.bf16.gmra.mrb[0].mxu0 %v6014
  %v6148 = vpop.f32.mrb[0].mxu0
  %v6149 = vadd.f32 0.0, %v6148
  %v6150 = vpop.f32.mrb[0].mxu0
  %v6151 = vpop.f32.mrb[0].mxu0
  %v6152 = vpop.f32.mrb[0].mxu0
  %6153 = vdwg.mxu0
  %v6154 = vadd.f32 %v5800, %v6149
  %s6155 = scalar_lea.vmem [#allocation2], 24
  %v6156 = vld [vmem:[%s6155] ss:$8 sm:$0x3]
  %s6157 = scalar_lea.vmem [#allocation2], 72
  %v6158 = vld [vmem:[%s6157] ss:$8 sm:$0x3]
  %s6159 = scalar_lea.vmem [#allocation2], 120
  %v6160 = vld [vmem:[%s6159] ss:$8 sm:$0x3]
  %s6161 = scalar_lea.vmem [#allocation2], 168
  %v6162 = vld [vmem:[%s6161] ss:$8 sm:$0x3]
  %s6163 = scalar_lea.vmem [#allocation2], 216
  %v6164 = vld [vmem:[%s6163] ss:$8 sm:$0x3]
  %s6165 = scalar_lea.vmem [#allocation2], 264
  %v6166 = vld [vmem:[%s6165] ss:$8 sm:$0x3]
  %s6167 = scalar_lea.vmem [#allocation2], 312
  %v6168 = vld [vmem:[%s6167] ss:$8 sm:$0x3]
  %s6169 = scalar_lea.vmem [#allocation2], 360
  %v6170 = vld [vmem:[%s6169] ss:$8 sm:$0x3]
  %v6179 = vlaneseq
  %v6180 = vshrl.u32 %v6179, 7
  %v6181 = vsub.s32 0, %v6180
  %v6182 = vrot.slane %v6156, %v6181
  %v6183 = vlaneseq
  %v6184 = vshrl.u32 %v6183, 7
  %v6185 = vsub.s32 1, %v6184
  %v6186 = vrot.slane %v6156, %v6185
  %v6187 = vlaneseq
  %v6188 = vshrl.u32 %v6187, 7
  %v6189 = vsub.s32 0, %v6188
  %v6190 = vrot.slane %v6158, %v6189
  %v6191 = vlaneseq
  %v6192 = vshrl.u32 %v6191, 7
  %v6193 = vsub.s32 1, %v6192
  %v6194 = vrot.slane %v6158, %v6193
  %v6195 = vlaneseq
  %v6196 = vshrl.u32 %v6195, 7
  %v6197 = vsub.s32 0, %v6196
  %v6198 = vrot.slane %v6160, %v6197
  %v6199 = vlaneseq
  %v6200 = vshrl.u32 %v6199, 7
  %v6201 = vsub.s32 1, %v6200
  %v6202 = vrot.slane %v6160, %v6201
  %v6203 = vlaneseq
  %v6204 = vshrl.u32 %v6203, 7
  %v6205 = vsub.s32 0, %v6204
  %v6206 = vrot.slane %v6162, %v6205
  %v6207 = vlaneseq
  %v6208 = vshrl.u32 %v6207, 7
  %v6209 = vsub.s32 1, %v6208
  %v6210 = vrot.slane %v6162, %v6209
  %v6211 = vlaneseq
  %v6212 = vshrl.u32 %v6211, 7
  %v6213 = vsub.s32 0, %v6212
  %v6214 = vrot.slane %v6164, %v6213
  %v6215 = vlaneseq
  %v6216 = vshrl.u32 %v6215, 7
  %v6217 = vsub.s32 1, %v6216
  %v6218 = vrot.slane %v6164, %v6217
  %v6219 = vlaneseq
  %v6220 = vshrl.u32 %v6219, 7
  %v6221 = vsub.s32 0, %v6220
  %v6222 = vrot.slane %v6166, %v6221
  %v6223 = vlaneseq
  %v6224 = vshrl.u32 %v6223, 7
  %v6225 = vsub.s32 1, %v6224
  %v6226 = vrot.slane %v6166, %v6225
  %v6227 = vlaneseq
  %v6228 = vshrl.u32 %v6227, 7
  %v6229 = vsub.s32 0, %v6228
  %v6230 = vrot.slane %v6168, %v6229
  %v6231 = vlaneseq
  %v6232 = vshrl.u32 %v6231, 7
  %v6233 = vsub.s32 1, %v6232
  %v6234 = vrot.slane %v6168, %v6233
  %v6235 = vlaneseq
  %v6236 = vshrl.u32 %v6235, 7
  %v6237 = vsub.s32 0, %v6236
  %v6238 = vrot.slane %v6170, %v6237
  %v6239 = vlaneseq
  %v6240 = vshrl.u32 %v6239, 7
  %v6241 = vsub.s32 1, %v6240
  %v6242 = vrot.slane %v6170, %v6241
  %v6259 = vpack.c.bf16 %v6182, %v6182
  %v6260 = vpack.c.bf16 %v6186, %v6186
  %v6261 = vpack.c.bf16 %v6190, %v6190
  %v6262 = vpack.c.bf16 %v6194, %v6194
  %v6263 = vpack.c.bf16 %v6198, %v6198
  %v6264 = vpack.c.bf16 %v6202, %v6202
  %v6265 = vpack.c.bf16 %v6206, %v6206
  %v6266 = vpack.c.bf16 %v6210, %v6210
  %v6267 = vpack.c.bf16 %v6214, %v6214
  %v6268 = vpack.c.bf16 %v6218, %v6218
  %v6269 = vpack.c.bf16 %v6222, %v6222
  %v6270 = vpack.c.bf16 %v6226, %v6226
  %v6271 = vpack.c.bf16 %v6230, %v6230
  %v6272 = vpack.c.bf16 %v6234, %v6234
  %v6273 = vpack.c.bf16 %v6238, %v6238
  %v6274 = vpack.c.bf16 %v6242, %v6242
  %s6275 = scalar_lea.vmem %s5, 1024
  %v6276 = vld [vmem:[%s6275] sm:$0xf]
  %v6277 = vld [vmem:[%s6275 + $0x4] sm:$0xf]
  %v6278 = vld [vmem:[%s6275 + $0x8] sm:$0xf]
  %v6279 = vld [vmem:[%s6275 + $0xc] sm:$0xf]
  %v6280 = vld [vmem:[%s6275 + $0x10] sm:$0xf]
  %v6281 = vld [vmem:[%s6275 + $0x14] sm:$0xf]
  %v6282 = vld [vmem:[%s6275 + $0x18] sm:$0xf]
  %v6283 = vld [vmem:[%s6275 + $0x1c] sm:$0xf]
  %v6284 = vld [vmem:[%s6275 + $0x20] sm:$0xf]
  %v6285 = vld [vmem:[%s6275 + $0x24] sm:$0xf]
  %v6286 = vld [vmem:[%s6275 + $0x28] sm:$0xf]
  %v6287 = vld [vmem:[%s6275 + $0x2c] sm:$0xf]
  %v6288 = vld [vmem:[%s6275 + $0x30] sm:$0xf]
  %v6289 = vld [vmem:[%s6275 + $0x34] sm:$0xf]
  %v6290 = vld [vmem:[%s6275 + $0x38] sm:$0xf]
  %v6291 = vld [vmem:[%s6275 + $0x3c] sm:$0xf]
  %v6292 = vld [vmem:[%s6275 + $0x40] sm:$0xf]
  %v6293 = vld [vmem:[%s6275 + $0x44] sm:$0xf]
  %v6294 = vld [vmem:[%s6275 + $0x48] sm:$0xf]
  %v6295 = vld [vmem:[%s6275 + $0x4c] sm:$0xf]
  %v6296 = vld [vmem:[%s6275 + $0x50] sm:$0xf]
  %v6297 = vld [vmem:[%s6275 + $0x54] sm:$0xf]
  %v6298 = vld [vmem:[%s6275 + $0x58] sm:$0xf]
  %v6299 = vld [vmem:[%s6275 + $0x5c] sm:$0xf]
  %v6300 = vld [vmem:[%s6275 + $0x60] sm:$0xf]
  %v6301 = vld [vmem:[%s6275 + $0x64] sm:$0xf]
  %v6302 = vld [vmem:[%s6275 + $0x68] sm:$0xf]
  %v6303 = vld [vmem:[%s6275 + $0x6c] sm:$0xf]
  %v6304 = vld [vmem:[%s6275 + $0x70] sm:$0xf]
  %v6305 = vld [vmem:[%s6275 + $0x74] sm:$0xf]
  %v6306 = vld [vmem:[%s6275 + $0x78] sm:$0xf]
  %v6307 = vld [vmem:[%s6275 + $0x7c] sm:$0xf]
  %v6324 = vunpack.c.l.b16 %v6259
  %v6325 = vunpack.c.l.b16 %v6260
  %v6326 = vunpack.c.l.b16 %v6261
  %v6327 = vunpack.c.l.b16 %v6262
  %v6328 = vunpack.c.l.b16 %v6263
  %v6329 = vunpack.c.l.b16 %v6264
  %v6330 = vunpack.c.l.b16 %v6265
  %v6331 = vunpack.c.l.b16 %v6266
  %v6332 = vunpack.c.l.b16 %v6267
  %v6333 = vunpack.c.l.b16 %v6268
  %v6334 = vunpack.c.l.b16 %v6269
  %v6335 = vunpack.c.l.b16 %v6270
  %v6336 = vunpack.c.l.b16 %v6271
  %v6337 = vunpack.c.l.b16 %v6272
  %v6338 = vunpack.c.l.b16 %v6273
  %v6339 = vunpack.c.l.b16 %v6274
  %v6340 = vrot.slane %v6326, 7
  %v6341 = vsel %vm3657, %v6340, %v6324
  %v6342 = vrot.slane %v6328, 6
  %v6343 = vsel %vm3660, %v6342, %v6341
  %v6344 = vrot.slane %v6330, 5
  %v6345 = vsel %vm3663, %v6344, %v6343
  %v6346 = vrot.slane %v6332, 4
  %v6347 = vsel %vm3666, %v6346, %v6345
  %v6348 = vrot.slane %v6334, 3
  %v6349 = vsel %vm3669, %v6348, %v6347
  %v6350 = vrot.slane %v6336, 2
  %v6351 = vsel %vm3672, %v6350, %v6349
  %v6352 = vrot.slane %v6338, 1
  %v6353 = vsel %vm3675, %v6352, %v6351
  %v6354 = vrot.slane %v6327, 7
  %v6355 = vsel %vm3657, %v6354, %v6325
  %v6356 = vrot.slane %v6329, 6
  %v6357 = vsel %vm3660, %v6356, %v6355
  %v6358 = vrot.slane %v6331, 5
  %v6359 = vsel %vm3663, %v6358, %v6357
  %v6360 = vrot.slane %v6333, 4
  %v6361 = vsel %vm3666, %v6360, %v6359
  %v6362 = vrot.slane %v6335, 3
  %v6363 = vsel %vm3669, %v6362, %v6361
  %v6364 = vrot.slane %v6337, 2
  %v6365 = vsel %vm3672, %v6364, %v6363
  %v6366 = vrot.slane %v6339, 1
  %v6367 = vsel %vm3675, %v6366, %v6365
  %v6368 = vpack.c.b16 %v6353, %v6353
  %v6369 = vpack.c.b16 %v6367, %v6367
  %v6404 = vunpack.c.l.b16 %v6276
  %v6405 = vunpack.c.l.b16 %v6277
  %v6406 = vunpack.c.l.b16 %v6278
  %v6407 = vunpack.c.l.b16 %v6279
  %v6408 = vunpack.c.l.b16 %v6280
  %v6409 = vunpack.c.l.b16 %v6281
  %v6410 = vunpack.c.l.b16 %v6282
  %v6411 = vunpack.c.l.b16 %v6283
  %v6412 = vunpack.c.l.b16 %v6284
  %v6413 = vunpack.c.l.b16 %v6285
  %v6414 = vunpack.c.l.b16 %v6286
  %v6415 = vunpack.c.l.b16 %v6287
  %v6416 = vunpack.c.l.b16 %v6288
  %v6417 = vunpack.c.l.b16 %v6289
  %v6418 = vunpack.c.l.b16 %v6290
  %v6419 = vunpack.c.l.b16 %v6291
  %v6420 = vunpack.c.l.b16 %v6292
  %v6421 = vunpack.c.l.b16 %v6293
  %v6422 = vunpack.c.l.b16 %v6294
  %v6423 = vunpack.c.l.b16 %v6295
  %v6424 = vunpack.c.l.b16 %v6296
  %v6425 = vunpack.c.l.b16 %v6297
  %v6426 = vunpack.c.l.b16 %v6298
  %v6427 = vunpack.c.l.b16 %v6299
  %v6428 = vunpack.c.l.b16 %v6300
  %v6429 = vunpack.c.l.b16 %v6301
  %v6430 = vunpack.c.l.b16 %v6302
  %v6431 = vunpack.c.l.b16 %v6303
  %v6432 = vunpack.c.l.b16 %v6304
  %v6433 = vunpack.c.l.b16 %v6305
  %v6434 = vunpack.c.l.b16 %v6306
  %v6435 = vunpack.c.l.b16 %v6307
  %v6436 = vpack.c.b16 %v6405, %v6404
  %v6437 = vpack.c.b16 %v6407, %v6406
  %v6438 = vpack.c.b16 %v6409, %v6408
  %v6439 = vpack.c.b16 %v6411, %v6410
  %v6440 = vpack.c.b16 %v6413, %v6412
  %v6441 = vpack.c.b16 %v6415, %v6414
  %v6442 = vpack.c.b16 %v6417, %v6416
  %v6443 = vpack.c.b16 %v6419, %v6418
  %v6444 = vpack.c.b16 %v6421, %v6420
  %v6445 = vpack.c.b16 %v6423, %v6422
  %v6446 = vpack.c.b16 %v6425, %v6424
  %v6447 = vpack.c.b16 %v6427, %v6426
  %v6448 = vpack.c.b16 %v6429, %v6428
  %v6449 = vpack.c.b16 %v6431, %v6430
  %v6450 = vpack.c.b16 %v6433, %v6432
  %v6451 = vpack.c.b16 %v6435, %v6434
  %6468 = vmatprep.subr.bf16.mxu0 0
  %6469 = vmatpush1.bf16.msra.mxu0 %v6436
  %6470 = vmatprep.subr.bf16.mxu0 0
  %6471 = vmatpush1.bf16.msra.mxu0 %v6437
  %6472 = vmatprep.subr.bf16.mxu0 0
  %6473 = vmatpush1.bf16.msra.mxu0 %v6438
  %6474 = vmatprep.subr.bf16.mxu0 0
  %6475 = vmatpush1.bf16.msra.mxu0 %v6439
  %6476 = vmatprep.subr.bf16.mxu0 0
  %6477 = vmatpush1.bf16.msra.mxu0 %v6440
  %6478 = vmatprep.subr.bf16.mxu0 0
  %6479 = vmatpush1.bf16.msra.mxu0 %v6441
  %6480 = vmatprep.subr.bf16.mxu0 0
  %6481 = vmatpush1.bf16.msra.mxu0 %v6442
  %6482 = vmatprep.subr.bf16.mxu0 0
  %6483 = vmatpush1.bf16.msra.mxu0 %v6443
  %6484 = vmatprep.subr.bf16.mxu0 0
  %6485 = vmatpush1.bf16.msra.mxu0 %v6444
  %6486 = vmatprep.subr.bf16.mxu0 0
  %6487 = vmatpush1.bf16.msra.mxu0 %v6445
  %6488 = vmatprep.subr.bf16.mxu0 0
  %6489 = vmatpush1.bf16.msra.mxu0 %v6446
  %6490 = vmatprep.subr.bf16.mxu0 0
  %6491 = vmatpush1.bf16.msra.mxu0 %v6447
  %6492 = vmatprep.subr.bf16.mxu0 0
  %6493 = vmatpush1.bf16.msra.mxu0 %v6448
  %6494 = vmatprep.subr.bf16.mxu0 0
  %6495 = vmatpush1.bf16.msra.mxu0 %v6449
  %6496 = vmatprep.subr.bf16.mxu0 0
  %6497 = vmatpush1.bf16.msra.mxu0 %v6450
  %6498 = vmatprep.subr.bf16.mxu0 0
  %6499 = vmatpush1.bf16.msra.mxu0 %v6451
  %6500 = vmatprep.mubr.bf16.mxu0 %v6369
  %6501 = vmatmul.mubr.bf16.gmra.mrb[0].mxu0 %v6368
  %v6502 = vpop.f32.mrb[0].mxu0
  %v6503 = vadd.f32 0.0, %v6502
  %v6504 = vpop.f32.mrb[0].mxu0
  %v6505 = vpop.f32.mrb[0].mxu0
  %v6506 = vpop.f32.mrb[0].mxu0
  %6507 = vdwg.mxu0
  %v6508 = vadd.f32 %v6154, %v6503
  %s6509 = scalar_lea.vmem [#allocation2], 25
  %v6510 = vld [vmem:[%s6509] ss:$8 sm:$0x3]
  %s6511 = scalar_lea.vmem [#allocation2], 73
  %v6512 = vld [vmem:[%s6511] ss:$8 sm:$0x3]
  %s6513 = scalar_lea.vmem [#allocation2], 121
  %v6514 = vld [vmem:[%s6513] ss:$8 sm:$0x3]
  %s6515 = scalar_lea.vmem [#allocation2], 169
  %v6516 = vld [vmem:[%s6515] ss:$8 sm:$0x3]
  %s6517 = scalar_lea.vmem [#allocation2], 217
  %v6518 = vld [vmem:[%s6517] ss:$8 sm:$0x3]
  %s6519 = scalar_lea.vmem [#allocation2], 265
  %v6520 = vld [vmem:[%s6519] ss:$8 sm:$0x3]
  %s6521 = scalar_lea.vmem [#allocation2], 313
  %v6522 = vld [vmem:[%s6521] ss:$8 sm:$0x3]
  %s6523 = scalar_lea.vmem [#allocation2], 361
  %v6524 = vld [vmem:[%s6523] ss:$8 sm:$0x3]
  %v6533 = vlaneseq
  %v6534 = vshrl.u32 %v6533, 7
  %v6535 = vsub.s32 0, %v6534
  %v6536 = vrot.slane %v6510, %v6535
  %v6537 = vlaneseq
  %v6538 = vshrl.u32 %v6537, 7
  %v6539 = vsub.s32 1, %v6538
  %v6540 = vrot.slane %v6510, %v6539
  %v6541 = vlaneseq
  %v6542 = vshrl.u32 %v6541, 7
  %v6543 = vsub.s32 0, %v6542
  %v6544 = vrot.slane %v6512, %v6543
  %v6545 = vlaneseq
  %v6546 = vshrl.u32 %v6545, 7
  %v6547 = vsub.s32 1, %v6546
  %v6548 = vrot.slane %v6512, %v6547
  %v6549 = vlaneseq
  %v6550 = vshrl.u32 %v6549, 7
  %v6551 = vsub.s32 0, %v6550
  %v6552 = vrot.slane %v6514, %v6551
  %v6553 = vlaneseq
  %v6554 = vshrl.u32 %v6553, 7
  %v6555 = vsub.s32 1, %v6554
  %v6556 = vrot.slane %v6514, %v6555
  %v6557 = vlaneseq
  %v6558 = vshrl.u32 %v6557, 7
  %v6559 = vsub.s32 0, %v6558
  %v6560 = vrot.slane %v6516, %v6559
  %v6561 = vlaneseq
  %v6562 = vshrl.u32 %v6561, 7
  %v6563 = vsub.s32 1, %v6562
  %v6564 = vrot.slane %v6516, %v6563
  %v6565 = vlaneseq
  %v6566 = vshrl.u32 %v6565, 7
  %v6567 = vsub.s32 0, %v6566
  %v6568 = vrot.slane %v6518, %v6567
  %v6569 = vlaneseq
  %v6570 = vshrl.u32 %v6569, 7
  %v6571 = vsub.s32 1, %v6570
  %v6572 = vrot.slane %v6518, %v6571
  %v6573 = vlaneseq
  %v6574 = vshrl.u32 %v6573, 7
  %v6575 = vsub.s32 0, %v6574
  %v6576 = vrot.slane %v6520, %v6575
  %v6577 = vlaneseq
  %v6578 = vshrl.u32 %v6577, 7
  %v6579 = vsub.s32 1, %v6578
  %v6580 = vrot.slane %v6520, %v6579
  %v6581 = vlaneseq
  %v6582 = vshrl.u32 %v6581, 7
  %v6583 = vsub.s32 0, %v6582
  %v6584 = vrot.slane %v6522, %v6583
  %v6585 = vlaneseq
  %v6586 = vshrl.u32 %v6585, 7
  %v6587 = vsub.s32 1, %v6586
  %v6588 = vrot.slane %v6522, %v6587
  %v6589 = vlaneseq
  %v6590 = vshrl.u32 %v6589, 7
  %v6591 = vsub.s32 0, %v6590
  %v6592 = vrot.slane %v6524, %v6591
  %v6593 = vlaneseq
  %v6594 = vshrl.u32 %v6593, 7
  %v6595 = vsub.s32 1, %v6594
  %v6596 = vrot.slane %v6524, %v6595
  %v6613 = vpack.c.bf16 %v6536, %v6536
  %v6614 = vpack.c.bf16 %v6540, %v6540
  %v6615 = vpack.c.bf16 %v6544, %v6544
  %v6616 = vpack.c.bf16 %v6548, %v6548
  %v6617 = vpack.c.bf16 %v6552, %v6552
  %v6618 = vpack.c.bf16 %v6556, %v6556
  %v6619 = vpack.c.bf16 %v6560, %v6560
  %v6620 = vpack.c.bf16 %v6564, %v6564
  %v6621 = vpack.c.bf16 %v6568, %v6568
  %v6622 = vpack.c.bf16 %v6572, %v6572
  %v6623 = vpack.c.bf16 %v6576, %v6576
  %v6624 = vpack.c.bf16 %v6580, %v6580
  %v6625 = vpack.c.bf16 %v6584, %v6584
  %v6626 = vpack.c.bf16 %v6588, %v6588
  %v6627 = vpack.c.bf16 %v6592, %v6592
  %v6628 = vpack.c.bf16 %v6596, %v6596
  %s6629 = scalar_lea.vmem %s5, 1152
  %v6630 = vld [vmem:[%s6629] sm:$0xf]
  %v6631 = vld [vmem:[%s6629 + $0x4] sm:$0xf]
  %v6632 = vld [vmem:[%s6629 + $0x8] sm:$0xf]
  %v6633 = vld [vmem:[%s6629 + $0xc] sm:$0xf]
  %v6634 = vld [vmem:[%s6629 + $0x10] sm:$0xf]
  %v6635 = vld [vmem:[%s6629 + $0x14] sm:$0xf]
  %v6636 = vld [vmem:[%s6629 + $0x18] sm:$0xf]
  %v6637 = vld [vmem:[%s6629 + $0x1c] sm:$0xf]
  %v6638 = vld [vmem:[%s6629 + $0x20] sm:$0xf]
  %v6639 = vld [vmem:[%s6629 + $0x24] sm:$0xf]
  %v6640 = vld [vmem:[%s6629 + $0x28] sm:$0xf]
  %v6641 = vld [vmem:[%s6629 + $0x2c] sm:$0xf]
  %v6642 = vld [vmem:[%s6629 + $0x30] sm:$0xf]
  %v6643 = vld [vmem:[%s6629 + $0x34] sm:$0xf]
  %v6644 = vld [vmem:[%s6629 + $0x38] sm:$0xf]
  %v6645 = vld [vmem:[%s6629 + $0x3c] sm:$0xf]
  %v6646 = vld [vmem:[%s6629 + $0x40] sm:$0xf]
  %v6647 = vld [vmem:[%s6629 + $0x44] sm:$0xf]
  %v6648 = vld [vmem:[%s6629 + $0x48] sm:$0xf]
  %v6649 = vld [vmem:[%s6629 + $0x4c] sm:$0xf]
  %v6650 = vld [vmem:[%s6629 + $0x50] sm:$0xf]
  %v6651 = vld [vmem:[%s6629 + $0x54] sm:$0xf]
  %v6652 = vld [vmem:[%s6629 + $0x58] sm:$0xf]
  %v6653 = vld [vmem:[%s6629 + $0x5c] sm:$0xf]
  %v6654 = vld [vmem:[%s6629 + $0x60] sm:$0xf]
  %v6655 = vld [vmem:[%s6629 + $0x64] sm:$0xf]
  %v6656 = vld [vmem:[%s6629 + $0x68] sm:$0xf]
  %v6657 = vld [vmem:[%s6629 + $0x6c] sm:$0xf]
  %v6658 = vld [vmem:[%s6629 + $0x70] sm:$0xf]
  %v6659 = vld [vmem:[%s6629 + $0x74] sm:$0xf]
  %v6660 = vld [vmem:[%s6629 + $0x78] sm:$0xf]
  %v6661 = vld [vmem:[%s6629 + $0x7c] sm:$0xf]
  %v6678 = vunpack.c.l.b16 %v6613
  %v6679 = vunpack.c.l.b16 %v6614
  %v6680 = vunpack.c.l.b16 %v6615
  %v6681 = vunpack.c.l.b16 %v6616
  %v6682 = vunpack.c.l.b16 %v6617
  %v6683 = vunpack.c.l.b16 %v6618
  %v6684 = vunpack.c.l.b16 %v6619
  %v6685 = vunpack.c.l.b16 %v6620
  %v6686 = vunpack.c.l.b16 %v6621
  %v6687 = vunpack.c.l.b16 %v6622
  %v6688 = vunpack.c.l.b16 %v6623
  %v6689 = vunpack.c.l.b16 %v6624
  %v6690 = vunpack.c.l.b16 %v6625
  %v6691 = vunpack.c.l.b16 %v6626
  %v6692 = vunpack.c.l.b16 %v6627
  %v6693 = vunpack.c.l.b16 %v6628
  %v6694 = vrot.slane %v6680, 7
  %v6695 = vsel %vm3657, %v6694, %v6678
  %v6696 = vrot.slane %v6682, 6
  %v6697 = vsel %vm3660, %v6696, %v6695
  %v6698 = vrot.slane %v6684, 5
  %v6699 = vsel %vm3663, %v6698, %v6697
  %v6700 = vrot.slane %v6686, 4
  %v6701 = vsel %vm3666, %v6700, %v6699
  %v6702 = vrot.slane %v6688, 3
  %v6703 = vsel %vm3669, %v6702, %v6701
  %v6704 = vrot.slane %v6690, 2
  %v6705 = vsel %vm3672, %v6704, %v6703
  %v6706 = vrot.slane %v6692, 1
  %v6707 = vsel %vm3675, %v6706, %v6705
  %v6708 = vrot.slane %v6681, 7
  %v6709 = vsel %vm3657, %v6708, %v6679
  %v6710 = vrot.slane %v6683, 6
  %v6711 = vsel %vm3660, %v6710, %v6709
  %v6712 = vrot.slane %v6685, 5
  %v6713 = vsel %vm3663, %v6712, %v6711
  %v6714 = vrot.slane %v6687, 4
  %v6715 = vsel %vm3666, %v6714, %v6713
  %v6716 = vrot.slane %v6689, 3
  %v6717 = vsel %vm3669, %v6716, %v6715
  %v6718 = vrot.slane %v6691, 2
  %v6719 = vsel %vm3672, %v6718, %v6717
  %v6720 = vrot.slane %v6693, 1
  %v6721 = vsel %vm3675, %v6720, %v6719
  %v6722 = vpack.c.b16 %v6707, %v6707
  %v6723 = vpack.c.b16 %v6721, %v6721
  %v6758 = vunpack.c.l.b16 %v6630
  %v6759 = vunpack.c.l.b16 %v6631
  %v6760 = vunpack.c.l.b16 %v6632
  %v6761 = vunpack.c.l.b16 %v6633
  %v6762 = vunpack.c.l.b16 %v6634
  %v6763 = vunpack.c.l.b16 %v6635
  %v6764 = vunpack.c.l.b16 %v6636
  %v6765 = vunpack.c.l.b16 %v6637
  %v6766 = vunpack.c.l.b16 %v6638
  %v6767 = vunpack.c.l.b16 %v6639
  %v6768 = vunpack.c.l.b16 %v6640
  %v6769 = vunpack.c.l.b16 %v6641
  %v6770 = vunpack.c.l.b16 %v6642
  %v6771 = vunpack.c.l.b16 %v6643
  %v6772 = vunpack.c.l.b16 %v6644
  %v6773 = vunpack.c.l.b16 %v6645
  %v6774 = vunpack.c.l.b16 %v6646
  %v6775 = vunpack.c.l.b16 %v6647
  %v6776 = vunpack.c.l.b16 %v6648
  %v6777 = vunpack.c.l.b16 %v6649
  %v6778 = vunpack.c.l.b16 %v6650
  %v6779 = vunpack.c.l.b16 %v6651
  %v6780 = vunpack.c.l.b16 %v6652
  %v6781 = vunpack.c.l.b16 %v6653
  %v6782 = vunpack.c.l.b16 %v6654
  %v6783 = vunpack.c.l.b16 %v6655
  %v6784 = vunpack.c.l.b16 %v6656
  %v6785 = vunpack.c.l.b16 %v6657
  %v6786 = vunpack.c.l.b16 %v6658
  %v6787 = vunpack.c.l.b16 %v6659
  %v6788 = vunpack.c.l.b16 %v6660
  %v6789 = vunpack.c.l.b16 %v6661
  %v6790 = vpack.c.b16 %v6759, %v6758
  %v6791 = vpack.c.b16 %v6761, %v6760
  %v6792 = vpack.c.b16 %v6763, %v6762
  %v6793 = vpack.c.b16 %v6765, %v6764
  %v6794 = vpack.c.b16 %v6767, %v6766
  %v6795 = vpack.c.b16 %v6769, %v6768
  %v6796 = vpack.c.b16 %v6771, %v6770
  %v6797 = vpack.c.b16 %v6773, %v6772
  %v6798 = vpack.c.b16 %v6775, %v6774
  %v6799 = vpack.c.b16 %v6777, %v6776
  %v6800 = vpack.c.b16 %v6779, %v6778
  %v6801 = vpack.c.b16 %v6781, %v6780
  %v6802 = vpack.c.b16 %v6783, %v6782
  %v6803 = vpack.c.b16 %v6785, %v6784
  %v6804 = vpack.c.b16 %v6787, %v6786
  %v6805 = vpack.c.b16 %v6789, %v6788
  %6822 = vmatprep.subr.bf16.mxu0 0
  %6823 = vmatpush1.bf16.msra.mxu0 %v6790
  %6824 = vmatprep.subr.bf16.mxu0 0
  %6825 = vmatpush1.bf16.msra.mxu0 %v6791
  %6826 = vmatprep.subr.bf16.mxu0 0
  %6827 = vmatpush1.bf16.msra.mxu0 %v6792
  %6828 = vmatprep.subr.bf16.mxu0 0
  %6829 = vmatpush1.bf16.msra.mxu0 %v6793
  %6830 = vmatprep.subr.bf16.mxu0 0
  %6831 = vmatpush1.bf16.msra.mxu0 %v6794
  %6832 = vmatprep.subr.bf16.mxu0 0
  %6833 = vmatpush1.bf16.msra.mxu0 %v6795
  %6834 = vmatprep.subr.bf16.mxu0 0
  %6835 = vmatpush1.bf16.msra.mxu0 %v6796
  %6836 = vmatprep.subr.bf16.mxu0 0
  %6837 = vmatpush1.bf16.msra.mxu0 %v6797
  %6838 = vmatprep.subr.bf16.mxu0 0
  %6839 = vmatpush1.bf16.msra.mxu0 %v6798
  %6840 = vmatprep.subr.bf16.mxu0 0
  %6841 = vmatpush1.bf16.msra.mxu0 %v6799
  %6842 = vmatprep.subr.bf16.mxu0 0
  %6843 = vmatpush1.bf16.msra.mxu0 %v6800
  %6844 = vmatprep.subr.bf16.mxu0 0
  %6845 = vmatpush1.bf16.msra.mxu0 %v6801
  %6846 = vmatprep.subr.bf16.mxu0 0
  %6847 = vmatpush1.bf16.msra.mxu0 %v6802
  %6848 = vmatprep.subr.bf16.mxu0 0
  %6849 = vmatpush1.bf16.msra.mxu0 %v6803
  %6850 = vmatprep.subr.bf16.mxu0 0
  %6851 = vmatpush1.bf16.msra.mxu0 %v6804
  %6852 = vmatprep.subr.bf16.mxu0 0
  %6853 = vmatpush1.bf16.msra.mxu0 %v6805
  %6854 = vmatprep.mubr.bf16.mxu0 %v6723
  %6855 = vmatmul.mubr.bf16.gmra.mrb[0].mxu0 %v6722
  %v6856 = vpop.f32.mrb[0].mxu0
  %v6857 = vadd.f32 0.0, %v6856
  %v6858 = vpop.f32.mrb[0].mxu0
  %v6859 = vpop.f32.mrb[0].mxu0
  %v6860 = vpop.f32.mrb[0].mxu0
  %6861 = vdwg.mxu0
  %v6862 = vadd.f32 %v6508, %v6857
  %s6863 = scalar_lea.vmem [#allocation2], 26
  %v6864 = vld [vmem:[%s6863] ss:$8 sm:$0x3]
  %s6865 = scalar_lea.vmem [#allocation2], 74
  %v6866 = vld [vmem:[%s6865] ss:$8 sm:$0x3]
  %s6867 = scalar_lea.vmem [#allocation2], 122
  %v6868 = vld [vmem:[%s6867] ss:$8 sm:$0x3]
  %s6869 = scalar_lea.vmem [#allocation2], 170
  %v6870 = vld [vmem:[%s6869] ss:$8 sm:$0x3]
  %s6871 = scalar_lea.vmem [#allocation2], 218
  %v6872 = vld [vmem:[%s6871] ss:$8 sm:$0x3]
  %s6873 = scalar_lea.vmem [#allocation2], 266
  %v6874 = vld [vmem:[%s6873] ss:$8 sm:$0x3]
  %s6875 = scalar_lea.vmem [#allocation2], 314
  %v6876 = vld [vmem:[%s6875] ss:$8 sm:$0x3]
  %s6877 = scalar_lea.vmem [#allocation2], 362
  %v6878 = vld [vmem:[%s6877] ss:$8 sm:$0x3]
  %v6887 = vlaneseq
  %v6888 = vshrl.u32 %v6887, 7
  %v6889 = vsub.s32 0, %v6888
  %v6890 = vrot.slane %v6864, %v6889
  %v6891 = vlaneseq
  %v6892 = vshrl.u32 %v6891, 7
  %v6893 = vsub.s32 1, %v6892
  %v6894 = vrot.slane %v6864, %v6893
  %v6895 = vlaneseq
  %v6896 = vshrl.u32 %v6895, 7
  %v6897 = vsub.s32 0, %v6896
  %v6898 = vrot.slane %v6866, %v6897
  %v6899 = vlaneseq
  %v6900 = vshrl.u32 %v6899, 7
  %v6901 = vsub.s32 1, %v6900
  %v6902 = vrot.slane %v6866, %v6901
  %v6903 = vlaneseq
  %v6904 = vshrl.u32 %v6903, 7
  %v6905 = vsub.s32 0, %v6904
  %v6906 = vrot.slane %v6868, %v6905
  %v6907 = vlaneseq
  %v6908 = vshrl.u32 %v6907, 7
  %v6909 = vsub.s32 1, %v6908
  %v6910 = vrot.slane %v6868, %v6909
  %v6911 = vlaneseq
  %v6912 = vshrl.u32 %v6911, 7
  %v6913 = vsub.s32 0, %v6912
  %v6914 = vrot.slane %v6870, %v6913
  %v6915 = vlaneseq
  %v6916 = vshrl.u32 %v6915, 7
  %v6917 = vsub.s32 1, %v6916
  %v6918 = vrot.slane %v6870, %v6917
  %v6919 = vlaneseq
  %v6920 = vshrl.u32 %v6919, 7
  %v6921 = vsub.s32 0, %v6920
  %v6922 = vrot.slane %v6872, %v6921
  %v6923 = vlaneseq
  %v6924 = vshrl.u32 %v6923, 7
  %v6925 = vsub.s32 1, %v6924
  %v6926 = vrot.slane %v6872, %v6925
  %v6927 = vlaneseq
  %v6928 = vshrl.u32 %v6927, 7
  %v6929 = vsub.s32 0, %v6928
  %v6930 = vrot.slane %v6874, %v6929
  %v6931 = vlaneseq
  %v6932 = vshrl.u32 %v6931, 7
  %v6933 = vsub.s32 1, %v6932
  %v6934 = vrot.slane %v6874, %v6933
  %v6935 = vlaneseq
  %v6936 = vshrl.u32 %v6935, 7
  %v6937 = vsub.s32 0, %v6936
  %v6938 = vrot.slane %v6876, %v6937
  %v6939 = vlaneseq
  %v6940 = vshrl.u32 %v6939, 7
  %v6941 = vsub.s32 1, %v6940
  %v6942 = vrot.slane %v6876, %v6941
  %v6943 = vlaneseq
  %v6944 = vshrl.u32 %v6943, 7
  %v6945 = vsub.s32 0, %v6944
  %v6946 = vrot.slane %v6878, %v6945
  %v6947 = vlaneseq
  %v6948 = vshrl.u32 %v6947, 7
  %v6949 = vsub.s32 1, %v6948
  %v6950 = vrot.slane %v6878, %v6949
  %v6967 = vpack.c.bf16 %v6890, %v6890
  %v6968 = vpack.c.bf16 %v6894, %v6894
  %v6969 = vpack.c.bf16 %v6898, %v6898
  %v6970 = vpack.c.bf16 %v6902, %v6902
  %v6971 = vpack.c.bf16 %v6906, %v6906
  %v6972 = vpack.c.bf16 %v6910, %v6910
  %v6973 = vpack.c.bf16 %v6914, %v6914
  %v6974 = vpack.c.bf16 %v6918, %v6918
  %v6975 = vpack.c.bf16 %v6922, %v6922
  %v6976 = vpack.c.bf16 %v6926, %v6926
  %v6977 = vpack.c.bf16 %v6930, %v6930
  %v6978 = vpack.c.bf16 %v6934, %v6934
  %v6979 = vpack.c.bf16 %v6938, %v6938
  %v6980 = vpack.c.bf16 %v6942, %v6942
  %v6981 = vpack.c.bf16 %v6946, %v6946
  %v6982 = vpack.c.bf16 %v6950, %v6950
  %s6983 = scalar_lea.vmem %s5, 1280
  %v6984 = vld [vmem:[%s6983] sm:$0xf]
  %v6985 = vld [vmem:[%s6983 + $0x4] sm:$0xf]
  %v6986 = vld [vmem:[%s6983 + $0x8] sm:$0xf]
  %v6987 = vld [vmem:[%s6983 + $0xc] sm:$0xf]
  %v6988 = vld [vmem:[%s6983 + $0x10] sm:$0xf]
  %v6989 = vld [vmem:[%s6983 + $0x14] sm:$0xf]
  %v6990 = vld [vmem:[%s6983 + $0x18] sm:$0xf]
  %v6991 = vld [vmem:[%s6983 + $0x1c] sm:$0xf]
  %v6992 = vld [vmem:[%s6983 + $0x20] sm:$0xf]
  %v6993 = vld [vmem:[%s6983 + $0x24] sm:$0xf]
  %v6994 = vld [vmem:[%s6983 + $0x28] sm:$0xf]
  %v6995 = vld [vmem:[%s6983 + $0x2c] sm:$0xf]
  %v6996 = vld [vmem:[%s6983 + $0x30] sm:$0xf]
  %v6997 = vld [vmem:[%s6983 + $0x34] sm:$0xf]
  %v6998 = vld [vmem:[%s6983 + $0x38] sm:$0xf]
  %v6999 = vld [vmem:[%s6983 + $0x3c] sm:$0xf]
  %v7000 = vld [vmem:[%s6983 + $0x40] sm:$0xf]
  %v7001 = vld [vmem:[%s6983 + $0x44] sm:$0xf]
  %v7002 = vld [vmem:[%s6983 + $0x48] sm:$0xf]
  %v7003 = vld [vmem:[%s6983 + $0x4c] sm:$0xf]
  %v7004 = vld [vmem:[%s6983 + $0x50] sm:$0xf]
  %v7005 = vld [vmem:[%s6983 + $0x54] sm:$0xf]
  %v7006 = vld [vmem:[%s6983 + $0x58] sm:$0xf]
  %v7007 = vld [vmem:[%s6983 + $0x5c] sm:$0xf]
  %v7008 = vld [vmem:[%s6983 + $0x60] sm:$0xf]
  %v7009 = vld [vmem:[%s6983 + $0x64] sm:$0xf]
  %v7010 = vld [vmem:[%s6983 + $0x68] sm:$0xf]
  %v7011 = vld [vmem:[%s6983 + $0x6c] sm:$0xf]
  %v7012 = vld [vmem:[%s6983 + $0x70] sm:$0xf]
  %v7013 = vld [vmem:[%s6983 + $0x74] sm:$0xf]
  %v7014 = vld [vmem:[%s6983 + $0x78] sm:$0xf]
  %v7015 = vld [vmem:[%s6983 + $0x7c] sm:$0xf]
  %v7032 = vunpack.c.l.b16 %v6967
  %v7033 = vunpack.c.l.b16 %v6968
  %v7034 = vunpack.c.l.b16 %v6969
  %v7035 = vunpack.c.l.b16 %v6970
  %v7036 = vunpack.c.l.b16 %v6971
  %v7037 = vunpack.c.l.b16 %v6972
  %v7038 = vunpack.c.l.b16 %v6973
  %v7039 = vunpack.c.l.b16 %v6974
  %v7040 = vunpack.c.l.b16 %v6975
  %v7041 = vunpack.c.l.b16 %v6976
  %v7042 = vunpack.c.l.b16 %v6977
  %v7043 = vunpack.c.l.b16 %v6978
  %v7044 = vunpack.c.l.b16 %v6979
  %v7045 = vunpack.c.l.b16 %v6980
  %v7046 = vunpack.c.l.b16 %v6981
  %v7047 = vunpack.c.l.b16 %v6982
  %v7048 = vrot.slane %v7034, 7
  %v7049 = vsel %vm3657, %v7048, %v7032
  %v7050 = vrot.slane %v7036, 6
  %v7051 = vsel %vm3660, %v7050, %v7049
  %v7052 = vrot.slane %v7038, 5
  %v7053 = vsel %vm3663, %v7052, %v7051
  %v7054 = vrot.slane %v7040, 4
  %v7055 = vsel %vm3666, %v7054, %v7053
  %v7056 = vrot.slane %v7042, 3
  %v7057 = vsel %vm3669, %v7056, %v7055
  %v7058 = vrot.slane %v7044, 2
  %v7059 = vsel %vm3672, %v7058, %v7057
  %v7060 = vrot.slane %v7046, 1
  %v7061 = vsel %vm3675, %v7060, %v7059
  %v7062 = vrot.slane %v7035, 7
  %v7063 = vsel %vm3657, %v7062, %v7033
  %v7064 = vrot.slane %v7037, 6
  %v7065 = vsel %vm3660, %v7064, %v7063
  %v7066 = vrot.slane %v7039, 5
  %v7067 = vsel %vm3663, %v7066, %v7065
  %v7068 = vrot.slane %v7041, 4
  %v7069 = vsel %vm3666, %v7068, %v7067
  %v7070 = vrot.slane %v7043, 3
  %v7071 = vsel %vm3669, %v7070, %v7069
  %v7072 = vrot.slane %v7045, 2
  %v7073 = vsel %vm3672, %v7072, %v7071
  %v7074 = vrot.slane %v7047, 1
  %v7075 = vsel %vm3675, %v7074, %v7073
  %v7076 = vpack.c.b16 %v7061, %v7061
  %v7077 = vpack.c.b16 %v7075, %v7075
  %v7112 = vunpack.c.l.b16 %v6984
  %v7113 = vunpack.c.l.b16 %v6985
  %v7114 = vunpack.c.l.b16 %v6986
  %v7115 = vunpack.c.l.b16 %v6987
  %v7116 = vunpack.c.l.b16 %v6988
  %v7117 = vunpack.c.l.b16 %v6989
  %v7118 = vunpack.c.l.b16 %v6990
  %v7119 = vunpack.c.l.b16 %v6991
  %v7120 = vunpack.c.l.b16 %v6992
  %v7121 = vunpack.c.l.b16 %v6993
  %v7122 = vunpack.c.l.b16 %v6994
  %v7123 = vunpack.c.l.b16 %v6995
  %v7124 = vunpack.c.l.b16 %v6996
  %v7125 = vunpack.c.l.b16 %v6997
  %v7126 = vunpack.c.l.b16 %v6998
  %v7127 = vunpack.c.l.b16 %v6999
  %v7128 = vunpack.c.l.b16 %v7000
  %v7129 = vunpack.c.l.b16 %v7001
  %v7130 = vunpack.c.l.b16 %v7002
  %v7131 = vunpack.c.l.b16 %v7003
  %v7132 = vunpack.c.l.b16 %v7004
  %v7133 = vunpack.c.l.b16 %v7005
  %v7134 = vunpack.c.l.b16 %v7006
  %v7135 = vunpack.c.l.b16 %v7007
  %v7136 = vunpack.c.l.b16 %v7008
  %v7137 = vunpack.c.l.b16 %v7009
  %v7138 = vunpack.c.l.b16 %v7010
  %v7139 = vunpack.c.l.b16 %v7011
  %v7140 = vunpack.c.l.b16 %v7012
  %v7141 = vunpack.c.l.b16 %v7013
  %v7142 = vunpack.c.l.b16 %v7014
  %v7143 = vunpack.c.l.b16 %v7015
  %v7144 = vpack.c.b16 %v7113, %v7112
  %v7145 = vpack.c.b16 %v7115, %v7114
  %v7146 = vpack.c.b16 %v7117, %v7116
  %v7147 = vpack.c.b16 %v7119, %v7118
  %v7148 = vpack.c.b16 %v7121, %v7120
  %v7149 = vpack.c.b16 %v7123, %v7122
  %v7150 = vpack.c.b16 %v7125, %v7124
  %v7151 = vpack.c.b16 %v7127, %v7126
  %v7152 = vpack.c.b16 %v7129, %v7128
  %v7153 = vpack.c.b16 %v7131, %v7130
  %v7154 = vpack.c.b16 %v7133, %v7132
  %v7155 = vpack.c.b16 %v7135, %v7134
  %v7156 = vpack.c.b16 %v7137, %v7136
  %v7157 = vpack.c.b16 %v7139, %v7138
  %v7158 = vpack.c.b16 %v7141, %v7140
  %v7159 = vpack.c.b16 %v7143, %v7142
  %7176 = vmatprep.subr.bf16.mxu0 0
  %7177 = vmatpush1.bf16.msra.mxu0 %v7144
  %7178 = vmatprep.subr.bf16.mxu0 0
  %7179 = vmatpush1.bf16.msra.mxu0 %v7145
  %7180 = vmatprep.subr.bf16.mxu0 0
  %7181 = vmatpush1.bf16.msra.mxu0 %v7146
  %7182 = vmatprep.subr.bf16.mxu0 0
  %7183 = vmatpush1.bf16.msra.mxu0 %v7147
  %7184 = vmatprep.subr.bf16.mxu0 0
  %7185 = vmatpush1.bf16.msra.mxu0 %v7148
  %7186 = vmatprep.subr.bf16.mxu0 0
  %7187 = vmatpush1.bf16.msra.mxu0 %v7149
  %7188 = vmatprep.subr.bf16.mxu0 0
  %7189 = vmatpush1.bf16.msra.mxu0 %v7150
  %7190 = vmatprep.subr.bf16.mxu0 0
  %7191 = vmatpush1.bf16.msra.mxu0 %v7151
  %7192 = vmatprep.subr.bf16.mxu0 0
  %7193 = vmatpush1.bf16.msra.mxu0 %v7152
  %7194 = vmatprep.subr.bf16.mxu0 0
  %7195 = vmatpush1.bf16.msra.mxu0 %v7153
  %7196 = vmatprep.subr.bf16.mxu0 0
  %7197 = vmatpush1.bf16.msra.mxu0 %v7154
  %7198 = vmatprep.subr.bf16.mxu0 0
  %7199 = vmatpush1.bf16.msra.mxu0 %v7155
  %7200 = vmatprep.subr.bf16.mxu0 0
  %7201 = vmatpush1.bf16.msra.mxu0 %v7156
  %7202 = vmatprep.subr.bf16.mxu0 0
  %7203 = vmatpush1.bf16.msra.mxu0 %v7157
  %7204 = vmatprep.subr.bf16.mxu0 0
  %7205 = vmatpush1.bf16.msra.mxu0 %v7158
  %7206 = vmatprep.subr.bf16.mxu0 0
  %7207 = vmatpush1.bf16.msra.mxu0 %v7159
  %7208 = vmatprep.mubr.bf16.mxu0 %v7077
  %7209 = vmatmul.mubr.bf16.gmra.mrb[0].mxu0 %v7076
  %v7210 = vpop.f32.mrb[0].mxu0
  %v7211 = vadd.f32 0.0, %v7210
  %v7212 = vpop.f32.mrb[0].mxu0
  %v7213 = vpop.f32.mrb[0].mxu0
  %v7214 = vpop.f32.mrb[0].mxu0
  %7215 = vdwg.mxu0
  %v7216 = vadd.f32 %v6862, %v7211
  %s7217 = scalar_lea.vmem [#allocation2], 27
  %v7218 = vld [vmem:[%s7217] ss:$8 sm:$0x3]
  %s7219 = scalar_lea.vmem [#allocation2], 75
  %v7220 = vld [vmem:[%s7219] ss:$8 sm:$0x3]
  %s7221 = scalar_lea.vmem [#allocation2], 123
  %v7222 = vld [vmem:[%s7221] ss:$8 sm:$0x3]
  %s7223 = scalar_lea.vmem [#allocation2], 171
  %v7224 = vld [vmem:[%s7223] ss:$8 sm:$0x3]
  %s7225 = scalar_lea.vmem [#allocation2], 219
  %v7226 = vld [vmem:[%s7225] ss:$8 sm:$0x3]
  %s7227 = scalar_lea.vmem [#allocation2], 267
  %v7228 = vld [vmem:[%s7227] ss:$8 sm:$0x3]
  %s7229 = scalar_lea.vmem [#allocation2], 315
  %v7230 = vld [vmem:[%s7229] ss:$8 sm:$0x3]
  %s7231 = scalar_lea.vmem [#allocation2], 363
  %v7232 = vld [vmem:[%s7231] ss:$8 sm:$0x3]
  %v7241 = vlaneseq
  %v7242 = vshrl.u32 %v7241, 7
  %v7243 = vsub.s32 0, %v7242
  %v7244 = vrot.slane %v7218, %v7243
  %v7245 = vlaneseq
  %v7246 = vshrl.u32 %v7245, 7
  %v7247 = vsub.s32 1, %v7246
  %v7248 = vrot.slane %v7218, %v7247
  %v7249 = vlaneseq
  %v7250 = vshrl.u32 %v7249, 7
  %v7251 = vsub.s32 0, %v7250
  %v7252 = vrot.slane %v7220, %v7251
  %v7253 = vlaneseq
  %v7254 = vshrl.u32 %v7253, 7
  %v7255 = vsub.s32 1, %v7254
  %v7256 = vrot.slane %v7220, %v7255
  %v7257 = vlaneseq
  %v7258 = vshrl.u32 %v7257, 7
  %v7259 = vsub.s32 0, %v7258
  %v7260 = vrot.slane %v7222, %v7259
  %v7261 = vlaneseq
  %v7262 = vshrl.u32 %v7261, 7
  %v7263 = vsub.s32 1, %v7262
  %v7264 = vrot.slane %v7222, %v7263
  %v7265 = vlaneseq
  %v7266 = vshrl.u32 %v7265, 7
  %v7267 = vsub.s32 0, %v7266
  %v7268 = vrot.slane %v7224, %v7267
  %v7269 = vlaneseq
  %v7270 = vshrl.u32 %v7269, 7
  %v7271 = vsub.s32 1, %v7270
  %v7272 = vrot.slane %v7224, %v7271
  %v7273 = vlaneseq
  %v7274 = vshrl.u32 %v7273, 7
  %v7275 = vsub.s32 0, %v7274
  %v7276 = vrot.slane %v7226, %v7275
  %v7277 = vlaneseq
  %v7278 = vshrl.u32 %v7277, 7
  %v7279 = vsub.s32 1, %v7278
  %v7280 = vrot.slane %v7226, %v7279
  %v7281 = vlaneseq
  %v7282 = vshrl.u32 %v7281, 7
  %v7283 = vsub.s32 0, %v7282
  %v7284 = vrot.slane %v7228, %v7283
  %v7285 = vlaneseq
  %v7286 = vshrl.u32 %v7285, 7
  %v7287 = vsub.s32 1, %v7286
  %v7288 = vrot.slane %v7228, %v7287
  %v7289 = vlaneseq
  %v7290 = vshrl.u32 %v7289, 7
  %v7291 = vsub.s32 0, %v7290
  %v7292 = vrot.slane %v7230, %v7291
  %v7293 = vlaneseq
  %v7294 = vshrl.u32 %v7293, 7
  %v7295 = vsub.s32 1, %v7294
  %v7296 = vrot.slane %v7230, %v7295
  %v7297 = vlaneseq
  %v7298 = vshrl.u32 %v7297, 7
  %v7299 = vsub.s32 0, %v7298
  %v7300 = vrot.slane %v7232, %v7299
  %v7301 = vlaneseq
  %v7302 = vshrl.u32 %v7301, 7
  %v7303 = vsub.s32 1, %v7302
  %v7304 = vrot.slane %v7232, %v7303
  %v7321 = vpack.c.bf16 %v7244, %v7244
  %v7322 = vpack.c.bf16 %v7248, %v7248
  %v7323 = vpack.c.bf16 %v7252, %v7252
  %v7324 = vpack.c.bf16 %v7256, %v7256
  %v7325 = vpack.c.bf16 %v7260, %v7260
  %v7326 = vpack.c.bf16 %v7264, %v7264
  %v7327 = vpack.c.bf16 %v7268, %v7268
  %v7328 = vpack.c.bf16 %v7272, %v7272
  %v7329 = vpack.c.bf16 %v7276, %v7276
  %v7330 = vpack.c.bf16 %v7280, %v7280
  %v7331 = vpack.c.bf16 %v7284, %v7284
  %v7332 = vpack.c.bf16 %v7288, %v7288
  %v7333 = vpack.c.bf16 %v7292, %v7292
  %v7334 = vpack.c.bf16 %v7296, %v7296
  %v7335 = vpack.c.bf16 %v7300, %v7300
  %v7336 = vpack.c.bf16 %v7304, %v7304
  %s7337 = scalar_lea.vmem %s5, 1408
  %v7338 = vld [vmem:[%s7337] sm:$0xf]
  %v7339 = vld [vmem:[%s7337 + $0x4] sm:$0xf]
  %v7340 = vld [vmem:[%s7337 + $0x8] sm:$0xf]
  %v7341 = vld [vmem:[%s7337 + $0xc] sm:$0xf]
  %v7342 = vld [vmem:[%s7337 + $0x10] sm:$0xf]
  %v7343 = vld [vmem:[%s7337 + $0x14] sm:$0xf]
  %v7344 = vld [vmem:[%s7337 + $0x18] sm:$0xf]
  %v7345 = vld [vmem:[%s7337 + $0x1c] sm:$0xf]
  %v7346 = vld [vmem:[%s7337 + $0x20] sm:$0xf]
  %v7347 = vld [vmem:[%s7337 + $0x24] sm:$0xf]
  %v7348 = vld [vmem:[%s7337 + $0x28] sm:$0xf]
  %v7349 = vld [vmem:[%s7337 + $0x2c] sm:$0xf]
  %v7350 = vld [vmem:[%s7337 + $0x30] sm:$0xf]
  %v7351 = vld [vmem:[%s7337 + $0x34] sm:$0xf]
  %v7352 = vld [vmem:[%s7337 + $0x38] sm:$0xf]
  %v7353 = vld [vmem:[%s7337 + $0x3c] sm:$0xf]
  %v7354 = vld [vmem:[%s7337 + $0x40] sm:$0xf]
  %v7355 = vld [vmem:[%s7337 + $0x44] sm:$0xf]
  %v7356 = vld [vmem:[%s7337 + $0x48] sm:$0xf]
  %v7357 = vld [vmem:[%s7337 + $0x4c] sm:$0xf]
  %v7358 = vld [vmem:[%s7337 + $0x50] sm:$0xf]
  %v7359 = vld [vmem:[%s7337 + $0x54] sm:$0xf]
  %v7360 = vld [vmem:[%s7337 + $0x58] sm:$0xf]
  %v7361 = vld [vmem:[%s7337 + $0x5c] sm:$0xf]
  %v7362 = vld [vmem:[%s7337 + $0x60] sm:$0xf]
  %v7363 = vld [vmem:[%s7337 + $0x64] sm:$0xf]
  %v7364 = vld [vmem:[%s7337 + $0x68] sm:$0xf]
  %v7365 = vld [vmem:[%s7337 + $0x6c] sm:$0xf]
  %v7366 = vld [vmem:[%s7337 + $0x70] sm:$0xf]
  %v7367 = vld [vmem:[%s7337 + $0x74] sm:$0xf]
  %v7368 = vld [vmem:[%s7337 + $0x78] sm:$0xf]
  %v7369 = vld [vmem:[%s7337 + $0x7c] sm:$0xf]
  %v7386 = vunpack.c.l.b16 %v7321
  %v7387 = vunpack.c.l.b16 %v7322
  %v7388 = vunpack.c.l.b16 %v7323
  %v7389 = vunpack.c.l.b16 %v7324
  %v7390 = vunpack.c.l.b16 %v7325
  %v7391 = vunpack.c.l.b16 %v7326
  %v7392 = vunpack.c.l.b16 %v7327
  %v7393 = vunpack.c.l.b16 %v7328
  %v7394 = vunpack.c.l.b16 %v7329
  %v7395 = vunpack.c.l.b16 %v7330
  %v7396 = vunpack.c.l.b16 %v7331
  %v7397 = vunpack.c.l.b16 %v7332
  %v7398 = vunpack.c.l.b16 %v7333
  %v7399 = vunpack.c.l.b16 %v7334
  %v7400 = vunpack.c.l.b16 %v7335
  %v7401 = vunpack.c.l.b16 %v7336
  %v7402 = vrot.slane %v7388, 7
  %v7403 = vsel %vm3657, %v7402, %v7386
  %v7404 = vrot.slane %v7390, 6
  %v7405 = vsel %vm3660, %v7404, %v7403
  %v7406 = vrot.slane %v7392, 5
  %v7407 = vsel %vm3663, %v7406, %v7405
  %v7408 = vrot.slane %v7394, 4
  %v7409 = vsel %vm3666, %v7408, %v7407
  %v7410 = vrot.slane %v7396, 3
  %v7411 = vsel %vm3669, %v7410, %v7409
  %v7412 = vrot.slane %v7398, 2
  %v7413 = vsel %vm3672, %v7412, %v7411
  %v7414 = vrot.slane %v7400, 1
  %v7415 = vsel %vm3675, %v7414, %v7413
  %v7416 = vrot.slane %v7389, 7
  %v7417 = vsel %vm3657, %v7416, %v7387
  %v7418 = vrot.slane %v7391, 6
  %v7419 = vsel %vm3660, %v7418, %v7417
  %v7420 = vrot.slane %v7393, 5
  %v7421 = vsel %vm3663, %v7420, %v7419
  %v7422 = vrot.slane %v7395, 4
  %v7423 = vsel %vm3666, %v7422, %v7421
  %v7424 = vrot.slane %v7397, 3
  %v7425 = vsel %vm3669, %v7424, %v7423
  %v7426 = vrot.slane %v7399, 2
  %v7427 = vsel %vm3672, %v7426, %v7425
  %v7428 = vrot.slane %v7401, 1
  %v7429 = vsel %vm3675, %v7428, %v7427
  %v7430 = vpack.c.b16 %v7415, %v7415
  %v7431 = vpack.c.b16 %v7429, %v7429
  %v7466 = vunpack.c.l.b16 %v7338
  %v7467 = vunpack.c.l.b16 %v7339
  %v7468 = vunpack.c.l.b16 %v7340
  %v7469 = vunpack.c.l.b16 %v7341
  %v7470 = vunpack.c.l.b16 %v7342
  %v7471 = vunpack.c.l.b16 %v7343
  %v7472 = vunpack.c.l.b16 %v7344
  %v7473 = vunpack.c.l.b16 %v7345
  %v7474 = vunpack.c.l.b16 %v7346
  %v7475 = vunpack.c.l.b16 %v7347
  %v7476 = vunpack.c.l.b16 %v7348
  %v7477 = vunpack.c.l.b16 %v7349
  %v7478 = vunpack.c.l.b16 %v7350
  %v7479 = vunpack.c.l.b16 %v7351
  %v7480 = vunpack.c.l.b16 %v7352
  %v7481 = vunpack.c.l.b16 %v7353
  %v7482 = vunpack.c.l.b16 %v7354
  %v7483 = vunpack.c.l.b16 %v7355
  %v7484 = vunpack.c.l.b16 %v7356
  %v7485 = vunpack.c.l.b16 %v7357
  %v7486 = vunpack.c.l.b16 %v7358
  %v7487 = vunpack.c.l.b16 %v7359
  %v7488 = vunpack.c.l.b16 %v7360
  %v7489 = vunpack.c.l.b16 %v7361
  %v7490 = vunpack.c.l.b16 %v7362
  %v7491 = vunpack.c.l.b16 %v7363
  %v7492 = vunpack.c.l.b16 %v7364
  %v7493 = vunpack.c.l.b16 %v7365
  %v7494 = vunpack.c.l.b16 %v7366
  %v7495 = vunpack.c.l.b16 %v7367
  %v7496 = vunpack.c.l.b16 %v7368
  %v7497 = vunpack.c.l.b16 %v7369
  %v7498 = vpack.c.b16 %v7467, %v7466
  %v7499 = vpack.c.b16 %v7469, %v7468
  %v7500 = vpack.c.b16 %v7471, %v7470
  %v7501 = vpack.c.b16 %v7473, %v7472
  %v7502 = vpack.c.b16 %v7475, %v7474
  %v7503 = vpack.c.b16 %v7477, %v7476
  %v7504 = vpack.c.b16 %v7479, %v7478
  %v7505 = vpack.c.b16 %v7481, %v7480
  %v7506 = vpack.c.b16 %v7483, %v7482
  %v7507 = vpack.c.b16 %v7485, %v7484
  %v7508 = vpack.c.b16 %v7487, %v7486
  %v7509 = vpack.c.b16 %v7489, %v7488
  %v7510 = vpack.c.b16 %v7491, %v7490
  %v7511 = vpack.c.b16 %v7493, %v7492
  %v7512 = vpack.c.b16 %v7495, %v7494
  %v7513 = vpack.c.b16 %v7497, %v7496
  %7530 = vmatprep.subr.bf16.mxu0 0
  %7531 = vmatpush1.bf16.msra.mxu0 %v7498
  %7532 = vmatprep.subr.bf16.mxu0 0
  %7533 = vmatpush1.bf16.msra.mxu0 %v7499
  %7534 = vmatprep.subr.bf16.mxu0 0
  %7535 = vmatpush1.bf16.msra.mxu0 %v7500
  %7536 = vmatprep.subr.bf16.mxu0 0
  %7537 = vmatpush1.bf16.msra.mxu0 %v7501
  %7538 = vmatprep.subr.bf16.mxu0 0
  %7539 = vmatpush1.bf16.msra.mxu0 %v7502
  %7540 = vmatprep.subr.bf16.mxu0 0
  %7541 = vmatpush1.bf16.msra.mxu0 %v7503
  %7542 = vmatprep.subr.bf16.mxu0 0
  %7543 = vmatpush1.bf16.msra.mxu0 %v7504
  %7544 = vmatprep.subr.bf16.mxu0 0
  %7545 = vmatpush1.bf16.msra.mxu0 %v7505
  %7546 = vmatprep.subr.bf16.mxu0 0
  %7547 = vmatpush1.bf16.msra.mxu0 %v7506
  %7548 = vmatprep.subr.bf16.mxu0 0
  %7549 = vmatpush1.bf16.msra.mxu0 %v7507
  %7550 = vmatprep.subr.bf16.mxu0 0
  %7551 = vmatpush1.bf16.msra.mxu0 %v7508
  %7552 = vmatprep.subr.bf16.mxu0 0
  %7553 = vmatpush1.bf16.msra.mxu0 %v7509
  %7554 = vmatprep.subr.bf16.mxu0 0
  %7555 = vmatpush1.bf16.msra.mxu0 %v7510
  %7556 = vmatprep.subr.bf16.mxu0 0
  %7557 = vmatpush1.bf16.msra.mxu0 %v7511
  %7558 = vmatprep.subr.bf16.mxu0 0
  %7559 = vmatpush1.bf16.msra.mxu0 %v7512
  %7560 = vmatprep.subr.bf16.mxu0 0
  %7561 = vmatpush1.bf16.msra.mxu0 %v7513
  %7562 = vmatprep.mubr.bf16.mxu0 %v7431
  %7563 = vmatmul.mubr.bf16.gmra.mrb[0].mxu0 %v7430
  %v7564 = vpop.f32.mrb[0].mxu0
  %v7565 = vadd.f32 0.0, %v7564
  %v7566 = vpop.f32.mrb[0].mxu0
  %v7567 = vpop.f32.mrb[0].mxu0
  %v7568 = vpop.f32.mrb[0].mxu0
  %7569 = vdwg.mxu0
  %v7570 = vadd.f32 %v7216, %v7565
  %s7571 = scalar_lea.vmem [#allocation2], 28
  %v7572 = vld [vmem:[%s7571] ss:$8 sm:$0x3]
  %s7573 = scalar_lea.vmem [#allocation2], 76
  %v7574 = vld [vmem:[%s7573] ss:$8 sm:$0x3]
  %s7575 = scalar_lea.vmem [#allocation2], 124
  %v7576 = vld [vmem:[%s7575] ss:$8 sm:$0x3]
  %s7577 = scalar_lea.vmem [#allocation2], 172
  %v7578 = vld [vmem:[%s7577] ss:$8 sm:$0x3]
  %s7579 = scalar_lea.vmem [#allocation2], 220
  %v7580 = vld [vmem:[%s7579] ss:$8 sm:$0x3]
  %s7581 = scalar_lea.vmem [#allocation2], 268
  %v7582 = vld [vmem:[%s7581] ss:$8 sm:$0x3]
  %s7583 = scalar_lea.vmem [#allocation2], 316
  %v7584 = vld [vmem:[%s7583] ss:$8 sm:$0x3]
  %s7585 = scalar_lea.vmem [#allocation2], 364
  %v7586 = vld [vmem:[%s7585] ss:$8 sm:$0x3]
  %v7595 = vlaneseq
  %v7596 = vshrl.u32 %v7595, 7
  %v7597 = vsub.s32 0, %v7596
  %v7598 = vrot.slane %v7572, %v7597
  %v7599 = vlaneseq
  %v7600 = vshrl.u32 %v7599, 7
  %v7601 = vsub.s32 1, %v7600
  %v7602 = vrot.slane %v7572, %v7601
  %v7603 = vlaneseq
  %v7604 = vshrl.u32 %v7603, 7
  %v7605 = vsub.s32 0, %v7604
  %v7606 = vrot.slane %v7574, %v7605
  %v7607 = vlaneseq
  %v7608 = vshrl.u32 %v7607, 7
  %v7609 = vsub.s32 1, %v7608
  %v7610 = vrot.slane %v7574, %v7609
  %v7611 = vlaneseq
  %v7612 = vshrl.u32 %v7611, 7
  %v7613 = vsub.s32 0, %v7612
  %v7614 = vrot.slane %v7576, %v7613
  %v7615 = vlaneseq
  %v7616 = vshrl.u32 %v7615, 7
  %v7617 = vsub.s32 1, %v7616
  %v7618 = vrot.slane %v7576, %v7617
  %v7619 = vlaneseq
  %v7620 = vshrl.u32 %v7619, 7
  %v7621 = vsub.s32 0, %v7620
  %v7622 = vrot.slane %v7578, %v7621
  %v7623 = vlaneseq
  %v7624 = vshrl.u32 %v7623, 7
  %v7625 = vsub.s32 1, %v7624
  %v7626 = vrot.slane %v7578, %v7625
  %v7627 = vlaneseq
  %v7628 = vshrl.u32 %v7627, 7
  %v7629 = vsub.s32 0, %v7628
  %v7630 = vrot.slane %v7580, %v7629
  %v7631 = vlaneseq
  %v7632 = vshrl.u32 %v7631, 7
  %v7633 = vsub.s32 1, %v7632
  %v7634 = vrot.slane %v7580, %v7633
  %v7635 = vlaneseq
  %v7636 = vshrl.u32 %v7635, 7
  %v7637 = vsub.s32 0, %v7636
  %v7638 = vrot.slane %v7582, %v7637
  %v7639 = vlaneseq
  %v7640 = vshrl.u32 %v7639, 7
  %v7641 = vsub.s32 1, %v7640
  %v7642 = vrot.slane %v7582, %v7641
  %v7643 = vlaneseq
  %v7644 = vshrl.u32 %v7643, 7
  %v7645 = vsub.s32 0, %v7644
  %v7646 = vrot.slane %v7584, %v7645
  %v7647 = vlaneseq
  %v7648 = vshrl.u32 %v7647, 7
  %v7649 = vsub.s32 1, %v7648
  %v7650 = vrot.slane %v7584, %v7649
  %v7651 = vlaneseq
  %v7652 = vshrl.u32 %v7651, 7
  %v7653 = vsub.s32 0, %v7652
  %v7654 = vrot.slane %v7586, %v7653
  %v7655 = vlaneseq
  %v7656 = vshrl.u32 %v7655, 7
  %v7657 = vsub.s32 1, %v7656
  %v7658 = vrot.slane %v7586, %v7657
  %v7675 = vpack.c.bf16 %v7598, %v7598
  %v7676 = vpack.c.bf16 %v7602, %v7602
  %v7677 = vpack.c.bf16 %v7606, %v7606
  %v7678 = vpack.c.bf16 %v7610, %v7610
  %v7679 = vpack.c.bf16 %v7614, %v7614
  %v7680 = vpack.c.bf16 %v7618, %v7618
  %v7681 = vpack.c.bf16 %v7622, %v7622
  %v7682 = vpack.c.bf16 %v7626, %v7626
  %v7683 = vpack.c.bf16 %v7630, %v7630
  %v7684 = vpack.c.bf16 %v7634, %v7634
  %v7685 = vpack.c.bf16 %v7638, %v7638
  %v7686 = vpack.c.bf16 %v7642, %v7642
  %v7687 = vpack.c.bf16 %v7646, %v7646
  %v7688 = vpack.c.bf16 %v7650, %v7650
  %v7689 = vpack.c.bf16 %v7654, %v7654
  %v7690 = vpack.c.bf16 %v7658, %v7658
  %s7691 = scalar_lea.vmem %s5, 1536
  %v7692 = vld [vmem:[%s7691] sm:$0xf]
  %v7693 = vld [vmem:[%s7691 + $0x4] sm:$0xf]
  %v7694 = vld [vmem:[%s7691 + $0x8] sm:$0xf]
  %v7695 = vld [vmem:[%s7691 + $0xc] sm:$0xf]
  %v7696 = vld [vmem:[%s7691 + $0x10] sm:$0xf]
  %v7697 = vld [vmem:[%s7691 + $0x14] sm:$0xf]
  %v7698 = vld [vmem:[%s7691 + $0x18] sm:$0xf]
  %v7699 = vld [vmem:[%s7691 + $0x1c] sm:$0xf]
  %v7700 = vld [vmem:[%s7691 + $0x20] sm:$0xf]
  %v7701 = vld [vmem:[%s7691 + $0x24] sm:$0xf]
  %v7702 = vld [vmem:[%s7691 + $0x28] sm:$0xf]
  %v7703 = vld [vmem:[%s7691 + $0x2c] sm:$0xf]
  %v7704 = vld [vmem:[%s7691 + $0x30] sm:$0xf]
  %v7705 = vld [vmem:[%s7691 + $0x34] sm:$0xf]
  %v7706 = vld [vmem:[%s7691 + $0x38] sm:$0xf]
  %v7707 = vld [vmem:[%s7691 + $0x3c] sm:$0xf]
  %v7708 = vld [vmem:[%s7691 + $0x40] sm:$0xf]
  %v7709 = vld [vmem:[%s7691 + $0x44] sm:$0xf]
  %v7710 = vld [vmem:[%s7691 + $0x48] sm:$0xf]
  %v7711 = vld [vmem:[%s7691 + $0x4c] sm:$0xf]
  %v7712 = vld [vmem:[%s7691 + $0x50] sm:$0xf]
  %v7713 = vld [vmem:[%s7691 + $0x54] sm:$0xf]
  %v7714 = vld [vmem:[%s7691 + $0x58] sm:$0xf]
  %v7715 = vld [vmem:[%s7691 + $0x5c] sm:$0xf]
  %v7716 = vld [vmem:[%s7691 + $0x60] sm:$0xf]
  %v7717 = vld [vmem:[%s7691 + $0x64] sm:$0xf]
  %v7718 = vld [vmem:[%s7691 + $0x68] sm:$0xf]
  %v7719 = vld [vmem:[%s7691 + $0x6c] sm:$0xf]
  %v7720 = vld [vmem:[%s7691 + $0x70] sm:$0xf]
  %v7721 = vld [vmem:[%s7691 + $0x74] sm:$0xf]
  %v7722 = vld [vmem:[%s7691 + $0x78] sm:$0xf]
  %v7723 = vld [vmem:[%s7691 + $0x7c] sm:$0xf]
  %v7740 = vunpack.c.l.b16 %v7675
  %v7741 = vunpack.c.l.b16 %v7676
  %v7742 = vunpack.c.l.b16 %v7677
  %v7743 = vunpack.c.l.b16 %v7678
  %v7744 = vunpack.c.l.b16 %v7679
  %v7745 = vunpack.c.l.b16 %v7680
  %v7746 = vunpack.c.l.b16 %v7681
  %v7747 = vunpack.c.l.b16 %v7682
  %v7748 = vunpack.c.l.b16 %v7683
  %v7749 = vunpack.c.l.b16 %v7684
  %v7750 = vunpack.c.l.b16 %v7685
  %v7751 = vunpack.c.l.b16 %v7686
  %v7752 = vunpack.c.l.b16 %v7687
  %v7753 = vunpack.c.l.b16 %v7688
  %v7754 = vunpack.c.l.b16 %v7689
  %v7755 = vunpack.c.l.b16 %v7690
  %v7756 = vrot.slane %v7742, 7
  %v7757 = vsel %vm3657, %v7756, %v7740
  %v7758 = vrot.slane %v7744, 6
  %v7759 = vsel %vm3660, %v7758, %v7757
  %v7760 = vrot.slane %v7746, 5
  %v7761 = vsel %vm3663, %v7760, %v7759
  %v7762 = vrot.slane %v7748, 4
  %v7763 = vsel %vm3666, %v7762, %v7761
  %v7764 = vrot.slane %v7750, 3
  %v7765 = vsel %vm3669, %v7764, %v7763
  %v7766 = vrot.slane %v7752, 2
  %v7767 = vsel %vm3672, %v7766, %v7765
  %v7768 = vrot.slane %v7754, 1
  %v7769 = vsel %vm3675, %v7768, %v7767
  %v7770 = vrot.slane %v7743, 7
  %v7771 = vsel %vm3657, %v7770, %v7741
  %v7772 = vrot.slane %v7745, 6
  %v7773 = vsel %vm3660, %v7772, %v7771
  %v7774 = vrot.slane %v7747, 5
  %v7775 = vsel %vm3663, %v7774, %v7773
  %v7776 = vrot.slane %v7749, 4
  %v7777 = vsel %vm3666, %v7776, %v7775
  %v7778 = vrot.slane %v7751, 3
  %v7779 = vsel %vm3669, %v7778, %v7777
  %v7780 = vrot.slane %v7753, 2
  %v7781 = vsel %vm3672, %v7780, %v7779
  %v7782 = vrot.slane %v7755, 1
  %v7783 = vsel %vm3675, %v7782, %v7781
  %v7784 = vpack.c.b16 %v7769, %v7769
  %v7785 = vpack.c.b16 %v7783, %v7783
  %v7820 = vunpack.c.l.b16 %v7692
  %v7821 = vunpack.c.l.b16 %v7693
  %v7822 = vunpack.c.l.b16 %v7694
  %v7823 = vunpack.c.l.b16 %v7695
  %v7824 = vunpack.c.l.b16 %v7696
  %v7825 = vunpack.c.l.b16 %v7697
  %v7826 = vunpack.c.l.b16 %v7698
  %v7827 = vunpack.c.l.b16 %v7699
  %v7828 = vunpack.c.l.b16 %v7700
  %v7829 = vunpack.c.l.b16 %v7701
  %v7830 = vunpack.c.l.b16 %v7702
  %v7831 = vunpack.c.l.b16 %v7703
  %v7832 = vunpack.c.l.b16 %v7704
  %v7833 = vunpack.c.l.b16 %v7705
  %v7834 = vunpack.c.l.b16 %v7706
  %v7835 = vunpack.c.l.b16 %v7707
  %v7836 = vunpack.c.l.b16 %v7708
  %v7837 = vunpack.c.l.b16 %v7709
  %v7838 = vunpack.c.l.b16 %v7710
  %v7839 = vunpack.c.l.b16 %v7711
  %v7840 = vunpack.c.l.b16 %v7712
  %v7841 = vunpack.c.l.b16 %v7713
  %v7842 = vunpack.c.l.b16 %v7714
  %v7843 = vunpack.c.l.b16 %v7715
  %v7844 = vunpack.c.l.b16 %v7716
  %v7845 = vunpack.c.l.b16 %v7717
  %v7846 = vunpack.c.l.b16 %v7718
  %v7847 = vunpack.c.l.b16 %v7719
  %v7848 = vunpack.c.l.b16 %v7720
  %v7849 = vunpack.c.l.b16 %v7721
  %v7850 = vunpack.c.l.b16 %v7722
  %v7851 = vunpack.c.l.b16 %v7723
  %v7852 = vpack.c.b16 %v7821, %v7820
  %v7853 = vpack.c.b16 %v7823, %v7822
  %v7854 = vpack.c.b16 %v7825, %v7824
  %v7855 = vpack.c.b16 %v7827, %v7826
  %v7856 = vpack.c.b16 %v7829, %v7828
  %v7857 = vpack.c.b16 %v7831, %v7830
  %v7858 = vpack.c.b16 %v7833, %v7832
  %v7859 = vpack.c.b16 %v7835, %v7834
  %v7860 = vpack.c.b16 %v7837, %v7836
  %v7861 = vpack.c.b16 %v7839, %v7838
  %v7862 = vpack.c.b16 %v7841, %v7840
  %v7863 = vpack.c.b16 %v7843, %v7842
  %v7864 = vpack.c.b16 %v7845, %v7844
  %v7865 = vpack.c.b16 %v7847, %v7846
  %v7866 = vpack.c.b16 %v7849, %v7848
  %v7867 = vpack.c.b16 %v7851, %v7850
  %7884 = vmatprep.subr.bf16.mxu0 0
  %7885 = vmatpush1.bf16.msra.mxu0 %v7852
  %7886 = vmatprep.subr.bf16.mxu0 0
  %7887 = vmatpush1.bf16.msra.mxu0 %v7853
  %7888 = vmatprep.subr.bf16.mxu0 0
  %7889 = vmatpush1.bf16.msra.mxu0 %v7854
  %7890 = vmatprep.subr.bf16.mxu0 0
  %7891 = vmatpush1.bf16.msra.mxu0 %v7855
  %7892 = vmatprep.subr.bf16.mxu0 0
  %7893 = vmatpush1.bf16.msra.mxu0 %v7856
  %7894 = vmatprep.subr.bf16.mxu0 0
  %7895 = vmatpush1.bf16.msra.mxu0 %v7857
  %7896 = vmatprep.subr.bf16.mxu0 0
  %7897 = vmatpush1.bf16.msra.mxu0 %v7858
  %7898 = vmatprep.subr.bf16.mxu0 0
  %7899 = vmatpush1.bf16.msra.mxu0 %v7859
  %7900 = vmatprep.subr.bf16.mxu0 0
  %7901 = vmatpush1.bf16.msra.mxu0 %v7860
  %7902 = vmatprep.subr.bf16.mxu0 0
  %7903 = vmatpush1.bf16.msra.mxu0 %v7861
  %7904 = vmatprep.subr.bf16.mxu0 0
  %7905 = vmatpush1.bf16.msra.mxu0 %v7862
  %7906 = vmatprep.subr.bf16.mxu0 0
  %7907 = vmatpush1.bf16.msra.mxu0 %v7863
  %7908 = vmatprep.subr.bf16.mxu0 0
  %7909 = vmatpush1.bf16.msra.mxu0 %v7864
  %7910 = vmatprep.subr.bf16.mxu0 0
  %7911 = vmatpush1.bf16.msra.mxu0 %v7865
  %7912 = vmatprep.subr.bf16.mxu0 0
  %7913 = vmatpush1.bf16.msra.mxu0 %v7866
  %7914 = vmatprep.subr.bf16.mxu0 0
  %7915 = vmatpush1.bf16.msra.mxu0 %v7867
  %7916 = vmatprep.mubr.bf16.mxu0 %v7785
  %7917 = vmatmul.mubr.bf16.gmra.mrb[0].mxu0 %v7784
  %v7918 = vpop.f32.mrb[0].mxu0
  %v7919 = vadd.f32 0.0, %v7918
  %v7920 = vpop.f32.mrb[0].mxu0
  %v7921 = vpop.f32.mrb[0].mxu0
  %v7922 = vpop.f32.mrb[0].mxu0
  %7923 = vdwg.mxu0
  %v7924 = vadd.f32 %v7570, %v7919
  %s7925 = scalar_lea.vmem [#allocation2], 29
  %v7926 = vld [vmem:[%s7925] ss:$8 sm:$0x3]
  %s7927 = scalar_lea.vmem [#allocation2], 77
  %v7928 = vld [vmem:[%s7927] ss:$8 sm:$0x3]
  %s7929 = scalar_lea.vmem [#allocation2], 125
  %v7930 = vld [vmem:[%s7929] ss:$8 sm:$0x3]
  %s7931 = scalar_lea.vmem [#allocation2], 173
  %v7932 = vld [vmem:[%s7931] ss:$8 sm:$0x3]
  %s7933 = scalar_lea.vmem [#allocation2], 221
  %v7934 = vld [vmem:[%s7933] ss:$8 sm:$0x3]
  %s7935 = scalar_lea.vmem [#allocation2], 269
  %v7936 = vld [vmem:[%s7935] ss:$8 sm:$0x3]
  %s7937 = scalar_lea.vmem [#allocation2], 317
  %v7938 = vld [vmem:[%s7937] ss:$8 sm:$0x3]
  %s7939 = scalar_lea.vmem [#allocation2], 365
  %v7940 = vld [vmem:[%s7939] ss:$8 sm:$0x3]
  %v7949 = vlaneseq
  %v7950 = vshrl.u32 %v7949, 7
  %v7951 = vsub.s32 0, %v7950
  %v7952 = vrot.slane %v7926, %v7951
  %v7953 = vlaneseq
  %v7954 = vshrl.u32 %v7953, 7
  %v7955 = vsub.s32 1, %v7954
  %v7956 = vrot.slane %v7926, %v7955
  %v7957 = vlaneseq
  %v7958 = vshrl.u32 %v7957, 7
  %v7959 = vsub.s32 0, %v7958
  %v7960 = vrot.slane %v7928, %v7959
  %v7961 = vlaneseq
  %v7962 = vshrl.u32 %v7961, 7
  %v7963 = vsub.s32 1, %v7962
  %v7964 = vrot.slane %v7928, %v7963
  %v7965 = vlaneseq
  %v7966 = vshrl.u32 %v7965, 7
  %v7967 = vsub.s32 0, %v7966
  %v7968 = vrot.slane %v7930, %v7967
  %v7969 = vlaneseq
  %v7970 = vshrl.u32 %v7969, 7
  %v7971 = vsub.s32 1, %v7970
  %v7972 = vrot.slane %v7930, %v7971
  %v7973 = vlaneseq
  %v7974 = vshrl.u32 %v7973, 7
  %v7975 = vsub.s32 0, %v7974
  %v7976 = vrot.slane %v7932, %v7975
  %v7977 = vlaneseq
  %v7978 = vshrl.u32 %v7977, 7
  %v7979 = vsub.s32 1, %v7978
  %v7980 = vrot.slane %v7932, %v7979
  %v7981 = vlaneseq
  %v7982 = vshrl.u32 %v7981, 7
  %v7983 = vsub.s32 0, %v7982
  %v7984 = vrot.slane %v7934, %v7983
  %v7985 = vlaneseq
  %v7986 = vshrl.u32 %v7985, 7
  %v7987 = vsub.s32 1, %v7986
  %v7988 = vrot.slane %v7934, %v7987
  %v7989 = vlaneseq
  %v7990 = vshrl.u32 %v7989, 7
  %v7991 = vsub.s32 0, %v7990
  %v7992 = vrot.slane %v7936, %v7991
  %v7993 = vlaneseq
  %v7994 = vshrl.u32 %v7993, 7
  %v7995 = vsub.s32 1, %v7994
  %v7996 = vrot.slane %v7936, %v7995
  %v7997 = vlaneseq
  %v7998 = vshrl.u32 %v7997, 7
  %v7999 = vsub.s32 0, %v7998
  %v8000 = vrot.slane %v7938, %v7999
  %v8001 = vlaneseq
  %v8002 = vshrl.u32 %v8001, 7
  %v8003 = vsub.s32 1, %v8002
  %v8004 = vrot.slane %v7938, %v8003
  %v8005 = vlaneseq
  %v8006 = vshrl.u32 %v8005, 7
  %v8007 = vsub.s32 0, %v8006
  %v8008 = vrot.slane %v7940, %v8007
  %v8009 = vlaneseq
  %v8010 = vshrl.u32 %v8009, 7
  %v8011 = vsub.s32 1, %v8010
  %v8012 = vrot.slane %v7940, %v8011
  %v8029 = vpack.c.bf16 %v7952, %v7952
  %v8030 = vpack.c.bf16 %v7956, %v7956
  %v8031 = vpack.c.bf16 %v7960, %v7960
  %v8032 = vpack.c.bf16 %v7964, %v7964
  %v8033 = vpack.c.bf16 %v7968, %v7968
  %v8034 = vpack.c.bf16 %v7972, %v7972
  %v8035 = vpack.c.bf16 %v7976, %v7976
  %v8036 = vpack.c.bf16 %v7980, %v7980
  %v8037 = vpack.c.bf16 %v7984, %v7984
  %v8038 = vpack.c.bf16 %v7988, %v7988
  %v8039 = vpack.c.bf16 %v7992, %v7992
  %v8040 = vpack.c.bf16 %v7996, %v7996
  %v8041 = vpack.c.bf16 %v8000, %v8000
  %v8042 = vpack.c.bf16 %v8004, %v8004
  %v8043 = vpack.c.bf16 %v8008, %v8008
  %v8044 = vpack.c.bf16 %v8012, %v8012
  %s8045 = scalar_lea.vmem %s5, 1664
  %v8046 = vld [vmem:[%s8045] sm:$0xf]
  %v8047 = vld [vmem:[%s8045 + $0x4] sm:$0xf]
  %v8048 = vld [vmem:[%s8045 + $0x8] sm:$0xf]
  %v8049 = vld [vmem:[%s8045 + $0xc] sm:$0xf]
  %v8050 = vld [vmem:[%s8045 + $0x10] sm:$0xf]
  %v8051 = vld [vmem:[%s8045 + $0x14] sm:$0xf]
  %v8052 = vld [vmem:[%s8045 + $0x18] sm:$0xf]
  %v8053 = vld [vmem:[%s8045 + $0x1c] sm:$0xf]
  %v8054 = vld [vmem:[%s8045 + $0x20] sm:$0xf]
  %v8055 = vld [vmem:[%s8045 + $0x24] sm:$0xf]
  %v8056 = vld [vmem:[%s8045 + $0x28] sm:$0xf]
  %v8057 = vld [vmem:[%s8045 + $0x2c] sm:$0xf]
  %v8058 = vld [vmem:[%s8045 + $0x30] sm:$0xf]
  %v8059 = vld [vmem:[%s8045 + $0x34] sm:$0xf]
  %v8060 = vld [vmem:[%s8045 + $0x38] sm:$0xf]
  %v8061 = vld [vmem:[%s8045 + $0x3c] sm:$0xf]
  %v8062 = vld [vmem:[%s8045 + $0x40] sm:$0xf]
  %v8063 = vld [vmem:[%s8045 + $0x44] sm:$0xf]
  %v8064 = vld [vmem:[%s8045 + $0x48] sm:$0xf]
  %v8065 = vld [vmem:[%s8045 + $0x4c] sm:$0xf]
  %v8066 = vld [vmem:[%s8045 + $0x50] sm:$0xf]
  %v8067 = vld [vmem:[%s8045 + $0x54] sm:$0xf]
  %v8068 = vld [vmem:[%s8045 + $0x58] sm:$0xf]
  %v8069 = vld [vmem:[%s8045 + $0x5c] sm:$0xf]
  %v8070 = vld [vmem:[%s8045 + $0x60] sm:$0xf]
  %v8071 = vld [vmem:[%s8045 + $0x64] sm:$0xf]
  %v8072 = vld [vmem:[%s8045 + $0x68] sm:$0xf]
  %v8073 = vld [vmem:[%s8045 + $0x6c] sm:$0xf]
  %v8074 = vld [vmem:[%s8045 + $0x70] sm:$0xf]
  %v8075 = vld [vmem:[%s8045 + $0x74] sm:$0xf]
  %v8076 = vld [vmem:[%s8045 + $0x78] sm:$0xf]
  %v8077 = vld [vmem:[%s8045 + $0x7c] sm:$0xf]
  %v8094 = vunpack.c.l.b16 %v8029
  %v8095 = vunpack.c.l.b16 %v8030
  %v8096 = vunpack.c.l.b16 %v8031
  %v8097 = vunpack.c.l.b16 %v8032
  %v8098 = vunpack.c.l.b16 %v8033
  %v8099 = vunpack.c.l.b16 %v8034
  %v8100 = vunpack.c.l.b16 %v8035
  %v8101 = vunpack.c.l.b16 %v8036
  %v8102 = vunpack.c.l.b16 %v8037
  %v8103 = vunpack.c.l.b16 %v8038
  %v8104 = vunpack.c.l.b16 %v8039
  %v8105 = vunpack.c.l.b16 %v8040
  %v8106 = vunpack.c.l.b16 %v8041
  %v8107 = vunpack.c.l.b16 %v8042
  %v8108 = vunpack.c.l.b16 %v8043
  %v8109 = vunpack.c.l.b16 %v8044
  %v8110 = vrot.slane %v8096, 7
  %v8111 = vsel %vm3657, %v8110, %v8094
  %v8112 = vrot.slane %v8098, 6
  %v8113 = vsel %vm3660, %v8112, %v8111
  %v8114 = vrot.slane %v8100, 5
  %v8115 = vsel %vm3663, %v8114, %v8113
  %v8116 = vrot.slane %v8102, 4
  %v8117 = vsel %vm3666, %v8116, %v8115
  %v8118 = vrot.slane %v8104, 3
  %v8119 = vsel %vm3669, %v8118, %v8117
  %v8120 = vrot.slane %v8106, 2
  %v8121 = vsel %vm3672, %v8120, %v8119
  %v8122 = vrot.slane %v8108, 1
  %v8123 = vsel %vm3675, %v8122, %v8121
  %v8124 = vrot.slane %v8097, 7
  %v8125 = vsel %vm3657, %v8124, %v8095
  %v8126 = vrot.slane %v8099, 6
  %v8127 = vsel %vm3660, %v8126, %v8125
  %v8128 = vrot.slane %v8101, 5
  %v8129 = vsel %vm3663, %v8128, %v8127
  %v8130 = vrot.slane %v8103, 4
  %v8131 = vsel %vm3666, %v8130, %v8129
  %v8132 = vrot.slane %v8105, 3
  %v8133 = vsel %vm3669, %v8132, %v8131
  %v8134 = vrot.slane %v8107, 2
  %v8135 = vsel %vm3672, %v8134, %v8133
  %v8136 = vrot.slane %v8109, 1
  %v8137 = vsel %vm3675, %v8136, %v8135
  %v8138 = vpack.c.b16 %v8123, %v8123
  %v8139 = vpack.c.b16 %v8137, %v8137
  %v8174 = vunpack.c.l.b16 %v8046
  %v8175 = vunpack.c.l.b16 %v8047
  %v8176 = vunpack.c.l.b16 %v8048
  %v8177 = vunpack.c.l.b16 %v8049
  %v8178 = vunpack.c.l.b16 %v8050
  %v8179 = vunpack.c.l.b16 %v8051
  %v8180 = vunpack.c.l.b16 %v8052
  %v8181 = vunpack.c.l.b16 %v8053
  %v8182 = vunpack.c.l.b16 %v8054
  %v8183 = vunpack.c.l.b16 %v8055
  %v8184 = vunpack.c.l.b16 %v8056
  %v8185 = vunpack.c.l.b16 %v8057
  %v8186 = vunpack.c.l.b16 %v8058
  %v8187 = vunpack.c.l.b16 %v8059
  %v8188 = vunpack.c.l.b16 %v8060
  %v8189 = vunpack.c.l.b16 %v8061
  %v8190 = vunpack.c.l.b16 %v8062
  %v8191 = vunpack.c.l.b16 %v8063
  %v8192 = vunpack.c.l.b16 %v8064
  %v8193 = vunpack.c.l.b16 %v8065
  %v8194 = vunpack.c.l.b16 %v8066
  %v8195 = vunpack.c.l.b16 %v8067
  %v8196 = vunpack.c.l.b16 %v8068
  %v8197 = vunpack.c.l.b16 %v8069
  %v8198 = vunpack.c.l.b16 %v8070
  %v8199 = vunpack.c.l.b16 %v8071
  %v8200 = vunpack.c.l.b16 %v8072
  %v8201 = vunpack.c.l.b16 %v8073
  %v8202 = vunpack.c.l.b16 %v8074
  %v8203 = vunpack.c.l.b16 %v8075
  %v8204 = vunpack.c.l.b16 %v8076
  %v8205 = vunpack.c.l.b16 %v8077
  %v8206 = vpack.c.b16 %v8175, %v8174
  %v8207 = vpack.c.b16 %v8177, %v8176
  %v8208 = vpack.c.b16 %v8179, %v8178
  %v8209 = vpack.c.b16 %v8181, %v8180
  %v8210 = vpack.c.b16 %v8183, %v8182
  %v8211 = vpack.c.b16 %v8185, %v8184
  %v8212 = vpack.c.b16 %v8187, %v8186
  %v8213 = vpack.c.b16 %v8189, %v8188
  %v8214 = vpack.c.b16 %v8191, %v8190
  %v8215 = vpack.c.b16 %v8193, %v8192
  %v8216 = vpack.c.b16 %v8195, %v8194
  %v8217 = vpack.c.b16 %v8197, %v8196
  %v8218 = vpack.c.b16 %v8199, %v8198
  %v8219 = vpack.c.b16 %v8201, %v8200
  %v8220 = vpack.c.b16 %v8203, %v8202
  %v8221 = vpack.c.b16 %v8205, %v8204
  %8238 = vmatprep.subr.bf16.mxu0 0
  %8239 = vmatpush1.bf16.msra.mxu0 %v8206
  %8240 = vmatprep.subr.bf16.mxu0 0
  %8241 = vmatpush1.bf16.msra.mxu0 %v8207
  %8242 = vmatprep.subr.bf16.mxu0 0
  %8243 = vmatpush1.bf16.msra.mxu0 %v8208
  %8244 = vmatprep.subr.bf16.mxu0 0
  %8245 = vmatpush1.bf16.msra.mxu0 %v8209
  %8246 = vmatprep.subr.bf16.mxu0 0
  %8247 = vmatpush1.bf16.msra.mxu0 %v8210
  %8248 = vmatprep.subr.bf16.mxu0 0
  %8249 = vmatpush1.bf16.msra.mxu0 %v8211
  %8250 = vmatprep.subr.bf16.mxu0 0
  %8251 = vmatpush1.bf16.msra.mxu0 %v8212
  %8252 = vmatprep.subr.bf16.mxu0 0
  %8253 = vmatpush1.bf16.msra.mxu0 %v8213
  %8254 = vmatprep.subr.bf16.mxu0 0
  %8255 = vmatpush1.bf16.msra.mxu0 %v8214
  %8256 = vmatprep.subr.bf16.mxu0 0
  %8257 = vmatpush1.bf16.msra.mxu0 %v8215
  %8258 = vmatprep.subr.bf16.mxu0 0
  %8259 = vmatpush1.bf16.msra.mxu0 %v8216
  %8260 = vmatprep.subr.bf16.mxu0 0
  %8261 = vmatpush1.bf16.msra.mxu0 %v8217
  %8262 = vmatprep.subr.bf16.mxu0 0
  %8263 = vmatpush1.bf16.msra.mxu0 %v8218
  %8264 = vmatprep.subr.bf16.mxu0 0
  %8265 = vmatpush1.bf16.msra.mxu0 %v8219
  %8266 = vmatprep.subr.bf16.mxu0 0
  %8267 = vmatpush1.bf16.msra.mxu0 %v8220
  %8268 = vmatprep.subr.bf16.mxu0 0
  %8269 = vmatpush1.bf16.msra.mxu0 %v8221
  %8270 = vmatprep.mubr.bf16.mxu0 %v8139
  %8271 = vmatmul.mubr.bf16.gmra.mrb[0].mxu0 %v8138
  %v8272 = vpop.f32.mrb[0].mxu0
  %v8273 = vadd.f32 0.0, %v8272
  %v8274 = vpop.f32.mrb[0].mxu0
  %v8275 = vpop.f32.mrb[0].mxu0
  %v8276 = vpop.f32.mrb[0].mxu0
  %8277 = vdwg.mxu0
  %v8278 = vadd.f32 %v7924, %v8273
  %s8279 = scalar_lea.vmem [#allocation2], 30
  %v8280 = vld [vmem:[%s8279] ss:$8 sm:$0x3]
  %s8281 = scalar_lea.vmem [#allocation2], 78
  %v8282 = vld [vmem:[%s8281] ss:$8 sm:$0x3]
  %s8283 = scalar_lea.vmem [#allocation2], 126
  %v8284 = vld [vmem:[%s8283] ss:$8 sm:$0x3]
  %s8285 = scalar_lea.vmem [#allocation2], 174
  %v8286 = vld [vmem:[%s8285] ss:$8 sm:$0x3]
  %s8287 = scalar_lea.vmem [#allocation2], 222
  %v8288 = vld [vmem:[%s8287] ss:$8 sm:$0x3]
  %s8289 = scalar_lea.vmem [#allocation2], 270
  %v8290 = vld [vmem:[%s8289] ss:$8 sm:$0x3]
  %s8291 = scalar_lea.vmem [#allocation2], 318
  %v8292 = vld [vmem:[%s8291] ss:$8 sm:$0x3]
  %s8293 = scalar_lea.vmem [#allocation2], 366
  %v8294 = vld [vmem:[%s8293] ss:$8 sm:$0x3]
  %v8303 = vlaneseq
  %v8304 = vshrl.u32 %v8303, 7
  %v8305 = vsub.s32 0, %v8304
  %v8306 = vrot.slane %v8280, %v8305
  %v8307 = vlaneseq
  %v8308 = vshrl.u32 %v8307, 7
  %v8309 = vsub.s32 1, %v8308
  %v8310 = vrot.slane %v8280, %v8309
  %v8311 = vlaneseq
  %v8312 = vshrl.u32 %v8311, 7
  %v8313 = vsub.s32 0, %v8312
  %v8314 = vrot.slane %v8282, %v8313
  %v8315 = vlaneseq
  %v8316 = vshrl.u32 %v8315, 7
  %v8317 = vsub.s32 1, %v8316
  %v8318 = vrot.slane %v8282, %v8317
  %v8319 = vlaneseq
  %v8320 = vshrl.u32 %v8319, 7
  %v8321 = vsub.s32 0, %v8320
  %v8322 = vrot.slane %v8284, %v8321
  %v8323 = vlaneseq
  %v8324 = vshrl.u32 %v8323, 7
  %v8325 = vsub.s32 1, %v8324
  %v8326 = vrot.slane %v8284, %v8325
  %v8327 = vlaneseq
  %v8328 = vshrl.u32 %v8327, 7
  %v8329 = vsub.s32 0, %v8328
  %v8330 = vrot.slane %v8286, %v8329
  %v8331 = vlaneseq
  %v8332 = vshrl.u32 %v8331, 7
  %v8333 = vsub.s32 1, %v8332
  %v8334 = vrot.slane %v8286, %v8333
  %v8335 = vlaneseq
  %v8336 = vshrl.u32 %v8335, 7
  %v8337 = vsub.s32 0, %v8336
  %v8338 = vrot.slane %v8288, %v8337
  %v8339 = vlaneseq
  %v8340 = vshrl.u32 %v8339, 7
  %v8341 = vsub.s32 1, %v8340
  %v8342 = vrot.slane %v8288, %v8341
  %v8343 = vlaneseq
  %v8344 = vshrl.u32 %v8343, 7
  %v8345 = vsub.s32 0, %v8344
  %v8346 = vrot.slane %v8290, %v8345
  %v8347 = vlaneseq
  %v8348 = vshrl.u32 %v8347, 7
  %v8349 = vsub.s32 1, %v8348
  %v8350 = vrot.slane %v8290, %v8349
  %v8351 = vlaneseq
  %v8352 = vshrl.u32 %v8351, 7
  %v8353 = vsub.s32 0, %v8352
  %v8354 = vrot.slane %v8292, %v8353
  %v8355 = vlaneseq
  %v8356 = vshrl.u32 %v8355, 7
  %v8357 = vsub.s32 1, %v8356
  %v8358 = vrot.slane %v8292, %v8357
  %v8359 = vlaneseq
  %v8360 = vshrl.u32 %v8359, 7
  %v8361 = vsub.s32 0, %v8360
  %v8362 = vrot.slane %v8294, %v8361
  %v8363 = vlaneseq
  %v8364 = vshrl.u32 %v8363, 7
  %v8365 = vsub.s32 1, %v8364
  %v8366 = vrot.slane %v8294, %v8365
  %v8383 = vpack.c.bf16 %v8306, %v8306
  %v8384 = vpack.c.bf16 %v8310, %v8310
  %v8385 = vpack.c.bf16 %v8314, %v8314
  %v8386 = vpack.c.bf16 %v8318, %v8318
  %v8387 = vpack.c.bf16 %v8322, %v8322
  %v8388 = vpack.c.bf16 %v8326, %v8326
  %v8389 = vpack.c.bf16 %v8330, %v8330
  %v8390 = vpack.c.bf16 %v8334, %v8334
  %v8391 = vpack.c.bf16 %v8338, %v8338
  %v8392 = vpack.c.bf16 %v8342, %v8342
  %v8393 = vpack.c.bf16 %v8346, %v8346
  %v8394 = vpack.c.bf16 %v8350, %v8350
  %v8395 = vpack.c.bf16 %v8354, %v8354
  %v8396 = vpack.c.bf16 %v8358, %v8358
  %v8397 = vpack.c.bf16 %v8362, %v8362
  %v8398 = vpack.c.bf16 %v8366, %v8366
  %s8399 = scalar_lea.vmem %s5, 1792
  %v8400 = vld [vmem:[%s8399] sm:$0xf]
  %v8401 = vld [vmem:[%s8399 + $0x4] sm:$0xf]
  %v8402 = vld [vmem:[%s8399 + $0x8] sm:$0xf]
  %v8403 = vld [vmem:[%s8399 + $0xc] sm:$0xf]
  %v8404 = vld [vmem:[%s8399 + $0x10] sm:$0xf]
  %v8405 = vld [vmem:[%s8399 + $0x14] sm:$0xf]
  %v8406 = vld [vmem:[%s8399 + $0x18] sm:$0xf]
  %v8407 = vld [vmem:[%s8399 + $0x1c] sm:$0xf]
  %v8408 = vld [vmem:[%s8399 + $0x20] sm:$0xf]
  %v8409 = vld [vmem:[%s8399 + $0x24] sm:$0xf]
  %v8410 = vld [vmem:[%s8399 + $0x28] sm:$0xf]
  %v8411 = vld [vmem:[%s8399 + $0x2c] sm:$0xf]
  %v8412 = vld [vmem:[%s8399 + $0x30] sm:$0xf]
  %v8413 = vld [vmem:[%s8399 + $0x34] sm:$0xf]
  %v8414 = vld [vmem:[%s8399 + $0x38] sm:$0xf]
  %v8415 = vld [vmem:[%s8399 + $0x3c] sm:$0xf]
  %v8416 = vld [vmem:[%s8399 + $0x40] sm:$0xf]
  %v8417 = vld [vmem:[%s8399 + $0x44] sm:$0xf]
  %v8418 = vld [vmem:[%s8399 + $0x48] sm:$0xf]
  %v8419 = vld [vmem:[%s8399 + $0x4c] sm:$0xf]
  %v8420 = vld [vmem:[%s8399 + $0x50] sm:$0xf]
  %v8421 = vld [vmem:[%s8399 + $0x54] sm:$0xf]
  %v8422 = vld [vmem:[%s8399 + $0x58] sm:$0xf]
  %v8423 = vld [vmem:[%s8399 + $0x5c] sm:$0xf]
  %v8424 = vld [vmem:[%s8399 + $0x60] sm:$0xf]
  %v8425 = vld [vmem:[%s8399 + $0x64] sm:$0xf]
  %v8426 = vld [vmem:[%s8399 + $0x68] sm:$0xf]
  %v8427 = vld [vmem:[%s8399 + $0x6c] sm:$0xf]
  %v8428 = vld [vmem:[%s8399 + $0x70] sm:$0xf]
  %v8429 = vld [vmem:[%s8399 + $0x74] sm:$0xf]
  %v8430 = vld [vmem:[%s8399 + $0x78] sm:$0xf]
  %v8431 = vld [vmem:[%s8399 + $0x7c] sm:$0xf]
  %v8448 = vunpack.c.l.b16 %v8383
  %v8449 = vunpack.c.l.b16 %v8384
  %v8450 = vunpack.c.l.b16 %v8385
  %v8451 = vunpack.c.l.b16 %v8386
  %v8452 = vunpack.c.l.b16 %v8387
  %v8453 = vunpack.c.l.b16 %v8388
  %v8454 = vunpack.c.l.b16 %v8389
  %v8455 = vunpack.c.l.b16 %v8390
  %v8456 = vunpack.c.l.b16 %v8391
  %v8457 = vunpack.c.l.b16 %v8392
  %v8458 = vunpack.c.l.b16 %v8393
  %v8459 = vunpack.c.l.b16 %v8394
  %v8460 = vunpack.c.l.b16 %v8395
  %v8461 = vunpack.c.l.b16 %v8396
  %v8462 = vunpack.c.l.b16 %v8397
  %v8463 = vunpack.c.l.b16 %v8398
  %v8464 = vrot.slane %v8450, 7
  %v8465 = vsel %vm3657, %v8464, %v8448
  %v8466 = vrot.slane %v8452, 6
  %v8467 = vsel %vm3660, %v8466, %v8465
  %v8468 = vrot.slane %v8454, 5
  %v8469 = vsel %vm3663, %v8468, %v8467
  %v8470 = vrot.slane %v8456, 4
  %v8471 = vsel %vm3666, %v8470, %v8469
  %v8472 = vrot.slane %v8458, 3
  %v8473 = vsel %vm3669, %v8472, %v8471
  %v8474 = vrot.slane %v8460, 2
  %v8475 = vsel %vm3672, %v8474, %v8473
  %v8476 = vrot.slane %v8462, 1
  %v8477 = vsel %vm3675, %v8476, %v8475
  %v8478 = vrot.slane %v8451, 7
  %v8479 = vsel %vm3657, %v8478, %v8449
  %v8480 = vrot.slane %v8453, 6
  %v8481 = vsel %vm3660, %v8480, %v8479
  %v8482 = vrot.slane %v8455, 5
  %v8483 = vsel %vm3663, %v8482, %v8481
  %v8484 = vrot.slane %v8457, 4
  %v8485 = vsel %vm3666, %v8484, %v8483
  %v8486 = vrot.slane %v8459, 3
  %v8487 = vsel %vm3669, %v8486, %v8485
  %v8488 = vrot.slane %v8461, 2
  %v8489 = vsel %vm3672, %v8488, %v8487
  %v8490 = vrot.slane %v8463, 1
  %v8491 = vsel %vm3675, %v8490, %v8489
  %v8492 = vpack.c.b16 %v8477, %v8477
  %v8493 = vpack.c.b16 %v8491, %v8491
  %v8528 = vunpack.c.l.b16 %v8400
  %v8529 = vunpack.c.l.b16 %v8401
  %v8530 = vunpack.c.l.b16 %v8402
  %v8531 = vunpack.c.l.b16 %v8403
  %v8532 = vunpack.c.l.b16 %v8404
  %v8533 = vunpack.c.l.b16 %v8405
  %v8534 = vunpack.c.l.b16 %v8406
  %v8535 = vunpack.c.l.b16 %v8407
  %v8536 = vunpack.c.l.b16 %v8408
  %v8537 = vunpack.c.l.b16 %v8409
  %v8538 = vunpack.c.l.b16 %v8410
  %v8539 = vunpack.c.l.b16 %v8411
  %v8540 = vunpack.c.l.b16 %v8412
  %v8541 = vunpack.c.l.b16 %v8413
  %v8542 = vunpack.c.l.b16 %v8414
  %v8543 = vunpack.c.l.b16 %v8415
  %v8544 = vunpack.c.l.b16 %v8416
  %v8545 = vunpack.c.l.b16 %v8417
  %v8546 = vunpack.c.l.b16 %v8418
  %v8547 = vunpack.c.l.b16 %v8419
  %v8548 = vunpack.c.l.b16 %v8420
  %v8549 = vunpack.c.l.b16 %v8421
  %v8550 = vunpack.c.l.b16 %v8422
  %v8551 = vunpack.c.l.b16 %v8423
  %v8552 = vunpack.c.l.b16 %v8424
  %v8553 = vunpack.c.l.b16 %v8425
  %v8554 = vunpack.c.l.b16 %v8426
  %v8555 = vunpack.c.l.b16 %v8427
  %v8556 = vunpack.c.l.b16 %v8428
  %v8557 = vunpack.c.l.b16 %v8429
  %v8558 = vunpack.c.l.b16 %v8430
  %v8559 = vunpack.c.l.b16 %v8431
  %v8560 = vpack.c.b16 %v8529, %v8528
  %v8561 = vpack.c.b16 %v8531, %v8530
  %v8562 = vpack.c.b16 %v8533, %v8532
  %v8563 = vpack.c.b16 %v8535, %v8534
  %v8564 = vpack.c.b16 %v8537, %v8536
  %v8565 = vpack.c.b16 %v8539, %v8538
  %v8566 = vpack.c.b16 %v8541, %v8540
  %v8567 = vpack.c.b16 %v8543, %v8542
  %v8568 = vpack.c.b16 %v8545, %v8544
  %v8569 = vpack.c.b16 %v8547, %v8546
  %v8570 = vpack.c.b16 %v8549, %v8548
  %v8571 = vpack.c.b16 %v8551, %v8550
  %v8572 = vpack.c.b16 %v8553, %v8552
  %v8573 = vpack.c.b16 %v8555, %v8554
  %v8574 = vpack.c.b16 %v8557, %v8556
  %v8575 = vpack.c.b16 %v8559, %v8558
  %8592 = vmatprep.subr.bf16.mxu0 0
  %8593 = vmatpush1.bf16.msra.mxu0 %v8560
  %8594 = vmatprep.subr.bf16.mxu0 0
  %8595 = vmatpush1.bf16.msra.mxu0 %v8561
  %8596 = vmatprep.subr.bf16.mxu0 0
  %8597 = vmatpush1.bf16.msra.mxu0 %v8562
  %8598 = vmatprep.subr.bf16.mxu0 0
  %8599 = vmatpush1.bf16.msra.mxu0 %v8563
  %8600 = vmatprep.subr.bf16.mxu0 0
  %8601 = vmatpush1.bf16.msra.mxu0 %v8564
  %8602 = vmatprep.subr.bf16.mxu0 0
  %8603 = vmatpush1.bf16.msra.mxu0 %v8565
  %8604 = vmatprep.subr.bf16.mxu0 0
  %8605 = vmatpush1.bf16.msra.mxu0 %v8566
  %8606 = vmatprep.subr.bf16.mxu0 0
  %8607 = vmatpush1.bf16.msra.mxu0 %v8567
  %8608 = vmatprep.subr.bf16.mxu0 0
  %8609 = vmatpush1.bf16.msra.mxu0 %v8568
  %8610 = vmatprep.subr.bf16.mxu0 0
  %8611 = vmatpush1.bf16.msra.mxu0 %v8569
  %8612 = vmatprep.subr.bf16.mxu0 0
  %8613 = vmatpush1.bf16.msra.mxu0 %v8570
  %8614 = vmatprep.subr.bf16.mxu0 0
  %8615 = vmatpush1.bf16.msra.mxu0 %v8571
  %8616 = vmatprep.subr.bf16.mxu0 0
  %8617 = vmatpush1.bf16.msra.mxu0 %v8572
  %8618 = vmatprep.subr.bf16.mxu0 0
  %8619 = vmatpush1.bf16.msra.mxu0 %v8573
  %8620 = vmatprep.subr.bf16.mxu0 0
  %8621 = vmatpush1.bf16.msra.mxu0 %v8574
  %8622 = vmatprep.subr.bf16.mxu0 0
  %8623 = vmatpush1.bf16.msra.mxu0 %v8575
  %8624 = vmatprep.mubr.bf16.mxu0 %v8493
  %8625 = vmatmul.mubr.bf16.gmra.mrb[0].mxu0 %v8492
  %v8626 = vpop.f32.mrb[0].mxu0
  %v8627 = vadd.f32 0.0, %v8626
  %v8628 = vpop.f32.mrb[0].mxu0
  %v8629 = vpop.f32.mrb[0].mxu0
  %v8630 = vpop.f32.mrb[0].mxu0
  %8631 = vdwg.mxu0
  %v8632 = vadd.f32 %v8278, %v8627
  %s8633 = scalar_lea.vmem [#allocation2], 31
  %v8634 = vld [vmem:[%s8633] ss:$8 sm:$0x3]
  %s8635 = scalar_lea.vmem [#allocation2], 79
  %v8636 = vld [vmem:[%s8635] ss:$8 sm:$0x3]
  %s8637 = scalar_lea.vmem [#allocation2], 127
  %v8638 = vld [vmem:[%s8637] ss:$8 sm:$0x3]
  %s8639 = scalar_lea.vmem [#allocation2], 175
  %v8640 = vld [vmem:[%s8639] ss:$8 sm:$0x3]
  %s8641 = scalar_lea.vmem [#allocation2], 223
  %v8642 = vld [vmem:[%s8641] ss:$8 sm:$0x3]
  %s8643 = scalar_lea.vmem [#allocation2], 271
  %v8644 = vld [vmem:[%s8643] ss:$8 sm:$0x3]
  %s8645 = scalar_lea.vmem [#allocation2], 319
  %v8646 = vld [vmem:[%s8645] ss:$8 sm:$0x3]
  %s8647 = scalar_lea.vmem [#allocation2], 367
  %v8648 = vld [vmem:[%s8647] ss:$8 sm:$0x3]
  %v8657 = vlaneseq
  %v8658 = vshrl.u32 %v8657, 7
  %v8659 = vsub.s32 0, %v8658
  %v8660 = vrot.slane %v8634, %v8659
  %v8661 = vlaneseq
  %v8662 = vshrl.u32 %v8661, 7
  %v8663 = vsub.s32 1, %v8662
  %v8664 = vrot.slane %v8634, %v8663
  %v8665 = vlaneseq
  %v8666 = vshrl.u32 %v8665, 7
  %v8667 = vsub.s32 0, %v8666
  %v8668 = vrot.slane %v8636, %v8667
  %v8669 = vlaneseq
  %v8670 = vshrl.u32 %v8669, 7
  %v8671 = vsub.s32 1, %v8670
  %v8672 = vrot.slane %v8636, %v8671
  %v8673 = vlaneseq
  %v8674 = vshrl.u32 %v8673, 7
  %v8675 = vsub.s32 0, %v8674
  %v8676 = vrot.slane %v8638, %v8675
  %v8677 = vlaneseq
  %v8678 = vshrl.u32 %v8677, 7
  %v8679 = vsub.s32 1, %v8678
  %v8680 = vrot.slane %v8638, %v8679
  %v8681 = vlaneseq
  %v8682 = vshrl.u32 %v8681, 7
  %v8683 = vsub.s32 0, %v8682
  %v8684 = vrot.slane %v8640, %v8683
  %v8685 = vlaneseq
  %v8686 = vshrl.u32 %v8685, 7
  %v8687 = vsub.s32 1, %v8686
  %v8688 = vrot.slane %v8640, %v8687
  %v8689 = vlaneseq
  %v8690 = vshrl.u32 %v8689, 7
  %v8691 = vsub.s32 0, %v8690
  %v8692 = vrot.slane %v8642, %v8691
  %v8693 = vlaneseq
  %v8694 = vshrl.u32 %v8693, 7
  %v8695 = vsub.s32 1, %v8694
  %v8696 = vrot.slane %v8642, %v8695
  %v8697 = vlaneseq
  %v8698 = vshrl.u32 %v8697, 7
  %v8699 = vsub.s32 0, %v8698
  %v8700 = vrot.slane %v8644, %v8699
  %v8701 = vlaneseq
  %v8702 = vshrl.u32 %v8701, 7
  %v8703 = vsub.s32 1, %v8702
  %v8704 = vrot.slane %v8644, %v8703
  %v8705 = vlaneseq
  %v8706 = vshrl.u32 %v8705, 7
  %v8707 = vsub.s32 0, %v8706
  %v8708 = vrot.slane %v8646, %v8707
  %v8709 = vlaneseq
  %v8710 = vshrl.u32 %v8709, 7
  %v8711 = vsub.s32 1, %v8710
  %v8712 = vrot.slane %v8646, %v8711
  %v8713 = vlaneseq
  %v8714 = vshrl.u32 %v8713, 7
  %v8715 = vsub.s32 0, %v8714
  %v8716 = vrot.slane %v8648, %v8715
  %v8717 = vlaneseq
  %v8718 = vshrl.u32 %v8717, 7
  %v8719 = vsub.s32 1, %v8718
  %v8720 = vrot.slane %v8648, %v8719
  %v8737 = vpack.c.bf16 %v8660, %v8660
  %v8738 = vpack.c.bf16 %v8664, %v8664
  %v8739 = vpack.c.bf16 %v8668, %v8668
  %v8740 = vpack.c.bf16 %v8672, %v8672
  %v8741 = vpack.c.bf16 %v8676, %v8676
  %v8742 = vpack.c.bf16 %v8680, %v8680
  %v8743 = vpack.c.bf16 %v8684, %v8684
  %v8744 = vpack.c.bf16 %v8688, %v8688
  %v8745 = vpack.c.bf16 %v8692, %v8692
  %v8746 = vpack.c.bf16 %v8696, %v8696
  %v8747 = vpack.c.bf16 %v8700, %v8700
  %v8748 = vpack.c.bf16 %v8704, %v8704
  %v8749 = vpack.c.bf16 %v8708, %v8708
  %v8750 = vpack.c.bf16 %v8712, %v8712
  %v8751 = vpack.c.bf16 %v8716, %v8716
  %v8752 = vpack.c.bf16 %v8720, %v8720
  %s8753 = scalar_lea.vmem %s5, 1920
  %v8754 = vld [vmem:[%s8753] sm:$0xf]
  %v8755 = vld [vmem:[%s8753 + $0x4] sm:$0xf]
  %v8756 = vld [vmem:[%s8753 + $0x8] sm:$0xf]
  %v8757 = vld [vmem:[%s8753 + $0xc] sm:$0xf]
  %v8758 = vld [vmem:[%s8753 + $0x10] sm:$0xf]
  %v8759 = vld [vmem:[%s8753 + $0x14] sm:$0xf]
  %v8760 = vld [vmem:[%s8753 + $0x18] sm:$0xf]
  %v8761 = vld [vmem:[%s8753 + $0x1c] sm:$0xf]
  %v8762 = vld [vmem:[%s8753 + $0x20] sm:$0xf]
  %v8763 = vld [vmem:[%s8753 + $0x24] sm:$0xf]
  %v8764 = vld [vmem:[%s8753 + $0x28] sm:$0xf]
  %v8765 = vld [vmem:[%s8753 + $0x2c] sm:$0xf]
  %v8766 = vld [vmem:[%s8753 + $0x30] sm:$0xf]
  %v8767 = vld [vmem:[%s8753 + $0x34] sm:$0xf]
  %v8768 = vld [vmem:[%s8753 + $0x38] sm:$0xf]
  %v8769 = vld [vmem:[%s8753 + $0x3c] sm:$0xf]
  %v8770 = vld [vmem:[%s8753 + $0x40] sm:$0xf]
  %v8771 = vld [vmem:[%s8753 + $0x44] sm:$0xf]
  %v8772 = vld [vmem:[%s8753 + $0x48] sm:$0xf]
  %v8773 = vld [vmem:[%s8753 + $0x4c] sm:$0xf]
  %v8774 = vld [vmem:[%s8753 + $0x50] sm:$0xf]
  %v8775 = vld [vmem:[%s8753 + $0x54] sm:$0xf]
  %v8776 = vld [vmem:[%s8753 + $0x58] sm:$0xf]
  %v8777 = vld [vmem:[%s8753 + $0x5c] sm:$0xf]
  %v8778 = vld [vmem:[%s8753 + $0x60] sm:$0xf]
  %v8779 = vld [vmem:[%s8753 + $0x64] sm:$0xf]
  %v8780 = vld [vmem:[%s8753 + $0x68] sm:$0xf]
  %v8781 = vld [vmem:[%s8753 + $0x6c] sm:$0xf]
  %v8782 = vld [vmem:[%s8753 + $0x70] sm:$0xf]
  %v8783 = vld [vmem:[%s8753 + $0x74] sm:$0xf]
  %v8784 = vld [vmem:[%s8753 + $0x78] sm:$0xf]
  %v8785 = vld [vmem:[%s8753 + $0x7c] sm:$0xf]
  %v8802 = vunpack.c.l.b16 %v8737
  %v8803 = vunpack.c.l.b16 %v8738
  %v8804 = vunpack.c.l.b16 %v8739
  %v8805 = vunpack.c.l.b16 %v8740
  %v8806 = vunpack.c.l.b16 %v8741
  %v8807 = vunpack.c.l.b16 %v8742
  %v8808 = vunpack.c.l.b16 %v8743
  %v8809 = vunpack.c.l.b16 %v8744
  %v8810 = vunpack.c.l.b16 %v8745
  %v8811 = vunpack.c.l.b16 %v8746
  %v8812 = vunpack.c.l.b16 %v8747
  %v8813 = vunpack.c.l.b16 %v8748
  %v8814 = vunpack.c.l.b16 %v8749
  %v8815 = vunpack.c.l.b16 %v8750
  %v8816 = vunpack.c.l.b16 %v8751
  %v8817 = vunpack.c.l.b16 %v8752
  %v8818 = vrot.slane %v8804, 7
  %v8819 = vsel %vm3657, %v8818, %v8802
  %v8820 = vrot.slane %v8806, 6
  %v8821 = vsel %vm3660, %v8820, %v8819
  %v8822 = vrot.slane %v8808, 5
  %v8823 = vsel %vm3663, %v8822, %v8821
  %v8824 = vrot.slane %v8810, 4
  %v8825 = vsel %vm3666, %v8824, %v8823
  %v8826 = vrot.slane %v8812, 3
  %v8827 = vsel %vm3669, %v8826, %v8825
  %v8828 = vrot.slane %v8814, 2
  %v8829 = vsel %vm3672, %v8828, %v8827
  %v8830 = vrot.slane %v8816, 1
  %v8831 = vsel %vm3675, %v8830, %v8829
  %v8832 = vrot.slane %v8805, 7
  %v8833 = vsel %vm3657, %v8832, %v8803
  %v8834 = vrot.slane %v8807, 6
  %v8835 = vsel %vm3660, %v8834, %v8833
  %v8836 = vrot.slane %v8809, 5
  %v8837 = vsel %vm3663, %v8836, %v8835
  %v8838 = vrot.slane %v8811, 4
  %v8839 = vsel %vm3666, %v8838, %v8837
  %v8840 = vrot.slane %v8813, 3
  %v8841 = vsel %vm3669, %v8840, %v8839
  %v8842 = vrot.slane %v8815, 2
  %v8843 = vsel %vm3672, %v8842, %v8841
  %v8844 = vrot.slane %v8817, 1
  %v8845 = vsel %vm3675, %v8844, %v8843
  %v8846 = vpack.c.b16 %v8831, %v8831
  %v8847 = vpack.c.b16 %v8845, %v8845
  %v8882 = vunpack.c.l.b16 %v8754
  %v8883 = vunpack.c.l.b16 %v8755
  %v8884 = vunpack.c.l.b16 %v8756
  %v8885 = vunpack.c.l.b16 %v8757
  %v8886 = vunpack.c.l.b16 %v8758
  %v8887 = vunpack.c.l.b16 %v8759
  %v8888 = vunpack.c.l.b16 %v8760
  %v8889 = vunpack.c.l.b16 %v8761
  %v8890 = vunpack.c.l.b16 %v8762
  %v8891 = vunpack.c.l.b16 %v8763
  %v8892 = vunpack.c.l.b16 %v8764
  %v8893 = vunpack.c.l.b16 %v8765
  %v8894 = vunpack.c.l.b16 %v8766
  %v8895 = vunpack.c.l.b16 %v8767
  %v8896 = vunpack.c.l.b16 %v8768
  %v8897 = vunpack.c.l.b16 %v8769
  %v8898 = vunpack.c.l.b16 %v8770
  %v8899 = vunpack.c.l.b16 %v8771
  %v8900 = vunpack.c.l.b16 %v8772
  %v8901 = vunpack.c.l.b16 %v8773
  %v8902 = vunpack.c.l.b16 %v8774
  %v8903 = vunpack.c.l.b16 %v8775
  %v8904 = vunpack.c.l.b16 %v8776
  %v8905 = vunpack.c.l.b16 %v8777
  %v8906 = vunpack.c.l.b16 %v8778
  %v8907 = vunpack.c.l.b16 %v8779
  %v8908 = vunpack.c.l.b16 %v8780
  %v8909 = vunpack.c.l.b16 %v8781
  %v8910 = vunpack.c.l.b16 %v8782
  %v8911 = vunpack.c.l.b16 %v8783
  %v8912 = vunpack.c.l.b16 %v8784
  %v8913 = vunpack.c.l.b16 %v8785
  %v8914 = vpack.c.b16 %v8883, %v8882
  %v8915 = vpack.c.b16 %v8885, %v8884
  %v8916 = vpack.c.b16 %v8887, %v8886
  %v8917 = vpack.c.b16 %v8889, %v8888
  %v8918 = vpack.c.b16 %v8891, %v8890
  %v8919 = vpack.c.b16 %v8893, %v8892
  %v8920 = vpack.c.b16 %v8895, %v8894
  %v8921 = vpack.c.b16 %v8897, %v8896
  %v8922 = vpack.c.b16 %v8899, %v8898
  %v8923 = vpack.c.b16 %v8901, %v8900
  %v8924 = vpack.c.b16 %v8903, %v8902
  %v8925 = vpack.c.b16 %v8905, %v8904
  %v8926 = vpack.c.b16 %v8907, %v8906
  %v8927 = vpack.c.b16 %v8909, %v8908
  %v8928 = vpack.c.b16 %v8911, %v8910
  %v8929 = vpack.c.b16 %v8913, %v8912
  %8946 = vmatprep.subr.bf16.mxu0 0
  %8947 = vmatpush1.bf16.msra.mxu0 %v8914
  %8948 = vmatprep.subr.bf16.mxu0 0
  %8949 = vmatpush1.bf16.msra.mxu0 %v8915
  %8950 = vmatprep.subr.bf16.mxu0 0
  %8951 = vmatpush1.bf16.msra.mxu0 %v8916
  %8952 = vmatprep.subr.bf16.mxu0 0
  %8953 = vmatpush1.bf16.msra.mxu0 %v8917
  %8954 = vmatprep.subr.bf16.mxu0 0
  %8955 = vmatpush1.bf16.msra.mxu0 %v8918
  %8956 = vmatprep.subr.bf16.mxu0 0
  %8957 = vmatpush1.bf16.msra.mxu0 %v8919
  %8958 = vmatprep.subr.bf16.mxu0 0
  %8959 = vmatpush1.bf16.msra.mxu0 %v8920
  %8960 = vmatprep.subr.bf16.mxu0 0
  %8961 = vmatpush1.bf16.msra.mxu0 %v8921
  %8962 = vmatprep.subr.bf16.mxu0 0
  %8963 = vmatpush1.bf16.msra.mxu0 %v8922
  %8964 = vmatprep.subr.bf16.mxu0 0
  %8965 = vmatpush1.bf16.msra.mxu0 %v8923
  %8966 = vmatprep.subr.bf16.mxu0 0
  %8967 = vmatpush1.bf16.msra.mxu0 %v8924
  %8968 = vmatprep.subr.bf16.mxu0 0
  %8969 = vmatpush1.bf16.msra.mxu0 %v8925
  %8970 = vmatprep.subr.bf16.mxu0 0
  %8971 = vmatpush1.bf16.msra.mxu0 %v8926
  %8972 = vmatprep.subr.bf16.mxu0 0
  %8973 = vmatpush1.bf16.msra.mxu0 %v8927
  %8974 = vmatprep.subr.bf16.mxu0 0
  %8975 = vmatpush1.bf16.msra.mxu0 %v8928
  %8976 = vmatprep.subr.bf16.mxu0 0
  %8977 = vmatpush1.bf16.msra.mxu0 %v8929
  %8978 = vmatprep.mubr.bf16.mxu0 %v8847
  %8979 = vmatmul.mubr.bf16.gmra.mrb[0].mxu0 %v8846
  %v8980 = vpop.f32.mrb[0].mxu0
  %v8981 = vadd.f32 0.0, %v8980
  %v8982 = vpop.f32.mrb[0].mxu0
  %v8983 = vpop.f32.mrb[0].mxu0
  %v8984 = vpop.f32.mrb[0].mxu0
  %8985 = vdwg.mxu0
  %v8986 = vadd.f32 %v8632, %v8981
  %v8987 = vld [vmem:[%s6] sm:$0x1]
  %v8989 = vlaneseq
  %v8990 = vshrl.u32 %v8989, 7
  %v8991 = vsub.s32 0, %v8990
  %v8992 = vrot.slane %v8987, %v8991
  %v8994 = vadd.f32 %v8986, %v8992
  %v8995 = vmax.f32 %v8994, 0.0
  %v8996 = vld [vmem:[%s7] sm:$0xff]
  %v8997 = vld [vmem:[%s7 + $0x8] sm:$0xff]
  %v8998 = vld [vmem:[%s7 + $0x10] sm:$0xff]
  %v8999 = vld [vmem:[%s7 + $0x18] sm:$0xff]
  %v9000 = vld [vmem:[%s8] sm:$0x1]
  %v9002 = vlaneseq
  %v9003 = vshrl.u32 %v9002, 7
  %v9004 = vsub.s32 0, %v9003
  %v9005 = vrot.slane %v9000, %v9004
  %vm9007 = vcmask 261120
  %v9009 = vsel %vm9007, %v8995, 0
  %9011 = vmatprep.subr.mxu0 0.0
  %9012 = vmatpush1.msra.mxu0 %v8996
  %9013 = vmatprep.subr.mxu0 0.0
  %9014 = vmatpush1.msra.mxu0 %v8997
  %9015 = vmatprep.subr.mxu0 0.0
  %9016 = vmatpush1.msra.mxu0 %v8998
  %9017 = vmatprep.subr.mxu0 0.0
  %9018 = vmatpush1.msra.mxu0 %v8999
  %9019 = vmatprep.subr.mxu0 0.0
  %9020 = vmatpush1.msra.mxu0 0.0
  %9021 = vmatprep.subr.mxu0 0.0
  %9022 = vmatpush1.msra.mxu0 0.0
  %9023 = vmatprep.subr.mxu0 0.0
  %9024 = vmatpush1.msra.mxu0 0.0
  %9025 = vmatprep.subr.mxu0 0.0
  %9026 = vmatpush1.msra.mxu0 0.0
  %9027 = vmatprep.subr.mxu0 0.0
  %9028 = vmatpush1.msra.mxu0 0.0
  %9029 = vmatprep.subr.mxu0 0.0
  %9030 = vmatpush1.msra.mxu0 0.0
  %9031 = vmatprep.subr.mxu0 0.0
  %9032 = vmatpush1.msra.mxu0 0.0
  %9033 = vmatprep.subr.mxu0 0.0
  %9034 = vmatpush1.msra.mxu0 0.0
  %9035 = vmatprep.subr.mxu0 0.0
  %9036 = vmatpush1.msra.mxu0 0.0
  %9037 = vmatprep.subr.mxu0 0.0
  %9038 = vmatpush1.msra.mxu0 0.0
  %9039 = vmatprep.subr.mxu0 0.0
  %9040 = vmatpush1.msra.mxu0 0.0
  %9041 = vmatprep.subr.mxu0 0.0
  %9042 = vmatpush1.msra.mxu0 0.0
  %9043 = vmatprep.subr.mxu0 0.0
  %9044 = vmatpush1.msra.mxu0 0.0
  %9045 = vmatprep.subr.mxu0 0.0
  %9046 = vmatpush1.msra.mxu0 0.0
  %9047 = vmatprep.subr.mxu0 0.0
  %9048 = vmatpush1.msra.mxu0 0.0
  %9049 = vmatprep.subr.mxu0 0.0
  %9050 = vmatpush1.msra.mxu0 0.0
  %9051 = vmatprep.subr.mxu0 0.0
  %9052 = vmatpush1.msra.mxu0 0.0
  %9053 = vmatprep.subr.mxu0 0.0
  %9054 = vmatpush1.msra.mxu0 0.0
  %9055 = vmatprep.subr.mxu0 0.0
  %9056 = vmatpush1.msra.mxu0 0.0
  %9057 = vmatprep.subr.mxu0 0.0
  %9058 = vmatpush1.msra.mxu0 0.0
  %9059 = vmatprep.subr.mxu0 0.0
  %9060 = vmatpush1.msra.mxu0 0.0
  %9061 = vmatprep.subr.mxu0 0.0
  %9062 = vmatpush1.msra.mxu0 0.0
  %9063 = vmatprep.subr.mxu0 0.0
  %9064 = vmatpush1.msra.mxu0 0.0
  %9065 = vmatprep.subr.mxu0 0.0
  %9066 = vmatpush1.msra.mxu0 0.0
  %9067 = vmatprep.subr.mxu0 0.0
  %9068 = vmatpush1.msra.mxu0 0.0
  %9069 = vmatprep.subr.mxu0 0.0
  %9070 = vmatpush1.msra.mxu0 0.0
  %9071 = vmatprep.subr.mxu0 0.0
  %9072 = vmatpush1.msra.mxu0 0.0
  %9073 = vmatprep.subr.mxu0 0.0
  %9074 = vmatpush1.msra.mxu0 0.0
  %9075 = vmatprep.mubr.f32.mxu0 0.0
  %9076 = vmatmul.mubr.f32.gmra.mrb[0].mxu0 %v9009
  %v9077 = vpop.f32.mrb[0].mxu0
  %v9078 = vadd.f32 %v9005, %v9077
  %v9079 = vpop.f32.mrb[0].mxu0
  %9080 = vdwg.mxu0
  %9081 = vst [vmem:[%s9] sm:$0xff] %v9078
  // Predicated region
  $region38: #{cnn_forward.1} parent=0 // pred_check
    _
  $region39: #{cnn_forward.1} parent=0 // pred_check_branch
    %9083 = sbr.rel (0) target = $region41
  $region40: #{cnn_forward.1} parent=0 // pred_region
    _
  $region41: #{cnn_forward.1} parent=0 // pred_fallthru
    _
  // Predicated region
  $region42: #{cnn_forward.1} parent=0 // pred_check
    _
  $region43: #{cnn_forward.1} parent=0 // pred_check_branch
    %9085 = sbr.rel (0) target = $region45
  $region44: #{cnn_forward.1} parent=0 // pred_region
    _
  $region45: #{cnn_forward.1} parent=0 // pred_fallthru
    _

</llo_original>
